<compile_context>
chip_gen: v6e
topology: v6e:2x2x1
jax: 0.10.0
libtpu: 0.0.40
codegen_flags: <defaults>
</compile_context>

<pallas_src>
import functools
import math

import jax
import jax.numpy as jnp
import numpy as np
from jax.experimental import pallas as pl
from jax.experimental.pallas import tpu as pltpu


def _round_up(x, m):
    return ((x + m - 1) // m) * m


def _largest_divisor(n, cap):
    for d in range(min(n, cap), 0, -1):
        if n % d == 0:
            return d
    return 1


# ----------------------------------------------------------------------------
# VMEM-budget-aware tiling.
# ----------------------------------------------------------------------------
def _vmem_bytes(t_blk, bb, Hp, ifp, act_bytes):
    """Conservative per-call VMEM footprint (default double-buffering)."""
    G = 4 * Hp
    total = 0
    total += 2 * t_blk * bb * ifp * act_bytes     # x block (double-buffered)
    total += 2 * t_blk * bb * Hp * act_bytes      # y block
    total += 2 * 2 * bb * Hp * 4                  # h0, c0 inputs
    total += 2 * 2 * bb * Hp * 4                  # h_n, c_n outputs
    total += 2 * ifp * G * act_bytes              # W_ih^T (resident, 2 bufs worst case)
    total += 2 * Hp * G * act_bytes               # W_hh^T
    total += 2 * G * 4                            # bias
    total += 2 * bb * Hp * 4                      # h/c state scratch
    total += t_blk * bb * G * 4                   # gx scratch (f32)
    return total


def _choose_tiling(seq, Bp, Hp, ifp_max, act_bytes):
    try:
        vmem_cap = int(pltpu.get_tpu_info().vmem_capacity_bytes)
    except Exception:
        vmem_cap = 64 * 1024 * 1024   # v7x per-TensorCore floor: be conservative

    # bb <= 32 rows: keeps h, c, the fused gate slab and one gx slice inside the
    # 64-vreg file (no spills in the unrolled serial loop) while still feeding
    # the MXU >= 32 LHS rows.
    bb = 8 * _largest_divisor(Bp // 8, 4)

    budget = int(0.45 * vmem_cap)
    t_blk = 32
    while t_blk > 8 and _vmem_bytes(t_blk, bb, Hp, ifp_max, act_bytes) > budget:
        t_blk //= 2
    t_blk = max(1, min(t_blk, seq))

    footprint = _vmem_bytes(t_blk, bb, Hp, ifp_max, act_bytes)
    vmem_limit = max(footprint + (8 << 20), 32 << 20)
    vmem_limit = min(vmem_limit, vmem_cap)
    return t_blk, bb, vmem_limit


# ----------------------------------------------------------------------------
# Pallas kernel: fused input projection + serial LSTM recurrence for one layer.
# Grid = (batch_blocks [parallel], time_blocks [arbitrary]).
# ----------------------------------------------------------------------------
def _lstm_fused_kernel(x_ref, h0_ref, c0_ref, wih_ref, whh_ref, bias_ref,
                       y_ref, hn_ref, cn_ref,
                       h_sc, c_sc, gx_sc,
                       *, t_blk, hidden_pad, seq_len, mask_tail, unroll):
    t = pl.program_id(1)
    Hp = hidden_pad
    bb = h_sc.shape[0]
    ifp = x_ref.shape[-1]

    # Load initial state at the first time block of this batch block (time is
    # the innermost grid axis, so this is correct when batch blocks run
    # serially on one core and when they are split across cores).
    @pl.when(t == 0)
    def _():
        h_sc[...] = h0_ref[...].astype(jnp.float32)
        c_sc[...] = c0_ref[...].astype(jnp.float32)

    # Fused input projection for the whole time block: one large MXU matmul
    # (bf16 operands, f32 accumulation), bias folded in once per block.
    xb = x_ref[...].reshape(t_blk * bb, ifp)
    gx = jnp.dot(xb, wih_ref[...], preferred_element_type=jnp.float32)
    gx_sc[...] = gx.reshape(t_blk, bb, 4 * Hp) + bias_ref[...]

    def gx_gate(i, k):
        # Per-gate, lane-aligned slice read straight from the scratch ref: keeps
        # live ranges short so the unrolled loop stays register-resident.
        return gx_sc[i, :, k * Hp:(k + 1) * Hp]

    def step(i, carry):
        h_prev, c_prev = carry                         # f32 loop carry (no scratch
        # One fused (bb, Hp) @ (Hp, 4*Hp) recurrent matmul.        #  traffic per step)
        gates = jnp.dot(h_prev.astype(whh_ref.dtype), whh_ref[...],
                        preferred_element_type=jnp.float32)

        i_g = jax.nn.sigmoid(gates[:, 0 * Hp:1 * Hp] + gx_gate(i, 0))
        f_g = jax.nn.sigmoid(gates[:, 1 * Hp:2 * Hp] + gx_gate(i, 1))
        g_g = jnp.tanh(gates[:, 2 * Hp:3 * Hp] + gx_gate(i, 2))
        o_g = jax.nn.sigmoid(gates[:, 3 * Hp:4 * Hp] + gx_gate(i, 3))

        c_new = f_g * c_prev + i_g * g_g
        h_new = o_g * jnp.tanh(c_new)

        if mask_tail:
            # cdiv time grid: freeze the state on padded timesteps past seq_len.
            valid = (t * t_blk + i) < seq_len
            h_new = jnp.where(valid, h_new, h_prev)
            c_new = jnp.where(valid, c_new, c_prev)

        y_ref[i] = h_new.astype(y_ref.dtype)
        return (h_new, c_new)

    h_fin, c_fin = jax.lax.fori_loop(0, t_blk, step, (h_sc[...], c_sc[...]),
                                     unroll=unroll)

    # Touch the state scratch only at block exit.
    h_sc[...] = h_fin
    c_sc[...] = c_fin

    # Final h/c emitted directly from the f32 state (no bf16 round trip).
    @pl.when(t == pl.num_programs(1) - 1)
    def _():
        hn_ref[...] = h_fin
        cn_ref[...] = c_fin


def lstm_layer_pallas(x, h0, c0, w_ih_t, w_hh_t, bias, *,
                      seq, t_blk, bb, vmem_limit, out_dtype):
    """One LSTM layer (fused input projection + recurrence).

    x      : (seq_pad, Bp, ifp)  activations (compute dtype)
    h0, c0 : (Bp, Hp) f32        padded initial state
    w_ih_t : (ifp, 4*Hp)         transposed, per-gate-padded input weight
    w_hh_t : (Hp, 4*Hp)          transposed, per-gate-padded recurrent weight
    bias   : (1, 4*Hp) f32       b_ih + b_hh, per-gate-padded
    Returns y (seq_pad, Bp, Hp) out_dtype, h_n (Bp, Hp) f32, c_n (Bp, Hp) f32.
    """
    seq_pad, Bp, ifp = x.shape
    Hp = w_hh_t.shape[0]
    G = 4 * Hp
    n_t = seq_pad // t_blk
    n_b = Bp // bb
    mask_tail = (seq_pad != seq)
    unroll = max(1, math.gcd(t_blk, 8))   # partial unroll caps vreg pressure

    kernel = functools.partial(_lstm_fused_kernel,
                               t_blk=t_blk, hidden_pad=Hp, seq_len=seq,
                               mask_tail=mask_tail, unroll=unroll)

    out_shapes = (
        jax.ShapeDtypeStruct((seq_pad, Bp, Hp), out_dtype),   # y
        jax.ShapeDtypeStruct((Bp, Hp), jnp.float32),          # h_n
        jax.ShapeDtypeStruct((Bp, Hp), jnp.float32),          # c_n
    )

    grid_spec = pltpu.PrefetchScalarGridSpec(
        num_scalar_prefetch=0,
        grid=(n_b, n_t),
        in_specs=[
            pl.BlockSpec((t_blk, bb, ifp), lambda b, t: (t, b, 0)),   # x block
            pl.BlockSpec((bb, Hp), lambda b, t: (b, 0)),              # h0
            pl.BlockSpec((bb, Hp), lambda b, t: (b, 0)),              # c0
            pl.BlockSpec((ifp, G), lambda b, t: (0, 0)),              # W_ih^T (resident)
            pl.BlockSpec((Hp, G), lambda b, t: (0, 0)),               # W_hh^T (resident)
            pl.BlockSpec((1, G), lambda b, t: (0, 0)),                # bias
        ],
        out_specs=[
            pl.BlockSpec((t_blk, bb, Hp), lambda b, t: (t, b, 0)),    # y
            pl.BlockSpec((bb, Hp), lambda b, t: (b, 0)),              # h_n
            pl.BlockSpec((bb, Hp), lambda b, t: (b, 0)),              # c_n
        ],
        scratch_shapes=[
            pltpu.VMEM((bb, Hp), jnp.float32),       # h state (across time blocks)
            pltpu.VMEM((bb, Hp), jnp.float32),       # c state
            pltpu.VMEM((t_blk, bb, G), jnp.float32),  # block gate pre-activations
        ],
    )

    return pl.pallas_call(
        kernel,
        out_shape=out_shapes,
        grid_spec=grid_spec,
        compiler_params=pltpu.CompilerParams(
            dimension_semantics=("parallel", "arbitrary"),
            vmem_limit_bytes=vmem_limit),
    )(x, h0, c0, w_ih_t, w_hh_t, bias)


# ----------------------------------------------------------------------------
# Parameter init (torch.nn.LSTM-style) and packing to the padded layout.
# ----------------------------------------------------------------------------
def init_lstm_params(key, input_size, hidden_size, num_layers):
    """Raw torch-style params: (w_ih (4H,in), w_hh (4H,H), b_ih, b_hh) per layer."""
    bound = 1.0 / math.sqrt(hidden_size)
    raw = []
    for layer in range(num_layers):
        in_feat = input_size if layer == 0 else hidden_size
        key, k1, k2, k3, k4 = jax.random.split(key, 5)
        w_ih = jax.random.uniform(k1, (4 * hidden_size, in_feat),
                                  jnp.float32, -bound, bound)
        w_hh = jax.random.uniform(k2, (4 * hidden_size, hidden_size),
                                  jnp.float32, -bound, bound)
        b_ih = jax.random.uniform(k3, (4 * hidden_size,), jnp.float32, -bound, bound)
        b_hh = jax.random.uniform(k4, (4 * hidden_size,), jnp.float32, -bound, bound)
        raw.append((w_ih, w_hh, b_ih, b_hh))
    return raw


def pack_lstm_params(raw, hidden_size, compute_dtype=jnp.bfloat16):
    """Transpose + per-gate pad H -> Hp (multiple of 128) + cast weights."""
    H = hidden_size
    Hp = _round_up(H, 128)
    packed = []
    for layer, (w_ih, w_hh, b_ih, b_hh) in enumerate(raw):
        in_feat = w_ih.shape[1]
        in_feat_p = in_feat if layer == 0 else Hp   # layers >0 consume padded y

        w_ih_t = w_ih.T.reshape(in_feat, 4, H)
        w_ih_t = jnp.pad(w_ih_t, ((0, in_feat_p - in_feat), (0, 0), (0, Hp - H)))
        w_ih_t = w_ih_t.reshape(in_feat_p, 4 * Hp).astype(compute_dtype)

        w_hh_t = w_hh.T.reshape(H, 4, H)
        w_hh_t = jnp.pad(w_hh_t, ((0, Hp - H), (0, 0), (0, Hp - H)))
        w_hh_t = w_hh_t.reshape(Hp, 4 * Hp).astype(compute_dtype)

        # Padded gate lanes get bias 0, so padded hidden columns stay exactly 0
        # through the recurrence (sigmoid(0)*0 contributions only).
        bias = (b_ih + b_hh).reshape(4, H)
        bias = jnp.pad(bias, ((0, 0), (0, Hp - H)))
        bias = bias.reshape(1, 4 * Hp).astype(jnp.float32)

        packed.append((w_ih_t, w_hh_t, bias))
    return packed


# ----------------------------------------------------------------------------
# CellLSTM forward: batch-first in/out, stacked layers, returns (z, (h_n, c_n))
# ----------------------------------------------------------------------------
def cell_lstm_forward(z, hidden, packed_params, *, compute_dtype=jnp.bfloat16):
    """z: (batch, seq, input_size); hidden = (h0, c0), each (L, batch, H)."""
    h0, c0 = hidden
    B, S, _ = z.shape
    _, _, H = h0.shape
    Hp = packed_params[0][1].shape[0]        # rows of W_hh^T == padded hidden
    ifp0 = packed_params[0][0].shape[0]      # layer-0 input features
    Bp = _round_up(B, 8)
    act_bytes = jnp.dtype(compute_dtype).itemsize

    t_blk, bb, vmem_limit = _choose_tiling(S, Bp, Hp, max(ifp0, Hp), act_bytes)
    n_t = pl.cdiv(S, t_blk)
    seq_pad = n_t * t_blk

    # Time-major; pad time to the t_blk grid and batch to a full sublane tile.
    x = jnp.transpose(z, (1, 0, 2))
    x = jnp.pad(x, ((0, seq_pad - S), (0, Bp - B), (0, 0))).astype(compute_dtype)

    def pad_state(s):  # (B, H) -> (Bp, Hp) f32 (zero pad keeps padded lanes at 0)
        return jnp.pad(s, ((0, Bp - B), (0, Hp - H))).astype(jnp.float32)

    # TODO(synk): v7x layer-over-time pipelining (second TensorCore) not implemented.
    h_ns, c_ns = [], []
    for layer, (w_ih_t, w_hh_t, bias) in enumerate(packed_params):
        y, h_n, c_n = lstm_layer_pallas(
            x, pad_state(h0[layer]), pad_state(c0[layer]), w_ih_t, w_hh_t, bias,
            seq=S, t_blk=t_blk, bb=bb, vmem_limit=vmem_limit,
            out_dtype=compute_dtype)
        h_ns.append(h_n[:B, :H])
        c_ns.append(c_n[:B, :H])
        x = y                                # padded activations feed next layer

    out = jnp.transpose(x[:S, :B, :H], (1, 0, 2)).astype(z.dtype)
    return out, (jnp.stack(h_ns, 0), jnp.stack(c_ns, 0))


# ----------------------------------------------------------------------------
# Pure-JAX f32 reference (mirrors torch.nn.LSTM math) for validation.
# ----------------------------------------------------------------------------
def cell_lstm_reference(z, hidden, raw_params):
    h0, c0 = hidden
    H = h0.shape[-1]
    x = jnp.transpose(z, (1, 0, 2))
    h_ns, c_ns = [], []
    for layer, (w_ih, w_hh, b_ih, b_hh) in enumerate(raw_params):
        w_ih_t, w_hh_t, b = w_ih.T, w_hh.T, b_ih + b_hh

        def step(carry, x_t, w_ih_t=w_ih_t, w_hh_t=w_hh_t, b=b):
            h, c = carry
            g = x_t @ w_ih_t + h @ w_hh_t + b
            i = jax.nn.sigmoid(g[:, 0 * H:1 * H])
            f = jax.nn.sigmoid(g[:, 1 * H:2 * H])
            gg = jnp.tanh(g[:, 2 * H:3 * H])
            o = jax.nn.sigmoid(g[:, 3 * H:4 * H])
            c_new = f * c + i * gg
            h_new = o * jnp.tanh(c_new)
            return (h_new, c_new), h_new

        (h_n, c_n), ys = jax.lax.scan(step, (h0[layer], c0[layer]), x)
        x = ys
        h_ns.append(h_n)
        c_ns.append(c_n)
    return jnp.transpose(x, (1, 0, 2)), (jnp.stack(h_ns, 0), jnp.stack(c_ns, 0))


def _run_case(batch, seq, input_size, hidden_size, num_layers,
              compute_dtype, atol, rtol, seed=0):
    key = jax.random.PRNGKey(seed)
    k_params, k_z, k_h, k_c = jax.random.split(key, 4)

    raw_params = init_lstm_params(k_params, input_size, hidden_size, num_layers)
    packed_params = pack_lstm_params(raw_params, hidden_size, compute_dtype)

    z = jax.random.normal(k_z, (batch, seq, input_size), jnp.float32)
    h0 = jax.random.normal(k_h, (num_layers, batch, hidden_size), jnp.float32)
    c0 = jax.random.normal(k_c, (num_layers, batch, hidden_size), jnp.float32)

    fwd = jax.jit(cell_lstm_forward, static_argnames=("compute_dtype",))
    out, (h_n, c_n) = fwd(z, (h0, c0), packed_params, compute_dtype=compute_dtype)
    jax.block_until_ready((out, h_n, c_n))

    ref_out, (ref_h, ref_c) = cell_lstm_reference(z, (h0, c0), raw_params)
    np.testing.assert_allclose(np.asarray(out), np.asarray(ref_out), atol=atol, rtol=rtol)
    np.testing.assert_allclose(np.asarray(h_n), np.asarray(ref_h), atol=atol, rtol=rtol)
    np.testing.assert_allclose(np.asarray(c_n), np.asarray(ref_c), atol=atol, rtol=rtol)


if __name__ == "__main__":
    # Small shapes consistent with the module (bf16 fast path).
    _run_case(batch=2, seq=8, input_size=16, hidden_size=32, num_layers=2,
              compute_dtype=jnp.bfloat16, atol=4e-2, rtol=4e-2)

    # Structural coverage: multi batch-block, multi time-block, masked tail
    # (seq=37 is not a multiple of t_blk), batch/hidden padding. Run in f32 so
    # the comparison against the f32 reference is tight.
    _run_case(batch=48, seq=37, input_size=16, hidden_size=32, num_layers=2,
              compute_dtype=jnp.float32, atol=1e-3, rtol=1e-3, seed=1)

    print("KERNEL_OK")
</pallas_src>

<mosaic_0001>
module attributes {stable_mosaic.version = 11 : i64} {
  func.func @_lstm_fused_kernel(%arg0: i32, %arg1: i32, %arg2: memref<8x8x128xbf16, #tpu.memory_space<vmem>>, %arg3: memref<8x128xf32, #tpu.memory_space<vmem>>, %arg4: memref<8x128xf32, #tpu.memory_space<vmem>>, %arg5: memref<128x512xbf16, #tpu.memory_space<vmem>>, %arg6: memref<128x512xbf16, #tpu.memory_space<vmem>>, %arg7: memref<1x512xf32, #tpu.memory_space<vmem>>, %arg8: memref<8x8x128xbf16, #tpu.memory_space<vmem>>, %arg9: memref<8x128xf32, #tpu.memory_space<vmem>>, %arg10: memref<8x128xf32, #tpu.memory_space<vmem>>, %arg11: memref<8x128xf32, #tpu.memory_space<vmem>>, %arg12: memref<8x128xf32, #tpu.memory_space<vmem>>, %arg13: memref<8x8x512xf32, #tpu.memory_space<vmem>>) attributes {dimension_semantics = [#tpu.dimension_semantics<parallel>, #tpu.dimension_semantics<arbitrary>], iteration_bounds = array<i64: 1, 1>, scalar_prefetch = 0 : i64, scratch_operands = 3 : i64, tpu.core_type = #tpu.core_type<tc>, window_params = [{transform_indices = @transform_0, window_bounds = array<i64: 8, 8, 128>}, {transform_indices = @transform_1, window_bounds = array<i64: 8, 128>}, {transform_indices = @transform_2, window_bounds = array<i64: 8, 128>}, {pipeline_mode = #tpu.pipeline_mode<synchronous>, transform_indices = @transform_3, window_bounds = array<i64: 128, 512>}, {pipeline_mode = #tpu.pipeline_mode<synchronous>, transform_indices = @transform_4, window_bounds = array<i64: 128, 512>}, {pipeline_mode = #tpu.pipeline_mode<synchronous>, transform_indices = @transform_5, window_bounds = array<i64: 1, 512>}, {transform_indices = @transform_6, window_bounds = array<i64: 8, 8, 128>}, {transform_indices = @transform_7, window_bounds = array<i64: 8, 128>}, {transform_indices = @transform_8, window_bounds = array<i64: 8, 128>}]} {
    %c0_i32 = arith.constant 0 : i32
    %0 = arith.cmpi eq, %arg1, %c0_i32 : i32
    %1 = arith.extui %0 : i1 to i32
    %c0_i32_0 = arith.constant 0 : i32
    %2 = arith.cmpi ne, %1, %c0_i32_0 : i32
    scf.if %2 {
      %c0_146 = arith.constant 0 : index
      %c0_147 = arith.constant 0 : index
      %412 = vector.load %arg3[%c0_146, %c0_147] : memref<8x128xf32, #tpu.memory_space<vmem>>, vector<8x128xf32>
      %c0_148 = arith.constant 0 : index
      %c0_149 = arith.constant 0 : index
      %413 = vector.load %arg11[%c0_148, %c0_149] : memref<8x128xf32, #tpu.memory_space<vmem>>, vector<8x128xf32>
      tpu.vector_store %arg11[%c0_148, %c0_149], %412 {strides = array<i32>} : memref<8x128xf32, #tpu.memory_space<vmem>>, vector<8x128xf32>,
      %c0_150 = arith.constant 0 : index
      %c0_151 = arith.constant 0 : index
      %414 = vector.load %arg4[%c0_150, %c0_151] : memref<8x128xf32, #tpu.memory_space<vmem>>, vector<8x128xf32>
      %c0_152 = arith.constant 0 : index
      %c0_153 = arith.constant 0 : index
      %415 = vector.load %arg12[%c0_152, %c0_153] : memref<8x128xf32, #tpu.memory_space<vmem>>, vector<8x128xf32>
      tpu.vector_store %arg12[%c0_152, %c0_153], %414 {strides = array<i32>} : memref<8x128xf32, #tpu.memory_space<vmem>>, vector<8x128xf32>,
    } else {
    }
    %c0 = arith.constant 0 : index
    %c0_1 = arith.constant 0 : index
    %c0_2 = arith.constant 0 : index
    %3 = vector.load %arg2[%c0, %c0_1, %c0_2] : memref<8x8x128xbf16, #tpu.memory_space<vmem>>, vector<8x8x128xbf16>
    %4 = vector.shape_cast %3 : vector<8x8x128xbf16> to vector<64x128xbf16>
    %c0_3 = arith.constant 0 : index
    %c0_4 = arith.constant 0 : index
    %5 = vector.load %arg5[%c0_3, %c0_4] : memref<128x512xbf16, #tpu.memory_space<vmem>>, vector<128x512xbf16>
    %cst = arith.constant dense<0.000000e+00> : vector<64x512xf32>
    %6 = tpu.matmul %4, %5, %cst {dimension_numbers = #tpu.dot_dimension_numbers<[1], [0], [0], [1], [0, 0, 1, 1], [], []>} : vector<64x128xbf16>, vector<128x512xbf16>, vector<64x512xf32> -> vector<64x512xf32>
    %7 = vector.shape_cast %6 : vector<64x512xf32> to vector<8x8x512xf32>
    %c0_5 = arith.constant 0 : index
    %c0_6 = arith.constant 0 : index
    %8 = vector.load %arg7[%c0_5, %c0_6] : memref<1x512xf32, #tpu.memory_space<vmem>>, vector<1x512xf32>
    %9 = vector.shape_cast %8 : vector<1x512xf32> to vector<1x1x512xf32>
    %10 = vector.broadcast %9 : vector<1x1x512xf32> to vector<8x8x512xf32>
    %11 = arith.addf %7, %10 : vector<8x8x512xf32>
    %c0_7 = arith.constant 0 : index
    %c0_8 = arith.constant 0 : index
    %c0_9 = arith.constant 0 : index
    %12 = vector.load %arg13[%c0_7, %c0_8, %c0_9] : memref<8x8x512xf32, #tpu.memory_space<vmem>>, vector<8x8x512xf32>
    tpu.vector_store %arg13[%c0_7, %c0_8, %c0_9], %11 {strides = array<i32>} : memref<8x8x512xf32, #tpu.memory_space<vmem>>, vector<8x8x512xf32>,
    %c0_10 = arith.constant 0 : index
    %c0_11 = arith.constant 0 : index
    %13 = vector.load %arg11[%c0_10, %c0_11] : memref<8x128xf32, #tpu.memory_space<vmem>>, vector<8x128xf32>
    %c0_12 = arith.constant 0 : index
    %c0_13 = arith.constant 0 : index
    %14 = vector.load %arg12[%c0_12, %c0_13] : memref<8x128xf32, #tpu.memory_space<vmem>>, vector<8x128xf32>
    %c0_i32_14 = arith.constant 0 : i32
    %15 = arith.truncf %13 : vector<8x128xf32> to vector<8x128xbf16>
    %c0_15 = arith.constant 0 : index
    %c0_16 = arith.constant 0 : index
    %16 = vector.load %arg6[%c0_15, %c0_16] : memref<128x512xbf16, #tpu.memory_space<vmem>>, vector<128x512xbf16>
    %cst_17 = arith.constant dense<0.000000e+00> : vector<8x512xf32>
    %17 = tpu.matmul %15, %16, %cst_17 {dimension_numbers = #tpu.dot_dimension_numbers<[1], [0], [0], [1], [0, 0, 1, 1], [], []>} : vector<8x128xbf16>, vector<128x512xbf16>, vector<8x512xf32> -> vector<8x512xf32>
    %18 = vector.extract_strided_slice %17 {offsets = [0, 0], sizes = [8, 128], strides = [1, 1]} : vector<8x512xf32> to vector<8x128xf32>
    %19 = arith.index_cast %c0_i32_14 : i32 to index
    %c0_18 = arith.constant 0 : index
    %c0_19 = arith.constant 0 : index
    %20 = vector.load %arg13[%19, %c0_18, %c0_19] : memref<8x8x512xf32, #tpu.memory_space<vmem>>, vector<1x8x128xf32>
    %21 = vector.shape_cast %20 : vector<1x8x128xf32> to vector<8x128xf32>
    %22 = arith.addf %18, %21 : vector<8x128xf32>
    %23 = arith.negf %22 : vector<8x128xf32>
    %24 = math.exp %23 : vector<8x128xf32>
    %cst_20 = arith.constant 1.000000e+00 : f32
    %25 = vector.broadcast %cst_20 : f32 to vector<8x128xf32>
    %26 = arith.addf %25, %24 : vector<8x128xf32>
    %27 = arith.divf %25, %26 : vector<8x128xf32>
    %28 = vector.extract_strided_slice %17 {offsets = [0, 128], sizes = [8, 128], strides = [1, 1]} : vector<8x512xf32> to vector<8x128xf32>
    %29 = arith.index_cast %c0_i32_14 : i32 to index
    %c0_21 = arith.constant 0 : index
    %c128 = arith.constant 128 : index
    %30 = vector.load %arg13[%29, %c0_21, %c128] : memref<8x8x512xf32, #tpu.memory_space<vmem>>, vector<1x8x128xf32>
    %31 = vector.shape_cast %30 : vector<1x8x128xf32> to vector<8x128xf32>
    %32 = arith.addf %28, %31 : vector<8x128xf32>
    %33 = arith.negf %32 : vector<8x128xf32>
    %34 = math.exp %33 : vector<8x128xf32>
    %cst_22 = arith.constant 1.000000e+00 : f32
    %35 = vector.broadcast %cst_22 : f32 to vector<8x128xf32>
    %36 = arith.addf %35, %34 : vector<8x128xf32>
    %37 = arith.divf %35, %36 : vector<8x128xf32>
    %38 = vector.extract_strided_slice %17 {offsets = [0, 256], sizes = [8, 128], strides = [1, 1]} : vector<8x512xf32> to vector<8x128xf32>
    %39 = arith.index_cast %c0_i32_14 : i32 to index
    %c0_23 = arith.constant 0 : index
    %c256 = arith.constant 256 : index
    %40 = vector.load %arg13[%39, %c0_23, %c256] : memref<8x8x512xf32, #tpu.memory_space<vmem>>, vector<1x8x128xf32>
    %41 = vector.shape_cast %40 : vector<1x8x128xf32> to vector<8x128xf32>
    %42 = arith.addf %38, %41 : vector<8x128xf32>
    %43 = math.tanh %42 : vector<8x128xf32>
    %44 = vector.extract_strided_slice %17 {offsets = [0, 384], sizes = [8, 128], strides = [1, 1]} : vector<8x512xf32> to vector<8x128xf32>
    %45 = arith.index_cast %c0_i32_14 : i32 to index
    %c0_24 = arith.constant 0 : index
    %c384 = arith.constant 384 : index
    %46 = vector.load %arg13[%45, %c0_24, %c384] : memref<8x8x512xf32, #tpu.memory_space<vmem>>, vector<1x8x128xf32>
    %47 = vector.shape_cast %46 : vector<1x8x128xf32> to vector<8x128xf32>
    %48 = arith.addf %44, %47 : vector<8x128xf32>
    %49 = arith.negf %48 : vector<8x128xf32>
    %50 = math.exp %49 : vector<8x128xf32>
    %cst_25 = arith.constant 1.000000e+00 : f32
    %51 = vector.broadcast %cst_25 : f32 to vector<8x128xf32>
    %52 = arith.addf %51, %50 : vector<8x128xf32>
    %53 = arith.divf %51, %52 : vector<8x128xf32>
    %54 = arith.mulf %37, %14 : vector<8x128xf32>
    %55 = arith.mulf %27, %43 : vector<8x128xf32>
    %56 = arith.addf %54, %55 : vector<8x128xf32>
    %57 = math.tanh %56 : vector<8x128xf32>
    %58 = arith.mulf %53, %57 : vector<8x128xf32>
    %59 = arith.truncf %58 : vector<8x128xf32> to vector<8x128xbf16>
    %60 = arith.index_cast %c0_i32_14 : i32 to index
    %c0_26 = arith.constant 0 : index
    %c0_27 = arith.constant 0 : index
    %61 = vector.load %arg8[%60, %c0_26, %c0_27] : memref<8x8x128xbf16, #tpu.memory_space<vmem>>, vector<1x8x128xbf16>
    %62 = vector.shape_cast %61 : vector<1x8x128xbf16> to vector<8x128xbf16>
    %63 = vector.shape_cast %59 : vector<8x128xbf16> to vector<1x8x128xbf16>
    tpu.vector_store %arg8[%60, %c0_26, %c0_27], %63 {strides = array<i32>} : memref<8x8x128xbf16, #tpu.memory_space<vmem>>, vector<1x8x128xbf16>,
    %c1_i32 = arith.constant 1 : i32
    %64 = arith.truncf %58 : vector<8x128xf32> to vector<8x128xbf16>
    %c0_28 = arith.constant 0 : index
    %c0_29 = arith.constant 0 : index
    %65 = vector.load %arg6[%c0_28, %c0_29] : memref<128x512xbf16, #tpu.memory_space<vmem>>, vector<128x512xbf16>
    %cst_30 = arith.constant dense<0.000000e+00> : vector<8x512xf32>
    %66 = tpu.matmul %64, %65, %cst_30 {dimension_numbers = #tpu.dot_dimension_numbers<[1], [0], [0], [1], [0, 0, 1, 1], [], []>} : vector<8x128xbf16>, vector<128x512xbf16>, vector<8x512xf32> -> vector<8x512xf32>
    %67 = vector.extract_strided_slice %66 {offsets = [0, 0], sizes = [8, 128], strides = [1, 1]} : vector<8x512xf32> to vector<8x128xf32>
    %68 = arith.index_cast %c1_i32 : i32 to index
    %c0_31 = arith.constant 0 : index
    %c0_32 = arith.constant 0 : index
    %69 = vector.load %arg13[%68, %c0_31, %c0_32] : memref<8x8x512xf32, #tpu.memory_space<vmem>>, vector<1x8x128xf32>
    %70 = vector.shape_cast %69 : vector<1x8x128xf32> to vector<8x128xf32>
    %71 = arith.addf %67, %70 : vector<8x128xf32>
    %72 = arith.negf %71 : vector<8x128xf32>
    %73 = math.exp %72 : vector<8x128xf32>
    %cst_33 = arith.constant 1.000000e+00 : f32
    %74 = vector.broadcast %cst_33 : f32 to vector<8x128xf32>
    %75 = arith.addf %74, %73 : vector<8x128xf32>
    %76 = arith.divf %74, %75 : vector<8x128xf32>
    %77 = vector.extract_strided_slice %66 {offsets = [0, 128], sizes = [8, 128], strides = [1, 1]} : vector<8x512xf32> to vector<8x128xf32>
    %78 = arith.index_cast %c1_i32 : i32 to index
    %c0_34 = arith.constant 0 : index
    %c128_35 = arith.constant 128 : index
    %79 = vector.load %arg13[%78, %c0_34, %c128_35] : memref<8x8x512xf32, #tpu.memory_space<vmem>>, vector<1x8x128xf32>
    %80 = vector.shape_cast %79 : vector<1x8x128xf32> to vector<8x128xf32>
    %81 = arith.addf %77, %80 : vector<8x128xf32>
    %82 = arith.negf %81 : vector<8x128xf32>
    %83 = math.exp %82 : vector<8x128xf32>
    %cst_36 = arith.constant 1.000000e+00 : f32
    %84 = vector.broadcast %cst_36 : f32 to vector<8x128xf32>
    %85 = arith.addf %84, %83 : vector<8x128xf32>
    %86 = arith.divf %84, %85 : vector<8x128xf32>
    %87 = vector.extract_strided_slice %66 {offsets = [0, 256], sizes = [8, 128], strides = [1, 1]} : vector<8x512xf32> to vector<8x128xf32>
    %88 = arith.index_cast %c1_i32 : i32 to index
    %c0_37 = arith.constant 0 : index
    %c256_38 = arith.constant 256 : index
    %89 = vector.load %arg13[%88, %c0_37, %c256_38] : memref<8x8x512xf32, #tpu.memory_space<vmem>>, vector<1x8x128xf32>
    %90 = vector.shape_cast %89 : vector<1x8x128xf32> to vector<8x128xf32>
    %91 = arith.addf %87, %90 : vector<8x128xf32>
    %92 = math.tanh %91 : vector<8x128xf32>
    %93 = vector.extract_strided_slice %66 {offsets = [0, 384], sizes = [8, 128], strides = [1, 1]} : vector<8x512xf32> to vector<8x128xf32>
    %94 = arith.index_cast %c1_i32 : i32 to index
    %c0_39 = arith.constant 0 : index
    %c384_40 = arith.constant 384 : index
    %95 = vector.load %arg13[%94, %c0_39, %c384_40] : memref<8x8x512xf32, #tpu.memory_space<vmem>>, vector<1x8x128xf32>
    %96 = vector.shape_cast %95 : vector<1x8x128xf32> to vector<8x128xf32>
    %97 = arith.addf %93, %96 : vector<8x128xf32>
    %98 = arith.negf %97 : vector<8x128xf32>
    %99 = math.exp %98 : vector<8x128xf32>
    %cst_41 = arith.constant 1.000000e+00 : f32
    %100 = vector.broadcast %cst_41 : f32 to vector<8x128xf32>
    %101 = arith.addf %100, %99 : vector<8x128xf32>
    %102 = arith.divf %100, %101 : vector<8x128xf32>
    %103 = arith.mulf %86, %56 : vector<8x128xf32>
    %104 = arith.mulf %76, %92 : vector<8x128xf32>
    %105 = arith.addf %103, %104 : vector<8x128xf32>
    %106 = math.tanh %105 : vector<8x128xf32>
    %107 = arith.mulf %102, %106 : vector<8x128xf32>
    %108 = arith.truncf %107 : vector<8x128xf32> to vector<8x128xbf16>
    %109 = arith.index_cast %c1_i32 : i32 to index
    %c0_42 = arith.constant 0 : index
    %c0_43 = arith.constant 0 : index
    %110 = vector.load %arg8[%109, %c0_42, %c0_43] : memref<8x8x128xbf16, #tpu.memory_space<vmem>>, vector<1x8x128xbf16>
    %111 = vector.shape_cast %110 : vector<1x8x128xbf16> to vector<8x128xbf16>
    %112 = vector.shape_cast %108 : vector<8x128xbf16> to vector<1x8x128xbf16>
    tpu.vector_store %arg8[%109, %c0_42, %c0_43], %112 {strides = array<i32>} : memref<8x8x128xbf16, #tpu.memory_space<vmem>>, vector<1x8x128xbf16>,
    %c2_i32 = arith.constant 2 : i32
    %113 = arith.truncf %107 : vector<8x128xf32> to vector<8x128xbf16>
    %c0_44 = arith.constant 0 : index
    %c0_45 = arith.constant 0 : index
    %114 = vector.load %arg6[%c0_44, %c0_45] : memref<128x512xbf16, #tpu.memory_space<vmem>>, vector<128x512xbf16>
    %cst_46 = arith.constant dense<0.000000e+00> : vector<8x512xf32>
    %115 = tpu.matmul %113, %114, %cst_46 {dimension_numbers = #tpu.dot_dimension_numbers<[1], [0], [0], [1], [0, 0, 1, 1], [], []>} : vector<8x128xbf16>, vector<128x512xbf16>, vector<8x512xf32> -> vector<8x512xf32>
    %116 = vector.extract_strided_slice %115 {offsets = [0, 0], sizes = [8, 128], strides = [1, 1]} : vector<8x512xf32> to vector<8x128xf32>
    %117 = arith.index_cast %c2_i32 : i32 to index
    %c0_47 = arith.constant 0 : index
    %c0_48 = arith.constant 0 : index
    %118 = vector.load %arg13[%117, %c0_47, %c0_48] : memref<8x8x512xf32, #tpu.memory_space<vmem>>, vector<1x8x128xf32>
    %119 = vector.shape_cast %118 : vector<1x8x128xf32> to vector<8x128xf32>
    %120 = arith.addf %116, %119 : vector<8x128xf32>
    %121 = arith.negf %120 : vector<8x128xf32>
    %122 = math.exp %121 : vector<8x128xf32>
    %cst_49 = arith.constant 1.000000e+00 : f32
    %123 = vector.broadcast %cst_49 : f32 to vector<8x128xf32>
    %124 = arith.addf %123, %122 : vector<8x128xf32>
    %125 = arith.divf %123, %124 : vector<8x128xf32>
    %126 = vector.extract_strided_slice %115 {offsets = [0, 128], sizes = [8, 128], strides = [1, 1]} : vector<8x512xf32> to vector<8x128xf32>
    %127 = arith.index_cast %c2_i32 : i32 to index
    %c0_50 = arith.constant 0 : index
    %c128_51 = arith.constant 128 : index
    %128 = vector.load %arg13[%127, %c0_50, %c128_51] : memref<8x8x512xf32, #tpu.memory_space<vmem>>, vector<1x8x128xf32>
    %129 = vector.shape_cast %128 : vector<1x8x128xf32> to vector<8x128xf32>
    %130 = arith.addf %126, %129 : vector<8x128xf32>
    %131 = arith.negf %130 : vector<8x128xf32>
    %132 = math.exp %131 : vector<8x128xf32>
    %cst_52 = arith.constant 1.000000e+00 : f32
    %133 = vector.broadcast %cst_52 : f32 to vector<8x128xf32>
    %134 = arith.addf %133, %132 : vector<8x128xf32>
    %135 = arith.divf %133, %134 : vector<8x128xf32>
    %136 = vector.extract_strided_slice %115 {offsets = [0, 256], sizes = [8, 128], strides = [1, 1]} : vector<8x512xf32> to vector<8x128xf32>
    %137 = arith.index_cast %c2_i32 : i32 to index
    %c0_53 = arith.constant 0 : index
    %c256_54 = arith.constant 256 : index
    %138 = vector.load %arg13[%137, %c0_53, %c256_54] : memref<8x8x512xf32, #tpu.memory_space<vmem>>, vector<1x8x128xf32>
    %139 = vector.shape_cast %138 : vector<1x8x128xf32> to vector<8x128xf32>
    %140 = arith.addf %136, %139 : vector<8x128xf32>
    %141 = math.tanh %140 : vector<8x128xf32>
    %142 = vector.extract_strided_slice %115 {offsets = [0, 384], sizes = [8, 128], strides = [1, 1]} : vector<8x512xf32> to vector<8x128xf32>
    %143 = arith.index_cast %c2_i32 : i32 to index
    %c0_55 = arith.constant 0 : index
    %c384_56 = arith.constant 384 : index
    %144 = vector.load %arg13[%143, %c0_55, %c384_56] : memref<8x8x512xf32, #tpu.memory_space<vmem>>, vector<1x8x128xf32>
    %145 = vector.shape_cast %144 : vector<1x8x128xf32> to vector<8x128xf32>
    %146 = arith.addf %142, %145 : vector<8x128xf32>
    %147 = arith.negf %146 : vector<8x128xf32>
    %148 = math.exp %147 : vector<8x128xf32>
    %cst_57 = arith.constant 1.000000e+00 : f32
    %149 = vector.broadcast %cst_57 : f32 to vector<8x128xf32>
    %150 = arith.addf %149, %148 : vector<8x128xf32>
    %151 = arith.divf %149, %150 : vector<8x128xf32>
    %152 = arith.mulf %135, %105 : vector<8x128xf32>
    %153 = arith.mulf %125, %141 : vector<8x128xf32>
    %154 = arith.addf %152, %153 : vector<8x128xf32>
    %155 = math.tanh %154 : vector<8x128xf32>
    %156 = arith.mulf %151, %155 : vector<8x128xf32>
    %157 = arith.truncf %156 : vector<8x128xf32> to vector<8x128xbf16>
    %158 = arith.index_cast %c2_i32 : i32 to index
    %c0_58 = arith.constant 0 : index
    %c0_59 = arith.constant 0 : index
    %159 = vector.load %arg8[%158, %c0_58, %c0_59] : memref<8x8x128xbf16, #tpu.memory_space<vmem>>, vector<1x8x128xbf16>
    %160 = vector.shape_cast %159 : vector<1x8x128xbf16> to vector<8x128xbf16>
    %161 = vector.shape_cast %157 : vector<8x128xbf16> to vector<1x8x128xbf16>
    tpu.vector_store %arg8[%158, %c0_58, %c0_59], %161 {strides = array<i32>} : memref<8x8x128xbf16, #tpu.memory_space<vmem>>, vector<1x8x128xbf16>,
    %c3_i32 = arith.constant 3 : i32
    %162 = arith.truncf %156 : vector<8x128xf32> to vector<8x128xbf16>
    %c0_60 = arith.constant 0 : index
    %c0_61 = arith.constant 0 : index
    %163 = vector.load %arg6[%c0_60, %c0_61] : memref<128x512xbf16, #tpu.memory_space<vmem>>, vector<128x512xbf16>
    %cst_62 = arith.constant dense<0.000000e+00> : vector<8x512xf32>
    %164 = tpu.matmul %162, %163, %cst_62 {dimension_numbers = #tpu.dot_dimension_numbers<[1], [0], [0], [1], [0, 0, 1, 1], [], []>} : vector<8x128xbf16>, vector<128x512xbf16>, vector<8x512xf32> -> vector<8x512xf32>
    %165 = vector.extract_strided_slice %164 {offsets = [0, 0], sizes = [8, 128], strides = [1, 1]} : vector<8x512xf32> to vector<8x128xf32>
    %166 = arith.index_cast %c3_i32 : i32 to index
    %c0_63 = arith.constant 0 : index
    %c0_64 = arith.constant 0 : index
    %167 = vector.load %arg13[%166, %c0_63, %c0_64] : memref<8x8x512xf32, #tpu.memory_space<vmem>>, vector<1x8x128xf32>
    %168 = vector.shape_cast %167 : vector<1x8x128xf32> to vector<8x128xf32>
    %169 = arith.addf %165, %168 : vector<8x128xf32>
    %170 = arith.negf %169 : vector<8x128xf32>
    %171 = math.exp %170 : vector<8x128xf32>
    %cst_65 = arith.constant 1.000000e+00 : f32
    %172 = vector.broadcast %cst_65 : f32 to vector<8x128xf32>
    %173 = arith.addf %172, %171 : vector<8x128xf32>
    %174 = arith.divf %172, %173 : vector<8x128xf32>
    %175 = vector.extract_strided_slice %164 {offsets = [0, 128], sizes = [8, 128], strides = [1, 1]} : vector<8x512xf32> to vector<8x128xf32>
    %176 = arith.index_cast %c3_i32 : i32 to index
    %c0_66 = arith.constant 0 : index
    %c128_67 = arith.constant 128 : index
    %177 = vector.load %arg13[%176, %c0_66, %c128_67] : memref<8x8x512xf32, #tpu.memory_space<vmem>>, vector<1x8x128xf32>
    %178 = vector.shape_cast %177 : vector<1x8x128xf32> to vector<8x128xf32>
    %179 = arith.addf %175, %178 : vector<8x128xf32>
    %180 = arith.negf %179 : vector<8x128xf32>
    %181 = math.exp %180 : vector<8x128xf32>
    %cst_68 = arith.constant 1.000000e+00 : f32
    %182 = vector.broadcast %cst_68 : f32 to vector<8x128xf32>
    %183 = arith.addf %182, %181 : vector<8x128xf32>
    %184 = arith.divf %182, %183 : vector<8x128xf32>
    %185 = vector.extract_strided_slice %164 {offsets = [0, 256], sizes = [8, 128], strides = [1, 1]} : vector<8x512xf32> to vector<8x128xf32>
    %186 = arith.index_cast %c3_i32 : i32 to index
    %c0_69 = arith.constant 0 : index
    %c256_70 = arith.constant 256 : index
    %187 = vector.load %arg13[%186, %c0_69, %c256_70] : memref<8x8x512xf32, #tpu.memory_space<vmem>>, vector<1x8x128xf32>
    %188 = vector.shape_cast %187 : vector<1x8x128xf32> to vector<8x128xf32>
    %189 = arith.addf %185, %188 : vector<8x128xf32>
    %190 = math.tanh %189 : vector<8x128xf32>
    %191 = vector.extract_strided_slice %164 {offsets = [0, 384], sizes = [8, 128], strides = [1, 1]} : vector<8x512xf32> to vector<8x128xf32>
    %192 = arith.index_cast %c3_i32 : i32 to index
    %c0_71 = arith.constant 0 : index
    %c384_72 = arith.constant 384 : index
    %193 = vector.load %arg13[%192, %c0_71, %c384_72] : memref<8x8x512xf32, #tpu.memory_space<vmem>>, vector<1x8x128xf32>
    %194 = vector.shape_cast %193 : vector<1x8x128xf32> to vector<8x128xf32>
    %195 = arith.addf %191, %194 : vector<8x128xf32>
    %196 = arith.negf %195 : vector<8x128xf32>
    %197 = math.exp %196 : vector<8x128xf32>
    %cst_73 = arith.constant 1.000000e+00 : f32
    %198 = vector.broadcast %cst_73 : f32 to vector<8x128xf32>
    %199 = arith.addf %198, %197 : vector<8x128xf32>
    %200 = arith.divf %198, %199 : vector<8x128xf32>
    %201 = arith.mulf %184, %154 : vector<8x128xf32>
    %202 = arith.mulf %174, %190 : vector<8x128xf32>
    %203 = arith.addf %201, %202 : vector<8x128xf32>
    %204 = math.tanh %203 : vector<8x128xf32>
    %205 = arith.mulf %200, %204 : vector<8x128xf32>
    %206 = arith.truncf %205 : vector<8x128xf32> to vector<8x128xbf16>
    %207 = arith.index_cast %c3_i32 : i32 to index
    %c0_74 = arith.constant 0 : index
    %c0_75 = arith.constant 0 : index
    %208 = vector.load %arg8[%207, %c0_74, %c0_75] : memref<8x8x128xbf16, #tpu.memory_space<vmem>>, vector<1x8x128xbf16>
    %209 = vector.shape_cast %208 : vector<1x8x128xbf16> to vector<8x128xbf16>
    %210 = vector.shape_cast %206 : vector<8x128xbf16> to vector<1x8x128xbf16>
    tpu.vector_store %arg8[%207, %c0_74, %c0_75], %210 {strides = array<i32>} : memref<8x8x128xbf16, #tpu.memory_space<vmem>>, vector<1x8x128xbf16>,
    %c4_i32 = arith.constant 4 : i32
    %211 = arith.truncf %205 : vector<8x128xf32> to vector<8x128xbf16>
    %c0_76 = arith.constant 0 : index
    %c0_77 = arith.constant 0 : index
    %212 = vector.load %arg6[%c0_76, %c0_77] : memref<128x512xbf16, #tpu.memory_space<vmem>>, vector<128x512xbf16>
    %cst_78 = arith.constant dense<0.000000e+00> : vector<8x512xf32>
    %213 = tpu.matmul %211, %212, %cst_78 {dimension_numbers = #tpu.dot_dimension_numbers<[1], [0], [0], [1], [0, 0, 1, 1], [], []>} : vector<8x128xbf16>, vector<128x512xbf16>, vector<8x512xf32> -> vector<8x512xf32>
    %214 = vector.extract_strided_slice %213 {offsets = [0, 0], sizes = [8, 128], strides = [1, 1]} : vector<8x512xf32> to vector<8x128xf32>
    %215 = arith.index_cast %c4_i32 : i32 to index
    %c0_79 = arith.constant 0 : index
    %c0_80 = arith.constant 0 : index
    %216 = vector.load %arg13[%215, %c0_79, %c0_80] : memref<8x8x512xf32, #tpu.memory_space<vmem>>, vector<1x8x128xf32>
    %217 = vector.shape_cast %216 : vector<1x8x128xf32> to vector<8x128xf32>
    %218 = arith.addf %214, %217 : vector<8x128xf32>
    %219 = arith.negf %218 : vector<8x128xf32>
    %220 = math.exp %219 : vector<8x128xf32>
    %cst_81 = arith.constant 1.000000e+00 : f32
    %221 = vector.broadcast %cst_81 : f32 to vector<8x128xf32>
    %222 = arith.addf %221, %220 : vector<8x128xf32>
    %223 = arith.divf %221, %222 : vector<8x128xf32>
    %224 = vector.extract_strided_slice %213 {offsets = [0, 128], sizes = [8, 128], strides = [1, 1]} : vector<8x512xf32> to vector<8x128xf32>
    %225 = arith.index_cast %c4_i32 : i32 to index
    %c0_82 = arith.constant 0 : index
    %c128_83 = arith.constant 128 : index
    %226 = vector.load %arg13[%225, %c0_82, %c128_83] : memref<8x8x512xf32, #tpu.memory_space<vmem>>, vector<1x8x128xf32>
    %227 = vector.shape_cast %226 : vector<1x8x128xf32> to vector<8x128xf32>
    %228 = arith.addf %224, %227 : vector<8x128xf32>
    %229 = arith.negf %228 : vector<8x128xf32>
    %230 = math.exp %229 : vector<8x128xf32>
    %cst_84 = arith.constant 1.000000e+00 : f32
    %231 = vector.broadcast %cst_84 : f32 to vector<8x128xf32>
    %232 = arith.addf %231, %230 : vector<8x128xf32>
    %233 = arith.divf %231, %232 : vector<8x128xf32>
    %234 = vector.extract_strided_slice %213 {offsets = [0, 256], sizes = [8, 128], strides = [1, 1]} : vector<8x512xf32> to vector<8x128xf32>
    %235 = arith.index_cast %c4_i32 : i32 to index
    %c0_85 = arith.constant 0 : index
    %c256_86 = arith.constant 256 : index
    %236 = vector.load %arg13[%235, %c0_85, %c256_86] : memref<8x8x512xf32, #tpu.memory_space<vmem>>, vector<1x8x128xf32>
    %237 = vector.shape_cast %236 : vector<1x8x128xf32> to vector<8x128xf32>
    %238 = arith.addf %234, %237 : vector<8x128xf32>
    %239 = math.tanh %238 : vector<8x128xf32>
    %240 = vector.extract_strided_slice %213 {offsets = [0, 384], sizes = [8, 128], strides = [1, 1]} : vector<8x512xf32> to vector<8x128xf32>
    %241 = arith.index_cast %c4_i32 : i32 to index
    %c0_87 = arith.constant 0 : index
    %c384_88 = arith.constant 384 : index
    %242 = vector.load %arg13[%241, %c0_87, %c384_88] : memref<8x8x512xf32, #tpu.memory_space<vmem>>, vector<1x8x128xf32>
    %243 = vector.shape_cast %242 : vector<1x8x128xf32> to vector<8x128xf32>
    %244 = arith.addf %240, %243 : vector<8x128xf32>
    %245 = arith.negf %244 : vector<8x128xf32>
    %246 = math.exp %245 : vector<8x128xf32>
    %cst_89 = arith.constant 1.000000e+00 : f32
    %247 = vector.broadcast %cst_89 : f32 to vector<8x128xf32>
    %248 = arith.addf %247, %246 : vector<8x128xf32>
    %249 = arith.divf %247, %248 : vector<8x128xf32>
    %250 = arith.mulf %233, %203 : vector<8x128xf32>
    %251 = arith.mulf %223, %239 : vector<8x128xf32>
    %252 = arith.addf %250, %251 : vector<8x128xf32>
    %253 = math.tanh %252 : vector<8x128xf32>
    %254 = arith.mulf %249, %253 : vector<8x128xf32>
    %255 = arith.truncf %254 : vector<8x128xf32> to vector<8x128xbf16>
    %256 = arith.index_cast %c4_i32 : i32 to index
    %c0_90 = arith.constant 0 : index
    %c0_91 = arith.constant 0 : index
    %257 = vector.load %arg8[%256, %c0_90, %c0_91] : memref<8x8x128xbf16, #tpu.memory_space<vmem>>, vector<1x8x128xbf16>
    %258 = vector.shape_cast %257 : vector<1x8x128xbf16> to vector<8x128xbf16>
    %259 = vector.shape_cast %255 : vector<8x128xbf16> to vector<1x8x128xbf16>
    tpu.vector_store %arg8[%256, %c0_90, %c0_91], %259 {strides = array<i32>} : memref<8x8x128xbf16, #tpu.memory_space<vmem>>, vector<1x8x128xbf16>,
    %c5_i32 = arith.constant 5 : i32
    %260 = arith.truncf %254 : vector<8x128xf32> to vector<8x128xbf16>
    %c0_92 = arith.constant 0 : index
    %c0_93 = arith.constant 0 : index
    %261 = vector.load %arg6[%c0_92, %c0_93] : memref<128x512xbf16, #tpu.memory_space<vmem>>, vector<128x512xbf16>
    %cst_94 = arith.constant dense<0.000000e+00> : vector<8x512xf32>
    %262 = tpu.matmul %260, %261, %cst_94 {dimension_numbers = #tpu.dot_dimension_numbers<[1], [0], [0], [1], [0, 0, 1, 1], [], []>} : vector<8x128xbf16>, vector<128x512xbf16>, vector<8x512xf32> -> vector<8x512xf32>
    %263 = vector.extract_strided_slice %262 {offsets = [0, 0], sizes = [8, 128], strides = [1, 1]} : vector<8x512xf32> to vector<8x128xf32>
    %264 = arith.index_cast %c5_i32 : i32 to index
    %c0_95 = arith.constant 0 : index
    %c0_96 = arith.constant 0 : index
    %265 = vector.load %arg13[%264, %c0_95, %c0_96] : memref<8x8x512xf32, #tpu.memory_space<vmem>>, vector<1x8x128xf32>
    %266 = vector.shape_cast %265 : vector<1x8x128xf32> to vector<8x128xf32>
    %267 = arith.addf %263, %266 : vector<8x128xf32>
    %268 = arith.negf %267 : vector<8x128xf32>
    %269 = math.exp %268 : vector<8x128xf32>
    %cst_97 = arith.constant 1.000000e+00 : f32
    %270 = vector.broadcast %cst_97 : f32 to vector<8x128xf32>
    %271 = arith.addf %270, %269 : vector<8x128xf32>
    %272 = arith.divf %270, %271 : vector<8x128xf32>
    %273 = vector.extract_strided_slice %262 {offsets = [0, 128], sizes = [8, 128], strides = [1, 1]} : vector<8x512xf32> to vector<8x128xf32>
    %274 = arith.index_cast %c5_i32 : i32 to index
    %c0_98 = arith.constant 0 : index
    %c128_99 = arith.constant 128 : index
    %275 = vector.load %arg13[%274, %c0_98, %c128_99] : memref<8x8x512xf32, #tpu.memory_space<vmem>>, vector<1x8x128xf32>
    %276 = vector.shape_cast %275 : vector<1x8x128xf32> to vector<8x128xf32>
    %277 = arith.addf %273, %276 : vector<8x128xf32>
    %278 = arith.negf %277 : vector<8x128xf32>
    %279 = math.exp %278 : vector<8x128xf32>
    %cst_100 = arith.constant 1.000000e+00 : f32
    %280 = vector.broadcast %cst_100 : f32 to vector<8x128xf32>
    %281 = arith.addf %280, %279 : vector<8x128xf32>
    %282 = arith.divf %280, %281 : vector<8x128xf32>
    %283 = vector.extract_strided_slice %262 {offsets = [0, 256], sizes = [8, 128], strides = [1, 1]} : vector<8x512xf32> to vector<8x128xf32>
    %284 = arith.index_cast %c5_i32 : i32 to index
    %c0_101 = arith.constant 0 : index
    %c256_102 = arith.constant 256 : index
    %285 = vector.load %arg13[%284, %c0_101, %c256_102] : memref<8x8x512xf32, #tpu.memory_space<vmem>>, vector<1x8x128xf32>
    %286 = vector.shape_cast %285 : vector<1x8x128xf32> to vector<8x128xf32>
    %287 = arith.addf %283, %286 : vector<8x128xf32>
    %288 = math.tanh %287 : vector<8x128xf32>
    %289 = vector.extract_strided_slice %262 {offsets = [0, 384], sizes = [8, 128], strides = [1, 1]} : vector<8x512xf32> to vector<8x128xf32>
    %290 = arith.index_cast %c5_i32 : i32 to index
    %c0_103 = arith.constant 0 : index
    %c384_104 = arith.constant 384 : index
    %291 = vector.load %arg13[%290, %c0_103, %c384_104] : memref<8x8x512xf32, #tpu.memory_space<vmem>>, vector<1x8x128xf32>
    %292 = vector.shape_cast %291 : vector<1x8x128xf32> to vector<8x128xf32>
    %293 = arith.addf %289, %292 : vector<8x128xf32>
    %294 = arith.negf %293 : vector<8x128xf32>
    %295 = math.exp %294 : vector<8x128xf32>
    %cst_105 = arith.constant 1.000000e+00 : f32
    %296 = vector.broadcast %cst_105 : f32 to vector<8x128xf32>
    %297 = arith.addf %296, %295 : vector<8x128xf32>
    %298 = arith.divf %296, %297 : vector<8x128xf32>
    %299 = arith.mulf %282, %252 : vector<8x128xf32>
    %300 = arith.mulf %272, %288 : vector<8x128xf32>
    %301 = arith.addf %299, %300 : vector<8x128xf32>
    %302 = math.tanh %301 : vector<8x128xf32>
    %303 = arith.mulf %298, %302 : vector<8x128xf32>
    %304 = arith.truncf %303 : vector<8x128xf32> to vector<8x128xbf16>
    %305 = arith.index_cast %c5_i32 : i32 to index
    %c0_106 = arith.constant 0 : index
    %c0_107 = arith.constant 0 : index
    %306 = vector.load %arg8[%305, %c0_106, %c0_107] : memref<8x8x128xbf16, #tpu.memory_space<vmem>>, vector<1x8x128xbf16>
    %307 = vector.shape_cast %306 : vector<1x8x128xbf16> to vector<8x128xbf16>
    %308 = vector.shape_cast %304 : vector<8x128xbf16> to vector<1x8x128xbf16>
    tpu.vector_store %arg8[%305, %c0_106, %c0_107], %308 {strides = array<i32>} : memref<8x8x128xbf16, #tpu.memory_space<vmem>>, vector<1x8x128xbf16>,
    %c6_i32 = arith.constant 6 : i32
    %309 = arith.truncf %303 : vector<8x128xf32> to vector<8x128xbf16>
    %c0_108 = arith.constant 0 : index
    %c0_109 = arith.constant 0 : index
    %310 = vector.load %arg6[%c0_108, %c0_109] : memref<128x512xbf16, #tpu.memory_space<vmem>>, vector<128x512xbf16>
    %cst_110 = arith.constant dense<0.000000e+00> : vector<8x512xf32>
    %311 = tpu.matmul %309, %310, %cst_110 {dimension_numbers = #tpu.dot_dimension_numbers<[1], [0], [0], [1], [0, 0, 1, 1], [], []>} : vector<8x128xbf16>, vector<128x512xbf16>, vector<8x512xf32> -> vector<8x512xf32>
    %312 = vector.extract_strided_slice %311 {offsets = [0, 0], sizes = [8, 128], strides = [1, 1]} : vector<8x512xf32> to vector<8x128xf32>
    %313 = arith.index_cast %c6_i32 : i32 to index
    %c0_111 = arith.constant 0 : index
    %c0_112 = arith.constant 0 : index
    %314 = vector.load %arg13[%313, %c0_111, %c0_112] : memref<8x8x512xf32, #tpu.memory_space<vmem>>, vector<1x8x128xf32>
    %315 = vector.shape_cast %314 : vector<1x8x128xf32> to vector<8x128xf32>
    %316 = arith.addf %312, %315 : vector<8x128xf32>
    %317 = arith.negf %316 : vector<8x128xf32>
    %318 = math.exp %317 : vector<8x128xf32>
    %cst_113 = arith.constant 1.000000e+00 : f32
    %319 = vector.broadcast %cst_113 : f32 to vector<8x128xf32>
    %320 = arith.addf %319, %318 : vector<8x128xf32>
    %321 = arith.divf %319, %320 : vector<8x128xf32>
    %322 = vector.extract_strided_slice %311 {offsets = [0, 128], sizes = [8, 128], strides = [1, 1]} : vector<8x512xf32> to vector<8x128xf32>
    %323 = arith.index_cast %c6_i32 : i32 to index
    %c0_114 = arith.constant 0 : index
    %c128_115 = arith.constant 128 : index
    %324 = vector.load %arg13[%323, %c0_114, %c128_115] : memref<8x8x512xf32, #tpu.memory_space<vmem>>, vector<1x8x128xf32>
    %325 = vector.shape_cast %324 : vector<1x8x128xf32> to vector<8x128xf32>
    %326 = arith.addf %322, %325 : vector<8x128xf32>
    %327 = arith.negf %326 : vector<8x128xf32>
    %328 = math.exp %327 : vector<8x128xf32>
    %cst_116 = arith.constant 1.000000e+00 : f32
    %329 = vector.broadcast %cst_116 : f32 to vector<8x128xf32>
    %330 = arith.addf %329, %328 : vector<8x128xf32>
    %331 = arith.divf %329, %330 : vector<8x128xf32>
    %332 = vector.extract_strided_slice %311 {offsets = [0, 256], sizes = [8, 128], strides = [1, 1]} : vector<8x512xf32> to vector<8x128xf32>
    %333 = arith.index_cast %c6_i32 : i32 to index
    %c0_117 = arith.constant 0 : index
    %c256_118 = arith.constant 256 : index
    %334 = vector.load %arg13[%333, %c0_117, %c256_118] : memref<8x8x512xf32, #tpu.memory_space<vmem>>, vector<1x8x128xf32>
    %335 = vector.shape_cast %334 : vector<1x8x128xf32> to vector<8x128xf32>
    %336 = arith.addf %332, %335 : vector<8x128xf32>
    %337 = math.tanh %336 : vector<8x128xf32>
    %338 = vector.extract_strided_slice %311 {offsets = [0, 384], sizes = [8, 128], strides = [1, 1]} : vector<8x512xf32> to vector<8x128xf32>
    %339 = arith.index_cast %c6_i32 : i32 to index
    %c0_119 = arith.constant 0 : index
    %c384_120 = arith.constant 384 : index
    %340 = vector.load %arg13[%339, %c0_119, %c384_120] : memref<8x8x512xf32, #tpu.memory_space<vmem>>, vector<1x8x128xf32>
    %341 = vector.shape_cast %340 : vector<1x8x128xf32> to vector<8x128xf32>
    %342 = arith.addf %338, %341 : vector<8x128xf32>
    %343 = arith.negf %342 : vector<8x128xf32>
    %344 = math.exp %343 : vector<8x128xf32>
    %cst_121 = arith.constant 1.000000e+00 : f32
    %345 = vector.broadcast %cst_121 : f32 to vector<8x128xf32>
    %346 = arith.addf %345, %344 : vector<8x128xf32>
    %347 = arith.divf %345, %346 : vector<8x128xf32>
    %348 = arith.mulf %331, %301 : vector<8x128xf32>
    %349 = arith.mulf %321, %337 : vector<8x128xf32>
    %350 = arith.addf %348, %349 : vector<8x128xf32>
    %351 = math.tanh %350 : vector<8x128xf32>
    %352 = arith.mulf %347, %351 : vector<8x128xf32>
    %353 = arith.truncf %352 : vector<8x128xf32> to vector<8x128xbf16>
    %354 = arith.index_cast %c6_i32 : i32 to index
    %c0_122 = arith.constant 0 : index
    %c0_123 = arith.constant 0 : index
    %355 = vector.load %arg8[%354, %c0_122, %c0_123] : memref<8x8x128xbf16, #tpu.memory_space<vmem>>, vector<1x8x128xbf16>
    %356 = vector.shape_cast %355 : vector<1x8x128xbf16> to vector<8x128xbf16>
    %357 = vector.shape_cast %353 : vector<8x128xbf16> to vector<1x8x128xbf16>
    tpu.vector_store %arg8[%354, %c0_122, %c0_123], %357 {strides = array<i32>} : memref<8x8x128xbf16, #tpu.memory_space<vmem>>, vector<1x8x128xbf16>,
    %c7_i32 = arith.constant 7 : i32
    %358 = arith.truncf %352 : vector<8x128xf32> to vector<8x128xbf16>
    %c0_124 = arith.constant 0 : index
    %c0_125 = arith.constant 0 : index
    %359 = vector.load %arg6[%c0_124, %c0_125] : memref<128x512xbf16, #tpu.memory_space<vmem>>, vector<128x512xbf16>
    %cst_126 = arith.constant dense<0.000000e+00> : vector<8x512xf32>
    %360 = tpu.matmul %358, %359, %cst_126 {dimension_numbers = #tpu.dot_dimension_numbers<[1], [0], [0], [1], [0, 0, 1, 1], [], []>} : vector<8x128xbf16>, vector<128x512xbf16>, vector<8x512xf32> -> vector<8x512xf32>
    %361 = vector.extract_strided_slice %360 {offsets = [0, 0], sizes = [8, 128], strides = [1, 1]} : vector<8x512xf32> to vector<8x128xf32>
    %362 = arith.index_cast %c7_i32 : i32 to index
    %c0_127 = arith.constant 0 : index
    %c0_128 = arith.constant 0 : index
    %363 = vector.load %arg13[%362, %c0_127, %c0_128] : memref<8x8x512xf32, #tpu.memory_space<vmem>>, vector<1x8x128xf32>
    %364 = vector.shape_cast %363 : vector<1x8x128xf32> to vector<8x128xf32>
    %365 = arith.addf %361, %364 : vector<8x128xf32>
    %366 = arith.negf %365 : vector<8x128xf32>
    %367 = math.exp %366 : vector<8x128xf32>
    %cst_129 = arith.constant 1.000000e+00 : f32
    %368 = vector.broadcast %cst_129 : f32 to vector<8x128xf32>
    %369 = arith.addf %368, %367 : vector<8x128xf32>
    %370 = arith.divf %368, %369 : vector<8x128xf32>
    %371 = vector.extract_strided_slice %360 {offsets = [0, 128], sizes = [8, 128], strides = [1, 1]} : vector<8x512xf32> to vector<8x128xf32>
    %372 = arith.index_cast %c7_i32 : i32 to index
    %c0_130 = arith.constant 0 : index
    %c128_131 = arith.constant 128 : index
    %373 = vector.load %arg13[%372, %c0_130, %c128_131] : memref<8x8x512xf32, #tpu.memory_space<vmem>>, vector<1x8x128xf32>
    %374 = vector.shape_cast %373 : vector<1x8x128xf32> to vector<8x128xf32>
    %375 = arith.addf %371, %374 : vector<8x128xf32>
    %376 = arith.negf %375 : vector<8x128xf32>
    %377 = math.exp %376 : vector<8x128xf32>
    %cst_132 = arith.constant 1.000000e+00 : f32
    %378 = vector.broadcast %cst_132 : f32 to vector<8x128xf32>
    %379 = arith.addf %378, %377 : vector<8x128xf32>
    %380 = arith.divf %378, %379 : vector<8x128xf32>
    %381 = vector.extract_strided_slice %360 {offsets = [0, 256], sizes = [8, 128], strides = [1, 1]} : vector<8x512xf32> to vector<8x128xf32>
    %382 = arith.index_cast %c7_i32 : i32 to index
    %c0_133 = arith.constant 0 : index
    %c256_134 = arith.constant 256 : index
    %383 = vector.load %arg13[%382, %c0_133, %c256_134] : memref<8x8x512xf32, #tpu.memory_space<vmem>>, vector<1x8x128xf32>
    %384 = vector.shape_cast %383 : vector<1x8x128xf32> to vector<8x128xf32>
    %385 = arith.addf %381, %384 : vector<8x128xf32>
    %386 = math.tanh %385 : vector<8x128xf32>
    %387 = vector.extract_strided_slice %360 {offsets = [0, 384], sizes = [8, 128], strides = [1, 1]} : vector<8x512xf32> to vector<8x128xf32>
    %388 = arith.index_cast %c7_i32 : i32 to index
    %c0_135 = arith.constant 0 : index
    %c384_136 = arith.constant 384 : index
    %389 = vector.load %arg13[%388, %c0_135, %c384_136] : memref<8x8x512xf32, #tpu.memory_space<vmem>>, vector<1x8x128xf32>
    %390 = vector.shape_cast %389 : vector<1x8x128xf32> to vector<8x128xf32>
    %391 = arith.addf %387, %390 : vector<8x128xf32>
    %392 = arith.negf %391 : vector<8x128xf32>
    %393 = math.exp %392 : vector<8x128xf32>
    %cst_137 = arith.constant 1.000000e+00 : f32
    %394 = vector.broadcast %cst_137 : f32 to vector<8x128xf32>
    %395 = arith.addf %394, %393 : vector<8x128xf32>
    %396 = arith.divf %394, %395 : vector<8x128xf32>
    %397 = arith.mulf %380, %350 : vector<8x128xf32>
    %398 = arith.mulf %370, %386 : vector<8x128xf32>
    %399 = arith.addf %397, %398 : vector<8x128xf32>
    %400 = math.tanh %399 : vector<8x128xf32>
    %401 = arith.mulf %396, %400 : vector<8x128xf32>
    %402 = arith.truncf %401 : vector<8x128xf32> to vector<8x128xbf16>
    %403 = arith.index_cast %c7_i32 : i32 to index
    %c0_138 = arith.constant 0 : index
    %c0_139 = arith.constant 0 : index
    %404 = vector.load %arg8[%403, %c0_138, %c0_139] : memref<8x8x128xbf16, #tpu.memory_space<vmem>>, vector<1x8x128xbf16>
    %405 = vector.shape_cast %404 : vector<1x8x128xbf16> to vector<8x128xbf16>
    %406 = vector.shape_cast %402 : vector<8x128xbf16> to vector<1x8x128xbf16>
    tpu.vector_store %arg8[%403, %c0_138, %c0_139], %406 {strides = array<i32>} : memref<8x8x128xbf16, #tpu.memory_space<vmem>>, vector<1x8x128xbf16>,
    %c8_i32 = arith.constant 8 : i32
    %c0_140 = arith.constant 0 : index
    %c0_141 = arith.constant 0 : index
    %407 = vector.load %arg11[%c0_140, %c0_141] : memref<8x128xf32, #tpu.memory_space<vmem>>, vector<8x128xf32>
    tpu.vector_store %arg11[%c0_140, %c0_141], %401 {strides = array<i32>} : memref<8x128xf32, #tpu.memory_space<vmem>>, vector<8x128xf32>,
    %c0_142 = arith.constant 0 : index
    %c0_143 = arith.constant 0 : index
    %408 = vector.load %arg12[%c0_142, %c0_143] : memref<8x128xf32, #tpu.memory_space<vmem>>, vector<8x128xf32>
    tpu.vector_store %arg12[%c0_142, %c0_143], %399 {strides = array<i32>} : memref<8x128xf32, #tpu.memory_space<vmem>>, vector<8x128xf32>,
    %c0_i32_144 = arith.constant 0 : i32
    %409 = arith.cmpi eq, %arg1, %c0_i32_144 : i32
    %410 = arith.extui %409 : i1 to i32
    %c0_i32_145 = arith.constant 0 : i32
    %411 = arith.cmpi ne, %410, %c0_i32_145 : i32
    scf.if %411 {
      %c0_146 = arith.constant 0 : index
      %c0_147 = arith.constant 0 : index
      %412 = vector.load %arg9[%c0_146, %c0_147] : memref<8x128xf32, #tpu.memory_space<vmem>>, vector<8x128xf32>
      tpu.vector_store %arg9[%c0_146, %c0_147], %401 {strides = array<i32>} : memref<8x128xf32, #tpu.memory_space<vmem>>, vector<8x128xf32>,
      %c0_148 = arith.constant 0 : index
      %c0_149 = arith.constant 0 : index
      %413 = vector.load %arg10[%c0_148, %c0_149] : memref<8x128xf32, #tpu.memory_space<vmem>>, vector<8x128xf32>
      tpu.vector_store %arg10[%c0_148, %c0_149], %399 {strides = array<i32>} : memref<8x128xf32, #tpu.memory_space<vmem>>, vector<8x128xf32>,
    } else {
    }
    return
  }
  func.func @transform_0(%arg0: i32, %arg1: i32) -> (i32, i32, i32) {
    %c0_i32 = arith.constant 0 : i32
    %c0_i32_0 = arith.constant 0 : i32
    return %arg1, %arg0, %c0_i32 : i32, i32, i32
  }
  func.func @transform_1(%arg0: i32, %arg1: i32) -> (i32, i32) {
    %c0_i32 = arith.constant 0 : i32
    %c0_i32_0 = arith.constant 0 : i32
    return %arg0, %c0_i32 : i32, i32
  }
  func.func @transform_2(%arg0: i32, %arg1: i32) -> (i32, i32) {
    %c0_i32 = arith.constant 0 : i32
    %c0_i32_0 = arith.constant 0 : i32
    return %arg0, %c0_i32 : i32, i32
  }
  func.func @transform_3(%arg0: i32, %arg1: i32) -> (i32, i32) {
    %c0_i32 = arith.constant 0 : i32
    %c0_i32_0 = arith.constant 0 : i32
    %c0_i32_1 = arith.constant 0 : i32
    return %c0_i32, %c0_i32_0 : i32, i32
  }
  func.func @transform_4(%arg0: i32, %arg1: i32) -> (i32, i32) {
    %c0_i32 = arith.constant 0 : i32
    %c0_i32_0 = arith.constant 0 : i32
    %c0_i32_1 = arith.constant 0 : i32
    return %c0_i32, %c0_i32_0 : i32, i32
  }
  func.func @transform_5(%arg0: i32, %arg1: i32) -> (i32, i32) {
    %c0_i32 = arith.constant 0 : i32
    %c0_i32_0 = arith.constant 0 : i32
    %c0_i32_1 = arith.constant 0 : i32
    return %c0_i32, %c0_i32_0 : i32, i32
  }
  func.func @transform_6(%arg0: i32, %arg1: i32) -> (i32, i32, i32) {
    %c0_i32 = arith.constant 0 : i32
    %c0_i32_0 = arith.constant 0 : i32
    return %arg1, %arg0, %c0_i32 : i32, i32, i32
  }
  func.func @transform_7(%arg0: i32, %arg1: i32) -> (i32, i32) {
    %c0_i32 = arith.constant 0 : i32
    %c0_i32_0 = arith.constant 0 : i32
    return %arg0, %c0_i32 : i32, i32
  }
  func.func @transform_8(%arg0: i32, %arg1: i32) -> (i32, i32) {
    %c0_i32 = arith.constant 0 : i32
    %c0_i32_0 = arith.constant 0 : i32
    return %arg0, %c0_i32 : i32, i32
  }
}

module attributes {stable_mosaic.version = 11 : i64} {
  func.func @_lstm_fused_kernel(%arg0: i32, %arg1: i32, %arg2: memref<8x8x16xbf16, #tpu.memory_space<vmem>>, %arg3: memref<8x128xf32, #tpu.memory_space<vmem>>, %arg4: memref<8x128xf32, #tpu.memory_space<vmem>>, %arg5: memref<16x512xbf16, #tpu.memory_space<vmem>>, %arg6: memref<128x512xbf16, #tpu.memory_space<vmem>>, %arg7: memref<1x512xf32, #tpu.memory_space<vmem>>, %arg8: memref<8x8x128xbf16, #tpu.memory_space<vmem>>, %arg9: memref<8x128xf32, #tpu.memory_space<vmem>>, %arg10: memref<8x128xf32, #tpu.memory_space<vmem>>, %arg11: memref<8x128xf32, #tpu.memory_space<vmem>>, %arg12: memref<8x128xf32, #tpu.memory_space<vmem>>, %arg13: memref<8x8x512xf32, #tpu.memory_space<vmem>>) attributes {dimension_semantics = [#tpu.dimension_semantics<parallel>, #tpu.dimension_semantics<arbitrary>], iteration_bounds = array<i64: 1, 1>, scalar_prefetch = 0 : i64, scratch_operands = 3 : i64, tpu.core_type = #tpu.core_type<tc>, window_params = [{transform_indices = @transform_0, window_bounds = array<i64: 8, 8, 16>}, {transform_indices = @transform_1, window_bounds = array<i64: 8, 128>}, {transform_indices = @transform_2, window_bounds = array<i64: 8, 128>}, {pipeline_mode = #tpu.pipeline_mode<synchronous>, transform_indices = @transform_3, window_bounds = array<i64: 16, 512>}, {pipeline_mode = #tpu.pipeline_mode<synchronous>, transform_indices = @transform_4, window_bounds = array<i64: 128, 512>}, {pipeline_mode = #tpu.pipeline_mode<synchronous>, transform_indices = @transform_5, window_bounds = array<i64: 1, 512>}, {transform_indices = @transform_6, window_bounds = array<i64: 8, 8, 128>}, {transform_indices = @transform_7, window_bounds = array<i64: 8, 128>}, {transform_indices = @transform_8, window_bounds = array<i64: 8, 128>}]} {
    %c0_i32 = arith.constant 0 : i32
    %0 = arith.cmpi eq, %arg1, %c0_i32 : i32
    %1 = arith.extui %0 : i1 to i32
    %c0_i32_0 = arith.constant 0 : i32
    %2 = arith.cmpi ne, %1, %c0_i32_0 : i32
    scf.if %2 {
      %c0_146 = arith.constant 0 : index
      %c0_147 = arith.constant 0 : index
      %412 = vector.load %arg3[%c0_146, %c0_147] : memref<8x128xf32, #tpu.memory_space<vmem>>, vector<8x128xf32>
      %c0_148 = arith.constant 0 : index
      %c0_149 = arith.constant 0 : index
      %413 = vector.load %arg11[%c0_148, %c0_149] : memref<8x128xf32, #tpu.memory_space<vmem>>, vector<8x128xf32>
      tpu.vector_store %arg11[%c0_148, %c0_149], %412 {strides = array<i32>} : memref<8x128xf32, #tpu.memory_space<vmem>>, vector<8x128xf32>,
      %c0_150 = arith.constant 0 : index
      %c0_151 = arith.constant 0 : index
      %414 = vector.load %arg4[%c0_150, %c0_151] : memref<8x128xf32, #tpu.memory_space<vmem>>, vector<8x128xf32>
      %c0_152 = arith.constant 0 : index
      %c0_153 = arith.constant 0 : index
      %415 = vector.load %arg12[%c0_152, %c0_153] : memref<8x128xf32, #tpu.memory_space<vmem>>, vector<8x128xf32>
      tpu.vector_store %arg12[%c0_152, %c0_153], %414 {strides = array<i32>} : memref<8x128xf32, #tpu.memory_space<vmem>>, vector<8x128xf32>,
    } else {
    }
    %c0 = arith.constant 0 : index
    %c0_1 = arith.constant 0 : index
    %c0_2 = arith.constant 0 : index
    %3 = vector.load %arg2[%c0, %c0_1, %c0_2] : memref<8x8x16xbf16, #tpu.memory_space<vmem>>, vector<8x8x16xbf16>
    %4 = vector.shape_cast %3 : vector<8x8x16xbf16> to vector<64x16xbf16>
    %c0_3 = arith.constant 0 : index
    %c0_4 = arith.constant 0 : index
    %5 = vector.load %arg5[%c0_3, %c0_4] : memref<16x512xbf16, #tpu.memory_space<vmem>>, vector<16x512xbf16>
    %cst = arith.constant dense<0.000000e+00> : vector<64x512xf32>
    %6 = tpu.matmul %4, %5, %cst {dimension_numbers = #tpu.dot_dimension_numbers<[1], [0], [0], [1], [0, 0, 1, 1], [], []>} : vector<64x16xbf16>, vector<16x512xbf16>, vector<64x512xf32> -> vector<64x512xf32>
    %7 = vector.shape_cast %6 : vector<64x512xf32> to vector<8x8x512xf32>
    %c0_5 = arith.constant 0 : index
    %c0_6 = arith.constant 0 : index
    %8 = vector.load %arg7[%c0_5, %c0_6] : memref<1x512xf32, #tpu.memory_space<vmem>>, vector<1x512xf32>
    %9 = vector.shape_cast %8 : vector<1x512xf32> to vector<1x1x512xf32>
    %10 = vector.broadcast %9 : vector<1x1x512xf32> to vector<8x8x512xf32>
    %11 = arith.addf %7, %10 : vector<8x8x512xf32>
    %c0_7 = arith.constant 0 : index
    %c0_8 = arith.constant 0 : index
    %c0_9 = arith.constant 0 : index
    %12 = vector.load %arg13[%c0_7, %c0_8, %c0_9] : memref<8x8x512xf32, #tpu.memory_space<vmem>>, vector<8x8x512xf32>
    tpu.vector_store %arg13[%c0_7, %c0_8, %c0_9], %11 {strides = array<i32>} : memref<8x8x512xf32, #tpu.memory_space<vmem>>, vector<8x8x512xf32>,
    %c0_10 = arith.constant 0 : index
    %c0_11 = arith.constant 0 : index
    %13 = vector.load %arg11[%c0_10, %c0_11] : memref<8x128xf32, #tpu.memory_space<vmem>>, vector<8x128xf32>
    %c0_12 = arith.constant 0 : index
    %c0_13 = arith.constant 0 : index
    %14 = vector.load %arg12[%c0_12, %c0_13] : memref<8x128xf32, #tpu.memory_space<vmem>>, vector<8x128xf32>
    %c0_i32_14 = arith.constant 0 : i32
    %15 = arith.truncf %13 : vector<8x128xf32> to vector<8x128xbf16>
    %c0_15 = arith.constant 0 : index
    %c0_16 = arith.constant 0 : index
    %16 = vector.load %arg6[%c0_15, %c0_16] : memref<128x512xbf16, #tpu.memory_space<vmem>>, vector<128x512xbf16>
    %cst_17 = arith.constant dense<0.000000e+00> : vector<8x512xf32>
    %17 = tpu.matmul %15, %16, %cst_17 {dimension_numbers = #tpu.dot_dimension_numbers<[1], [0], [0], [1], [0, 0, 1, 1], [], []>} : vector<8x128xbf16>, vector<128x512xbf16>, vector<8x512xf32> -> vector<8x512xf32>
    %18 = vector.extract_strided_slice %17 {offsets = [0, 0], sizes = [8, 128], strides = [1, 1]} : vector<8x512xf32> to vector<8x128xf32>
    %19 = arith.index_cast %c0_i32_14 : i32 to index
    %c0_18 = arith.constant 0 : index
    %c0_19 = arith.constant 0 : index
    %20 = vector.load %arg13[%19, %c0_18, %c0_19] : memref<8x8x512xf32, #tpu.memory_space<vmem>>, vector<1x8x128xf32>
    %21 = vector.shape_cast %20 : vector<1x8x128xf32> to vector<8x128xf32>
    %22 = arith.addf %18, %21 : vector<8x128xf32>
    %23 = arith.negf %22 : vector<8x128xf32>
    %24 = math.exp %23 : vector<8x128xf32>
    %cst_20 = arith.constant 1.000000e+00 : f32
    %25 = vector.broadcast %cst_20 : f32 to vector<8x128xf32>
    %26 = arith.addf %25, %24 : vector<8x128xf32>
    %27 = arith.divf %25, %26 : vector<8x128xf32>
    %28 = vector.extract_strided_slice %17 {offsets = [0, 128], sizes = [8, 128], strides = [1, 1]} : vector<8x512xf32> to vector<8x128xf32>
    %29 = arith.index_cast %c0_i32_14 : i32 to index
    %c0_21 = arith.constant 0 : index
    %c128 = arith.constant 128 : index
    %30 = vector.load %arg13[%29, %c0_21, %c128] : memref<8x8x512xf32, #tpu.memory_space<vmem>>, vector<1x8x128xf32>
    %31 = vector.shape_cast %30 : vector<1x8x128xf32> to vector<8x128xf32>
    %32 = arith.addf %28, %31 : vector<8x128xf32>
    %33 = arith.negf %32 : vector<8x128xf32>
    %34 = math.exp %33 : vector<8x128xf32>
    %cst_22 = arith.constant 1.000000e+00 : f32
    %35 = vector.broadcast %cst_22 : f32 to vector<8x128xf32>
    %36 = arith.addf %35, %34 : vector<8x128xf32>
    %37 = arith.divf %35, %36 : vector<8x128xf32>
    %38 = vector.extract_strided_slice %17 {offsets = [0, 256], sizes = [8, 128], strides = [1, 1]} : vector<8x512xf32> to vector<8x128xf32>
    %39 = arith.index_cast %c0_i32_14 : i32 to index
    %c0_23 = arith.constant 0 : index
    %c256 = arith.constant 256 : index
    %40 = vector.load %arg13[%39, %c0_23, %c256] : memref<8x8x512xf32, #tpu.memory_space<vmem>>, vector<1x8x128xf32>
    %41 = vector.shape_cast %40 : vector<1x8x128xf32> to vector<8x128xf32>
    %42 = arith.addf %38, %41 : vector<8x128xf32>
    %43 = math.tanh %42 : vector<8x128xf32>
    %44 = vector.extract_strided_slice %17 {offsets = [0, 384], sizes = [8, 128], strides = [1, 1]} : vector<8x512xf32> to vector<8x128xf32>
    %45 = arith.index_cast %c0_i32_14 : i32 to index
    %c0_24 = arith.constant 0 : index
    %c384 = arith.constant 384 : index
    %46 = vector.load %arg13[%45, %c0_24, %c384] : memref<8x8x512xf32, #tpu.memory_space<vmem>>, vector<1x8x128xf32>
    %47 = vector.shape_cast %46 : vector<1x8x128xf32> to vector<8x128xf32>
    %48 = arith.addf %44, %47 : vector<8x128xf32>
    %49 = arith.negf %48 : vector<8x128xf32>
    %50 = math.exp %49 : vector<8x128xf32>
    %cst_25 = arith.constant 1.000000e+00 : f32
    %51 = vector.broadcast %cst_25 : f32 to vector<8x128xf32>
    %52 = arith.addf %51, %50 : vector<8x128xf32>
    %53 = arith.divf %51, %52 : vector<8x128xf32>
    %54 = arith.mulf %37, %14 : vector<8x128xf32>
    %55 = arith.mulf %27, %43 : vector<8x128xf32>
    %56 = arith.addf %54, %55 : vector<8x128xf32>
    %57 = math.tanh %56 : vector<8x128xf32>
    %58 = arith.mulf %53, %57 : vector<8x128xf32>
    %59 = arith.truncf %58 : vector<8x128xf32> to vector<8x128xbf16>
    %60 = arith.index_cast %c0_i32_14 : i32 to index
    %c0_26 = arith.constant 0 : index
    %c0_27 = arith.constant 0 : index
    %61 = vector.load %arg8[%60, %c0_26, %c0_27] : memref<8x8x128xbf16, #tpu.memory_space<vmem>>, vector<1x8x128xbf16>
    %62 = vector.shape_cast %61 : vector<1x8x128xbf16> to vector<8x128xbf16>
    %63 = vector.shape_cast %59 : vector<8x128xbf16> to vector<1x8x128xbf16>
    tpu.vector_store %arg8[%60, %c0_26, %c0_27], %63 {strides = array<i32>} : memref<8x8x128xbf16, #tpu.memory_space<vmem>>, vector<1x8x128xbf16>,
    %c1_i32 = arith.constant 1 : i32
    %64 = arith.truncf %58 : vector<8x128xf32> to vector<8x128xbf16>
    %c0_28 = arith.constant 0 : index
    %c0_29 = arith.constant 0 : index
    %65 = vector.load %arg6[%c0_28, %c0_29] : memref<128x512xbf16, #tpu.memory_space<vmem>>, vector<128x512xbf16>
    %cst_30 = arith.constant dense<0.000000e+00> : vector<8x512xf32>
    %66 = tpu.matmul %64, %65, %cst_30 {dimension_numbers = #tpu.dot_dimension_numbers<[1], [0], [0], [1], [0, 0, 1, 1], [], []>} : vector<8x128xbf16>, vector<128x512xbf16>, vector<8x512xf32> -> vector<8x512xf32>
    %67 = vector.extract_strided_slice %66 {offsets = [0, 0], sizes = [8, 128], strides = [1, 1]} : vector<8x512xf32> to vector<8x128xf32>
    %68 = arith.index_cast %c1_i32 : i32 to index
    %c0_31 = arith.constant 0 : index
    %c0_32 = arith.constant 0 : index
    %69 = vector.load %arg13[%68, %c0_31, %c0_32] : memref<8x8x512xf32, #tpu.memory_space<vmem>>, vector<1x8x128xf32>
    %70 = vector.shape_cast %69 : vector<1x8x128xf32> to vector<8x128xf32>
    %71 = arith.addf %67, %70 : vector<8x128xf32>
    %72 = arith.negf %71 : vector<8x128xf32>
    %73 = math.exp %72 : vector<8x128xf32>
    %cst_33 = arith.constant 1.000000e+00 : f32
    %74 = vector.broadcast %cst_33 : f32 to vector<8x128xf32>
    %75 = arith.addf %74, %73 : vector<8x128xf32>
    %76 = arith.divf %74, %75 : vector<8x128xf32>
    %77 = vector.extract_strided_slice %66 {offsets = [0, 128], sizes = [8, 128], strides = [1, 1]} : vector<8x512xf32> to vector<8x128xf32>
    %78 = arith.index_cast %c1_i32 : i32 to index
    %c0_34 = arith.constant 0 : index
    %c128_35 = arith.constant 128 : index
    %79 = vector.load %arg13[%78, %c0_34, %c128_35] : memref<8x8x512xf32, #tpu.memory_space<vmem>>, vector<1x8x128xf32>
    %80 = vector.shape_cast %79 : vector<1x8x128xf32> to vector<8x128xf32>
    %81 = arith.addf %77, %80 : vector<8x128xf32>
    %82 = arith.negf %81 : vector<8x128xf32>
    %83 = math.exp %82 : vector<8x128xf32>
    %cst_36 = arith.constant 1.000000e+00 : f32
    %84 = vector.broadcast %cst_36 : f32 to vector<8x128xf32>
    %85 = arith.addf %84, %83 : vector<8x128xf32>
    %86 = arith.divf %84, %85 : vector<8x128xf32>
    %87 = vector.extract_strided_slice %66 {offsets = [0, 256], sizes = [8, 128], strides = [1, 1]} : vector<8x512xf32> to vector<8x128xf32>
    %88 = arith.index_cast %c1_i32 : i32 to index
    %c0_37 = arith.constant 0 : index
    %c256_38 = arith.constant 256 : index
    %89 = vector.load %arg13[%88, %c0_37, %c256_38] : memref<8x8x512xf32, #tpu.memory_space<vmem>>, vector<1x8x128xf32>
    %90 = vector.shape_cast %89 : vector<1x8x128xf32> to vector<8x128xf32>
    %91 = arith.addf %87, %90 : vector<8x128xf32>
    %92 = math.tanh %91 : vector<8x128xf32>
    %93 = vector.extract_strided_slice %66 {offsets = [0, 384], sizes = [8, 128], strides = [1, 1]} : vector<8x512xf32> to vector<8x128xf32>
    %94 = arith.index_cast %c1_i32 : i32 to index
    %c0_39 = arith.constant 0 : index
    %c384_40 = arith.constant 384 : index
    %95 = vector.load %arg13[%94, %c0_39, %c384_40] : memref<8x8x512xf32, #tpu.memory_space<vmem>>, vector<1x8x128xf32>
    %96 = vector.shape_cast %95 : vector<1x8x128xf32> to vector<8x128xf32>
    %97 = arith.addf %93, %96 : vector<8x128xf32>
    %98 = arith.negf %97 : vector<8x128xf32>
    %99 = math.exp %98 : vector<8x128xf32>
    %cst_41 = arith.constant 1.000000e+00 : f32
    %100 = vector.broadcast %cst_41 : f32 to vector<8x128xf32>
    %101 = arith.addf %100, %99 : vector<8x128xf32>
    %102 = arith.divf %100, %101 : vector<8x128xf32>
    %103 = arith.mulf %86, %56 : vector<8x128xf32>
    %104 = arith.mulf %76, %92 : vector<8x128xf32>
    %105 = arith.addf %103, %104 : vector<8x128xf32>
    %106 = math.tanh %105 : vector<8x128xf32>
    %107 = arith.mulf %102, %106 : vector<8x128xf32>
    %108 = arith.truncf %107 : vector<8x128xf32> to vector<8x128xbf16>
    %109 = arith.index_cast %c1_i32 : i32 to index
    %c0_42 = arith.constant 0 : index
    %c0_43 = arith.constant 0 : index
    %110 = vector.load %arg8[%109, %c0_42, %c0_43] : memref<8x8x128xbf16, #tpu.memory_space<vmem>>, vector<1x8x128xbf16>
    %111 = vector.shape_cast %110 : vector<1x8x128xbf16> to vector<8x128xbf16>
    %112 = vector.shape_cast %108 : vector<8x128xbf16> to vector<1x8x128xbf16>
    tpu.vector_store %arg8[%109, %c0_42, %c0_43], %112 {strides = array<i32>} : memref<8x8x128xbf16, #tpu.memory_space<vmem>>, vector<1x8x128xbf16>,
    %c2_i32 = arith.constant 2 : i32
    %113 = arith.truncf %107 : vector<8x128xf32> to vector<8x128xbf16>
    %c0_44 = arith.constant 0 : index
    %c0_45 = arith.constant 0 : index
    %114 = vector.load %arg6[%c0_44, %c0_45] : memref<128x512xbf16, #tpu.memory_space<vmem>>, vector<128x512xbf16>
    %cst_46 = arith.constant dense<0.000000e+00> : vector<8x512xf32>
    %115 = tpu.matmul %113, %114, %cst_46 {dimension_numbers = #tpu.dot_dimension_numbers<[1], [0], [0], [1], [0, 0, 1, 1], [], []>} : vector<8x128xbf16>, vector<128x512xbf16>, vector<8x512xf32> -> vector<8x512xf32>
    %116 = vector.extract_strided_slice %115 {offsets = [0, 0], sizes = [8, 128], strides = [1, 1]} : vector<8x512xf32> to vector<8x128xf32>
    %117 = arith.index_cast %c2_i32 : i32 to index
    %c0_47 = arith.constant 0 : index
    %c0_48 = arith.constant 0 : index
    %118 = vector.load %arg13[%117, %c0_47, %c0_48] : memref<8x8x512xf32, #tpu.memory_space<vmem>>, vector<1x8x128xf32>
    %119 = vector.shape_cast %118 : vector<1x8x128xf32> to vector<8x128xf32>
    %120 = arith.addf %116, %119 : vector<8x128xf32>
    %121 = arith.negf %120 : vector<8x128xf32>
    %122 = math.exp %121 : vector<8x128xf32>
    %cst_49 = arith.constant 1.000000e+00 : f32
    %123 = vector.broadcast %cst_49 : f32 to vector<8x128xf32>
    %124 = arith.addf %123, %122 : vector<8x128xf32>
    %125 = arith.divf %123, %124 : vector<8x128xf32>
    %126 = vector.extract_strided_slice %115 {offsets = [0, 128], sizes = [8, 128], strides = [1, 1]} : vector<8x512xf32> to vector<8x128xf32>
    %127 = arith.index_cast %c2_i32 : i32 to index
    %c0_50 = arith.constant 0 : index
    %c128_51 = arith.constant 128 : index
    %128 = vector.load %arg13[%127, %c0_50, %c128_51] : memref<8x8x512xf32, #tpu.memory_space<vmem>>, vector<1x8x128xf32>
    %129 = vector.shape_cast %128 : vector<1x8x128xf32> to vector<8x128xf32>
    %130 = arith.addf %126, %129 : vector<8x128xf32>
    %131 = arith.negf %130 : vector<8x128xf32>
    %132 = math.exp %131 : vector<8x128xf32>
    %cst_52 = arith.constant 1.000000e+00 : f32
    %133 = vector.broadcast %cst_52 : f32 to vector<8x128xf32>
    %134 = arith.addf %133, %132 : vector<8x128xf32>
    %135 = arith.divf %133, %134 : vector<8x128xf32>
    %136 = vector.extract_strided_slice %115 {offsets = [0, 256], sizes = [8, 128], strides = [1, 1]} : vector<8x512xf32> to vector<8x128xf32>
    %137 = arith.index_cast %c2_i32 : i32 to index
    %c0_53 = arith.constant 0 : index
    %c256_54 = arith.constant 256 : index
    %138 = vector.load %arg13[%137, %c0_53, %c256_54] : memref<8x8x512xf32, #tpu.memory_space<vmem>>, vector<1x8x128xf32>
    %139 = vector.shape_cast %138 : vector<1x8x128xf32> to vector<8x128xf32>
    %140 = arith.addf %136, %139 : vector<8x128xf32>
    %141 = math.tanh %140 : vector<8x128xf32>
    %142 = vector.extract_strided_slice %115 {offsets = [0, 384], sizes = [8, 128], strides = [1, 1]} : vector<8x512xf32> to vector<8x128xf32>
    %143 = arith.index_cast %c2_i32 : i32 to index
    %c0_55 = arith.constant 0 : index
    %c384_56 = arith.constant 384 : index
    %144 = vector.load %arg13[%143, %c0_55, %c384_56] : memref<8x8x512xf32, #tpu.memory_space<vmem>>, vector<1x8x128xf32>
    %145 = vector.shape_cast %144 : vector<1x8x128xf32> to vector<8x128xf32>
    %146 = arith.addf %142, %145 : vector<8x128xf32>
    %147 = arith.negf %146 : vector<8x128xf32>
    %148 = math.exp %147 : vector<8x128xf32>
    %cst_57 = arith.constant 1.000000e+00 : f32
    %149 = vector.broadcast %cst_57 : f32 to vector<8x128xf32>
    %150 = arith.addf %149, %148 : vector<8x128xf32>
    %151 = arith.divf %149, %150 : vector<8x128xf32>
    %152 = arith.mulf %135, %105 : vector<8x128xf32>
    %153 = arith.mulf %125, %141 : vector<8x128xf32>
    %154 = arith.addf %152, %153 : vector<8x128xf32>
    %155 = math.tanh %154 : vector<8x128xf32>
    %156 = arith.mulf %151, %155 : vector<8x128xf32>
    %157 = arith.truncf %156 : vector<8x128xf32> to vector<8x128xbf16>
    %158 = arith.index_cast %c2_i32 : i32 to index
    %c0_58 = arith.constant 0 : index
    %c0_59 = arith.constant 0 : index
    %159 = vector.load %arg8[%158, %c0_58, %c0_59] : memref<8x8x128xbf16, #tpu.memory_space<vmem>>, vector<1x8x128xbf16>
    %160 = vector.shape_cast %159 : vector<1x8x128xbf16> to vector<8x128xbf16>
    %161 = vector.shape_cast %157 : vector<8x128xbf16> to vector<1x8x128xbf16>
    tpu.vector_store %arg8[%158, %c0_58, %c0_59], %161 {strides = array<i32>} : memref<8x8x128xbf16, #tpu.memory_space<vmem>>, vector<1x8x128xbf16>,
    %c3_i32 = arith.constant 3 : i32
    %162 = arith.truncf %156 : vector<8x128xf32> to vector<8x128xbf16>
    %c0_60 = arith.constant 0 : index
    %c0_61 = arith.constant 0 : index
    %163 = vector.load %arg6[%c0_60, %c0_61] : memref<128x512xbf16, #tpu.memory_space<vmem>>, vector<128x512xbf16>
    %cst_62 = arith.constant dense<0.000000e+00> : vector<8x512xf32>
    %164 = tpu.matmul %162, %163, %cst_62 {dimension_numbers = #tpu.dot_dimension_numbers<[1], [0], [0], [1], [0, 0, 1, 1], [], []>} : vector<8x128xbf16>, vector<128x512xbf16>, vector<8x512xf32> -> vector<8x512xf32>
    %165 = vector.extract_strided_slice %164 {offsets = [0, 0], sizes = [8, 128], strides = [1, 1]} : vector<8x512xf32> to vector<8x128xf32>
    %166 = arith.index_cast %c3_i32 : i32 to index
    %c0_63 = arith.constant 0 : index
    %c0_64 = arith.constant 0 : index
    %167 = vector.load %arg13[%166, %c0_63, %c0_64] : memref<8x8x512xf32, #tpu.memory_space<vmem>>, vector<1x8x128xf32>
    %168 = vector.shape_cast %167 : vector<1x8x128xf32> to vector<8x128xf32>
    %169 = arith.addf %165, %168 : vector<8x128xf32>
    %170 = arith.negf %169 : vector<8x128xf32>
    %171 = math.exp %170 : vector<8x128xf32>
    %cst_65 = arith.constant 1.000000e+00 : f32
    %172 = vector.broadcast %cst_65 : f32 to vector<8x128xf32>
    %173 = arith.addf %172, %171 : vector<8x128xf32>
    %174 = arith.divf %172, %173 : vector<8x128xf32>
    %175 = vector.extract_strided_slice %164 {offsets = [0, 128], sizes = [8, 128], strides = [1, 1]} : vector<8x512xf32> to vector<8x128xf32>
    %176 = arith.index_cast %c3_i32 : i32 to index
    %c0_66 = arith.constant 0 : index
    %c128_67 = arith.constant 128 : index
    %177 = vector.load %arg13[%176, %c0_66, %c128_67] : memref<8x8x512xf32, #tpu.memory_space<vmem>>, vector<1x8x128xf32>
    %178 = vector.shape_cast %177 : vector<1x8x128xf32> to vector<8x128xf32>
    %179 = arith.addf %175, %178 : vector<8x128xf32>
    %180 = arith.negf %179 : vector<8x128xf32>
    %181 = math.exp %180 : vector<8x128xf32>
    %cst_68 = arith.constant 1.000000e+00 : f32
    %182 = vector.broadcast %cst_68 : f32 to vector<8x128xf32>
    %183 = arith.addf %182, %181 : vector<8x128xf32>
    %184 = arith.divf %182, %183 : vector<8x128xf32>
    %185 = vector.extract_strided_slice %164 {offsets = [0, 256], sizes = [8, 128], strides = [1, 1]} : vector<8x512xf32> to vector<8x128xf32>
    %186 = arith.index_cast %c3_i32 : i32 to index
    %c0_69 = arith.constant 0 : index
    %c256_70 = arith.constant 256 : index
    %187 = vector.load %arg13[%186, %c0_69, %c256_70] : memref<8x8x512xf32, #tpu.memory_space<vmem>>, vector<1x8x128xf32>
    %188 = vector.shape_cast %187 : vector<1x8x128xf32> to vector<8x128xf32>
    %189 = arith.addf %185, %188 : vector<8x128xf32>
    %190 = math.tanh %189 : vector<8x128xf32>
    %191 = vector.extract_strided_slice %164 {offsets = [0, 384], sizes = [8, 128], strides = [1, 1]} : vector<8x512xf32> to vector<8x128xf32>
    %192 = arith.index_cast %c3_i32 : i32 to index
    %c0_71 = arith.constant 0 : index
    %c384_72 = arith.constant 384 : index
    %193 = vector.load %arg13[%192, %c0_71, %c384_72] : memref<8x8x512xf32, #tpu.memory_space<vmem>>, vector<1x8x128xf32>
    %194 = vector.shape_cast %193 : vector<1x8x128xf32> to vector<8x128xf32>
    %195 = arith.addf %191, %194 : vector<8x128xf32>
    %196 = arith.negf %195 : vector<8x128xf32>
    %197 = math.exp %196 : vector<8x128xf32>
    %cst_73 = arith.constant 1.000000e+00 : f32
    %198 = vector.broadcast %cst_73 : f32 to vector<8x128xf32>
    %199 = arith.addf %198, %197 : vector<8x128xf32>
    %200 = arith.divf %198, %199 : vector<8x128xf32>
    %201 = arith.mulf %184, %154 : vector<8x128xf32>
    %202 = arith.mulf %174, %190 : vector<8x128xf32>
    %203 = arith.addf %201, %202 : vector<8x128xf32>
    %204 = math.tanh %203 : vector<8x128xf32>
    %205 = arith.mulf %200, %204 : vector<8x128xf32>
    %206 = arith.truncf %205 : vector<8x128xf32> to vector<8x128xbf16>
    %207 = arith.index_cast %c3_i32 : i32 to index
    %c0_74 = arith.constant 0 : index
    %c0_75 = arith.constant 0 : index
    %208 = vector.load %arg8[%207, %c0_74, %c0_75] : memref<8x8x128xbf16, #tpu.memory_space<vmem>>, vector<1x8x128xbf16>
    %209 = vector.shape_cast %208 : vector<1x8x128xbf16> to vector<8x128xbf16>
    %210 = vector.shape_cast %206 : vector<8x128xbf16> to vector<1x8x128xbf16>
    tpu.vector_store %arg8[%207, %c0_74, %c0_75], %210 {strides = array<i32>} : memref<8x8x128xbf16, #tpu.memory_space<vmem>>, vector<1x8x128xbf16>,
    %c4_i32 = arith.constant 4 : i32
    %211 = arith.truncf %205 : vector<8x128xf32> to vector<8x128xbf16>
    %c0_76 = arith.constant 0 : index
    %c0_77 = arith.constant 0 : index
    %212 = vector.load %arg6[%c0_76, %c0_77] : memref<128x512xbf16, #tpu.memory_space<vmem>>, vector<128x512xbf16>
    %cst_78 = arith.constant dense<0.000000e+00> : vector<8x512xf32>
    %213 = tpu.matmul %211, %212, %cst_78 {dimension_numbers = #tpu.dot_dimension_numbers<[1], [0], [0], [1], [0, 0, 1, 1], [], []>} : vector<8x128xbf16>, vector<128x512xbf16>, vector<8x512xf32> -> vector<8x512xf32>
    %214 = vector.extract_strided_slice %213 {offsets = [0, 0], sizes = [8, 128], strides = [1, 1]} : vector<8x512xf32> to vector<8x128xf32>
    %215 = arith.index_cast %c4_i32 : i32 to index
    %c0_79 = arith.constant 0 : index
    %c0_80 = arith.constant 0 : index
    %216 = vector.load %arg13[%215, %c0_79, %c0_80] : memref<8x8x512xf32, #tpu.memory_space<vmem>>, vector<1x8x128xf32>
    %217 = vector.shape_cast %216 : vector<1x8x128xf32> to vector<8x128xf32>
    %218 = arith.addf %214, %217 : vector<8x128xf32>
    %219 = arith.negf %218 : vector<8x128xf32>
    %220 = math.exp %219 : vector<8x128xf32>
    %cst_81 = arith.constant 1.000000e+00 : f32
    %221 = vector.broadcast %cst_81 : f32 to vector<8x128xf32>
    %222 = arith.addf %221, %220 : vector<8x128xf32>
    %223 = arith.divf %221, %222 : vector<8x128xf32>
    %224 = vector.extract_strided_slice %213 {offsets = [0, 128], sizes = [8, 128], strides = [1, 1]} : vector<8x512xf32> to vector<8x128xf32>
    %225 = arith.index_cast %c4_i32 : i32 to index
    %c0_82 = arith.constant 0 : index
    %c128_83 = arith.constant 128 : index
    %226 = vector.load %arg13[%225, %c0_82, %c128_83] : memref<8x8x512xf32, #tpu.memory_space<vmem>>, vector<1x8x128xf32>
    %227 = vector.shape_cast %226 : vector<1x8x128xf32> to vector<8x128xf32>
    %228 = arith.addf %224, %227 : vector<8x128xf32>
    %229 = arith.negf %228 : vector<8x128xf32>
    %230 = math.exp %229 : vector<8x128xf32>
    %cst_84 = arith.constant 1.000000e+00 : f32
    %231 = vector.broadcast %cst_84 : f32 to vector<8x128xf32>
    %232 = arith.addf %231, %230 : vector<8x128xf32>
    %233 = arith.divf %231, %232 : vector<8x128xf32>
    %234 = vector.extract_strided_slice %213 {offsets = [0, 256], sizes = [8, 128], strides = [1, 1]} : vector<8x512xf32> to vector<8x128xf32>
    %235 = arith.index_cast %c4_i32 : i32 to index
    %c0_85 = arith.constant 0 : index
    %c256_86 = arith.constant 256 : index
    %236 = vector.load %arg13[%235, %c0_85, %c256_86] : memref<8x8x512xf32, #tpu.memory_space<vmem>>, vector<1x8x128xf32>
    %237 = vector.shape_cast %236 : vector<1x8x128xf32> to vector<8x128xf32>
    %238 = arith.addf %234, %237 : vector<8x128xf32>
    %239 = math.tanh %238 : vector<8x128xf32>
    %240 = vector.extract_strided_slice %213 {offsets = [0, 384], sizes = [8, 128], strides = [1, 1]} : vector<8x512xf32> to vector<8x128xf32>
    %241 = arith.index_cast %c4_i32 : i32 to index
    %c0_87 = arith.constant 0 : index
    %c384_88 = arith.constant 384 : index
    %242 = vector.load %arg13[%241, %c0_87, %c384_88] : memref<8x8x512xf32, #tpu.memory_space<vmem>>, vector<1x8x128xf32>
    %243 = vector.shape_cast %242 : vector<1x8x128xf32> to vector<8x128xf32>
    %244 = arith.addf %240, %243 : vector<8x128xf32>
    %245 = arith.negf %244 : vector<8x128xf32>
    %246 = math.exp %245 : vector<8x128xf32>
    %cst_89 = arith.constant 1.000000e+00 : f32
    %247 = vector.broadcast %cst_89 : f32 to vector<8x128xf32>
    %248 = arith.addf %247, %246 : vector<8x128xf32>
    %249 = arith.divf %247, %248 : vector<8x128xf32>
    %250 = arith.mulf %233, %203 : vector<8x128xf32>
    %251 = arith.mulf %223, %239 : vector<8x128xf32>
    %252 = arith.addf %250, %251 : vector<8x128xf32>
    %253 = math.tanh %252 : vector<8x128xf32>
    %254 = arith.mulf %249, %253 : vector<8x128xf32>
    %255 = arith.truncf %254 : vector<8x128xf32> to vector<8x128xbf16>
    %256 = arith.index_cast %c4_i32 : i32 to index
    %c0_90 = arith.constant 0 : index
    %c0_91 = arith.constant 0 : index
    %257 = vector.load %arg8[%256, %c0_90, %c0_91] : memref<8x8x128xbf16, #tpu.memory_space<vmem>>, vector<1x8x128xbf16>
    %258 = vector.shape_cast %257 : vector<1x8x128xbf16> to vector<8x128xbf16>
    %259 = vector.shape_cast %255 : vector<8x128xbf16> to vector<1x8x128xbf16>
    tpu.vector_store %arg8[%256, %c0_90, %c0_91], %259 {strides = array<i32>} : memref<8x8x128xbf16, #tpu.memory_space<vmem>>, vector<1x8x128xbf16>,
    %c5_i32 = arith.constant 5 : i32
    %260 = arith.truncf %254 : vector<8x128xf32> to vector<8x128xbf16>
    %c0_92 = arith.constant 0 : index
    %c0_93 = arith.constant 0 : index
    %261 = vector.load %arg6[%c0_92, %c0_93] : memref<128x512xbf16, #tpu.memory_space<vmem>>, vector<128x512xbf16>
    %cst_94 = arith.constant dense<0.000000e+00> : vector<8x512xf32>
    %262 = tpu.matmul %260, %261, %cst_94 {dimension_numbers = #tpu.dot_dimension_numbers<[1], [0], [0], [1], [0, 0, 1, 1], [], []>} : vector<8x128xbf16>, vector<128x512xbf16>, vector<8x512xf32> -> vector<8x512xf32>
    %263 = vector.extract_strided_slice %262 {offsets = [0, 0], sizes = [8, 128], strides = [1, 1]} : vector<8x512xf32> to vector<8x128xf32>
    %264 = arith.index_cast %c5_i32 : i32 to index
    %c0_95 = arith.constant 0 : index
    %c0_96 = arith.constant 0 : index
    %265 = vector.load %arg13[%264, %c0_95, %c0_96] : memref<8x8x512xf32, #tpu.memory_space<vmem>>, vector<1x8x128xf32>
    %266 = vector.shape_cast %265 : vector<1x8x128xf32> to vector<8x128xf32>
    %267 = arith.addf %263, %266 : vector<8x128xf32>
    %268 = arith.negf %267 : vector<8x128xf32>
    %269 = math.exp %268 : vector<8x128xf32>
    %cst_97 = arith.constant 1.000000e+00 : f32
    %270 = vector.broadcast %cst_97 : f32 to vector<8x128xf32>
    %271 = arith.addf %270, %269 : vector<8x128xf32>
    %272 = arith.divf %270, %271 : vector<8x128xf32>
    %273 = vector.extract_strided_slice %262 {offsets = [0, 128], sizes = [8, 128], strides = [1, 1]} : vector<8x512xf32> to vector<8x128xf32>
    %274 = arith.index_cast %c5_i32 : i32 to index
    %c0_98 = arith.constant 0 : index
    %c128_99 = arith.constant 128 : index
    %275 = vector.load %arg13[%274, %c0_98, %c128_99] : memref<8x8x512xf32, #tpu.memory_space<vmem>>, vector<1x8x128xf32>
    %276 = vector.shape_cast %275 : vector<1x8x128xf32> to vector<8x128xf32>
    %277 = arith.addf %273, %276 : vector<8x128xf32>
    %278 = arith.negf %277 : vector<8x128xf32>
    %279 = math.exp %278 : vector<8x128xf32>
    %cst_100 = arith.constant 1.000000e+00 : f32
    %280 = vector.broadcast %cst_100 : f32 to vector<8x128xf32>
    %281 = arith.addf %280, %279 : vector<8x128xf32>
    %282 = arith.divf %280, %281 : vector<8x128xf32>
    %283 = vector.extract_strided_slice %262 {offsets = [0, 256], sizes = [8, 128], strides = [1, 1]} : vector<8x512xf32> to vector<8x128xf32>
    %284 = arith.index_cast %c5_i32 : i32 to index
    %c0_101 = arith.constant 0 : index
    %c256_102 = arith.constant 256 : index
    %285 = vector.load %arg13[%284, %c0_101, %c256_102] : memref<8x8x512xf32, #tpu.memory_space<vmem>>, vector<1x8x128xf32>
    %286 = vector.shape_cast %285 : vector<1x8x128xf32> to vector<8x128xf32>
    %287 = arith.addf %283, %286 : vector<8x128xf32>
    %288 = math.tanh %287 : vector<8x128xf32>
    %289 = vector.extract_strided_slice %262 {offsets = [0, 384], sizes = [8, 128], strides = [1, 1]} : vector<8x512xf32> to vector<8x128xf32>
    %290 = arith.index_cast %c5_i32 : i32 to index
    %c0_103 = arith.constant 0 : index
    %c384_104 = arith.constant 384 : index
    %291 = vector.load %arg13[%290, %c0_103, %c384_104] : memref<8x8x512xf32, #tpu.memory_space<vmem>>, vector<1x8x128xf32>
    %292 = vector.shape_cast %291 : vector<1x8x128xf32> to vector<8x128xf32>
    %293 = arith.addf %289, %292 : vector<8x128xf32>
    %294 = arith.negf %293 : vector<8x128xf32>
    %295 = math.exp %294 : vector<8x128xf32>
    %cst_105 = arith.constant 1.000000e+00 : f32
    %296 = vector.broadcast %cst_105 : f32 to vector<8x128xf32>
    %297 = arith.addf %296, %295 : vector<8x128xf32>
    %298 = arith.divf %296, %297 : vector<8x128xf32>
    %299 = arith.mulf %282, %252 : vector<8x128xf32>
    %300 = arith.mulf %272, %288 : vector<8x128xf32>
    %301 = arith.addf %299, %300 : vector<8x128xf32>
    %302 = math.tanh %301 : vector<8x128xf32>
    %303 = arith.mulf %298, %302 : vector<8x128xf32>
    %304 = arith.truncf %303 : vector<8x128xf32> to vector<8x128xbf16>
    %305 = arith.index_cast %c5_i32 : i32 to index
    %c0_106 = arith.constant 0 : index
    %c0_107 = arith.constant 0 : index
    %306 = vector.load %arg8[%305, %c0_106, %c0_107] : memref<8x8x128xbf16, #tpu.memory_space<vmem>>, vector<1x8x128xbf16>
    %307 = vector.shape_cast %306 : vector<1x8x128xbf16> to vector<8x128xbf16>
    %308 = vector.shape_cast %304 : vector<8x128xbf16> to vector<1x8x128xbf16>
    tpu.vector_store %arg8[%305, %c0_106, %c0_107], %308 {strides = array<i32>} : memref<8x8x128xbf16, #tpu.memory_space<vmem>>, vector<1x8x128xbf16>,
    %c6_i32 = arith.constant 6 : i32
    %309 = arith.truncf %303 : vector<8x128xf32> to vector<8x128xbf16>
    %c0_108 = arith.constant 0 : index
    %c0_109 = arith.constant 0 : index
    %310 = vector.load %arg6[%c0_108, %c0_109] : memref<128x512xbf16, #tpu.memory_space<vmem>>, vector<128x512xbf16>
    %cst_110 = arith.constant dense<0.000000e+00> : vector<8x512xf32>
    %311 = tpu.matmul %309, %310, %cst_110 {dimension_numbers = #tpu.dot_dimension_numbers<[1], [0], [0], [1], [0, 0, 1, 1], [], []>} : vector<8x128xbf16>, vector<128x512xbf16>, vector<8x512xf32> -> vector<8x512xf32>
    %312 = vector.extract_strided_slice %311 {offsets = [0, 0], sizes = [8, 128], strides = [1, 1]} : vector<8x512xf32> to vector<8x128xf32>
    %313 = arith.index_cast %c6_i32 : i32 to index
    %c0_111 = arith.constant 0 : index
    %c0_112 = arith.constant 0 : index
    %314 = vector.load %arg13[%313, %c0_111, %c0_112] : memref<8x8x512xf32, #tpu.memory_space<vmem>>, vector<1x8x128xf32>
    %315 = vector.shape_cast %314 : vector<1x8x128xf32> to vector<8x128xf32>
    %316 = arith.addf %312, %315 : vector<8x128xf32>
    %317 = arith.negf %316 : vector<8x128xf32>
    %318 = math.exp %317 : vector<8x128xf32>
    %cst_113 = arith.constant 1.000000e+00 : f32
    %319 = vector.broadcast %cst_113 : f32 to vector<8x128xf32>
    %320 = arith.addf %319, %318 : vector<8x128xf32>
    %321 = arith.divf %319, %320 : vector<8x128xf32>
    %322 = vector.extract_strided_slice %311 {offsets = [0, 128], sizes = [8, 128], strides = [1, 1]} : vector<8x512xf32> to vector<8x128xf32>
    %323 = arith.index_cast %c6_i32 : i32 to index
    %c0_114 = arith.constant 0 : index
    %c128_115 = arith.constant 128 : index
    %324 = vector.load %arg13[%323, %c0_114, %c128_115] : memref<8x8x512xf32, #tpu.memory_space<vmem>>, vector<1x8x128xf32>
    %325 = vector.shape_cast %324 : vector<1x8x128xf32> to vector<8x128xf32>
    %326 = arith.addf %322, %325 : vector<8x128xf32>
    %327 = arith.negf %326 : vector<8x128xf32>
    %328 = math.exp %327 : vector<8x128xf32>
    %cst_116 = arith.constant 1.000000e+00 : f32
    %329 = vector.broadcast %cst_116 : f32 to vector<8x128xf32>
    %330 = arith.addf %329, %328 : vector<8x128xf32>
    %331 = arith.divf %329, %330 : vector<8x128xf32>
    %332 = vector.extract_strided_slice %311 {offsets = [0, 256], sizes = [8, 128], strides = [1, 1]} : vector<8x512xf32> to vector<8x128xf32>
    %333 = arith.index_cast %c6_i32 : i32 to index
    %c0_117 = arith.constant 0 : index
    %c256_118 = arith.constant 256 : index
    %334 = vector.load %arg13[%333, %c0_117, %c256_118] : memref<8x8x512xf32, #tpu.memory_space<vmem>>, vector<1x8x128xf32>
    %335 = vector.shape_cast %334 : vector<1x8x128xf32> to vector<8x128xf32>
    %336 = arith.addf %332, %335 : vector<8x128xf32>
    %337 = math.tanh %336 : vector<8x128xf32>
    %338 = vector.extract_strided_slice %311 {offsets = [0, 384], sizes = [8, 128], strides = [1, 1]} : vector<8x512xf32> to vector<8x128xf32>
    %339 = arith.index_cast %c6_i32 : i32 to index
    %c0_119 = arith.constant 0 : index
    %c384_120 = arith.constant 384 : index
    %340 = vector.load %arg13[%339, %c0_119, %c384_120] : memref<8x8x512xf32, #tpu.memory_space<vmem>>, vector<1x8x128xf32>
    %341 = vector.shape_cast %340 : vector<1x8x128xf32> to vector<8x128xf32>
    %342 = arith.addf %338, %341 : vector<8x128xf32>
    %343 = arith.negf %342 : vector<8x128xf32>
    %344 = math.exp %343 : vector<8x128xf32>
    %cst_121 = arith.constant 1.000000e+00 : f32
    %345 = vector.broadcast %cst_121 : f32 to vector<8x128xf32>
    %346 = arith.addf %345, %344 : vector<8x128xf32>
    %347 = arith.divf %345, %346 : vector<8x128xf32>
    %348 = arith.mulf %331, %301 : vector<8x128xf32>
    %349 = arith.mulf %321, %337 : vector<8x128xf32>
    %350 = arith.addf %348, %349 : vector<8x128xf32>
    %351 = math.tanh %350 : vector<8x128xf32>
    %352 = arith.mulf %347, %351 : vector<8x128xf32>
    %353 = arith.truncf %352 : vector<8x128xf32> to vector<8x128xbf16>
    %354 = arith.index_cast %c6_i32 : i32 to index
    %c0_122 = arith.constant 0 : index
    %c0_123 = arith.constant 0 : index
    %355 = vector.load %arg8[%354, %c0_122, %c0_123] : memref<8x8x128xbf16, #tpu.memory_space<vmem>>, vector<1x8x128xbf16>
    %356 = vector.shape_cast %355 : vector<1x8x128xbf16> to vector<8x128xbf16>
    %357 = vector.shape_cast %353 : vector<8x128xbf16> to vector<1x8x128xbf16>
    tpu.vector_store %arg8[%354, %c0_122, %c0_123], %357 {strides = array<i32>} : memref<8x8x128xbf16, #tpu.memory_space<vmem>>, vector<1x8x128xbf16>,
    %c7_i32 = arith.constant 7 : i32
    %358 = arith.truncf %352 : vector<8x128xf32> to vector<8x128xbf16>
    %c0_124 = arith.constant 0 : index
    %c0_125 = arith.constant 0 : index
    %359 = vector.load %arg6[%c0_124, %c0_125] : memref<128x512xbf16, #tpu.memory_space<vmem>>, vector<128x512xbf16>
    %cst_126 = arith.constant dense<0.000000e+00> : vector<8x512xf32>
    %360 = tpu.matmul %358, %359, %cst_126 {dimension_numbers = #tpu.dot_dimension_numbers<[1], [0], [0], [1], [0, 0, 1, 1], [], []>} : vector<8x128xbf16>, vector<128x512xbf16>, vector<8x512xf32> -> vector<8x512xf32>
    %361 = vector.extract_strided_slice %360 {offsets = [0, 0], sizes = [8, 128], strides = [1, 1]} : vector<8x512xf32> to vector<8x128xf32>
    %362 = arith.index_cast %c7_i32 : i32 to index
    %c0_127 = arith.constant 0 : index
    %c0_128 = arith.constant 0 : index
    %363 = vector.load %arg13[%362, %c0_127, %c0_128] : memref<8x8x512xf32, #tpu.memory_space<vmem>>, vector<1x8x128xf32>
    %364 = vector.shape_cast %363 : vector<1x8x128xf32> to vector<8x128xf32>
    %365 = arith.addf %361, %364 : vector<8x128xf32>
    %366 = arith.negf %365 : vector<8x128xf32>
    %367 = math.exp %366 : vector<8x128xf32>
    %cst_129 = arith.constant 1.000000e+00 : f32
    %368 = vector.broadcast %cst_129 : f32 to vector<8x128xf32>
    %369 = arith.addf %368, %367 : vector<8x128xf32>
    %370 = arith.divf %368, %369 : vector<8x128xf32>
    %371 = vector.extract_strided_slice %360 {offsets = [0, 128], sizes = [8, 128], strides = [1, 1]} : vector<8x512xf32> to vector<8x128xf32>
    %372 = arith.index_cast %c7_i32 : i32 to index
    %c0_130 = arith.constant 0 : index
    %c128_131 = arith.constant 128 : index
    %373 = vector.load %arg13[%372, %c0_130, %c128_131] : memref<8x8x512xf32, #tpu.memory_space<vmem>>, vector<1x8x128xf32>
    %374 = vector.shape_cast %373 : vector<1x8x128xf32> to vector<8x128xf32>
    %375 = arith.addf %371, %374 : vector<8x128xf32>
    %376 = arith.negf %375 : vector<8x128xf32>
    %377 = math.exp %376 : vector<8x128xf32>
    %cst_132 = arith.constant 1.000000e+00 : f32
    %378 = vector.broadcast %cst_132 : f32 to vector<8x128xf32>
    %379 = arith.addf %378, %377 : vector<8x128xf32>
    %380 = arith.divf %378, %379 : vector<8x128xf32>
    %381 = vector.extract_strided_slice %360 {offsets = [0, 256], sizes = [8, 128], strides = [1, 1]} : vector<8x512xf32> to vector<8x128xf32>
    %382 = arith.index_cast %c7_i32 : i32 to index
    %c0_133 = arith.constant 0 : index
    %c256_134 = arith.constant 256 : index
    %383 = vector.load %arg13[%382, %c0_133, %c256_134] : memref<8x8x512xf32, #tpu.memory_space<vmem>>, vector<1x8x128xf32>
    %384 = vector.shape_cast %383 : vector<1x8x128xf32> to vector<8x128xf32>
    %385 = arith.addf %381, %384 : vector<8x128xf32>
    %386 = math.tanh %385 : vector<8x128xf32>
    %387 = vector.extract_strided_slice %360 {offsets = [0, 384], sizes = [8, 128], strides = [1, 1]} : vector<8x512xf32> to vector<8x128xf32>
    %388 = arith.index_cast %c7_i32 : i32 to index
    %c0_135 = arith.constant 0 : index
    %c384_136 = arith.constant 384 : index
    %389 = vector.load %arg13[%388, %c0_135, %c384_136] : memref<8x8x512xf32, #tpu.memory_space<vmem>>, vector<1x8x128xf32>
    %390 = vector.shape_cast %389 : vector<1x8x128xf32> to vector<8x128xf32>
    %391 = arith.addf %387, %390 : vector<8x128xf32>
    %392 = arith.negf %391 : vector<8x128xf32>
    %393 = math.exp %392 : vector<8x128xf32>
    %cst_137 = arith.constant 1.000000e+00 : f32
    %394 = vector.broadcast %cst_137 : f32 to vector<8x128xf32>
    %395 = arith.addf %394, %393 : vector<8x128xf32>
    %396 = arith.divf %394, %395 : vector<8x128xf32>
    %397 = arith.mulf %380, %350 : vector<8x128xf32>
    %398 = arith.mulf %370, %386 : vector<8x128xf32>
    %399 = arith.addf %397, %398 : vector<8x128xf32>
    %400 = math.tanh %399 : vector<8x128xf32>
    %401 = arith.mulf %396, %400 : vector<8x128xf32>
    %402 = arith.truncf %401 : vector<8x128xf32> to vector<8x128xbf16>
    %403 = arith.index_cast %c7_i32 : i32 to index
    %c0_138 = arith.constant 0 : index
    %c0_139 = arith.constant 0 : index
    %404 = vector.load %arg8[%403, %c0_138, %c0_139] : memref<8x8x128xbf16, #tpu.memory_space<vmem>>, vector<1x8x128xbf16>
    %405 = vector.shape_cast %404 : vector<1x8x128xbf16> to vector<8x128xbf16>
    %406 = vector.shape_cast %402 : vector<8x128xbf16> to vector<1x8x128xbf16>
    tpu.vector_store %arg8[%403, %c0_138, %c0_139], %406 {strides = array<i32>} : memref<8x8x128xbf16, #tpu.memory_space<vmem>>, vector<1x8x128xbf16>,
    %c8_i32 = arith.constant 8 : i32
    %c0_140 = arith.constant 0 : index
    %c0_141 = arith.constant 0 : index
    %407 = vector.load %arg11[%c0_140, %c0_141] : memref<8x128xf32, #tpu.memory_space<vmem>>, vector<8x128xf32>
    tpu.vector_store %arg11[%c0_140, %c0_141], %401 {strides = array<i32>} : memref<8x128xf32, #tpu.memory_space<vmem>>, vector<8x128xf32>,
    %c0_142 = arith.constant 0 : index
    %c0_143 = arith.constant 0 : index
    %408 = vector.load %arg12[%c0_142, %c0_143] : memref<8x128xf32, #tpu.memory_space<vmem>>, vector<8x128xf32>
    tpu.vector_store %arg12[%c0_142, %c0_143], %399 {strides = array<i32>} : memref<8x128xf32, #tpu.memory_space<vmem>>, vector<8x128xf32>,
    %c0_i32_144 = arith.constant 0 : i32
    %409 = arith.cmpi eq, %arg1, %c0_i32_144 : i32
    %410 = arith.extui %409 : i1 to i32
    %c0_i32_145 = arith.constant 0 : i32
    %411 = arith.cmpi ne, %410, %c0_i32_145 : i32
    scf.if %411 {
      %c0_146 = arith.constant 0 : index
      %c0_147 = arith.constant 0 : index
      %412 = vector.load %arg9[%c0_146, %c0_147] : memref<8x128xf32, #tpu.memory_space<vmem>>, vector<8x128xf32>
      tpu.vector_store %arg9[%c0_146, %c0_147], %401 {strides = array<i32>} : memref<8x128xf32, #tpu.memory_space<vmem>>, vector<8x128xf32>,
      %c0_148 = arith.constant 0 : index
      %c0_149 = arith.constant 0 : index
      %413 = vector.load %arg10[%c0_148, %c0_149] : memref<8x128xf32, #tpu.memory_space<vmem>>, vector<8x128xf32>
      tpu.vector_store %arg10[%c0_148, %c0_149], %399 {strides = array<i32>} : memref<8x128xf32, #tpu.memory_space<vmem>>, vector<8x128xf32>,
    } else {
    }
    return
  }
  func.func @transform_0(%arg0: i32, %arg1: i32) -> (i32, i32, i32) {
    %c0_i32 = arith.constant 0 : i32
    %c0_i32_0 = arith.constant 0 : i32
    return %arg1, %arg0, %c0_i32 : i32, i32, i32
  }
  func.func @transform_1(%arg0: i32, %arg1: i32) -> (i32, i32) {
    %c0_i32 = arith.constant 0 : i32
    %c0_i32_0 = arith.constant 0 : i32
    return %arg0, %c0_i32 : i32, i32
  }
  func.func @transform_2(%arg0: i32, %arg1: i32) -> (i32, i32) {
    %c0_i32 = arith.constant 0 : i32
    %c0_i32_0 = arith.constant 0 : i32
    return %arg0, %c0_i32 : i32, i32
  }
  func.func @transform_3(%arg0: i32, %arg1: i32) -> (i32, i32) {
    %c0_i32 = arith.constant 0 : i32
    %c0_i32_0 = arith.constant 0 : i32
    %c0_i32_1 = arith.constant 0 : i32
    return %c0_i32, %c0_i32_0 : i32, i32
  }
  func.func @transform_4(%arg0: i32, %arg1: i32) -> (i32, i32) {
    %c0_i32 = arith.constant 0 : i32
    %c0_i32_0 = arith.constant 0 : i32
    %c0_i32_1 = arith.constant 0 : i32
    return %c0_i32, %c0_i32_0 : i32, i32
  }
  func.func @transform_5(%arg0: i32, %arg1: i32) -> (i32, i32) {
    %c0_i32 = arith.constant 0 : i32
    %c0_i32_0 = arith.constant 0 : i32
    %c0_i32_1 = arith.constant 0 : i32
    return %c0_i32, %c0_i32_0 : i32, i32
  }
  func.func @transform_6(%arg0: i32, %arg1: i32) -> (i32, i32, i32) {
    %c0_i32 = arith.constant 0 : i32
    %c0_i32_0 = arith.constant 0 : i32
    return %arg1, %arg0, %c0_i32 : i32, i32, i32
  }
  func.func @transform_7(%arg0: i32, %arg1: i32) -> (i32, i32) {
    %c0_i32 = arith.constant 0 : i32
    %c0_i32_0 = arith.constant 0 : i32
    return %arg0, %c0_i32 : i32, i32
  }
  func.func @transform_8(%arg0: i32, %arg1: i32) -> (i32, i32) {
    %c0_i32 = arith.constant 0 : i32
    %c0_i32_0 = arith.constant 0 : i32
    return %arg0, %c0_i32 : i32, i32
  }
}

</mosaic_0001>

<llo_original>
// kernel: cell_lstm_forward.2
$region0: #{cell_lstm_forward.2}
  #allocation0 [shape = 'u32[]', space=smem, size = 0x4, offset = 0x4, fixed_abs, tag = 'smem constant byte address 0x4 - core index']
  #allocation1 [shape = 'u32[144,128]{1,0:T(1,128)}', space=vmem, size = 0x12000, scoped, tag = 'internal scratch']
  #allocation2 [shape = 'f32[8,128]{1,0:T(8,128)}', space=vmem, size = 0x1000, scoped, tag = 'scratch operand']
  #allocation3 [shape = 'f32[8,128]{1,0:T(8,128)}', space=vmem, size = 0x1000, scoped, tag = 'scratch operand']
  #allocation4 [shape = 'f32[8,8,512]{2,1,0:T(8,128)}', space=vmem, size = 0x20000, scoped, tag = 'scratch operand']
  %s0 = inlined_call_operand.vmem [shape: bf16[8,8,16], index: 0, kind: input, shape index: {}]
  %s1 = inlined_call_operand.vmem [shape: f32[8,128], index: 1, kind: input, shape index: {}]
  %s2 = inlined_call_operand.vmem [shape: f32[8,128], index: 2, kind: input, shape index: {}]
  %s3 = inlined_call_operand.hbm [shape: bf16[16,512], index: 3, kind: input, shape index: {}]
  %s4 = inlined_call_operand.hbm [shape: bf16[128,512], index: 4, kind: input, shape index: {}]
  %s5 = inlined_call_operand.hbm [shape: f32[1,512], index: 5, kind: input, shape index: {}]
  %s6 = inlined_call_operand.vmem [shape: bf16[8,8,128], index: 6, kind: output, shape index: {0}]
  %s7 = inlined_call_operand.vmem [shape: f32[8,128], index: 7, kind: output, shape index: {1}]
  %s8 = inlined_call_operand.vmem [shape: f32[8,128], index: 8, kind: output, shape index: {2}]
  %9 = xla_tuple %s6, %s7, %s8
  %s10 = sld [smem:[#allocation0]]
  $region70: #{cell_lstm_forward.2} parent=0
    _
  %s12 = ssub.s32 1, %s10
  %s13 = scalar_select 0, %s12, %s10
  $region1: #{cell_lstm_forward.2} parent=0
    #allocation5 [shape = 'u8[16384]{0}', space=vmem, size = 0x4000, scoped, tag = 'input window, operand 3, single buffered']
    #allocation6 [shape = 's32[1]{0}', space=sflag, size = 0x4, scoped, tag = 'scoped memory for cell_lstm_forward.2']
    #allocation7 [shape = 'u8[131072]{0}', space=vmem, size = 0x20000, scoped, tag = 'input window, operand 4, single buffered']
    #allocation8 [shape = 's32[1]{0}', space=sflag, size = 0x4, scoped, tag = 'scoped memory for cell_lstm_forward.2']
    #allocation9 [shape = 'u8[2048]{0}', space=vmem, size = 0x800, scoped, tag = 'input window, operand 5, single buffered']
    %14 = vsyncpa [#allocation6], 0
    %15 = vsyncpa [#allocation8], 0
    // Predicated region
    $region2: #{cell_lstm_forward.2} parent=1 // pred_check
      _
    $region3: #{cell_lstm_forward.2} parent=1 // pred_check_branch
      %17 = sbr.rel (0) target = $region5
    $region4: #{cell_lstm_forward.2} parent=1 // pred_region
      _
    $region5: #{cell_lstm_forward.2} parent=1 // pred_fallthru
      _
    // Predicated region
    $region6: #{cell_lstm_forward.2} parent=1 // pred_check
      _
    $region7: #{cell_lstm_forward.2} parent=1 // pred_check_branch
      %19 = sbr.rel (0) target = $region9
    $region8: #{cell_lstm_forward.2} parent=1 // pred_region
      _
    $region9: #{cell_lstm_forward.2} parent=1 // pred_fallthru
      _
    // Predicated region
    $region10: #{cell_lstm_forward.2} parent=1 // pred_check
      _
    $region11: #{cell_lstm_forward.2} parent=1 // pred_check_branch
      %21 = sbr.rel (0) target = $region13
    $region12: #{cell_lstm_forward.2} parent=1 // pred_region
      _
    $region13: #{cell_lstm_forward.2} parent=1 // pred_fallthru
      _
    // Predicated region
    $region14: #{cell_lstm_forward.2} parent=1 // pred_check
      _
    $region15: #{cell_lstm_forward.2} parent=1 // pred_check_branch
      %23 = sbr.rel (0) target = $region17
    $region16: #{cell_lstm_forward.2} parent=1 // pred_region
      %s25 = ssub.s32 512, 512
      %26 = vsyncadd [#allocation6], %s25
      %s27 = sshll.u32 [#allocation5], 4
      %s28 = int_to_ptr.vmem [resolvable:$true] %s27
      %33 = dma.hbm_to_vmem [thread:$0]  %s3, 512, %s28, [#allocation6], 256, 256, 16
    $region17: #{cell_lstm_forward.2} parent=1 // pred_fallthru
      _
    // Predicated region
    $region18: #{cell_lstm_forward.2} parent=1 // pred_check
      _
    $region19: #{cell_lstm_forward.2} parent=1 // pred_check_branch
      %35 = sbr.rel (0) target = $region21
    $region20: #{cell_lstm_forward.2} parent=1 // pred_region
      %s37 = ssub.s32 4096, 4096
      %38 = vsyncadd [#allocation8], %s37
      %s39 = sshll.u32 [#allocation7], 4
      %s40 = int_to_ptr.vmem [resolvable:$true] %s39
      %45 = dma.hbm_to_vmem [thread:$0]  %s4, 4096, %s40, [#allocation8], 256, 256, 16
    $region21: #{cell_lstm_forward.2} parent=1 // pred_fallthru
      _
    // Predicated region
    $region22: #{cell_lstm_forward.2} parent=1 // pred_check
      _
    $region23: #{cell_lstm_forward.2} parent=1 // pred_check_branch
      %47 = sbr.rel (0) target = $region25
    $region24: #{cell_lstm_forward.2} parent=1 // pred_region
      %s49 = ssub.s32 64, 64
      %50 = vsyncadd [#allocation8], %s49
      %s52 = sshll.u32 [#allocation9], 4
      %s53 = int_to_ptr.vmem [resolvable:$true] %s52
      %55 = dma.hbm_to_vmem [thread:$0]  %s5, 64, %s53, [#allocation8]
    $region25: #{cell_lstm_forward.2} parent=1 // pred_fallthru
      _
    // Predicated region
    $region26: #{cell_lstm_forward.2} parent=1 // pred_check
      _
    $region27: #{cell_lstm_forward.2} parent=1 // pred_check_branch
      %57 = sbr.rel (0) target = $region29
    $region28: #{cell_lstm_forward.2} parent=1 // pred_region
      %58 = dma.done [#allocation6], 512
    $region29: #{cell_lstm_forward.2} parent=1 // pred_fallthru
      _
    // Predicated region
    $region30: #{cell_lstm_forward.2} parent=1 // pred_check
      _
    $region31: #{cell_lstm_forward.2} parent=1 // pred_check_branch
      %60 = sbr.rel (0) target = $region33
    $region32: #{cell_lstm_forward.2} parent=1 // pred_region
      %61 = dma.done [#allocation8], 4096
    $region33: #{cell_lstm_forward.2} parent=1 // pred_fallthru
      _
    // Predicated region
    $region34: #{cell_lstm_forward.2} parent=1 // pred_check
      _
    $region35: #{cell_lstm_forward.2} parent=1 // pred_check_branch
      %63 = sbr.rel (0) target = $region37
    $region36: #{cell_lstm_forward.2} parent=1 // pred_region
      %64 = dma.done [#allocation8], 64
    $region37: #{cell_lstm_forward.2} parent=1 // pred_fallthru
      _
    %p66 = scmp.eq.s32.totalorder 0, 0
    // Predicated region
    $region38: #{cell_lstm_forward.2} parent=1 // pred_check
      %p67 = pneg %p66
    $region39: #{cell_lstm_forward.2} parent=1 // pred_check_branch
      %69 = sbr.rel (%p67) target = $region41
    $region40: #{cell_lstm_forward.2} parent=1 // pred_region
      %v70 = vld [vmem:[%s1] sm:$0xff]
      %71 = vst [vmem:[#allocation2] sm:$0xff] %v70
      %v72 = vld [vmem:[%s2] sm:$0xff]
      %73 = vst [vmem:[#allocation3] sm:$0xff] %v72
    $region41: #{cell_lstm_forward.2} parent=1 // pred_fallthru
      _
    %v74 = vld [vmem:[%s0] sm:$0xf]
    %v75 = vld [vmem:[%s0 + $0x4] sm:$0xf]
    %v76 = vld [vmem:[%s0 + $0x8] sm:$0xf]
    %v77 = vld [vmem:[%s0 + $0xc] sm:$0xf]
    %v78 = vld [vmem:[%s0 + $0x10] sm:$0xf]
    %v79 = vld [vmem:[%s0 + $0x14] sm:$0xf]
    %v80 = vld [vmem:[%s0 + $0x18] sm:$0xf]
    %v81 = vld [vmem:[%s0 + $0x1c] sm:$0xf]
    %v82 = vld [vmem:[#allocation5] sm:$0xff]
    %v83 = vld [vmem:[#allocation5 + $0x8] sm:$0xff]
    %v84 = vld [vmem:[#allocation5 + $0x10] sm:$0xff]
    %v85 = vld [vmem:[#allocation5 + $0x18] sm:$0xff]
    %v94 = vunpack.c.l.b16 %v74
    %v95 = vunpack.c.l.b16 %v75
    %v96 = vunpack.c.l.b16 %v76
    %v97 = vunpack.c.l.b16 %v77
    %v98 = vunpack.c.l.b16 %v78
    %v99 = vunpack.c.l.b16 %v79
    %v100 = vunpack.c.l.b16 %v80
    %v101 = vunpack.c.l.b16 %v81
    %v102 = vpack.c.b16 %v95, %v94
    %v103 = vpack.c.b16 %v97, %v96
    %v104 = vpack.c.b16 %v99, %v98
    %v105 = vpack.c.b16 %v101, %v100
    %v110 = vunpack.c.l.b16 %v82
    %v111 = vunpack.c.h.b16 %v82
    %v112 = vunpack.c.l.b16 %v83
    %v113 = vunpack.c.h.b16 %v83
    %v114 = vunpack.c.l.b16 %v84
    %v115 = vunpack.c.h.b16 %v84
    %v116 = vunpack.c.l.b16 %v85
    %v117 = vunpack.c.h.b16 %v85
    %v118 = vpack.c.b16 %v114, %v110
    %v119 = vpack.c.b16 %v115, %v111
    %v120 = vpack.c.b16 %v116, %v112
    %v121 = vpack.c.b16 %v117, %v113
    %vm126 = vcmask 130048
    %v128 = vsel %vm126, %v102, 0
    %v131 = vsel %vm126, %v103, 0
    %v134 = vsel %vm126, %v104, 0
    %v137 = vsel %vm126, %v105, 0
    %139 = vmatprep.subr.bf16.mxu0 0
    %140 = vmatpush1.bf16.msra.mxu0 0
    %141 = vmatprep.subr.bf16.mxu0 0
    %142 = vmatpush1.bf16.msra.mxu0 0
    %143 = vmatprep.subr.bf16.mxu0 0
    %144 = vmatpush1.bf16.msra.mxu0 0
    %145 = vmatprep.subr.bf16.mxu0 0
    %146 = vmatpush1.bf16.msra.mxu0 0
    %147 = vmatprep.subr.bf16.mxu0 0
    %148 = vmatpush1.bf16.msra.mxu0 0
    %149 = vmatprep.subr.bf16.mxu0 0
    %150 = vmatpush1.bf16.msra.mxu0 0
    %151 = vmatprep.subr.bf16.mxu0 0
    %152 = vmatpush1.bf16.msra.mxu0 0
    %153 = vmatprep.subr.bf16.mxu0 %v119
    %154 = vmatpush1.bf16.msra.mxu0 %v118
    %155 = vmatprep.subr.bf16.mxu0 0
    %156 = vmatpush2.bf16.msra.mxu0 0
    %157 = vmatprep.subr.bf16.mxu0 0
    %158 = vmatpush2.bf16.msra.mxu0 0
    %159 = vmatprep.subr.bf16.mxu0 0
    %160 = vmatpush2.bf16.msra.mxu0 0
    %161 = vmatprep.subr.bf16.mxu0 0
    %162 = vmatpush2.bf16.msra.mxu0 0
    %163 = vmatprep.subr.bf16.mxu0 0
    %164 = vmatpush2.bf16.msra.mxu0 0
    %165 = vmatprep.subr.bf16.mxu0 0
    %166 = vmatpush2.bf16.msra.mxu0 0
    %167 = vmatprep.subr.bf16.mxu0 0
    %168 = vmatpush2.bf16.msra.mxu0 0
    %169 = vmatprep.subr.bf16.mxu0 0
    %170 = vmatpush2.bf16.msra.mxu0 0
    %171 = vmatprep.mubr.bf16.mxu0 0
    %172 = vmatmul.mubr.bf16.gmra.mxu0 %v128
    %v173 = vpop.f32.mrf.mxu0
    %v174 = vadd.f32 0.0, %v173
    %v175 = vpop.f32.mrf.mxu0
    %v176 = vadd.f32 0.0, %v175
    %v177 = vpop.f32.mrf.mxu0
    %v178 = vadd.f32 0.0, %v177
    %v179 = vpop.f32.mrf.mxu0
    %v180 = vadd.f32 0.0, %v179
    %181 = vmatprep.mubr.bf16.mxu0 0
    %182 = vmatmul.mubr.bf16.gmra.mxu0 %v131
    %v183 = vpop.f32.mrf.mxu0
    %v184 = vadd.f32 0.0, %v183
    %v185 = vpop.f32.mrf.mxu0
    %v186 = vadd.f32 0.0, %v185
    %v187 = vpop.f32.mrf.mxu0
    %v188 = vadd.f32 0.0, %v187
    %v189 = vpop.f32.mrf.mxu0
    %v190 = vadd.f32 0.0, %v189
    %191 = vmatprep.mubr.bf16.mxu0 0
    %192 = vmatmul.mubr.bf16.gmra.mxu0 %v134
    %v193 = vpop.f32.mrf.mxu0
    %v194 = vadd.f32 0.0, %v193
    %v195 = vpop.f32.mrf.mxu0
    %v196 = vadd.f32 0.0, %v195
    %v197 = vpop.f32.mrf.mxu0
    %v198 = vadd.f32 0.0, %v197
    %v199 = vpop.f32.mrf.mxu0
    %v200 = vadd.f32 0.0, %v199
    %201 = vmatprep.mubr.bf16.mxu0 0
    %202 = vmatmul.mubr.bf16.gmra.mxu0 %v137
    %v203 = vpop.f32.mrf.mxu0
    %v204 = vadd.f32 0.0, %v203
    %v205 = vpop.f32.mrf.mxu0
    %v206 = vadd.f32 0.0, %v205
    %v207 = vpop.f32.mrf.mxu0
    %v208 = vadd.f32 0.0, %v207
    %v209 = vpop.f32.mrf.mxu0
    %v210 = vadd.f32 0.0, %v209
    %211 = vdwg.mxu0
    %212 = vmatprep.subr.bf16.mxu0 0
    %213 = vmatpush1.bf16.msra.mxu0 0
    %214 = vmatprep.subr.bf16.mxu0 0
    %215 = vmatpush1.bf16.msra.mxu0 0
    %216 = vmatprep.subr.bf16.mxu0 0
    %217 = vmatpush1.bf16.msra.mxu0 0
    %218 = vmatprep.subr.bf16.mxu0 0
    %219 = vmatpush1.bf16.msra.mxu0 0
    %220 = vmatprep.subr.bf16.mxu0 0
    %221 = vmatpush1.bf16.msra.mxu0 0
    %222 = vmatprep.subr.bf16.mxu0 0
    %223 = vmatpush1.bf16.msra.mxu0 0
    %224 = vmatprep.subr.bf16.mxu0 0
    %225 = vmatpush1.bf16.msra.mxu0 0
    %226 = vmatprep.subr.bf16.mxu0 %v121
    %227 = vmatpush1.bf16.msra.mxu0 %v120
    %228 = vmatprep.subr.bf16.mxu0 0
    %229 = vmatpush2.bf16.msra.mxu0 0
    %230 = vmatprep.subr.bf16.mxu0 0
    %231 = vmatpush2.bf16.msra.mxu0 0
    %232 = vmatprep.subr.bf16.mxu0 0
    %233 = vmatpush2.bf16.msra.mxu0 0
    %234 = vmatprep.subr.bf16.mxu0 0
    %235 = vmatpush2.bf16.msra.mxu0 0
    %236 = vmatprep.subr.bf16.mxu0 0
    %237 = vmatpush2.bf16.msra.mxu0 0
    %238 = vmatprep.subr.bf16.mxu0 0
    %239 = vmatpush2.bf16.msra.mxu0 0
    %240 = vmatprep.subr.bf16.mxu0 0
    %241 = vmatpush2.bf16.msra.mxu0 0
    %242 = vmatprep.subr.bf16.mxu0 0
    %243 = vmatpush2.bf16.msra.mxu0 0
    %244 = vmatprep.mubr.bf16.mxu0 0
    %245 = vmatmul.mubr.bf16.gmra.mxu0 %v128
    %v246 = vpop.f32.mrf.mxu0
    %v247 = vadd.f32 0.0, %v246
    %v248 = vpop.f32.mrf.mxu0
    %v249 = vadd.f32 0.0, %v248
    %v250 = vpop.f32.mrf.mxu0
    %v251 = vadd.f32 0.0, %v250
    %v252 = vpop.f32.mrf.mxu0
    %v253 = vadd.f32 0.0, %v252
    %254 = vmatprep.mubr.bf16.mxu0 0
    %255 = vmatmul.mubr.bf16.gmra.mxu0 %v131
    %v256 = vpop.f32.mrf.mxu0
    %v257 = vadd.f32 0.0, %v256
    %v258 = vpop.f32.mrf.mxu0
    %v259 = vadd.f32 0.0, %v258
    %v260 = vpop.f32.mrf.mxu0
    %v261 = vadd.f32 0.0, %v260
    %v262 = vpop.f32.mrf.mxu0
    %v263 = vadd.f32 0.0, %v262
    %264 = vmatprep.mubr.bf16.mxu0 0
    %265 = vmatmul.mubr.bf16.gmra.mxu0 %v134
    %v266 = vpop.f32.mrf.mxu0
    %v267 = vadd.f32 0.0, %v266
    %v268 = vpop.f32.mrf.mxu0
    %v269 = vadd.f32 0.0, %v268
    %v270 = vpop.f32.mrf.mxu0
    %v271 = vadd.f32 0.0, %v270
    %v272 = vpop.f32.mrf.mxu0
    %v273 = vadd.f32 0.0, %v272
    %274 = vmatprep.mubr.bf16.mxu0 0
    %275 = vmatmul.mubr.bf16.gmra.mxu0 %v137
    %v276 = vpop.f32.mrf.mxu0
    %v277 = vadd.f32 0.0, %v276
    %v278 = vpop.f32.mrf.mxu0
    %v279 = vadd.f32 0.0, %v278
    %v280 = vpop.f32.mrf.mxu0
    %v281 = vadd.f32 0.0, %v280
    %v282 = vpop.f32.mrf.mxu0
    %v283 = vadd.f32 0.0, %v282
    %284 = vdwg.mxu0
    %v285 = vld [vmem:[#allocation9] sm:$0xf]
    %v287 = vlaneseq
    %v288 = vshrl.u32 %v287, 7
    %v289 = vsub.s32 0, %v288
    %v290 = vrot.slane %v285, %v289
    %v291 = vlaneseq
    %v292 = vshrl.u32 %v291, 7
    %v293 = vsub.s32 1, %v292
    %v294 = vrot.slane %v285, %v293
    %v295 = vlaneseq
    %v296 = vshrl.u32 %v295, 7
    %v297 = vsub.s32 2, %v296
    %v298 = vrot.slane %v285, %v297
    %v299 = vlaneseq
    %v300 = vshrl.u32 %v299, 7
    %v301 = vsub.s32 3, %v300
    %v302 = vrot.slane %v285, %v301
    %v307 = vadd.f32 %v174, %v290
    %v308 = vadd.f32 %v176, %v294
    %v309 = vadd.f32 %v247, %v298
    %v310 = vadd.f32 %v249, %v302
    %v311 = vadd.f32 %v178, %v290
    %v312 = vadd.f32 %v180, %v294
    %v313 = vadd.f32 %v251, %v298
    %v314 = vadd.f32 %v253, %v302
    %v315 = vadd.f32 %v184, %v290
    %v316 = vadd.f32 %v186, %v294
    %v317 = vadd.f32 %v257, %v298
    %v318 = vadd.f32 %v259, %v302
    %v319 = vadd.f32 %v188, %v290
    %v320 = vadd.f32 %v190, %v294
    %v321 = vadd.f32 %v261, %v298
    %v322 = vadd.f32 %v263, %v302
    %v323 = vadd.f32 %v194, %v290
    %v324 = vadd.f32 %v196, %v294
    %v325 = vadd.f32 %v267, %v298
    %v326 = vadd.f32 %v269, %v302
    %v327 = vadd.f32 %v198, %v290
    %v328 = vadd.f32 %v200, %v294
    %v329 = vadd.f32 %v271, %v298
    %v330 = vadd.f32 %v273, %v302
    %v331 = vadd.f32 %v204, %v290
    %v332 = vadd.f32 %v206, %v294
    %v333 = vadd.f32 %v277, %v298
    %v334 = vadd.f32 %v279, %v302
    %v335 = vadd.f32 %v208, %v290
    %v336 = vadd.f32 %v210, %v294
    %v337 = vadd.f32 %v281, %v298
    %v338 = vadd.f32 %v283, %v302
    %339 = vst [vmem:[#allocation4] sm:$0xff] %v307
    %340 = vst [vmem:[#allocation4 + $0x8] sm:$0xff] %v308
    %341 = vst [vmem:[#allocation4 + $0x10] sm:$0xff] %v309
    %342 = vst [vmem:[#allocation4 + $0x18] sm:$0xff] %v310
    %343 = vst [vmem:[#allocation4 + $0x20] sm:$0xff] %v311
    %344 = vst [vmem:[#allocation4 + $0x28] sm:$0xff] %v312
    %345 = vst [vmem:[#allocation4 + $0x30] sm:$0xff] %v313
    %346 = vst [vmem:[#allocation4 + $0x38] sm:$0xff] %v314
    %347 = vst [vmem:[#allocation4 + $0x40] sm:$0xff] %v315
    %348 = vst [vmem:[#allocation4 + $0x48] sm:$0xff] %v316
    %349 = vst [vmem:[#allocation4 + $0x50] sm:$0xff] %v317
    %350 = vst [vmem:[#allocation4 + $0x58] sm:$0xff] %v318
    %351 = vst [vmem:[#allocation4 + $0x60] sm:$0xff] %v319
    %352 = vst [vmem:[#allocation4 + $0x68] sm:$0xff] %v320
    %353 = vst [vmem:[#allocation4 + $0x70] sm:$0xff] %v321
    %354 = vst [vmem:[#allocation4 + $0x78] sm:$0xff] %v322
    %355 = vst [vmem:[#allocation4 + $0x80] sm:$0xff] %v323
    %356 = vst [vmem:[#allocation4 + $0x88] sm:$0xff] %v324
    %357 = vst [vmem:[#allocation4 + $0x90] sm:$0xff] %v325
    %358 = vst [vmem:[#allocation4 + $0x98] sm:$0xff] %v326
    %359 = vst [vmem:[#allocation4 + $0xa0] sm:$0xff] %v327
    %360 = vst [vmem:[#allocation4 + $0xa8] sm:$0xff] %v328
    %361 = vst [vmem:[#allocation4 + $0xb0] sm:$0xff] %v329
    %362 = vst [vmem:[#allocation4 + $0xb8] sm:$0xff] %v330
    %363 = vst [vmem:[#allocation4 + $0xc0] sm:$0xff] %v331
    %364 = vst [vmem:[#allocation4 + $0xc8] sm:$0xff] %v332
    %365 = vst [vmem:[#allocation4 + $0xd0] sm:$0xff] %v333
    %366 = vst [vmem:[#allocation4 + $0xd8] sm:$0xff] %v334
    %367 = vst [vmem:[#allocation4 + $0xe0] sm:$0xff] %v335
    %368 = vst [vmem:[#allocation4 + $0xe8] sm:$0xff] %v336
    %369 = vst [vmem:[#allocation4 + $0xf0] sm:$0xff] %v337
    %370 = vst [vmem:[#allocation4 + $0xf8] sm:$0xff] %v338
    %v371 = vld [vmem:[#allocation2] sm:$0xff]
    %v372 = vld [vmem:[#allocation3] sm:$0xff]
    %v373 = vpack.c.bf16 %v371, %v371
    %v374 = vld [vmem:[#allocation7] sm:$0xff]
    %v375 = vld [vmem:[#allocation7 + $0x8] sm:$0xff]
    %v376 = vld [vmem:[#allocation7 + $0x10] sm:$0xff]
    %v377 = vld [vmem:[#allocation7 + $0x18] sm:$0xff]
    %v378 = vld [vmem:[#allocation7 + $0x20] sm:$0xff]
    %v379 = vld [vmem:[#allocation7 + $0x28] sm:$0xff]
    %v380 = vld [vmem:[#allocation7 + $0x30] sm:$0xff]
    %v381 = vld [vmem:[#allocation7 + $0x38] sm:$0xff]
    %v382 = vld [vmem:[#allocation7 + $0x40] sm:$0xff]
    %v383 = vld [vmem:[#allocation7 + $0x48] sm:$0xff]
    %v384 = vld [vmem:[#allocation7 + $0x50] sm:$0xff]
    %v385 = vld [vmem:[#allocation7 + $0x58] sm:$0xff]
    %v386 = vld [vmem:[#allocation7 + $0x60] sm:$0xff]
    %v387 = vld [vmem:[#allocation7 + $0x68] sm:$0xff]
    %v388 = vld [vmem:[#allocation7 + $0x70] sm:$0xff]
    %v389 = vld [vmem:[#allocation7 + $0x78] sm:$0xff]
    %v390 = vld [vmem:[#allocation7 + $0x80] sm:$0xff]
    %v391 = vld [vmem:[#allocation7 + $0x88] sm:$0xff]
    %v392 = vld [vmem:[#allocation7 + $0x90] sm:$0xff]
    %v393 = vld [vmem:[#allocation7 + $0x98] sm:$0xff]
    %v394 = vld [vmem:[#allocation7 + $0xa0] sm:$0xff]
    %v395 = vld [vmem:[#allocation7 + $0xa8] sm:$0xff]
    %v396 = vld [vmem:[#allocation7 + $0xb0] sm:$0xff]
    %v397 = vld [vmem:[#allocation7 + $0xb8] sm:$0xff]
    %v398 = vld [vmem:[#allocation7 + $0xc0] sm:$0xff]
    %v399 = vld [vmem:[#allocation7 + $0xc8] sm:$0xff]
    %v400 = vld [vmem:[#allocation7 + $0xd0] sm:$0xff]
    %v401 = vld [vmem:[#allocation7 + $0xd8] sm:$0xff]
    %v402 = vld [vmem:[#allocation7 + $0xe0] sm:$0xff]
    %v403 = vld [vmem:[#allocation7 + $0xe8] sm:$0xff]
    %v404 = vld [vmem:[#allocation7 + $0xf0] sm:$0xff]
    %v405 = vld [vmem:[#allocation7 + $0xf8] sm:$0xff]
    %v438 = vunpack.c.l.b16 %v374
    %v439 = vunpack.c.h.b16 %v374
    %v440 = vunpack.c.l.b16 %v375
    %v441 = vunpack.c.h.b16 %v375
    %v442 = vunpack.c.l.b16 %v376
    %v443 = vunpack.c.h.b16 %v376
    %v444 = vunpack.c.l.b16 %v377
    %v445 = vunpack.c.h.b16 %v377
    %v446 = vunpack.c.l.b16 %v378
    %v447 = vunpack.c.h.b16 %v378
    %v448 = vunpack.c.l.b16 %v379
    %v449 = vunpack.c.h.b16 %v379
    %v450 = vunpack.c.l.b16 %v380
    %v451 = vunpack.c.h.b16 %v380
    %v452 = vunpack.c.l.b16 %v381
    %v453 = vunpack.c.h.b16 %v381
    %v454 = vunpack.c.l.b16 %v382
    %v455 = vunpack.c.h.b16 %v382
    %v456 = vunpack.c.l.b16 %v383
    %v457 = vunpack.c.h.b16 %v383
    %v458 = vunpack.c.l.b16 %v384
    %v459 = vunpack.c.h.b16 %v384
    %v460 = vunpack.c.l.b16 %v385
    %v461 = vunpack.c.h.b16 %v385
    %v462 = vunpack.c.l.b16 %v386
    %v463 = vunpack.c.h.b16 %v386
    %v464 = vunpack.c.l.b16 %v387
    %v465 = vunpack.c.h.b16 %v387
    %v466 = vunpack.c.l.b16 %v388
    %v467 = vunpack.c.h.b16 %v388
    %v468 = vunpack.c.l.b16 %v389
    %v469 = vunpack.c.h.b16 %v389
    %v470 = vunpack.c.l.b16 %v390
    %v471 = vunpack.c.h.b16 %v390
    %v472 = vunpack.c.l.b16 %v391
    %v473 = vunpack.c.h.b16 %v391
    %v474 = vunpack.c.l.b16 %v392
    %v475 = vunpack.c.h.b16 %v392
    %v476 = vunpack.c.l.b16 %v393
    %v477 = vunpack.c.h.b16 %v393
    %v478 = vunpack.c.l.b16 %v394
    %v479 = vunpack.c.h.b16 %v394
    %v480 = vunpack.c.l.b16 %v395
    %v481 = vunpack.c.h.b16 %v395
    %v482 = vunpack.c.l.b16 %v396
    %v483 = vunpack.c.h.b16 %v396
    %v484 = vunpack.c.l.b16 %v397
    %v485 = vunpack.c.h.b16 %v397
    %v486 = vunpack.c.l.b16 %v398
    %v487 = vunpack.c.h.b16 %v398
    %v488 = vunpack.c.l.b16 %v399
    %v489 = vunpack.c.h.b16 %v399
    %v490 = vunpack.c.l.b16 %v400
    %v491 = vunpack.c.h.b16 %v400
    %v492 = vunpack.c.l.b16 %v401
    %v493 = vunpack.c.h.b16 %v401
    %v494 = vunpack.c.l.b16 %v402
    %v495 = vunpack.c.h.b16 %v402
    %v496 = vunpack.c.l.b16 %v403
    %v497 = vunpack.c.h.b16 %v403
    %v498 = vunpack.c.l.b16 %v404
    %v499 = vunpack.c.h.b16 %v404
    %v500 = vunpack.c.l.b16 %v405
    %v501 = vunpack.c.h.b16 %v405
    %v502 = vpack.c.b16 %v442, %v438
    %v503 = vpack.c.b16 %v443, %v439
    %v504 = vpack.c.b16 %v444, %v440
    %v505 = vpack.c.b16 %v445, %v441
    %v506 = vpack.c.b16 %v450, %v446
    %v507 = vpack.c.b16 %v451, %v447
    %v508 = vpack.c.b16 %v452, %v448
    %v509 = vpack.c.b16 %v453, %v449
    %v510 = vpack.c.b16 %v458, %v454
    %v511 = vpack.c.b16 %v459, %v455
    %v512 = vpack.c.b16 %v460, %v456
    %v513 = vpack.c.b16 %v461, %v457
    %v514 = vpack.c.b16 %v466, %v462
    %v515 = vpack.c.b16 %v467, %v463
    %v516 = vpack.c.b16 %v468, %v464
    %v517 = vpack.c.b16 %v469, %v465
    %v518 = vpack.c.b16 %v474, %v470
    %v519 = vpack.c.b16 %v475, %v471
    %v520 = vpack.c.b16 %v476, %v472
    %v521 = vpack.c.b16 %v477, %v473
    %v522 = vpack.c.b16 %v482, %v478
    %v523 = vpack.c.b16 %v483, %v479
    %v524 = vpack.c.b16 %v484, %v480
    %v525 = vpack.c.b16 %v485, %v481
    %v526 = vpack.c.b16 %v490, %v486
    %v527 = vpack.c.b16 %v491, %v487
    %v528 = vpack.c.b16 %v492, %v488
    %v529 = vpack.c.b16 %v493, %v489
    %v530 = vpack.c.b16 %v498, %v494
    %v531 = vpack.c.b16 %v499, %v495
    %v532 = vpack.c.b16 %v500, %v496
    %v533 = vpack.c.b16 %v501, %v497
    %566 = vmatprep.subr.bf16.mxu0 %v531
    %567 = vmatpush1.bf16.msra.mxu0 %v530
    %568 = vmatprep.subr.bf16.mxu0 %v527
    %569 = vmatpush1.bf16.msra.mxu0 %v526
    %570 = vmatprep.subr.bf16.mxu0 %v523
    %571 = vmatpush1.bf16.msra.mxu0 %v522
    %572 = vmatprep.subr.bf16.mxu0 %v519
    %573 = vmatpush1.bf16.msra.mxu0 %v518
    %574 = vmatprep.subr.bf16.mxu0 %v515
    %575 = vmatpush1.bf16.msra.mxu0 %v514
    %576 = vmatprep.subr.bf16.mxu0 %v511
    %577 = vmatpush1.bf16.msra.mxu0 %v510
    %578 = vmatprep.subr.bf16.mxu0 %v507
    %579 = vmatpush1.bf16.msra.mxu0 %v506
    %580 = vmatprep.subr.bf16.mxu0 %v503
    %581 = vmatpush1.bf16.msra.mxu0 %v502
    %582 = vmatprep.subr.bf16.mxu0 0
    %583 = vmatpush2.bf16.msra.mxu0 0
    %584 = vmatprep.subr.bf16.mxu0 0
    %585 = vmatpush2.bf16.msra.mxu0 0
    %586 = vmatprep.subr.bf16.mxu0 0
    %587 = vmatpush2.bf16.msra.mxu0 0
    %588 = vmatprep.subr.bf16.mxu0 0
    %589 = vmatpush2.bf16.msra.mxu0 0
    %590 = vmatprep.subr.bf16.mxu0 0
    %591 = vmatpush2.bf16.msra.mxu0 0
    %592 = vmatprep.subr.bf16.mxu0 0
    %593 = vmatpush2.bf16.msra.mxu0 0
    %594 = vmatprep.subr.bf16.mxu0 0
    %595 = vmatpush2.bf16.msra.mxu0 0
    %596 = vmatprep.subr.bf16.mxu0 0
    %597 = vmatpush2.bf16.msra.mxu0 0
    %598 = vmatprep.mubr.bf16.mxu0 0
    %599 = vmatmul.mubr.bf16.gmra.mxu0 %v373
    %v600 = vpop.f32.mrf.mxu0
    %v601 = vadd.f32 0.0, %v600
    %v602 = vpop.f32.mrf.mxu0
    %v603 = vadd.f32 0.0, %v602
    %v604 = vpop.f32.mrf.mxu0
    %v605 = vpop.f32.mrf.mxu0
    %606 = vdwg.mxu0
    %607 = vmatprep.subr.bf16.mxu0 %v533
    %608 = vmatpush1.bf16.msra.mxu0 %v532
    %609 = vmatprep.subr.bf16.mxu0 %v529
    %610 = vmatpush1.bf16.msra.mxu0 %v528
    %611 = vmatprep.subr.bf16.mxu0 %v525
    %612 = vmatpush1.bf16.msra.mxu0 %v524
    %613 = vmatprep.subr.bf16.mxu0 %v521
    %614 = vmatpush1.bf16.msra.mxu0 %v520
    %615 = vmatprep.subr.bf16.mxu0 %v517
    %616 = vmatpush1.bf16.msra.mxu0 %v516
    %617 = vmatprep.subr.bf16.mxu0 %v513
    %618 = vmatpush1.bf16.msra.mxu0 %v512
    %619 = vmatprep.subr.bf16.mxu0 %v509
    %620 = vmatpush1.bf16.msra.mxu0 %v508
    %621 = vmatprep.subr.bf16.mxu0 %v505
    %622 = vmatpush1.bf16.msra.mxu0 %v504
    %623 = vmatprep.subr.bf16.mxu0 0
    %624 = vmatpush2.bf16.msra.mxu0 0
    %625 = vmatprep.subr.bf16.mxu0 0
    %626 = vmatpush2.bf16.msra.mxu0 0
    %627 = vmatprep.subr.bf16.mxu0 0
    %628 = vmatpush2.bf16.msra.mxu0 0
    %629 = vmatprep.subr.bf16.mxu0 0
    %630 = vmatpush2.bf16.msra.mxu0 0
    %631 = vmatprep.subr.bf16.mxu0 0
    %632 = vmatpush2.bf16.msra.mxu0 0
    %633 = vmatprep.subr.bf16.mxu0 0
    %634 = vmatpush2.bf16.msra.mxu0 0
    %635 = vmatprep.subr.bf16.mxu0 0
    %636 = vmatpush2.bf16.msra.mxu0 0
    %637 = vmatprep.subr.bf16.mxu0 0
    %638 = vmatpush2.bf16.msra.mxu0 0
    %639 = vmatprep.mubr.bf16.mxu0 0
    %640 = vmatmul.mubr.bf16.gmra.mxu0 %v373
    %v641 = vpop.f32.mrf.mxu0
    %v642 = vadd.f32 0.0, %v641
    %v643 = vpop.f32.mrf.mxu0
    %v644 = vadd.f32 0.0, %v643
    %v645 = vpop.f32.mrf.mxu0
    %v646 = vpop.f32.mrf.mxu0
    %647 = vdwg.mxu0
    %v648 = vld [vmem:[#allocation4] sm:$0xff]
    %v649 = vadd.f32 %v601, %v648
    %v650 = vxor.u32 %v649, 2147483648
    %v651 = vmul.f32 %v650, 1.442695
    %v652 = vpow.pop %v651
    %v653 = vadd.f32 %v652, 1.0
    %v654 = vrcp.pop %v653
    %v655 = vmul.f32 1.0, %v654
    %v656 = vld [vmem:[#allocation4 + $0x8] sm:$0xff]
    %v657 = vadd.f32 %v603, %v656
    %v658 = vxor.u32 %v657, 2147483648
    %v659 = vmul.f32 %v658, 1.442695
    %v660 = vpow.pop %v659
    %v661 = vadd.f32 %v660, 1.0
    %v662 = vrcp.pop %v661
    %v663 = vmul.f32 1.0, %v662
    %v664 = vld [vmem:[#allocation4 + $0x10] sm:$0xff]
    %v665 = vadd.f32 %v642, %v664
    %v666 = vtanh.pop %v665
    %v667 = vld [vmem:[#allocation4 + $0x18] sm:$0xff]
    %v668 = vadd.f32 %v644, %v667
    %v669 = vxor.u32 %v668, 2147483648
    %v670 = vmul.f32 %v669, 1.442695
    %v671 = vpow.pop %v670
    %v672 = vadd.f32 %v671, 1.0
    %v673 = vrcp.pop %v672
    %v674 = vmul.f32 1.0, %v673
    %v675 = vmul.f32 %v663, %v372
    %v676 = vmul.f32 %v655, %v666
    %v677 = vadd.f32 %v675, %v676
    %v678 = vtanh.pop %v677
    %v679 = vmul.f32 %v674, %v678
    %v680 = vpack.c.bf16 %v679, %v679
    %681 = vst [vmem:[%s6] sm:$0xf] %v680
    %v682 = vld [vmem:[#allocation7] sm:$0xff]
    %v683 = vld [vmem:[#allocation7 + $0x8] sm:$0xff]
    %v684 = vld [vmem:[#allocation7 + $0x10] sm:$0xff]
    %v685 = vld [vmem:[#allocation7 + $0x18] sm:$0xff]
    %v686 = vld [vmem:[#allocation7 + $0x20] sm:$0xff]
    %v687 = vld [vmem:[#allocation7 + $0x28] sm:$0xff]
    %v688 = vld [vmem:[#allocation7 + $0x30] sm:$0xff]
    %v689 = vld [vmem:[#allocation7 + $0x38] sm:$0xff]
    %v690 = vld [vmem:[#allocation7 + $0x40] sm:$0xff]
    %v691 = vld [vmem:[#allocation7 + $0x48] sm:$0xff]
    %v692 = vld [vmem:[#allocation7 + $0x50] sm:$0xff]
    %v693 = vld [vmem:[#allocation7 + $0x58] sm:$0xff]
    %v694 = vld [vmem:[#allocation7 + $0x60] sm:$0xff]
    %v695 = vld [vmem:[#allocation7 + $0x68] sm:$0xff]
    %v696 = vld [vmem:[#allocation7 + $0x70] sm:$0xff]
    %v697 = vld [vmem:[#allocation7 + $0x78] sm:$0xff]
    %v698 = vld [vmem:[#allocation7 + $0x80] sm:$0xff]
    %v699 = vld [vmem:[#allocation7 + $0x88] sm:$0xff]
    %v700 = vld [vmem:[#allocation7 + $0x90] sm:$0xff]
    %v701 = vld [vmem:[#allocation7 + $0x98] sm:$0xff]
    %v702 = vld [vmem:[#allocation7 + $0xa0] sm:$0xff]
    %v703 = vld [vmem:[#allocation7 + $0xa8] sm:$0xff]
    %v704 = vld [vmem:[#allocation7 + $0xb0] sm:$0xff]
    %v705 = vld [vmem:[#allocation7 + $0xb8] sm:$0xff]
    %v706 = vld [vmem:[#allocation7 + $0xc0] sm:$0xff]
    %v707 = vld [vmem:[#allocation7 + $0xc8] sm:$0xff]
    %v708 = vld [vmem:[#allocation7 + $0xd0] sm:$0xff]
    %v709 = vld [vmem:[#allocation7 + $0xd8] sm:$0xff]
    %v710 = vld [vmem:[#allocation7 + $0xe0] sm:$0xff]
    %v711 = vld [vmem:[#allocation7 + $0xe8] sm:$0xff]
    %v712 = vld [vmem:[#allocation7 + $0xf0] sm:$0xff]
    %v713 = vld [vmem:[#allocation7 + $0xf8] sm:$0xff]
    %v746 = vunpack.c.l.b16 %v682
    %v747 = vunpack.c.h.b16 %v682
    %v748 = vunpack.c.l.b16 %v683
    %v749 = vunpack.c.h.b16 %v683
    %v750 = vunpack.c.l.b16 %v684
    %v751 = vunpack.c.h.b16 %v684
    %v752 = vunpack.c.l.b16 %v685
    %v753 = vunpack.c.h.b16 %v685
    %v754 = vunpack.c.l.b16 %v686
    %v755 = vunpack.c.h.b16 %v686
    %v756 = vunpack.c.l.b16 %v687
    %v757 = vunpack.c.h.b16 %v687
    %v758 = vunpack.c.l.b16 %v688
    %v759 = vunpack.c.h.b16 %v688
    %v760 = vunpack.c.l.b16 %v689
    %v761 = vunpack.c.h.b16 %v689
    %v762 = vunpack.c.l.b16 %v690
    %v763 = vunpack.c.h.b16 %v690
    %v764 = vunpack.c.l.b16 %v691
    %v765 = vunpack.c.h.b16 %v691
    %v766 = vunpack.c.l.b16 %v692
    %v767 = vunpack.c.h.b16 %v692
    %v768 = vunpack.c.l.b16 %v693
    %v769 = vunpack.c.h.b16 %v693
    %v770 = vunpack.c.l.b16 %v694
    %v771 = vunpack.c.h.b16 %v694
    %v772 = vunpack.c.l.b16 %v695
    %v773 = vunpack.c.h.b16 %v695
    %v774 = vunpack.c.l.b16 %v696
    %v775 = vunpack.c.h.b16 %v696
    %v776 = vunpack.c.l.b16 %v697
    %v777 = vunpack.c.h.b16 %v697
    %v778 = vunpack.c.l.b16 %v698
    %v779 = vunpack.c.h.b16 %v698
    %v780 = vunpack.c.l.b16 %v699
    %v781 = vunpack.c.h.b16 %v699
    %v782 = vunpack.c.l.b16 %v700
    %v783 = vunpack.c.h.b16 %v700
    %v784 = vunpack.c.l.b16 %v701
    %v785 = vunpack.c.h.b16 %v701
    %v786 = vunpack.c.l.b16 %v702
    %v787 = vunpack.c.h.b16 %v702
    %v788 = vunpack.c.l.b16 %v703
    %v789 = vunpack.c.h.b16 %v703
    %v790 = vunpack.c.l.b16 %v704
    %v791 = vunpack.c.h.b16 %v704
    %v792 = vunpack.c.l.b16 %v705
    %v793 = vunpack.c.h.b16 %v705
    %v794 = vunpack.c.l.b16 %v706
    %v795 = vunpack.c.h.b16 %v706
    %v796 = vunpack.c.l.b16 %v707
    %v797 = vunpack.c.h.b16 %v707
    %v798 = vunpack.c.l.b16 %v708
    %v799 = vunpack.c.h.b16 %v708
    %v800 = vunpack.c.l.b16 %v709
    %v801 = vunpack.c.h.b16 %v709
    %v802 = vunpack.c.l.b16 %v710
    %v803 = vunpack.c.h.b16 %v710
    %v804 = vunpack.c.l.b16 %v711
    %v805 = vunpack.c.h.b16 %v711
    %v806 = vunpack.c.l.b16 %v712
    %v807 = vunpack.c.h.b16 %v712
    %v808 = vunpack.c.l.b16 %v713
    %v809 = vunpack.c.h.b16 %v713
    %v810 = vpack.c.b16 %v750, %v746
    %v811 = vpack.c.b16 %v751, %v747
    %v812 = vpack.c.b16 %v752, %v748
    %v813 = vpack.c.b16 %v753, %v749
    %v814 = vpack.c.b16 %v758, %v754
    %v815 = vpack.c.b16 %v759, %v755
    %v816 = vpack.c.b16 %v760, %v756
    %v817 = vpack.c.b16 %v761, %v757
    %v818 = vpack.c.b16 %v766, %v762
    %v819 = vpack.c.b16 %v767, %v763
    %v820 = vpack.c.b16 %v768, %v764
    %v821 = vpack.c.b16 %v769, %v765
    %v822 = vpack.c.b16 %v774, %v770
    %v823 = vpack.c.b16 %v775, %v771
    %v824 = vpack.c.b16 %v776, %v772
    %v825 = vpack.c.b16 %v777, %v773
    %v826 = vpack.c.b16 %v782, %v778
    %v827 = vpack.c.b16 %v783, %v779
    %v828 = vpack.c.b16 %v784, %v780
    %v829 = vpack.c.b16 %v785, %v781
    %v830 = vpack.c.b16 %v790, %v786
    %v831 = vpack.c.b16 %v791, %v787
    %v832 = vpack.c.b16 %v792, %v788
    %v833 = vpack.c.b16 %v793, %v789
    %v834 = vpack.c.b16 %v798, %v794
    %v835 = vpack.c.b16 %v799, %v795
    %v836 = vpack.c.b16 %v800, %v796
    %v837 = vpack.c.b16 %v801, %v797
    %v838 = vpack.c.b16 %v806, %v802
    %v839 = vpack.c.b16 %v807, %v803
    %v840 = vpack.c.b16 %v808, %v804
    %v841 = vpack.c.b16 %v809, %v805
    %874 = vmatprep.subr.bf16.mxu0 %v839
    %875 = vmatpush1.bf16.msra.mxu0 %v838
    %876 = vmatprep.subr.bf16.mxu0 %v835
    %877 = vmatpush1.bf16.msra.mxu0 %v834
    %878 = vmatprep.subr.bf16.mxu0 %v831
    %879 = vmatpush1.bf16.msra.mxu0 %v830
    %880 = vmatprep.subr.bf16.mxu0 %v827
    %881 = vmatpush1.bf16.msra.mxu0 %v826
    %882 = vmatprep.subr.bf16.mxu0 %v823
    %883 = vmatpush1.bf16.msra.mxu0 %v822
    %884 = vmatprep.subr.bf16.mxu0 %v819
    %885 = vmatpush1.bf16.msra.mxu0 %v818
    %886 = vmatprep.subr.bf16.mxu0 %v815
    %887 = vmatpush1.bf16.msra.mxu0 %v814
    %888 = vmatprep.subr.bf16.mxu0 %v811
    %889 = vmatpush1.bf16.msra.mxu0 %v810
    %890 = vmatprep.subr.bf16.mxu0 0
    %891 = vmatpush2.bf16.msra.mxu0 0
    %892 = vmatprep.subr.bf16.mxu0 0
    %893 = vmatpush2.bf16.msra.mxu0 0
    %894 = vmatprep.subr.bf16.mxu0 0
    %895 = vmatpush2.bf16.msra.mxu0 0
    %896 = vmatprep.subr.bf16.mxu0 0
    %897 = vmatpush2.bf16.msra.mxu0 0
    %898 = vmatprep.subr.bf16.mxu0 0
    %899 = vmatpush2.bf16.msra.mxu0 0
    %900 = vmatprep.subr.bf16.mxu0 0
    %901 = vmatpush2.bf16.msra.mxu0 0
    %902 = vmatprep.subr.bf16.mxu0 0
    %903 = vmatpush2.bf16.msra.mxu0 0
    %904 = vmatprep.subr.bf16.mxu0 0
    %905 = vmatpush2.bf16.msra.mxu0 0
    %906 = vmatprep.mubr.bf16.mxu0 0
    %907 = vmatmul.mubr.bf16.gmra.mxu0 %v680
    %v908 = vpop.f32.mrf.mxu0
    %v909 = vadd.f32 0.0, %v908
    %v910 = vpop.f32.mrf.mxu0
    %v911 = vadd.f32 0.0, %v910
    %v912 = vpop.f32.mrf.mxu0
    %v913 = vpop.f32.mrf.mxu0
    %914 = vdwg.mxu0
    %915 = vmatprep.subr.bf16.mxu0 %v841
    %916 = vmatpush1.bf16.msra.mxu0 %v840
    %917 = vmatprep.subr.bf16.mxu0 %v837
    %918 = vmatpush1.bf16.msra.mxu0 %v836
    %919 = vmatprep.subr.bf16.mxu0 %v833
    %920 = vmatpush1.bf16.msra.mxu0 %v832
    %921 = vmatprep.subr.bf16.mxu0 %v829
    %922 = vmatpush1.bf16.msra.mxu0 %v828
    %923 = vmatprep.subr.bf16.mxu0 %v825
    %924 = vmatpush1.bf16.msra.mxu0 %v824
    %925 = vmatprep.subr.bf16.mxu0 %v821
    %926 = vmatpush1.bf16.msra.mxu0 %v820
    %927 = vmatprep.subr.bf16.mxu0 %v817
    %928 = vmatpush1.bf16.msra.mxu0 %v816
    %929 = vmatprep.subr.bf16.mxu0 %v813
    %930 = vmatpush1.bf16.msra.mxu0 %v812
    %931 = vmatprep.subr.bf16.mxu0 0
    %932 = vmatpush2.bf16.msra.mxu0 0
    %933 = vmatprep.subr.bf16.mxu0 0
    %934 = vmatpush2.bf16.msra.mxu0 0
    %935 = vmatprep.subr.bf16.mxu0 0
    %936 = vmatpush2.bf16.msra.mxu0 0
    %937 = vmatprep.subr.bf16.mxu0 0
    %938 = vmatpush2.bf16.msra.mxu0 0
    %939 = vmatprep.subr.bf16.mxu0 0
    %940 = vmatpush2.bf16.msra.mxu0 0
    %941 = vmatprep.subr.bf16.mxu0 0
    %942 = vmatpush2.bf16.msra.mxu0 0
    %943 = vmatprep.subr.bf16.mxu0 0
    %944 = vmatpush2.bf16.msra.mxu0 0
    %945 = vmatprep.subr.bf16.mxu0 0
    %946 = vmatpush2.bf16.msra.mxu0 0
    %947 = vmatprep.mubr.bf16.mxu0 0
    %948 = vmatmul.mubr.bf16.gmra.mxu0 %v680
    %v949 = vpop.f32.mrf.mxu0
    %v950 = vadd.f32 0.0, %v949
    %v951 = vpop.f32.mrf.mxu0
    %v952 = vadd.f32 0.0, %v951
    %v953 = vpop.f32.mrf.mxu0
    %v954 = vpop.f32.mrf.mxu0
    %955 = vdwg.mxu0
    %s956 = scalar_lea.vmem [#allocation4], 32
    %v957 = vld [vmem:[%s956] sm:$0xff]
    %v958 = vadd.f32 %v909, %v957
    %v959 = vxor.u32 %v958, 2147483648
    %v960 = vmul.f32 %v959, 1.442695
    %v961 = vpow.pop %v960
    %v962 = vadd.f32 %v961, 1.0
    %v963 = vrcp.pop %v962
    %v964 = vmul.f32 1.0, %v963
    %v965 = vld [vmem:[%s956 + $0x8] sm:$0xff]
    %v966 = vadd.f32 %v911, %v965
    %v967 = vxor.u32 %v966, 2147483648
    %v968 = vmul.f32 %v967, 1.442695
    %v969 = vpow.pop %v968
    %v970 = vadd.f32 %v969, 1.0
    %v971 = vrcp.pop %v970
    %v972 = vmul.f32 1.0, %v971
    %v973 = vld [vmem:[%s956 + $0x10] sm:$0xff]
    %v974 = vadd.f32 %v950, %v973
    %v975 = vtanh.pop %v974
    %v976 = vld [vmem:[%s956 + $0x18] sm:$0xff]
    %v977 = vadd.f32 %v952, %v976
    %v978 = vxor.u32 %v977, 2147483648
    %v979 = vmul.f32 %v978, 1.442695
    %v980 = vpow.pop %v979
    %v981 = vadd.f32 %v980, 1.0
    %v982 = vrcp.pop %v981
    %v983 = vmul.f32 1.0, %v982
    %v984 = vmul.f32 %v972, %v677
    %v985 = vmul.f32 %v964, %v975
    %v986 = vadd.f32 %v984, %v985
    %v987 = vtanh.pop %v986
    %v988 = vmul.f32 %v983, %v987
    %v989 = vpack.c.bf16 %v988, %v988
    %s990 = scalar_lea.vmem %s6, 4
    %991 = vst [vmem:[%s990] sm:$0xf] %v989
    %v992 = vld [vmem:[#allocation7] sm:$0xff]
    %v993 = vld [vmem:[#allocation7 + $0x8] sm:$0xff]
    %v994 = vld [vmem:[#allocation7 + $0x10] sm:$0xff]
    %v995 = vld [vmem:[#allocation7 + $0x18] sm:$0xff]
    %v996 = vld [vmem:[#allocation7 + $0x20] sm:$0xff]
    %v997 = vld [vmem:[#allocation7 + $0x28] sm:$0xff]
    %v998 = vld [vmem:[#allocation7 + $0x30] sm:$0xff]
    %v999 = vld [vmem:[#allocation7 + $0x38] sm:$0xff]
    %v1000 = vld [vmem:[#allocation7 + $0x40] sm:$0xff]
    %v1001 = vld [vmem:[#allocation7 + $0x48] sm:$0xff]
    %v1002 = vld [vmem:[#allocation7 + $0x50] sm:$0xff]
    %v1003 = vld [vmem:[#allocation7 + $0x58] sm:$0xff]
    %v1004 = vld [vmem:[#allocation7 + $0x60] sm:$0xff]
    %v1005 = vld [vmem:[#allocation7 + $0x68] sm:$0xff]
    %v1006 = vld [vmem:[#allocation7 + $0x70] sm:$0xff]
    %v1007 = vld [vmem:[#allocation7 + $0x78] sm:$0xff]
    %v1008 = vld [vmem:[#allocation7 + $0x80] sm:$0xff]
    %v1009 = vld [vmem:[#allocation7 + $0x88] sm:$0xff]
    %v1010 = vld [vmem:[#allocation7 + $0x90] sm:$0xff]
    %v1011 = vld [vmem:[#allocation7 + $0x98] sm:$0xff]
    %v1012 = vld [vmem:[#allocation7 + $0xa0] sm:$0xff]
    %v1013 = vld [vmem:[#allocation7 + $0xa8] sm:$0xff]
    %v1014 = vld [vmem:[#allocation7 + $0xb0] sm:$0xff]
    %v1015 = vld [vmem:[#allocation7 + $0xb8] sm:$0xff]
    %v1016 = vld [vmem:[#allocation7 + $0xc0] sm:$0xff]
    %v1017 = vld [vmem:[#allocation7 + $0xc8] sm:$0xff]
    %v1018 = vld [vmem:[#allocation7 + $0xd0] sm:$0xff]
    %v1019 = vld [vmem:[#allocation7 + $0xd8] sm:$0xff]
    %v1020 = vld [vmem:[#allocation7 + $0xe0] sm:$0xff]
    %v1021 = vld [vmem:[#allocation7 + $0xe8] sm:$0xff]
    %v1022 = vld [vmem:[#allocation7 + $0xf0] sm:$0xff]
    %v1023 = vld [vmem:[#allocation7 + $0xf8] sm:$0xff]
    %v1056 = vunpack.c.l.b16 %v992
    %v1057 = vunpack.c.h.b16 %v992
    %v1058 = vunpack.c.l.b16 %v993
    %v1059 = vunpack.c.h.b16 %v993
    %v1060 = vunpack.c.l.b16 %v994
    %v1061 = vunpack.c.h.b16 %v994
    %v1062 = vunpack.c.l.b16 %v995
    %v1063 = vunpack.c.h.b16 %v995
    %v1064 = vunpack.c.l.b16 %v996
    %v1065 = vunpack.c.h.b16 %v996
    %v1066 = vunpack.c.l.b16 %v997
    %v1067 = vunpack.c.h.b16 %v997
    %v1068 = vunpack.c.l.b16 %v998
    %v1069 = vunpack.c.h.b16 %v998
    %v1070 = vunpack.c.l.b16 %v999
    %v1071 = vunpack.c.h.b16 %v999
    %v1072 = vunpack.c.l.b16 %v1000
    %v1073 = vunpack.c.h.b16 %v1000
    %v1074 = vunpack.c.l.b16 %v1001
    %v1075 = vunpack.c.h.b16 %v1001
    %v1076 = vunpack.c.l.b16 %v1002
    %v1077 = vunpack.c.h.b16 %v1002
    %v1078 = vunpack.c.l.b16 %v1003
    %v1079 = vunpack.c.h.b16 %v1003
    %v1080 = vunpack.c.l.b16 %v1004
    %v1081 = vunpack.c.h.b16 %v1004
    %v1082 = vunpack.c.l.b16 %v1005
    %v1083 = vunpack.c.h.b16 %v1005
    %v1084 = vunpack.c.l.b16 %v1006
    %v1085 = vunpack.c.h.b16 %v1006
    %v1086 = vunpack.c.l.b16 %v1007
    %v1087 = vunpack.c.h.b16 %v1007
    %v1088 = vunpack.c.l.b16 %v1008
    %v1089 = vunpack.c.h.b16 %v1008
    %v1090 = vunpack.c.l.b16 %v1009
    %v1091 = vunpack.c.h.b16 %v1009
    %v1092 = vunpack.c.l.b16 %v1010
    %v1093 = vunpack.c.h.b16 %v1010
    %v1094 = vunpack.c.l.b16 %v1011
    %v1095 = vunpack.c.h.b16 %v1011
    %v1096 = vunpack.c.l.b16 %v1012
    %v1097 = vunpack.c.h.b16 %v1012
    %v1098 = vunpack.c.l.b16 %v1013
    %v1099 = vunpack.c.h.b16 %v1013
    %v1100 = vunpack.c.l.b16 %v1014
    %v1101 = vunpack.c.h.b16 %v1014
    %v1102 = vunpack.c.l.b16 %v1015
    %v1103 = vunpack.c.h.b16 %v1015
    %v1104 = vunpack.c.l.b16 %v1016
    %v1105 = vunpack.c.h.b16 %v1016
    %v1106 = vunpack.c.l.b16 %v1017
    %v1107 = vunpack.c.h.b16 %v1017
    %v1108 = vunpack.c.l.b16 %v1018
    %v1109 = vunpack.c.h.b16 %v1018
    %v1110 = vunpack.c.l.b16 %v1019
    %v1111 = vunpack.c.h.b16 %v1019
    %v1112 = vunpack.c.l.b16 %v1020
    %v1113 = vunpack.c.h.b16 %v1020
    %v1114 = vunpack.c.l.b16 %v1021
    %v1115 = vunpack.c.h.b16 %v1021
    %v1116 = vunpack.c.l.b16 %v1022
    %v1117 = vunpack.c.h.b16 %v1022
    %v1118 = vunpack.c.l.b16 %v1023
    %v1119 = vunpack.c.h.b16 %v1023
    %v1120 = vpack.c.b16 %v1060, %v1056
    %v1121 = vpack.c.b16 %v1061, %v1057
    %v1122 = vpack.c.b16 %v1062, %v1058
    %v1123 = vpack.c.b16 %v1063, %v1059
    %v1124 = vpack.c.b16 %v1068, %v1064
    %v1125 = vpack.c.b16 %v1069, %v1065
    %v1126 = vpack.c.b16 %v1070, %v1066
    %v1127 = vpack.c.b16 %v1071, %v1067
    %v1128 = vpack.c.b16 %v1076, %v1072
    %v1129 = vpack.c.b16 %v1077, %v1073
    %v1130 = vpack.c.b16 %v1078, %v1074
    %v1131 = vpack.c.b16 %v1079, %v1075
    %v1132 = vpack.c.b16 %v1084, %v1080
    %v1133 = vpack.c.b16 %v1085, %v1081
    %v1134 = vpack.c.b16 %v1086, %v1082
    %v1135 = vpack.c.b16 %v1087, %v1083
    %v1136 = vpack.c.b16 %v1092, %v1088
    %v1137 = vpack.c.b16 %v1093, %v1089
    %v1138 = vpack.c.b16 %v1094, %v1090
    %v1139 = vpack.c.b16 %v1095, %v1091
    %v1140 = vpack.c.b16 %v1100, %v1096
    %v1141 = vpack.c.b16 %v1101, %v1097
    %v1142 = vpack.c.b16 %v1102, %v1098
    %v1143 = vpack.c.b16 %v1103, %v1099
    %v1144 = vpack.c.b16 %v1108, %v1104
    %v1145 = vpack.c.b16 %v1109, %v1105
    %v1146 = vpack.c.b16 %v1110, %v1106
    %v1147 = vpack.c.b16 %v1111, %v1107
    %v1148 = vpack.c.b16 %v1116, %v1112
    %v1149 = vpack.c.b16 %v1117, %v1113
    %v1150 = vpack.c.b16 %v1118, %v1114
    %v1151 = vpack.c.b16 %v1119, %v1115
    %1184 = vmatprep.subr.bf16.mxu0 %v1149
    %1185 = vmatpush1.bf16.msra.mxu0 %v1148
    %1186 = vmatprep.subr.bf16.mxu0 %v1145
    %1187 = vmatpush1.bf16.msra.mxu0 %v1144
    %1188 = vmatprep.subr.bf16.mxu0 %v1141
    %1189 = vmatpush1.bf16.msra.mxu0 %v1140
    %1190 = vmatprep.subr.bf16.mxu0 %v1137
    %1191 = vmatpush1.bf16.msra.mxu0 %v1136
    %1192 = vmatprep.subr.bf16.mxu0 %v1133
    %1193 = vmatpush1.bf16.msra.mxu0 %v1132
    %1194 = vmatprep.subr.bf16.mxu0 %v1129
    %1195 = vmatpush1.bf16.msra.mxu0 %v1128
    %1196 = vmatprep.subr.bf16.mxu0 %v1125
    %1197 = vmatpush1.bf16.msra.mxu0 %v1124
    %1198 = vmatprep.subr.bf16.mxu0 %v1121
    %1199 = vmatpush1.bf16.msra.mxu0 %v1120
    %1200 = vmatprep.subr.bf16.mxu0 0
    %1201 = vmatpush2.bf16.msra.mxu0 0
    %1202 = vmatprep.subr.bf16.mxu0 0
    %1203 = vmatpush2.bf16.msra.mxu0 0
    %1204 = vmatprep.subr.bf16.mxu0 0
    %1205 = vmatpush2.bf16.msra.mxu0 0
    %1206 = vmatprep.subr.bf16.mxu0 0
    %1207 = vmatpush2.bf16.msra.mxu0 0
    %1208 = vmatprep.subr.bf16.mxu0 0
    %1209 = vmatpush2.bf16.msra.mxu0 0
    %1210 = vmatprep.subr.bf16.mxu0 0
    %1211 = vmatpush2.bf16.msra.mxu0 0
    %1212 = vmatprep.subr.bf16.mxu0 0
    %1213 = vmatpush2.bf16.msra.mxu0 0
    %1214 = vmatprep.subr.bf16.mxu0 0
    %1215 = vmatpush2.bf16.msra.mxu0 0
    %1216 = vmatprep.mubr.bf16.mxu0 0
    %1217 = vmatmul.mubr.bf16.gmra.mxu0 %v989
    %v1218 = vpop.f32.mrf.mxu0
    %v1219 = vadd.f32 0.0, %v1218
    %v1220 = vpop.f32.mrf.mxu0
    %v1221 = vadd.f32 0.0, %v1220
    %v1222 = vpop.f32.mrf.mxu0
    %v1223 = vpop.f32.mrf.mxu0
    %1224 = vdwg.mxu0
    %1225 = vmatprep.subr.bf16.mxu0 %v1151
    %1226 = vmatpush1.bf16.msra.mxu0 %v1150
    %1227 = vmatprep.subr.bf16.mxu0 %v1147
    %1228 = vmatpush1.bf16.msra.mxu0 %v1146
    %1229 = vmatprep.subr.bf16.mxu0 %v1143
    %1230 = vmatpush1.bf16.msra.mxu0 %v1142
    %1231 = vmatprep.subr.bf16.mxu0 %v1139
    %1232 = vmatpush1.bf16.msra.mxu0 %v1138
    %1233 = vmatprep.subr.bf16.mxu0 %v1135
    %1234 = vmatpush1.bf16.msra.mxu0 %v1134
    %1235 = vmatprep.subr.bf16.mxu0 %v1131
    %1236 = vmatpush1.bf16.msra.mxu0 %v1130
    %1237 = vmatprep.subr.bf16.mxu0 %v1127
    %1238 = vmatpush1.bf16.msra.mxu0 %v1126
    %1239 = vmatprep.subr.bf16.mxu0 %v1123
    %1240 = vmatpush1.bf16.msra.mxu0 %v1122
    %1241 = vmatprep.subr.bf16.mxu0 0
    %1242 = vmatpush2.bf16.msra.mxu0 0
    %1243 = vmatprep.subr.bf16.mxu0 0
    %1244 = vmatpush2.bf16.msra.mxu0 0
    %1245 = vmatprep.subr.bf16.mxu0 0
    %1246 = vmatpush2.bf16.msra.mxu0 0
    %1247 = vmatprep.subr.bf16.mxu0 0
    %1248 = vmatpush2.bf16.msra.mxu0 0
    %1249 = vmatprep.subr.bf16.mxu0 0
    %1250 = vmatpush2.bf16.msra.mxu0 0
    %1251 = vmatprep.subr.bf16.mxu0 0
    %1252 = vmatpush2.bf16.msra.mxu0 0
    %1253 = vmatprep.subr.bf16.mxu0 0
    %1254 = vmatpush2.bf16.msra.mxu0 0
    %1255 = vmatprep.subr.bf16.mxu0 0
    %1256 = vmatpush2.bf16.msra.mxu0 0
    %1257 = vmatprep.mubr.bf16.mxu0 0
    %1258 = vmatmul.mubr.bf16.gmra.mxu0 %v989
    %v1259 = vpop.f32.mrf.mxu0
    %v1260 = vadd.f32 0.0, %v1259
    %v1261 = vpop.f32.mrf.mxu0
    %v1262 = vadd.f32 0.0, %v1261
    %v1263 = vpop.f32.mrf.mxu0
    %v1264 = vpop.f32.mrf.mxu0
    %1265 = vdwg.mxu0
    %s1266 = scalar_lea.vmem [#allocation4], 64
    %v1267 = vld [vmem:[%s1266] sm:$0xff]
    %v1268 = vadd.f32 %v1219, %v1267
    %v1269 = vxor.u32 %v1268, 2147483648
    %v1270 = vmul.f32 %v1269, 1.442695
    %v1271 = vpow.pop %v1270
    %v1272 = vadd.f32 %v1271, 1.0
    %v1273 = vrcp.pop %v1272
    %v1274 = vmul.f32 1.0, %v1273
    %v1275 = vld [vmem:[%s1266 + $0x8] sm:$0xff]
    %v1276 = vadd.f32 %v1221, %v1275
    %v1277 = vxor.u32 %v1276, 2147483648
    %v1278 = vmul.f32 %v1277, 1.442695
    %v1279 = vpow.pop %v1278
    %v1280 = vadd.f32 %v1279, 1.0
    %v1281 = vrcp.pop %v1280
    %v1282 = vmul.f32 1.0, %v1281
    %v1283 = vld [vmem:[%s1266 + $0x10] sm:$0xff]
    %v1284 = vadd.f32 %v1260, %v1283
    %v1285 = vtanh.pop %v1284
    %v1286 = vld [vmem:[%s1266 + $0x18] sm:$0xff]
    %v1287 = vadd.f32 %v1262, %v1286
    %v1288 = vxor.u32 %v1287, 2147483648
    %v1289 = vmul.f32 %v1288, 1.442695
    %v1290 = vpow.pop %v1289
    %v1291 = vadd.f32 %v1290, 1.0
    %v1292 = vrcp.pop %v1291
    %v1293 = vmul.f32 1.0, %v1292
    %v1294 = vmul.f32 %v1282, %v986
    %v1295 = vmul.f32 %v1274, %v1285
    %v1296 = vadd.f32 %v1294, %v1295
    %v1297 = vtanh.pop %v1296
    %v1298 = vmul.f32 %v1293, %v1297
    %v1299 = vpack.c.bf16 %v1298, %v1298
    %s1300 = scalar_lea.vmem %s6, 8
    %1301 = vst [vmem:[%s1300] sm:$0xf] %v1299
    %v1302 = vld [vmem:[#allocation7] sm:$0xff]
    %v1303 = vld [vmem:[#allocation7 + $0x8] sm:$0xff]
    %v1304 = vld [vmem:[#allocation7 + $0x10] sm:$0xff]
    %v1305 = vld [vmem:[#allocation7 + $0x18] sm:$0xff]
    %v1306 = vld [vmem:[#allocation7 + $0x20] sm:$0xff]
    %v1307 = vld [vmem:[#allocation7 + $0x28] sm:$0xff]
    %v1308 = vld [vmem:[#allocation7 + $0x30] sm:$0xff]
    %v1309 = vld [vmem:[#allocation7 + $0x38] sm:$0xff]
    %v1310 = vld [vmem:[#allocation7 + $0x40] sm:$0xff]
    %v1311 = vld [vmem:[#allocation7 + $0x48] sm:$0xff]
    %v1312 = vld [vmem:[#allocation7 + $0x50] sm:$0xff]
    %v1313 = vld [vmem:[#allocation7 + $0x58] sm:$0xff]
    %v1314 = vld [vmem:[#allocation7 + $0x60] sm:$0xff]
    %v1315 = vld [vmem:[#allocation7 + $0x68] sm:$0xff]
    %v1316 = vld [vmem:[#allocation7 + $0x70] sm:$0xff]
    %v1317 = vld [vmem:[#allocation7 + $0x78] sm:$0xff]
    %v1318 = vld [vmem:[#allocation7 + $0x80] sm:$0xff]
    %v1319 = vld [vmem:[#allocation7 + $0x88] sm:$0xff]
    %v1320 = vld [vmem:[#allocation7 + $0x90] sm:$0xff]
    %v1321 = vld [vmem:[#allocation7 + $0x98] sm:$0xff]
    %v1322 = vld [vmem:[#allocation7 + $0xa0] sm:$0xff]
    %v1323 = vld [vmem:[#allocation7 + $0xa8] sm:$0xff]
    %v1324 = vld [vmem:[#allocation7 + $0xb0] sm:$0xff]
    %v1325 = vld [vmem:[#allocation7 + $0xb8] sm:$0xff]
    %v1326 = vld [vmem:[#allocation7 + $0xc0] sm:$0xff]
    %v1327 = vld [vmem:[#allocation7 + $0xc8] sm:$0xff]
    %v1328 = vld [vmem:[#allocation7 + $0xd0] sm:$0xff]
    %v1329 = vld [vmem:[#allocation7 + $0xd8] sm:$0xff]
    %v1330 = vld [vmem:[#allocation7 + $0xe0] sm:$0xff]
    %v1331 = vld [vmem:[#allocation7 + $0xe8] sm:$0xff]
    %v1332 = vld [vmem:[#allocation7 + $0xf0] sm:$0xff]
    %v1333 = vld [vmem:[#allocation7 + $0xf8] sm:$0xff]
    %v1366 = vunpack.c.l.b16 %v1302
    %v1367 = vunpack.c.h.b16 %v1302
    %v1368 = vunpack.c.l.b16 %v1303
    %v1369 = vunpack.c.h.b16 %v1303
    %v1370 = vunpack.c.l.b16 %v1304
    %v1371 = vunpack.c.h.b16 %v1304
    %v1372 = vunpack.c.l.b16 %v1305
    %v1373 = vunpack.c.h.b16 %v1305
    %v1374 = vunpack.c.l.b16 %v1306
    %v1375 = vunpack.c.h.b16 %v1306
    %v1376 = vunpack.c.l.b16 %v1307
    %v1377 = vunpack.c.h.b16 %v1307
    %v1378 = vunpack.c.l.b16 %v1308
    %v1379 = vunpack.c.h.b16 %v1308
    %v1380 = vunpack.c.l.b16 %v1309
    %v1381 = vunpack.c.h.b16 %v1309
    %v1382 = vunpack.c.l.b16 %v1310
    %v1383 = vunpack.c.h.b16 %v1310
    %v1384 = vunpack.c.l.b16 %v1311
    %v1385 = vunpack.c.h.b16 %v1311
    %v1386 = vunpack.c.l.b16 %v1312
    %v1387 = vunpack.c.h.b16 %v1312
    %v1388 = vunpack.c.l.b16 %v1313
    %v1389 = vunpack.c.h.b16 %v1313
    %v1390 = vunpack.c.l.b16 %v1314
    %v1391 = vunpack.c.h.b16 %v1314
    %v1392 = vunpack.c.l.b16 %v1315
    %v1393 = vunpack.c.h.b16 %v1315
    %v1394 = vunpack.c.l.b16 %v1316
    %v1395 = vunpack.c.h.b16 %v1316
    %v1396 = vunpack.c.l.b16 %v1317
    %v1397 = vunpack.c.h.b16 %v1317
    %v1398 = vunpack.c.l.b16 %v1318
    %v1399 = vunpack.c.h.b16 %v1318
    %v1400 = vunpack.c.l.b16 %v1319
    %v1401 = vunpack.c.h.b16 %v1319
    %v1402 = vunpack.c.l.b16 %v1320
    %v1403 = vunpack.c.h.b16 %v1320
    %v1404 = vunpack.c.l.b16 %v1321
    %v1405 = vunpack.c.h.b16 %v1321
    %v1406 = vunpack.c.l.b16 %v1322
    %v1407 = vunpack.c.h.b16 %v1322
    %v1408 = vunpack.c.l.b16 %v1323
    %v1409 = vunpack.c.h.b16 %v1323
    %v1410 = vunpack.c.l.b16 %v1324
    %v1411 = vunpack.c.h.b16 %v1324
    %v1412 = vunpack.c.l.b16 %v1325
    %v1413 = vunpack.c.h.b16 %v1325
    %v1414 = vunpack.c.l.b16 %v1326
    %v1415 = vunpack.c.h.b16 %v1326
    %v1416 = vunpack.c.l.b16 %v1327
    %v1417 = vunpack.c.h.b16 %v1327
    %v1418 = vunpack.c.l.b16 %v1328
    %v1419 = vunpack.c.h.b16 %v1328
    %v1420 = vunpack.c.l.b16 %v1329
    %v1421 = vunpack.c.h.b16 %v1329
    %v1422 = vunpack.c.l.b16 %v1330
    %v1423 = vunpack.c.h.b16 %v1330
    %v1424 = vunpack.c.l.b16 %v1331
    %v1425 = vunpack.c.h.b16 %v1331
    %v1426 = vunpack.c.l.b16 %v1332
    %v1427 = vunpack.c.h.b16 %v1332
    %v1428 = vunpack.c.l.b16 %v1333
    %v1429 = vunpack.c.h.b16 %v1333
    %v1430 = vpack.c.b16 %v1370, %v1366
    %v1431 = vpack.c.b16 %v1371, %v1367
    %v1432 = vpack.c.b16 %v1372, %v1368
    %v1433 = vpack.c.b16 %v1373, %v1369
    %v1434 = vpack.c.b16 %v1378, %v1374
    %v1435 = vpack.c.b16 %v1379, %v1375
    %v1436 = vpack.c.b16 %v1380, %v1376
    %v1437 = vpack.c.b16 %v1381, %v1377
    %v1438 = vpack.c.b16 %v1386, %v1382
    %v1439 = vpack.c.b16 %v1387, %v1383
    %v1440 = vpack.c.b16 %v1388, %v1384
    %v1441 = vpack.c.b16 %v1389, %v1385
    %v1442 = vpack.c.b16 %v1394, %v1390
    %v1443 = vpack.c.b16 %v1395, %v1391
    %v1444 = vpack.c.b16 %v1396, %v1392
    %v1445 = vpack.c.b16 %v1397, %v1393
    %v1446 = vpack.c.b16 %v1402, %v1398
    %v1447 = vpack.c.b16 %v1403, %v1399
    %v1448 = vpack.c.b16 %v1404, %v1400
    %v1449 = vpack.c.b16 %v1405, %v1401
    %v1450 = vpack.c.b16 %v1410, %v1406
    %v1451 = vpack.c.b16 %v1411, %v1407
    %v1452 = vpack.c.b16 %v1412, %v1408
    %v1453 = vpack.c.b16 %v1413, %v1409
    %v1454 = vpack.c.b16 %v1418, %v1414
    %v1455 = vpack.c.b16 %v1419, %v1415
    %v1456 = vpack.c.b16 %v1420, %v1416
    %v1457 = vpack.c.b16 %v1421, %v1417
    %v1458 = vpack.c.b16 %v1426, %v1422
    %v1459 = vpack.c.b16 %v1427, %v1423
    %v1460 = vpack.c.b16 %v1428, %v1424
    %v1461 = vpack.c.b16 %v1429, %v1425
    %1494 = vmatprep.subr.bf16.mxu0 %v1459
    %1495 = vmatpush1.bf16.msra.mxu0 %v1458
    %1496 = vmatprep.subr.bf16.mxu0 %v1455
    %1497 = vmatpush1.bf16.msra.mxu0 %v1454
    %1498 = vmatprep.subr.bf16.mxu0 %v1451
    %1499 = vmatpush1.bf16.msra.mxu0 %v1450
    %1500 = vmatprep.subr.bf16.mxu0 %v1447
    %1501 = vmatpush1.bf16.msra.mxu0 %v1446
    %1502 = vmatprep.subr.bf16.mxu0 %v1443
    %1503 = vmatpush1.bf16.msra.mxu0 %v1442
    %1504 = vmatprep.subr.bf16.mxu0 %v1439
    %1505 = vmatpush1.bf16.msra.mxu0 %v1438
    %1506 = vmatprep.subr.bf16.mxu0 %v1435
    %1507 = vmatpush1.bf16.msra.mxu0 %v1434
    %1508 = vmatprep.subr.bf16.mxu0 %v1431
    %1509 = vmatpush1.bf16.msra.mxu0 %v1430
    %1510 = vmatprep.subr.bf16.mxu0 0
    %1511 = vmatpush2.bf16.msra.mxu0 0
    %1512 = vmatprep.subr.bf16.mxu0 0
    %1513 = vmatpush2.bf16.msra.mxu0 0
    %1514 = vmatprep.subr.bf16.mxu0 0
    %1515 = vmatpush2.bf16.msra.mxu0 0
    %1516 = vmatprep.subr.bf16.mxu0 0
    %1517 = vmatpush2.bf16.msra.mxu0 0
    %1518 = vmatprep.subr.bf16.mxu0 0
    %1519 = vmatpush2.bf16.msra.mxu0 0
    %1520 = vmatprep.subr.bf16.mxu0 0
    %1521 = vmatpush2.bf16.msra.mxu0 0
    %1522 = vmatprep.subr.bf16.mxu0 0
    %1523 = vmatpush2.bf16.msra.mxu0 0
    %1524 = vmatprep.subr.bf16.mxu0 0
    %1525 = vmatpush2.bf16.msra.mxu0 0
    %1526 = vmatprep.mubr.bf16.mxu0 0
    %1527 = vmatmul.mubr.bf16.gmra.mxu0 %v1299
    %v1528 = vpop.f32.mrf.mxu0
    %v1529 = vadd.f32 0.0, %v1528
    %v1530 = vpop.f32.mrf.mxu0
    %v1531 = vadd.f32 0.0, %v1530
    %v1532 = vpop.f32.mrf.mxu0
    %v1533 = vpop.f32.mrf.mxu0
    %1534 = vdwg.mxu0
    %1535 = vmatprep.subr.bf16.mxu0 %v1461
    %1536 = vmatpush1.bf16.msra.mxu0 %v1460
    %1537 = vmatprep.subr.bf16.mxu0 %v1457
    %1538 = vmatpush1.bf16.msra.mxu0 %v1456
    %1539 = vmatprep.subr.bf16.mxu0 %v1453
    %1540 = vmatpush1.bf16.msra.mxu0 %v1452
    %1541 = vmatprep.subr.bf16.mxu0 %v1449
    %1542 = vmatpush1.bf16.msra.mxu0 %v1448
    %1543 = vmatprep.subr.bf16.mxu0 %v1445
    %1544 = vmatpush1.bf16.msra.mxu0 %v1444
    %1545 = vmatprep.subr.bf16.mxu0 %v1441
    %1546 = vmatpush1.bf16.msra.mxu0 %v1440
    %1547 = vmatprep.subr.bf16.mxu0 %v1437
    %1548 = vmatpush1.bf16.msra.mxu0 %v1436
    %1549 = vmatprep.subr.bf16.mxu0 %v1433
    %1550 = vmatpush1.bf16.msra.mxu0 %v1432
    %1551 = vmatprep.subr.bf16.mxu0 0
    %1552 = vmatpush2.bf16.msra.mxu0 0
    %1553 = vmatprep.subr.bf16.mxu0 0
    %1554 = vmatpush2.bf16.msra.mxu0 0
    %1555 = vmatprep.subr.bf16.mxu0 0
    %1556 = vmatpush2.bf16.msra.mxu0 0
    %1557 = vmatprep.subr.bf16.mxu0 0
    %1558 = vmatpush2.bf16.msra.mxu0 0
    %1559 = vmatprep.subr.bf16.mxu0 0
    %1560 = vmatpush2.bf16.msra.mxu0 0
    %1561 = vmatprep.subr.bf16.mxu0 0
    %1562 = vmatpush2.bf16.msra.mxu0 0
    %1563 = vmatprep.subr.bf16.mxu0 0
    %1564 = vmatpush2.bf16.msra.mxu0 0
    %1565 = vmatprep.subr.bf16.mxu0 0
    %1566 = vmatpush2.bf16.msra.mxu0 0
    %1567 = vmatprep.mubr.bf16.mxu0 0
    %1568 = vmatmul.mubr.bf16.gmra.mxu0 %v1299
    %v1569 = vpop.f32.mrf.mxu0
    %v1570 = vadd.f32 0.0, %v1569
    %v1571 = vpop.f32.mrf.mxu0
    %v1572 = vadd.f32 0.0, %v1571
    %v1573 = vpop.f32.mrf.mxu0
    %v1574 = vpop.f32.mrf.mxu0
    %1575 = vdwg.mxu0
    %s1576 = scalar_lea.vmem [#allocation4], 96
    %v1577 = vld [vmem:[%s1576] sm:$0xff]
    %v1578 = vadd.f32 %v1529, %v1577
    %v1579 = vxor.u32 %v1578, 2147483648
    %v1580 = vmul.f32 %v1579, 1.442695
    %v1581 = vpow.pop %v1580
    %v1582 = vadd.f32 %v1581, 1.0
    %v1583 = vrcp.pop %v1582
    %v1584 = vmul.f32 1.0, %v1583
    %v1585 = vld [vmem:[%s1576 + $0x8] sm:$0xff]
    %v1586 = vadd.f32 %v1531, %v1585
    %v1587 = vxor.u32 %v1586, 2147483648
    %v1588 = vmul.f32 %v1587, 1.442695
    %v1589 = vpow.pop %v1588
    %v1590 = vadd.f32 %v1589, 1.0
    %v1591 = vrcp.pop %v1590
    %v1592 = vmul.f32 1.0, %v1591
    %v1593 = vld [vmem:[%s1576 + $0x10] sm:$0xff]
    %v1594 = vadd.f32 %v1570, %v1593
    %v1595 = vtanh.pop %v1594
    %v1596 = vld [vmem:[%s1576 + $0x18] sm:$0xff]
    %v1597 = vadd.f32 %v1572, %v1596
    %v1598 = vxor.u32 %v1597, 2147483648
    %v1599 = vmul.f32 %v1598, 1.442695
    %v1600 = vpow.pop %v1599
    %v1601 = vadd.f32 %v1600, 1.0
    %v1602 = vrcp.pop %v1601
    %v1603 = vmul.f32 1.0, %v1602
    %v1604 = vmul.f32 %v1592, %v1296
    %v1605 = vmul.f32 %v1584, %v1595
    %v1606 = vadd.f32 %v1604, %v1605
    %v1607 = vtanh.pop %v1606
    %v1608 = vmul.f32 %v1603, %v1607
    %v1609 = vpack.c.bf16 %v1608, %v1608
    %s1610 = scalar_lea.vmem %s6, 12
    %1611 = vst [vmem:[%s1610] sm:$0xf] %v1609
    %v1612 = vld [vmem:[#allocation7] sm:$0xff]
    %v1613 = vld [vmem:[#allocation7 + $0x8] sm:$0xff]
    %v1614 = vld [vmem:[#allocation7 + $0x10] sm:$0xff]
    %v1615 = vld [vmem:[#allocation7 + $0x18] sm:$0xff]
    %v1616 = vld [vmem:[#allocation7 + $0x20] sm:$0xff]
    %v1617 = vld [vmem:[#allocation7 + $0x28] sm:$0xff]
    %v1618 = vld [vmem:[#allocation7 + $0x30] sm:$0xff]
    %v1619 = vld [vmem:[#allocation7 + $0x38] sm:$0xff]
    %v1620 = vld [vmem:[#allocation7 + $0x40] sm:$0xff]
    %v1621 = vld [vmem:[#allocation7 + $0x48] sm:$0xff]
    %v1622 = vld [vmem:[#allocation7 + $0x50] sm:$0xff]
    %v1623 = vld [vmem:[#allocation7 + $0x58] sm:$0xff]
    %v1624 = vld [vmem:[#allocation7 + $0x60] sm:$0xff]
    %v1625 = vld [vmem:[#allocation7 + $0x68] sm:$0xff]
    %v1626 = vld [vmem:[#allocation7 + $0x70] sm:$0xff]
    %v1627 = vld [vmem:[#allocation7 + $0x78] sm:$0xff]
    %v1628 = vld [vmem:[#allocation7 + $0x80] sm:$0xff]
    %v1629 = vld [vmem:[#allocation7 + $0x88] sm:$0xff]
    %v1630 = vld [vmem:[#allocation7 + $0x90] sm:$0xff]
    %v1631 = vld [vmem:[#allocation7 + $0x98] sm:$0xff]
    %v1632 = vld [vmem:[#allocation7 + $0xa0] sm:$0xff]
    %v1633 = vld [vmem:[#allocation7 + $0xa8] sm:$0xff]
    %v1634 = vld [vmem:[#allocation7 + $0xb0] sm:$0xff]
    %v1635 = vld [vmem:[#allocation7 + $0xb8] sm:$0xff]
    %v1636 = vld [vmem:[#allocation7 + $0xc0] sm:$0xff]
    %v1637 = vld [vmem:[#allocation7 + $0xc8] sm:$0xff]
    %v1638 = vld [vmem:[#allocation7 + $0xd0] sm:$0xff]
    %v1639 = vld [vmem:[#allocation7 + $0xd8] sm:$0xff]
    %v1640 = vld [vmem:[#allocation7 + $0xe0] sm:$0xff]
    %v1641 = vld [vmem:[#allocation7 + $0xe8] sm:$0xff]
    %v1642 = vld [vmem:[#allocation7 + $0xf0] sm:$0xff]
    %v1643 = vld [vmem:[#allocation7 + $0xf8] sm:$0xff]
    %v1676 = vunpack.c.l.b16 %v1612
    %v1677 = vunpack.c.h.b16 %v1612
    %v1678 = vunpack.c.l.b16 %v1613
    %v1679 = vunpack.c.h.b16 %v1613
    %v1680 = vunpack.c.l.b16 %v1614
    %v1681 = vunpack.c.h.b16 %v1614
    %v1682 = vunpack.c.l.b16 %v1615
    %v1683 = vunpack.c.h.b16 %v1615
    %v1684 = vunpack.c.l.b16 %v1616
    %v1685 = vunpack.c.h.b16 %v1616
    %v1686 = vunpack.c.l.b16 %v1617
    %v1687 = vunpack.c.h.b16 %v1617
    %v1688 = vunpack.c.l.b16 %v1618
    %v1689 = vunpack.c.h.b16 %v1618
    %v1690 = vunpack.c.l.b16 %v1619
    %v1691 = vunpack.c.h.b16 %v1619
    %v1692 = vunpack.c.l.b16 %v1620
    %v1693 = vunpack.c.h.b16 %v1620
    %v1694 = vunpack.c.l.b16 %v1621
    %v1695 = vunpack.c.h.b16 %v1621
    %v1696 = vunpack.c.l.b16 %v1622
    %v1697 = vunpack.c.h.b16 %v1622
    %v1698 = vunpack.c.l.b16 %v1623
    %v1699 = vunpack.c.h.b16 %v1623
    %v1700 = vunpack.c.l.b16 %v1624
    %v1701 = vunpack.c.h.b16 %v1624
    %v1702 = vunpack.c.l.b16 %v1625
    %v1703 = vunpack.c.h.b16 %v1625
    %v1704 = vunpack.c.l.b16 %v1626
    %v1705 = vunpack.c.h.b16 %v1626
    %v1706 = vunpack.c.l.b16 %v1627
    %v1707 = vunpack.c.h.b16 %v1627
    %v1708 = vunpack.c.l.b16 %v1628
    %v1709 = vunpack.c.h.b16 %v1628
    %v1710 = vunpack.c.l.b16 %v1629
    %v1711 = vunpack.c.h.b16 %v1629
    %v1712 = vunpack.c.l.b16 %v1630
    %v1713 = vunpack.c.h.b16 %v1630
    %v1714 = vunpack.c.l.b16 %v1631
    %v1715 = vunpack.c.h.b16 %v1631
    %v1716 = vunpack.c.l.b16 %v1632
    %v1717 = vunpack.c.h.b16 %v1632
    %v1718 = vunpack.c.l.b16 %v1633
    %v1719 = vunpack.c.h.b16 %v1633
    %v1720 = vunpack.c.l.b16 %v1634
    %v1721 = vunpack.c.h.b16 %v1634
    %v1722 = vunpack.c.l.b16 %v1635
    %v1723 = vunpack.c.h.b16 %v1635
    %v1724 = vunpack.c.l.b16 %v1636
    %v1725 = vunpack.c.h.b16 %v1636
    %v1726 = vunpack.c.l.b16 %v1637
    %v1727 = vunpack.c.h.b16 %v1637
    %v1728 = vunpack.c.l.b16 %v1638
    %v1729 = vunpack.c.h.b16 %v1638
    %v1730 = vunpack.c.l.b16 %v1639
    %v1731 = vunpack.c.h.b16 %v1639
    %v1732 = vunpack.c.l.b16 %v1640
    %v1733 = vunpack.c.h.b16 %v1640
    %v1734 = vunpack.c.l.b16 %v1641
    %v1735 = vunpack.c.h.b16 %v1641
    %v1736 = vunpack.c.l.b16 %v1642
    %v1737 = vunpack.c.h.b16 %v1642
    %v1738 = vunpack.c.l.b16 %v1643
    %v1739 = vunpack.c.h.b16 %v1643
    %v1740 = vpack.c.b16 %v1680, %v1676
    %v1741 = vpack.c.b16 %v1681, %v1677
    %v1742 = vpack.c.b16 %v1682, %v1678
    %v1743 = vpack.c.b16 %v1683, %v1679
    %v1744 = vpack.c.b16 %v1688, %v1684
    %v1745 = vpack.c.b16 %v1689, %v1685
    %v1746 = vpack.c.b16 %v1690, %v1686
    %v1747 = vpack.c.b16 %v1691, %v1687
    %v1748 = vpack.c.b16 %v1696, %v1692
    %v1749 = vpack.c.b16 %v1697, %v1693
    %v1750 = vpack.c.b16 %v1698, %v1694
    %v1751 = vpack.c.b16 %v1699, %v1695
    %v1752 = vpack.c.b16 %v1704, %v1700
    %v1753 = vpack.c.b16 %v1705, %v1701
    %v1754 = vpack.c.b16 %v1706, %v1702
    %v1755 = vpack.c.b16 %v1707, %v1703
    %v1756 = vpack.c.b16 %v1712, %v1708
    %v1757 = vpack.c.b16 %v1713, %v1709
    %v1758 = vpack.c.b16 %v1714, %v1710
    %v1759 = vpack.c.b16 %v1715, %v1711
    %v1760 = vpack.c.b16 %v1720, %v1716
    %v1761 = vpack.c.b16 %v1721, %v1717
    %v1762 = vpack.c.b16 %v1722, %v1718
    %v1763 = vpack.c.b16 %v1723, %v1719
    %v1764 = vpack.c.b16 %v1728, %v1724
    %v1765 = vpack.c.b16 %v1729, %v1725
    %v1766 = vpack.c.b16 %v1730, %v1726
    %v1767 = vpack.c.b16 %v1731, %v1727
    %v1768 = vpack.c.b16 %v1736, %v1732
    %v1769 = vpack.c.b16 %v1737, %v1733
    %v1770 = vpack.c.b16 %v1738, %v1734
    %v1771 = vpack.c.b16 %v1739, %v1735
    %1804 = vmatprep.subr.bf16.mxu0 %v1769
    %1805 = vmatpush1.bf16.msra.mxu0 %v1768
    %1806 = vmatprep.subr.bf16.mxu0 %v1765
    %1807 = vmatpush1.bf16.msra.mxu0 %v1764
    %1808 = vmatprep.subr.bf16.mxu0 %v1761
    %1809 = vmatpush1.bf16.msra.mxu0 %v1760
    %1810 = vmatprep.subr.bf16.mxu0 %v1757
    %1811 = vmatpush1.bf16.msra.mxu0 %v1756
    %1812 = vmatprep.subr.bf16.mxu0 %v1753
    %1813 = vmatpush1.bf16.msra.mxu0 %v1752
    %1814 = vmatprep.subr.bf16.mxu0 %v1749
    %1815 = vmatpush1.bf16.msra.mxu0 %v1748
    %1816 = vmatprep.subr.bf16.mxu0 %v1745
    %1817 = vmatpush1.bf16.msra.mxu0 %v1744
    %1818 = vmatprep.subr.bf16.mxu0 %v1741
    %1819 = vmatpush1.bf16.msra.mxu0 %v1740
    %1820 = vmatprep.subr.bf16.mxu0 0
    %1821 = vmatpush2.bf16.msra.mxu0 0
    %1822 = vmatprep.subr.bf16.mxu0 0
    %1823 = vmatpush2.bf16.msra.mxu0 0
    %1824 = vmatprep.subr.bf16.mxu0 0
    %1825 = vmatpush2.bf16.msra.mxu0 0
    %1826 = vmatprep.subr.bf16.mxu0 0
    %1827 = vmatpush2.bf16.msra.mxu0 0
    %1828 = vmatprep.subr.bf16.mxu0 0
    %1829 = vmatpush2.bf16.msra.mxu0 0
    %1830 = vmatprep.subr.bf16.mxu0 0
    %1831 = vmatpush2.bf16.msra.mxu0 0
    %1832 = vmatprep.subr.bf16.mxu0 0
    %1833 = vmatpush2.bf16.msra.mxu0 0
    %1834 = vmatprep.subr.bf16.mxu0 0
    %1835 = vmatpush2.bf16.msra.mxu0 0
    %1836 = vmatprep.mubr.bf16.mxu0 0
    %1837 = vmatmul.mubr.bf16.gmra.mxu0 %v1609
    %v1838 = vpop.f32.mrf.mxu0
    %v1839 = vadd.f32 0.0, %v1838
    %v1840 = vpop.f32.mrf.mxu0
    %v1841 = vadd.f32 0.0, %v1840
    %v1842 = vpop.f32.mrf.mxu0
    %v1843 = vpop.f32.mrf.mxu0
    %1844 = vdwg.mxu0
    %1845 = vmatprep.subr.bf16.mxu0 %v1771
    %1846 = vmatpush1.bf16.msra.mxu0 %v1770
    %1847 = vmatprep.subr.bf16.mxu0 %v1767
    %1848 = vmatpush1.bf16.msra.mxu0 %v1766
    %1849 = vmatprep.subr.bf16.mxu0 %v1763
    %1850 = vmatpush1.bf16.msra.mxu0 %v1762
    %1851 = vmatprep.subr.bf16.mxu0 %v1759
    %1852 = vmatpush1.bf16.msra.mxu0 %v1758
    %1853 = vmatprep.subr.bf16.mxu0 %v1755
    %1854 = vmatpush1.bf16.msra.mxu0 %v1754
    %1855 = vmatprep.subr.bf16.mxu0 %v1751
    %1856 = vmatpush1.bf16.msra.mxu0 %v1750
    %1857 = vmatprep.subr.bf16.mxu0 %v1747
    %1858 = vmatpush1.bf16.msra.mxu0 %v1746
    %1859 = vmatprep.subr.bf16.mxu0 %v1743
    %1860 = vmatpush1.bf16.msra.mxu0 %v1742
    %1861 = vmatprep.subr.bf16.mxu0 0
    %1862 = vmatpush2.bf16.msra.mxu0 0
    %1863 = vmatprep.subr.bf16.mxu0 0
    %1864 = vmatpush2.bf16.msra.mxu0 0
    %1865 = vmatprep.subr.bf16.mxu0 0
    %1866 = vmatpush2.bf16.msra.mxu0 0
    %1867 = vmatprep.subr.bf16.mxu0 0
    %1868 = vmatpush2.bf16.msra.mxu0 0
    %1869 = vmatprep.subr.bf16.mxu0 0
    %1870 = vmatpush2.bf16.msra.mxu0 0
    %1871 = vmatprep.subr.bf16.mxu0 0
    %1872 = vmatpush2.bf16.msra.mxu0 0
    %1873 = vmatprep.subr.bf16.mxu0 0
    %1874 = vmatpush2.bf16.msra.mxu0 0
    %1875 = vmatprep.subr.bf16.mxu0 0
    %1876 = vmatpush2.bf16.msra.mxu0 0
    %1877 = vmatprep.mubr.bf16.mxu0 0
    %1878 = vmatmul.mubr.bf16.gmra.mxu0 %v1609
    %v1879 = vpop.f32.mrf.mxu0
    %v1880 = vadd.f32 0.0, %v1879
    %v1881 = vpop.f32.mrf.mxu0
    %v1882 = vadd.f32 0.0, %v1881
    %v1883 = vpop.f32.mrf.mxu0
    %v1884 = vpop.f32.mrf.mxu0
    %1885 = vdwg.mxu0
    %s1886 = scalar_lea.vmem [#allocation4], 128
    %v1887 = vld [vmem:[%s1886] sm:$0xff]
    %v1888 = vadd.f32 %v1839, %v1887
    %v1889 = vxor.u32 %v1888, 2147483648
    %v1890 = vmul.f32 %v1889, 1.442695
    %v1891 = vpow.pop %v1890
    %v1892 = vadd.f32 %v1891, 1.0
    %v1893 = vrcp.pop %v1892
    %v1894 = vmul.f32 1.0, %v1893
    %v1895 = vld [vmem:[%s1886 + $0x8] sm:$0xff]
    %v1896 = vadd.f32 %v1841, %v1895
    %v1897 = vxor.u32 %v1896, 2147483648
    %v1898 = vmul.f32 %v1897, 1.442695
    %v1899 = vpow.pop %v1898
    %v1900 = vadd.f32 %v1899, 1.0
    %v1901 = vrcp.pop %v1900
    %v1902 = vmul.f32 1.0, %v1901
    %v1903 = vld [vmem:[%s1886 + $0x10] sm:$0xff]
    %v1904 = vadd.f32 %v1880, %v1903
    %v1905 = vtanh.pop %v1904
    %v1906 = vld [vmem:[%s1886 + $0x18] sm:$0xff]
    %v1907 = vadd.f32 %v1882, %v1906
    %v1908 = vxor.u32 %v1907, 2147483648
    %v1909 = vmul.f32 %v1908, 1.442695
    %v1910 = vpow.pop %v1909
    %v1911 = vadd.f32 %v1910, 1.0
    %v1912 = vrcp.pop %v1911
    %v1913 = vmul.f32 1.0, %v1912
    %v1914 = vmul.f32 %v1902, %v1606
    %v1915 = vmul.f32 %v1894, %v1905
    %v1916 = vadd.f32 %v1914, %v1915
    %v1917 = vtanh.pop %v1916
    %v1918 = vmul.f32 %v1913, %v1917
    %v1919 = vpack.c.bf16 %v1918, %v1918
    %s1920 = scalar_lea.vmem %s6, 16
    %1921 = vst [vmem:[%s1920] sm:$0xf] %v1919
    %v1922 = vld [vmem:[#allocation7] sm:$0xff]
    %v1923 = vld [vmem:[#allocation7 + $0x8] sm:$0xff]
    %v1924 = vld [vmem:[#allocation7 + $0x10] sm:$0xff]
    %v1925 = vld [vmem:[#allocation7 + $0x18] sm:$0xff]
    %v1926 = vld [vmem:[#allocation7 + $0x20] sm:$0xff]
    %v1927 = vld [vmem:[#allocation7 + $0x28] sm:$0xff]
    %v1928 = vld [vmem:[#allocation7 + $0x30] sm:$0xff]
    %v1929 = vld [vmem:[#allocation7 + $0x38] sm:$0xff]
    %v1930 = vld [vmem:[#allocation7 + $0x40] sm:$0xff]
    %v1931 = vld [vmem:[#allocation7 + $0x48] sm:$0xff]
    %v1932 = vld [vmem:[#allocation7 + $0x50] sm:$0xff]
    %v1933 = vld [vmem:[#allocation7 + $0x58] sm:$0xff]
    %v1934 = vld [vmem:[#allocation7 + $0x60] sm:$0xff]
    %v1935 = vld [vmem:[#allocation7 + $0x68] sm:$0xff]
    %v1936 = vld [vmem:[#allocation7 + $0x70] sm:$0xff]
    %v1937 = vld [vmem:[#allocation7 + $0x78] sm:$0xff]
    %v1938 = vld [vmem:[#allocation7 + $0x80] sm:$0xff]
    %v1939 = vld [vmem:[#allocation7 + $0x88] sm:$0xff]
    %v1940 = vld [vmem:[#allocation7 + $0x90] sm:$0xff]
    %v1941 = vld [vmem:[#allocation7 + $0x98] sm:$0xff]
    %v1942 = vld [vmem:[#allocation7 + $0xa0] sm:$0xff]
    %v1943 = vld [vmem:[#allocation7 + $0xa8] sm:$0xff]
    %v1944 = vld [vmem:[#allocation7 + $0xb0] sm:$0xff]
    %v1945 = vld [vmem:[#allocation7 + $0xb8] sm:$0xff]
    %v1946 = vld [vmem:[#allocation7 + $0xc0] sm:$0xff]
    %v1947 = vld [vmem:[#allocation7 + $0xc8] sm:$0xff]
    %v1948 = vld [vmem:[#allocation7 + $0xd0] sm:$0xff]
    %v1949 = vld [vmem:[#allocation7 + $0xd8] sm:$0xff]
    %v1950 = vld [vmem:[#allocation7 + $0xe0] sm:$0xff]
    %v1951 = vld [vmem:[#allocation7 + $0xe8] sm:$0xff]
    %v1952 = vld [vmem:[#allocation7 + $0xf0] sm:$0xff]
    %v1953 = vld [vmem:[#allocation7 + $0xf8] sm:$0xff]
    %v1986 = vunpack.c.l.b16 %v1922
    %v1987 = vunpack.c.h.b16 %v1922
    %v1988 = vunpack.c.l.b16 %v1923
    %v1989 = vunpack.c.h.b16 %v1923
    %v1990 = vunpack.c.l.b16 %v1924
    %v1991 = vunpack.c.h.b16 %v1924
    %v1992 = vunpack.c.l.b16 %v1925
    %v1993 = vunpack.c.h.b16 %v1925
    %v1994 = vunpack.c.l.b16 %v1926
    %v1995 = vunpack.c.h.b16 %v1926
    %v1996 = vunpack.c.l.b16 %v1927
    %v1997 = vunpack.c.h.b16 %v1927
    %v1998 = vunpack.c.l.b16 %v1928
    %v1999 = vunpack.c.h.b16 %v1928
    %v2000 = vunpack.c.l.b16 %v1929
    %v2001 = vunpack.c.h.b16 %v1929
    %v2002 = vunpack.c.l.b16 %v1930
    %v2003 = vunpack.c.h.b16 %v1930
    %v2004 = vunpack.c.l.b16 %v1931
    %v2005 = vunpack.c.h.b16 %v1931
    %v2006 = vunpack.c.l.b16 %v1932
    %v2007 = vunpack.c.h.b16 %v1932
    %v2008 = vunpack.c.l.b16 %v1933
    %v2009 = vunpack.c.h.b16 %v1933
    %v2010 = vunpack.c.l.b16 %v1934
    %v2011 = vunpack.c.h.b16 %v1934
    %v2012 = vunpack.c.l.b16 %v1935
    %v2013 = vunpack.c.h.b16 %v1935
    %v2014 = vunpack.c.l.b16 %v1936
    %v2015 = vunpack.c.h.b16 %v1936
    %v2016 = vunpack.c.l.b16 %v1937
    %v2017 = vunpack.c.h.b16 %v1937
    %v2018 = vunpack.c.l.b16 %v1938
    %v2019 = vunpack.c.h.b16 %v1938
    %v2020 = vunpack.c.l.b16 %v1939
    %v2021 = vunpack.c.h.b16 %v1939
    %v2022 = vunpack.c.l.b16 %v1940
    %v2023 = vunpack.c.h.b16 %v1940
    %v2024 = vunpack.c.l.b16 %v1941
    %v2025 = vunpack.c.h.b16 %v1941
    %v2026 = vunpack.c.l.b16 %v1942
    %v2027 = vunpack.c.h.b16 %v1942
    %v2028 = vunpack.c.l.b16 %v1943
    %v2029 = vunpack.c.h.b16 %v1943
    %v2030 = vunpack.c.l.b16 %v1944
    %v2031 = vunpack.c.h.b16 %v1944
    %v2032 = vunpack.c.l.b16 %v1945
    %v2033 = vunpack.c.h.b16 %v1945
    %v2034 = vunpack.c.l.b16 %v1946
    %v2035 = vunpack.c.h.b16 %v1946
    %v2036 = vunpack.c.l.b16 %v1947
    %v2037 = vunpack.c.h.b16 %v1947
    %v2038 = vunpack.c.l.b16 %v1948
    %v2039 = vunpack.c.h.b16 %v1948
    %v2040 = vunpack.c.l.b16 %v1949
    %v2041 = vunpack.c.h.b16 %v1949
    %v2042 = vunpack.c.l.b16 %v1950
    %v2043 = vunpack.c.h.b16 %v1950
    %v2044 = vunpack.c.l.b16 %v1951
    %v2045 = vunpack.c.h.b16 %v1951
    %v2046 = vunpack.c.l.b16 %v1952
    %v2047 = vunpack.c.h.b16 %v1952
    %v2048 = vunpack.c.l.b16 %v1953
    %v2049 = vunpack.c.h.b16 %v1953
    %v2050 = vpack.c.b16 %v1990, %v1986
    %v2051 = vpack.c.b16 %v1991, %v1987
    %v2052 = vpack.c.b16 %v1992, %v1988
    %v2053 = vpack.c.b16 %v1993, %v1989
    %v2054 = vpack.c.b16 %v1998, %v1994
    %v2055 = vpack.c.b16 %v1999, %v1995
    %v2056 = vpack.c.b16 %v2000, %v1996
    %v2057 = vpack.c.b16 %v2001, %v1997
    %v2058 = vpack.c.b16 %v2006, %v2002
    %v2059 = vpack.c.b16 %v2007, %v2003
    %v2060 = vpack.c.b16 %v2008, %v2004
    %v2061 = vpack.c.b16 %v2009, %v2005
    %v2062 = vpack.c.b16 %v2014, %v2010
    %v2063 = vpack.c.b16 %v2015, %v2011
    %v2064 = vpack.c.b16 %v2016, %v2012
    %v2065 = vpack.c.b16 %v2017, %v2013
    %v2066 = vpack.c.b16 %v2022, %v2018
    %v2067 = vpack.c.b16 %v2023, %v2019
    %v2068 = vpack.c.b16 %v2024, %v2020
    %v2069 = vpack.c.b16 %v2025, %v2021
    %v2070 = vpack.c.b16 %v2030, %v2026
    %v2071 = vpack.c.b16 %v2031, %v2027
    %v2072 = vpack.c.b16 %v2032, %v2028
    %v2073 = vpack.c.b16 %v2033, %v2029
    %v2074 = vpack.c.b16 %v2038, %v2034
    %v2075 = vpack.c.b16 %v2039, %v2035
    %v2076 = vpack.c.b16 %v2040, %v2036
    %v2077 = vpack.c.b16 %v2041, %v2037
    %v2078 = vpack.c.b16 %v2046, %v2042
    %v2079 = vpack.c.b16 %v2047, %v2043
    %v2080 = vpack.c.b16 %v2048, %v2044
    %v2081 = vpack.c.b16 %v2049, %v2045
    %2114 = vmatprep.subr.bf16.mxu0 %v2079
    %2115 = vmatpush1.bf16.msra.mxu0 %v2078
    %2116 = vmatprep.subr.bf16.mxu0 %v2075
    %2117 = vmatpush1.bf16.msra.mxu0 %v2074
    %2118 = vmatprep.subr.bf16.mxu0 %v2071
    %2119 = vmatpush1.bf16.msra.mxu0 %v2070
    %2120 = vmatprep.subr.bf16.mxu0 %v2067
    %2121 = vmatpush1.bf16.msra.mxu0 %v2066
    %2122 = vmatprep.subr.bf16.mxu0 %v2063
    %2123 = vmatpush1.bf16.msra.mxu0 %v2062
    %2124 = vmatprep.subr.bf16.mxu0 %v2059
    %2125 = vmatpush1.bf16.msra.mxu0 %v2058
    %2126 = vmatprep.subr.bf16.mxu0 %v2055
    %2127 = vmatpush1.bf16.msra.mxu0 %v2054
    %2128 = vmatprep.subr.bf16.mxu0 %v2051
    %2129 = vmatpush1.bf16.msra.mxu0 %v2050
    %2130 = vmatprep.subr.bf16.mxu0 0
    %2131 = vmatpush2.bf16.msra.mxu0 0
    %2132 = vmatprep.subr.bf16.mxu0 0
    %2133 = vmatpush2.bf16.msra.mxu0 0
    %2134 = vmatprep.subr.bf16.mxu0 0
    %2135 = vmatpush2.bf16.msra.mxu0 0
    %2136 = vmatprep.subr.bf16.mxu0 0
    %2137 = vmatpush2.bf16.msra.mxu0 0
    %2138 = vmatprep.subr.bf16.mxu0 0
    %2139 = vmatpush2.bf16.msra.mxu0 0
    %2140 = vmatprep.subr.bf16.mxu0 0
    %2141 = vmatpush2.bf16.msra.mxu0 0
    %2142 = vmatprep.subr.bf16.mxu0 0
    %2143 = vmatpush2.bf16.msra.mxu0 0
    %2144 = vmatprep.subr.bf16.mxu0 0
    %2145 = vmatpush2.bf16.msra.mxu0 0
    %2146 = vmatprep.mubr.bf16.mxu0 0
    %2147 = vmatmul.mubr.bf16.gmra.mxu0 %v1919
    %v2148 = vpop.f32.mrf.mxu0
    %v2149 = vadd.f32 0.0, %v2148
    %v2150 = vpop.f32.mrf.mxu0
    %v2151 = vadd.f32 0.0, %v2150
    %v2152 = vpop.f32.mrf.mxu0
    %v2153 = vpop.f32.mrf.mxu0
    %2154 = vdwg.mxu0
    %2155 = vmatprep.subr.bf16.mxu0 %v2081
    %2156 = vmatpush1.bf16.msra.mxu0 %v2080
    %2157 = vmatprep.subr.bf16.mxu0 %v2077
    %2158 = vmatpush1.bf16.msra.mxu0 %v2076
    %2159 = vmatprep.subr.bf16.mxu0 %v2073
    %2160 = vmatpush1.bf16.msra.mxu0 %v2072
    %2161 = vmatprep.subr.bf16.mxu0 %v2069
    %2162 = vmatpush1.bf16.msra.mxu0 %v2068
    %2163 = vmatprep.subr.bf16.mxu0 %v2065
    %2164 = vmatpush1.bf16.msra.mxu0 %v2064
    %2165 = vmatprep.subr.bf16.mxu0 %v2061
    %2166 = vmatpush1.bf16.msra.mxu0 %v2060
    %2167 = vmatprep.subr.bf16.mxu0 %v2057
    %2168 = vmatpush1.bf16.msra.mxu0 %v2056
    %2169 = vmatprep.subr.bf16.mxu0 %v2053
    %2170 = vmatpush1.bf16.msra.mxu0 %v2052
    %2171 = vmatprep.subr.bf16.mxu0 0
    %2172 = vmatpush2.bf16.msra.mxu0 0
    %2173 = vmatprep.subr.bf16.mxu0 0
    %2174 = vmatpush2.bf16.msra.mxu0 0
    %2175 = vmatprep.subr.bf16.mxu0 0
    %2176 = vmatpush2.bf16.msra.mxu0 0
    %2177 = vmatprep.subr.bf16.mxu0 0
    %2178 = vmatpush2.bf16.msra.mxu0 0
    %2179 = vmatprep.subr.bf16.mxu0 0
    %2180 = vmatpush2.bf16.msra.mxu0 0
    %2181 = vmatprep.subr.bf16.mxu0 0
    %2182 = vmatpush2.bf16.msra.mxu0 0
    %2183 = vmatprep.subr.bf16.mxu0 0
    %2184 = vmatpush2.bf16.msra.mxu0 0
    %2185 = vmatprep.subr.bf16.mxu0 0
    %2186 = vmatpush2.bf16.msra.mxu0 0
    %2187 = vmatprep.mubr.bf16.mxu0 0
    %2188 = vmatmul.mubr.bf16.gmra.mxu0 %v1919
    %v2189 = vpop.f32.mrf.mxu0
    %v2190 = vadd.f32 0.0, %v2189
    %v2191 = vpop.f32.mrf.mxu0
    %v2192 = vadd.f32 0.0, %v2191
    %v2193 = vpop.f32.mrf.mxu0
    %v2194 = vpop.f32.mrf.mxu0
    %2195 = vdwg.mxu0
    %s2196 = scalar_lea.vmem [#allocation4], 160
    %v2197 = vld [vmem:[%s2196] sm:$0xff]
    %v2198 = vadd.f32 %v2149, %v2197
    %v2199 = vxor.u32 %v2198, 2147483648
    %v2200 = vmul.f32 %v2199, 1.442695
    %v2201 = vpow.pop %v2200
    %v2202 = vadd.f32 %v2201, 1.0
    %v2203 = vrcp.pop %v2202
    %v2204 = vmul.f32 1.0, %v2203
    %v2205 = vld [vmem:[%s2196 + $0x8] sm:$0xff]
    %v2206 = vadd.f32 %v2151, %v2205
    %v2207 = vxor.u32 %v2206, 2147483648
    %v2208 = vmul.f32 %v2207, 1.442695
    %v2209 = vpow.pop %v2208
    %v2210 = vadd.f32 %v2209, 1.0
    %v2211 = vrcp.pop %v2210
    %v2212 = vmul.f32 1.0, %v2211
    %v2213 = vld [vmem:[%s2196 + $0x10] sm:$0xff]
    %v2214 = vadd.f32 %v2190, %v2213
    %v2215 = vtanh.pop %v2214
    %v2216 = vld [vmem:[%s2196 + $0x18] sm:$0xff]
    %v2217 = vadd.f32 %v2192, %v2216
    %v2218 = vxor.u32 %v2217, 2147483648
    %v2219 = vmul.f32 %v2218, 1.442695
    %v2220 = vpow.pop %v2219
    %v2221 = vadd.f32 %v2220, 1.0
    %v2222 = vrcp.pop %v2221
    %v2223 = vmul.f32 1.0, %v2222
    %v2224 = vmul.f32 %v2212, %v1916
    %v2225 = vmul.f32 %v2204, %v2215
    %v2226 = vadd.f32 %v2224, %v2225
    %v2227 = vtanh.pop %v2226
    %v2228 = vmul.f32 %v2223, %v2227
    %v2229 = vpack.c.bf16 %v2228, %v2228
    %s2230 = scalar_lea.vmem %s6, 20
    %2231 = vst [vmem:[%s2230] sm:$0xf] %v2229
    %v2232 = vld [vmem:[#allocation7] sm:$0xff]
    %v2233 = vld [vmem:[#allocation7 + $0x8] sm:$0xff]
    %v2234 = vld [vmem:[#allocation7 + $0x10] sm:$0xff]
    %v2235 = vld [vmem:[#allocation7 + $0x18] sm:$0xff]
    %v2236 = vld [vmem:[#allocation7 + $0x20] sm:$0xff]
    %v2237 = vld [vmem:[#allocation7 + $0x28] sm:$0xff]
    %v2238 = vld [vmem:[#allocation7 + $0x30] sm:$0xff]
    %v2239 = vld [vmem:[#allocation7 + $0x38] sm:$0xff]
    %v2240 = vld [vmem:[#allocation7 + $0x40] sm:$0xff]
    %v2241 = vld [vmem:[#allocation7 + $0x48] sm:$0xff]
    %v2242 = vld [vmem:[#allocation7 + $0x50] sm:$0xff]
    %v2243 = vld [vmem:[#allocation7 + $0x58] sm:$0xff]
    %v2244 = vld [vmem:[#allocation7 + $0x60] sm:$0xff]
    %v2245 = vld [vmem:[#allocation7 + $0x68] sm:$0xff]
    %v2246 = vld [vmem:[#allocation7 + $0x70] sm:$0xff]
    %v2247 = vld [vmem:[#allocation7 + $0x78] sm:$0xff]
    %v2248 = vld [vmem:[#allocation7 + $0x80] sm:$0xff]
    %v2249 = vld [vmem:[#allocation7 + $0x88] sm:$0xff]
    %v2250 = vld [vmem:[#allocation7 + $0x90] sm:$0xff]
    %v2251 = vld [vmem:[#allocation7 + $0x98] sm:$0xff]
    %v2252 = vld [vmem:[#allocation7 + $0xa0] sm:$0xff]
    %v2253 = vld [vmem:[#allocation7 + $0xa8] sm:$0xff]
    %v2254 = vld [vmem:[#allocation7 + $0xb0] sm:$0xff]
    %v2255 = vld [vmem:[#allocation7 + $0xb8] sm:$0xff]
    %v2256 = vld [vmem:[#allocation7 + $0xc0] sm:$0xff]
    %v2257 = vld [vmem:[#allocation7 + $0xc8] sm:$0xff]
    %v2258 = vld [vmem:[#allocation7 + $0xd0] sm:$0xff]
    %v2259 = vld [vmem:[#allocation7 + $0xd8] sm:$0xff]
    %v2260 = vld [vmem:[#allocation7 + $0xe0] sm:$0xff]
    %v2261 = vld [vmem:[#allocation7 + $0xe8] sm:$0xff]
    %v2262 = vld [vmem:[#allocation7 + $0xf0] sm:$0xff]
    %v2263 = vld [vmem:[#allocation7 + $0xf8] sm:$0xff]
    %v2296 = vunpack.c.l.b16 %v2232
    %v2297 = vunpack.c.h.b16 %v2232
    %v2298 = vunpack.c.l.b16 %v2233
    %v2299 = vunpack.c.h.b16 %v2233
    %v2300 = vunpack.c.l.b16 %v2234
    %v2301 = vunpack.c.h.b16 %v2234
    %v2302 = vunpack.c.l.b16 %v2235
    %v2303 = vunpack.c.h.b16 %v2235
    %v2304 = vunpack.c.l.b16 %v2236
    %v2305 = vunpack.c.h.b16 %v2236
    %v2306 = vunpack.c.l.b16 %v2237
    %v2307 = vunpack.c.h.b16 %v2237
    %v2308 = vunpack.c.l.b16 %v2238
    %v2309 = vunpack.c.h.b16 %v2238
    %v2310 = vunpack.c.l.b16 %v2239
    %v2311 = vunpack.c.h.b16 %v2239
    %v2312 = vunpack.c.l.b16 %v2240
    %v2313 = vunpack.c.h.b16 %v2240
    %v2314 = vunpack.c.l.b16 %v2241
    %v2315 = vunpack.c.h.b16 %v2241
    %v2316 = vunpack.c.l.b16 %v2242
    %v2317 = vunpack.c.h.b16 %v2242
    %v2318 = vunpack.c.l.b16 %v2243
    %v2319 = vunpack.c.h.b16 %v2243
    %v2320 = vunpack.c.l.b16 %v2244
    %v2321 = vunpack.c.h.b16 %v2244
    %v2322 = vunpack.c.l.b16 %v2245
    %v2323 = vunpack.c.h.b16 %v2245
    %v2324 = vunpack.c.l.b16 %v2246
    %v2325 = vunpack.c.h.b16 %v2246
    %v2326 = vunpack.c.l.b16 %v2247
    %v2327 = vunpack.c.h.b16 %v2247
    %v2328 = vunpack.c.l.b16 %v2248
    %v2329 = vunpack.c.h.b16 %v2248
    %v2330 = vunpack.c.l.b16 %v2249
    %v2331 = vunpack.c.h.b16 %v2249
    %v2332 = vunpack.c.l.b16 %v2250
    %v2333 = vunpack.c.h.b16 %v2250
    %v2334 = vunpack.c.l.b16 %v2251
    %v2335 = vunpack.c.h.b16 %v2251
    %v2336 = vunpack.c.l.b16 %v2252
    %v2337 = vunpack.c.h.b16 %v2252
    %v2338 = vunpack.c.l.b16 %v2253
    %v2339 = vunpack.c.h.b16 %v2253
    %v2340 = vunpack.c.l.b16 %v2254
    %v2341 = vunpack.c.h.b16 %v2254
    %v2342 = vunpack.c.l.b16 %v2255
    %v2343 = vunpack.c.h.b16 %v2255
    %v2344 = vunpack.c.l.b16 %v2256
    %v2345 = vunpack.c.h.b16 %v2256
    %v2346 = vunpack.c.l.b16 %v2257
    %v2347 = vunpack.c.h.b16 %v2257
    %v2348 = vunpack.c.l.b16 %v2258
    %v2349 = vunpack.c.h.b16 %v2258
    %v2350 = vunpack.c.l.b16 %v2259
    %v2351 = vunpack.c.h.b16 %v2259
    %v2352 = vunpack.c.l.b16 %v2260
    %v2353 = vunpack.c.h.b16 %v2260
    %v2354 = vunpack.c.l.b16 %v2261
    %v2355 = vunpack.c.h.b16 %v2261
    %v2356 = vunpack.c.l.b16 %v2262
    %v2357 = vunpack.c.h.b16 %v2262
    %v2358 = vunpack.c.l.b16 %v2263
    %v2359 = vunpack.c.h.b16 %v2263
    %v2360 = vpack.c.b16 %v2300, %v2296
    %v2361 = vpack.c.b16 %v2301, %v2297
    %v2362 = vpack.c.b16 %v2302, %v2298
    %v2363 = vpack.c.b16 %v2303, %v2299
    %v2364 = vpack.c.b16 %v2308, %v2304
    %v2365 = vpack.c.b16 %v2309, %v2305
    %v2366 = vpack.c.b16 %v2310, %v2306
    %v2367 = vpack.c.b16 %v2311, %v2307
    %v2368 = vpack.c.b16 %v2316, %v2312
    %v2369 = vpack.c.b16 %v2317, %v2313
    %v2370 = vpack.c.b16 %v2318, %v2314
    %v2371 = vpack.c.b16 %v2319, %v2315
    %v2372 = vpack.c.b16 %v2324, %v2320
    %v2373 = vpack.c.b16 %v2325, %v2321
    %v2374 = vpack.c.b16 %v2326, %v2322
    %v2375 = vpack.c.b16 %v2327, %v2323
    %v2376 = vpack.c.b16 %v2332, %v2328
    %v2377 = vpack.c.b16 %v2333, %v2329
    %v2378 = vpack.c.b16 %v2334, %v2330
    %v2379 = vpack.c.b16 %v2335, %v2331
    %v2380 = vpack.c.b16 %v2340, %v2336
    %v2381 = vpack.c.b16 %v2341, %v2337
    %v2382 = vpack.c.b16 %v2342, %v2338
    %v2383 = vpack.c.b16 %v2343, %v2339
    %v2384 = vpack.c.b16 %v2348, %v2344
    %v2385 = vpack.c.b16 %v2349, %v2345
    %v2386 = vpack.c.b16 %v2350, %v2346
    %v2387 = vpack.c.b16 %v2351, %v2347
    %v2388 = vpack.c.b16 %v2356, %v2352
    %v2389 = vpack.c.b16 %v2357, %v2353
    %v2390 = vpack.c.b16 %v2358, %v2354
    %v2391 = vpack.c.b16 %v2359, %v2355
    %2424 = vmatprep.subr.bf16.mxu0 %v2389
    %2425 = vmatpush1.bf16.msra.mxu0 %v2388
    %2426 = vmatprep.subr.bf16.mxu0 %v2385
    %2427 = vmatpush1.bf16.msra.mxu0 %v2384
    %2428 = vmatprep.subr.bf16.mxu0 %v2381
    %2429 = vmatpush1.bf16.msra.mxu0 %v2380
    %2430 = vmatprep.subr.bf16.mxu0 %v2377
    %2431 = vmatpush1.bf16.msra.mxu0 %v2376
    %2432 = vmatprep.subr.bf16.mxu0 %v2373
    %2433 = vmatpush1.bf16.msra.mxu0 %v2372
    %2434 = vmatprep.subr.bf16.mxu0 %v2369
    %2435 = vmatpush1.bf16.msra.mxu0 %v2368
    %2436 = vmatprep.subr.bf16.mxu0 %v2365
    %2437 = vmatpush1.bf16.msra.mxu0 %v2364
    %2438 = vmatprep.subr.bf16.mxu0 %v2361
    %2439 = vmatpush1.bf16.msra.mxu0 %v2360
    %2440 = vmatprep.subr.bf16.mxu0 0
    %2441 = vmatpush2.bf16.msra.mxu0 0
    %2442 = vmatprep.subr.bf16.mxu0 0
    %2443 = vmatpush2.bf16.msra.mxu0 0
    %2444 = vmatprep.subr.bf16.mxu0 0
    %2445 = vmatpush2.bf16.msra.mxu0 0
    %2446 = vmatprep.subr.bf16.mxu0 0
    %2447 = vmatpush2.bf16.msra.mxu0 0
    %2448 = vmatprep.subr.bf16.mxu0 0
    %2449 = vmatpush2.bf16.msra.mxu0 0
    %2450 = vmatprep.subr.bf16.mxu0 0
    %2451 = vmatpush2.bf16.msra.mxu0 0
    %2452 = vmatprep.subr.bf16.mxu0 0
    %2453 = vmatpush2.bf16.msra.mxu0 0
    %2454 = vmatprep.subr.bf16.mxu0 0
    %2455 = vmatpush2.bf16.msra.mxu0 0
    %2456 = vmatprep.mubr.bf16.mxu0 0
    %2457 = vmatmul.mubr.bf16.gmra.mxu0 %v2229
    %v2458 = vpop.f32.mrf.mxu0
    %v2459 = vadd.f32 0.0, %v2458
    %v2460 = vpop.f32.mrf.mxu0
    %v2461 = vadd.f32 0.0, %v2460
    %v2462 = vpop.f32.mrf.mxu0
    %v2463 = vpop.f32.mrf.mxu0
    %2464 = vdwg.mxu0
    %2465 = vmatprep.subr.bf16.mxu0 %v2391
    %2466 = vmatpush1.bf16.msra.mxu0 %v2390
    %2467 = vmatprep.subr.bf16.mxu0 %v2387
    %2468 = vmatpush1.bf16.msra.mxu0 %v2386
    %2469 = vmatprep.subr.bf16.mxu0 %v2383
    %2470 = vmatpush1.bf16.msra.mxu0 %v2382
    %2471 = vmatprep.subr.bf16.mxu0 %v2379
    %2472 = vmatpush1.bf16.msra.mxu0 %v2378
    %2473 = vmatprep.subr.bf16.mxu0 %v2375
    %2474 = vmatpush1.bf16.msra.mxu0 %v2374
    %2475 = vmatprep.subr.bf16.mxu0 %v2371
    %2476 = vmatpush1.bf16.msra.mxu0 %v2370
    %2477 = vmatprep.subr.bf16.mxu0 %v2367
    %2478 = vmatpush1.bf16.msra.mxu0 %v2366
    %2479 = vmatprep.subr.bf16.mxu0 %v2363
    %2480 = vmatpush1.bf16.msra.mxu0 %v2362
    %2481 = vmatprep.subr.bf16.mxu0 0
    %2482 = vmatpush2.bf16.msra.mxu0 0
    %2483 = vmatprep.subr.bf16.mxu0 0
    %2484 = vmatpush2.bf16.msra.mxu0 0
    %2485 = vmatprep.subr.bf16.mxu0 0
    %2486 = vmatpush2.bf16.msra.mxu0 0
    %2487 = vmatprep.subr.bf16.mxu0 0
    %2488 = vmatpush2.bf16.msra.mxu0 0
    %2489 = vmatprep.subr.bf16.mxu0 0
    %2490 = vmatpush2.bf16.msra.mxu0 0
    %2491 = vmatprep.subr.bf16.mxu0 0
    %2492 = vmatpush2.bf16.msra.mxu0 0
    %2493 = vmatprep.subr.bf16.mxu0 0
    %2494 = vmatpush2.bf16.msra.mxu0 0
    %2495 = vmatprep.subr.bf16.mxu0 0
    %2496 = vmatpush2.bf16.msra.mxu0 0
    %2497 = vmatprep.mubr.bf16.mxu0 0
    %2498 = vmatmul.mubr.bf16.gmra.mxu0 %v2229
    %v2499 = vpop.f32.mrf.mxu0
    %v2500 = vadd.f32 0.0, %v2499
    %v2501 = vpop.f32.mrf.mxu0
    %v2502 = vadd.f32 0.0, %v2501
    %v2503 = vpop.f32.mrf.mxu0
    %v2504 = vpop.f32.mrf.mxu0
    %2505 = vdwg.mxu0
    %s2506 = scalar_lea.vmem [#allocation4], 192
    %v2507 = vld [vmem:[%s2506] sm:$0xff]
    %v2508 = vadd.f32 %v2459, %v2507
    %v2509 = vxor.u32 %v2508, 2147483648
    %v2510 = vmul.f32 %v2509, 1.442695
    %v2511 = vpow.pop %v2510
    %v2512 = vadd.f32 %v2511, 1.0
    %v2513 = vrcp.pop %v2512
    %v2514 = vmul.f32 1.0, %v2513
    %v2515 = vld [vmem:[%s2506 + $0x8] sm:$0xff]
    %v2516 = vadd.f32 %v2461, %v2515
    %v2517 = vxor.u32 %v2516, 2147483648
    %v2518 = vmul.f32 %v2517, 1.442695
    %v2519 = vpow.pop %v2518
    %v2520 = vadd.f32 %v2519, 1.0
    %v2521 = vrcp.pop %v2520
    %v2522 = vmul.f32 1.0, %v2521
    %v2523 = vld [vmem:[%s2506 + $0x10] sm:$0xff]
    %v2524 = vadd.f32 %v2500, %v2523
    %v2525 = vtanh.pop %v2524
    %v2526 = vld [vmem:[%s2506 + $0x18] sm:$0xff]
    %v2527 = vadd.f32 %v2502, %v2526
    %v2528 = vxor.u32 %v2527, 2147483648
    %v2529 = vmul.f32 %v2528, 1.442695
    %v2530 = vpow.pop %v2529
    %v2531 = vadd.f32 %v2530, 1.0
    %v2532 = vrcp.pop %v2531
    %v2533 = vmul.f32 1.0, %v2532
    %v2534 = vmul.f32 %v2522, %v2226
    %v2535 = vmul.f32 %v2514, %v2525
    %v2536 = vadd.f32 %v2534, %v2535
    %v2537 = vtanh.pop %v2536
    %v2538 = vmul.f32 %v2533, %v2537
    %v2539 = vpack.c.bf16 %v2538, %v2538
    %s2540 = scalar_lea.vmem %s6, 24
    %2541 = vst [vmem:[%s2540] sm:$0xf] %v2539
    %v2542 = vld [vmem:[#allocation7] sm:$0xff]
    %v2543 = vld [vmem:[#allocation7 + $0x8] sm:$0xff]
    %v2544 = vld [vmem:[#allocation7 + $0x10] sm:$0xff]
    %v2545 = vld [vmem:[#allocation7 + $0x18] sm:$0xff]
    %v2546 = vld [vmem:[#allocation7 + $0x20] sm:$0xff]
    %v2547 = vld [vmem:[#allocation7 + $0x28] sm:$0xff]
    %v2548 = vld [vmem:[#allocation7 + $0x30] sm:$0xff]
    %v2549 = vld [vmem:[#allocation7 + $0x38] sm:$0xff]
    %v2550 = vld [vmem:[#allocation7 + $0x40] sm:$0xff]
    %v2551 = vld [vmem:[#allocation7 + $0x48] sm:$0xff]
    %v2552 = vld [vmem:[#allocation7 + $0x50] sm:$0xff]
    %v2553 = vld [vmem:[#allocation7 + $0x58] sm:$0xff]
    %v2554 = vld [vmem:[#allocation7 + $0x60] sm:$0xff]
    %v2555 = vld [vmem:[#allocation7 + $0x68] sm:$0xff]
    %v2556 = vld [vmem:[#allocation7 + $0x70] sm:$0xff]
    %v2557 = vld [vmem:[#allocation7 + $0x78] sm:$0xff]
    %v2558 = vld [vmem:[#allocation7 + $0x80] sm:$0xff]
    %v2559 = vld [vmem:[#allocation7 + $0x88] sm:$0xff]
    %v2560 = vld [vmem:[#allocation7 + $0x90] sm:$0xff]
    %v2561 = vld [vmem:[#allocation7 + $0x98] sm:$0xff]
    %v2562 = vld [vmem:[#allocation7 + $0xa0] sm:$0xff]
    %v2563 = vld [vmem:[#allocation7 + $0xa8] sm:$0xff]
    %v2564 = vld [vmem:[#allocation7 + $0xb0] sm:$0xff]
    %v2565 = vld [vmem:[#allocation7 + $0xb8] sm:$0xff]
    %v2566 = vld [vmem:[#allocation7 + $0xc0] sm:$0xff]
    %v2567 = vld [vmem:[#allocation7 + $0xc8] sm:$0xff]
    %v2568 = vld [vmem:[#allocation7 + $0xd0] sm:$0xff]
    %v2569 = vld [vmem:[#allocation7 + $0xd8] sm:$0xff]
    %v2570 = vld [vmem:[#allocation7 + $0xe0] sm:$0xff]
    %v2571 = vld [vmem:[#allocation7 + $0xe8] sm:$0xff]
    %v2572 = vld [vmem:[#allocation7 + $0xf0] sm:$0xff]
    %v2573 = vld [vmem:[#allocation7 + $0xf8] sm:$0xff]
    %v2606 = vunpack.c.l.b16 %v2542
    %v2607 = vunpack.c.h.b16 %v2542
    %v2608 = vunpack.c.l.b16 %v2543
    %v2609 = vunpack.c.h.b16 %v2543
    %v2610 = vunpack.c.l.b16 %v2544
    %v2611 = vunpack.c.h.b16 %v2544
    %v2612 = vunpack.c.l.b16 %v2545
    %v2613 = vunpack.c.h.b16 %v2545
    %v2614 = vunpack.c.l.b16 %v2546
    %v2615 = vunpack.c.h.b16 %v2546
    %v2616 = vunpack.c.l.b16 %v2547
    %v2617 = vunpack.c.h.b16 %v2547
    %v2618 = vunpack.c.l.b16 %v2548
    %v2619 = vunpack.c.h.b16 %v2548
    %v2620 = vunpack.c.l.b16 %v2549
    %v2621 = vunpack.c.h.b16 %v2549
    %v2622 = vunpack.c.l.b16 %v2550
    %v2623 = vunpack.c.h.b16 %v2550
    %v2624 = vunpack.c.l.b16 %v2551
    %v2625 = vunpack.c.h.b16 %v2551
    %v2626 = vunpack.c.l.b16 %v2552
    %v2627 = vunpack.c.h.b16 %v2552
    %v2628 = vunpack.c.l.b16 %v2553
    %v2629 = vunpack.c.h.b16 %v2553
    %v2630 = vunpack.c.l.b16 %v2554
    %v2631 = vunpack.c.h.b16 %v2554
    %v2632 = vunpack.c.l.b16 %v2555
    %v2633 = vunpack.c.h.b16 %v2555
    %v2634 = vunpack.c.l.b16 %v2556
    %v2635 = vunpack.c.h.b16 %v2556
    %v2636 = vunpack.c.l.b16 %v2557
    %v2637 = vunpack.c.h.b16 %v2557
    %v2638 = vunpack.c.l.b16 %v2558
    %v2639 = vunpack.c.h.b16 %v2558
    %v2640 = vunpack.c.l.b16 %v2559
    %v2641 = vunpack.c.h.b16 %v2559
    %v2642 = vunpack.c.l.b16 %v2560
    %v2643 = vunpack.c.h.b16 %v2560
    %v2644 = vunpack.c.l.b16 %v2561
    %v2645 = vunpack.c.h.b16 %v2561
    %v2646 = vunpack.c.l.b16 %v2562
    %v2647 = vunpack.c.h.b16 %v2562
    %v2648 = vunpack.c.l.b16 %v2563
    %v2649 = vunpack.c.h.b16 %v2563
    %v2650 = vunpack.c.l.b16 %v2564
    %v2651 = vunpack.c.h.b16 %v2564
    %v2652 = vunpack.c.l.b16 %v2565
    %v2653 = vunpack.c.h.b16 %v2565
    %v2654 = vunpack.c.l.b16 %v2566
    %v2655 = vunpack.c.h.b16 %v2566
    %v2656 = vunpack.c.l.b16 %v2567
    %v2657 = vunpack.c.h.b16 %v2567
    %v2658 = vunpack.c.l.b16 %v2568
    %v2659 = vunpack.c.h.b16 %v2568
    %v2660 = vunpack.c.l.b16 %v2569
    %v2661 = vunpack.c.h.b16 %v2569
    %v2662 = vunpack.c.l.b16 %v2570
    %v2663 = vunpack.c.h.b16 %v2570
    %v2664 = vunpack.c.l.b16 %v2571
    %v2665 = vunpack.c.h.b16 %v2571
    %v2666 = vunpack.c.l.b16 %v2572
    %v2667 = vunpack.c.h.b16 %v2572
    %v2668 = vunpack.c.l.b16 %v2573
    %v2669 = vunpack.c.h.b16 %v2573
    %v2670 = vpack.c.b16 %v2610, %v2606
    %v2671 = vpack.c.b16 %v2611, %v2607
    %v2672 = vpack.c.b16 %v2612, %v2608
    %v2673 = vpack.c.b16 %v2613, %v2609
    %v2674 = vpack.c.b16 %v2618, %v2614
    %v2675 = vpack.c.b16 %v2619, %v2615
    %v2676 = vpack.c.b16 %v2620, %v2616
    %v2677 = vpack.c.b16 %v2621, %v2617
    %v2678 = vpack.c.b16 %v2626, %v2622
    %v2679 = vpack.c.b16 %v2627, %v2623
    %v2680 = vpack.c.b16 %v2628, %v2624
    %v2681 = vpack.c.b16 %v2629, %v2625
    %v2682 = vpack.c.b16 %v2634, %v2630
    %v2683 = vpack.c.b16 %v2635, %v2631
    %v2684 = vpack.c.b16 %v2636, %v2632
    %v2685 = vpack.c.b16 %v2637, %v2633
    %v2686 = vpack.c.b16 %v2642, %v2638
    %v2687 = vpack.c.b16 %v2643, %v2639
    %v2688 = vpack.c.b16 %v2644, %v2640
    %v2689 = vpack.c.b16 %v2645, %v2641
    %v2690 = vpack.c.b16 %v2650, %v2646
    %v2691 = vpack.c.b16 %v2651, %v2647
    %v2692 = vpack.c.b16 %v2652, %v2648
    %v2693 = vpack.c.b16 %v2653, %v2649
    %v2694 = vpack.c.b16 %v2658, %v2654
    %v2695 = vpack.c.b16 %v2659, %v2655
    %v2696 = vpack.c.b16 %v2660, %v2656
    %v2697 = vpack.c.b16 %v2661, %v2657
    %v2698 = vpack.c.b16 %v2666, %v2662
    %v2699 = vpack.c.b16 %v2667, %v2663
    %v2700 = vpack.c.b16 %v2668, %v2664
    %v2701 = vpack.c.b16 %v2669, %v2665
    %2734 = vmatprep.subr.bf16.mxu0 %v2699
    %2735 = vmatpush1.bf16.msra.mxu0 %v2698
    %2736 = vmatprep.subr.bf16.mxu0 %v2695
    %2737 = vmatpush1.bf16.msra.mxu0 %v2694
    %2738 = vmatprep.subr.bf16.mxu0 %v2691
    %2739 = vmatpush1.bf16.msra.mxu0 %v2690
    %2740 = vmatprep.subr.bf16.mxu0 %v2687
    %2741 = vmatpush1.bf16.msra.mxu0 %v2686
    %2742 = vmatprep.subr.bf16.mxu0 %v2683
    %2743 = vmatpush1.bf16.msra.mxu0 %v2682
    %2744 = vmatprep.subr.bf16.mxu0 %v2679
    %2745 = vmatpush1.bf16.msra.mxu0 %v2678
    %2746 = vmatprep.subr.bf16.mxu0 %v2675
    %2747 = vmatpush1.bf16.msra.mxu0 %v2674
    %2748 = vmatprep.subr.bf16.mxu0 %v2671
    %2749 = vmatpush1.bf16.msra.mxu0 %v2670
    %2750 = vmatprep.subr.bf16.mxu0 0
    %2751 = vmatpush2.bf16.msra.mxu0 0
    %2752 = vmatprep.subr.bf16.mxu0 0
    %2753 = vmatpush2.bf16.msra.mxu0 0
    %2754 = vmatprep.subr.bf16.mxu0 0
    %2755 = vmatpush2.bf16.msra.mxu0 0
    %2756 = vmatprep.subr.bf16.mxu0 0
    %2757 = vmatpush2.bf16.msra.mxu0 0
    %2758 = vmatprep.subr.bf16.mxu0 0
    %2759 = vmatpush2.bf16.msra.mxu0 0
    %2760 = vmatprep.subr.bf16.mxu0 0
    %2761 = vmatpush2.bf16.msra.mxu0 0
    %2762 = vmatprep.subr.bf16.mxu0 0
    %2763 = vmatpush2.bf16.msra.mxu0 0
    %2764 = vmatprep.subr.bf16.mxu0 0
    %2765 = vmatpush2.bf16.msra.mxu0 0
    %2766 = vmatprep.mubr.bf16.mxu0 0
    %2767 = vmatmul.mubr.bf16.gmra.mxu0 %v2539
    %v2768 = vpop.f32.mrf.mxu0
    %v2769 = vadd.f32 0.0, %v2768
    %v2770 = vpop.f32.mrf.mxu0
    %v2771 = vadd.f32 0.0, %v2770
    %v2772 = vpop.f32.mrf.mxu0
    %v2773 = vpop.f32.mrf.mxu0
    %2774 = vdwg.mxu0
    %2775 = vmatprep.subr.bf16.mxu0 %v2701
    %2776 = vmatpush1.bf16.msra.mxu0 %v2700
    %2777 = vmatprep.subr.bf16.mxu0 %v2697
    %2778 = vmatpush1.bf16.msra.mxu0 %v2696
    %2779 = vmatprep.subr.bf16.mxu0 %v2693
    %2780 = vmatpush1.bf16.msra.mxu0 %v2692
    %2781 = vmatprep.subr.bf16.mxu0 %v2689
    %2782 = vmatpush1.bf16.msra.mxu0 %v2688
    %2783 = vmatprep.subr.bf16.mxu0 %v2685
    %2784 = vmatpush1.bf16.msra.mxu0 %v2684
    %2785 = vmatprep.subr.bf16.mxu0 %v2681
    %2786 = vmatpush1.bf16.msra.mxu0 %v2680
    %2787 = vmatprep.subr.bf16.mxu0 %v2677
    %2788 = vmatpush1.bf16.msra.mxu0 %v2676
    %2789 = vmatprep.subr.bf16.mxu0 %v2673
    %2790 = vmatpush1.bf16.msra.mxu0 %v2672
    %2791 = vmatprep.subr.bf16.mxu0 0
    %2792 = vmatpush2.bf16.msra.mxu0 0
    %2793 = vmatprep.subr.bf16.mxu0 0
    %2794 = vmatpush2.bf16.msra.mxu0 0
    %2795 = vmatprep.subr.bf16.mxu0 0
    %2796 = vmatpush2.bf16.msra.mxu0 0
    %2797 = vmatprep.subr.bf16.mxu0 0
    %2798 = vmatpush2.bf16.msra.mxu0 0
    %2799 = vmatprep.subr.bf16.mxu0 0
    %2800 = vmatpush2.bf16.msra.mxu0 0
    %2801 = vmatprep.subr.bf16.mxu0 0
    %2802 = vmatpush2.bf16.msra.mxu0 0
    %2803 = vmatprep.subr.bf16.mxu0 0
    %2804 = vmatpush2.bf16.msra.mxu0 0
    %2805 = vmatprep.subr.bf16.mxu0 0
    %2806 = vmatpush2.bf16.msra.mxu0 0
    %2807 = vmatprep.mubr.bf16.mxu0 0
    %2808 = vmatmul.mubr.bf16.gmra.mxu0 %v2539
    %v2809 = vpop.f32.mrf.mxu0
    %v2810 = vadd.f32 0.0, %v2809
    %v2811 = vpop.f32.mrf.mxu0
    %v2812 = vadd.f32 0.0, %v2811
    %v2813 = vpop.f32.mrf.mxu0
    %v2814 = vpop.f32.mrf.mxu0
    %2815 = vdwg.mxu0
    %s2816 = scalar_lea.vmem [#allocation4], 224
    %v2817 = vld [vmem:[%s2816] sm:$0xff]
    %v2818 = vadd.f32 %v2769, %v2817
    %v2819 = vxor.u32 %v2818, 2147483648
    %v2820 = vmul.f32 %v2819, 1.442695
    %v2821 = vpow.pop %v2820
    %v2822 = vadd.f32 %v2821, 1.0
    %v2823 = vrcp.pop %v2822
    %v2824 = vmul.f32 1.0, %v2823
    %v2825 = vld [vmem:[%s2816 + $0x8] sm:$0xff]
    %v2826 = vadd.f32 %v2771, %v2825
    %v2827 = vxor.u32 %v2826, 2147483648
    %v2828 = vmul.f32 %v2827, 1.442695
    %v2829 = vpow.pop %v2828
    %v2830 = vadd.f32 %v2829, 1.0
    %v2831 = vrcp.pop %v2830
    %v2832 = vmul.f32 1.0, %v2831
    %v2833 = vld [vmem:[%s2816 + $0x10] sm:$0xff]
    %v2834 = vadd.f32 %v2810, %v2833
    %v2835 = vtanh.pop %v2834
    %v2836 = vld [vmem:[%s2816 + $0x18] sm:$0xff]
    %v2837 = vadd.f32 %v2812, %v2836
    %v2838 = vxor.u32 %v2837, 2147483648
    %v2839 = vmul.f32 %v2838, 1.442695
    %v2840 = vpow.pop %v2839
    %v2841 = vadd.f32 %v2840, 1.0
    %v2842 = vrcp.pop %v2841
    %v2843 = vmul.f32 1.0, %v2842
    %v2844 = vmul.f32 %v2832, %v2536
    %v2845 = vmul.f32 %v2824, %v2835
    %v2846 = vadd.f32 %v2844, %v2845
    %v2847 = vtanh.pop %v2846
    %v2848 = vmul.f32 %v2843, %v2847
    %v2849 = vpack.c.bf16 %v2848, %v2848
    %s2850 = scalar_lea.vmem %s6, 28
    %2851 = vst [vmem:[%s2850] sm:$0xf] %v2849
    %2852 = vst [vmem:[#allocation2] sm:$0xff] %v2848
    %2853 = vst [vmem:[#allocation3] sm:$0xff] %v2846
    // Predicated region
    $region42: #{cell_lstm_forward.2} parent=1 // pred_check
      %p2854 = pneg %p66
    $region43: #{cell_lstm_forward.2} parent=1 // pred_check_branch
      %2856 = sbr.rel (%p2854) target = $region45
    $region44: #{cell_lstm_forward.2} parent=1 // pred_region
      %2857 = vst [vmem:[%s7] sm:$0xff] %v2848
      %2858 = vst [vmem:[%s8] sm:$0xff] %v2846
    $region45: #{cell_lstm_forward.2} parent=1 // pred_fallthru
      _
    // Predicated region
    $region46: #{cell_lstm_forward.2} parent=1 // pred_check
      _
    $region47: #{cell_lstm_forward.2} parent=1 // pred_check_branch
      %2860 = sbr.rel (0) target = $region49
    $region48: #{cell_lstm_forward.2} parent=1 // pred_region
      _
    $region49: #{cell_lstm_forward.2} parent=1 // pred_fallthru
      _
    // Predicated region
    $region50: #{cell_lstm_forward.2} parent=1 // pred_check
      _
    $region51: #{cell_lstm_forward.2} parent=1 // pred_check_branch
      %2862 = sbr.rel (0) target = $region53
    $region52: #{cell_lstm_forward.2} parent=1 // pred_region
      _
    $region53: #{cell_lstm_forward.2} parent=1 // pred_fallthru
      _
    // Predicated region
    $region54: #{cell_lstm_forward.2} parent=1 // pred_check
      _
    $region55: #{cell_lstm_forward.2} parent=1 // pred_check_branch
      %2864 = sbr.rel (0) target = $region57
    $region56: #{cell_lstm_forward.2} parent=1 // pred_region
      _
    $region57: #{cell_lstm_forward.2} parent=1 // pred_fallthru
      _
    // Predicated region
    $region58: #{cell_lstm_forward.2} parent=1 // pred_check
      _
    $region59: #{cell_lstm_forward.2} parent=1 // pred_check_branch
      %2866 = sbr.rel (0) target = $region61
    $region60: #{cell_lstm_forward.2} parent=1 // pred_region
      _
    $region61: #{cell_lstm_forward.2} parent=1 // pred_fallthru
      _
    // Predicated region
    $region62: #{cell_lstm_forward.2} parent=1 // pred_check
      _
    $region63: #{cell_lstm_forward.2} parent=1 // pred_check_branch
      %2868 = sbr.rel (0) target = $region65
    $region64: #{cell_lstm_forward.2} parent=1 // pred_region
      _
    $region65: #{cell_lstm_forward.2} parent=1 // pred_fallthru
      _
    // Predicated region
    $region66: #{cell_lstm_forward.2} parent=1 // pred_check
      _
    $region67: #{cell_lstm_forward.2} parent=1 // pred_check_branch
      %2870 = sbr.rel (0) target = $region69
    $region68: #{cell_lstm_forward.2} parent=1 // pred_region
      _
    $region69: #{cell_lstm_forward.2} parent=1 // pred_fallthru
      _
    %2871 = vsyncpa [#allocation6], 1
    %2872 = vsyncpa [#allocation8], 1

// kernel: cell_lstm_forward.3
$region0: #{cell_lstm_forward.3}
  #allocation0 [shape = 'u32[]', space=smem, size = 0x4, offset = 0x4, fixed_abs, tag = 'smem constant byte address 0x4 - core index']
  #allocation1 [shape = 'u32[144,128]{1,0:T(1,128)}', space=vmem, size = 0x12000, scoped, tag = 'internal scratch']
  #allocation2 [shape = 'f32[8,128]{1,0:T(8,128)}', space=vmem, size = 0x1000, scoped, tag = 'scratch operand']
  #allocation3 [shape = 'f32[8,128]{1,0:T(8,128)}', space=vmem, size = 0x1000, scoped, tag = 'scratch operand']
  #allocation4 [shape = 'f32[8,8,512]{2,1,0:T(8,128)}', space=vmem, size = 0x20000, scoped, tag = 'scratch operand']
  %s0 = inlined_call_operand.vmem [shape: bf16[8,8,128], index: 0, kind: input, shape index: {}]
  %s1 = inlined_call_operand.vmem [shape: f32[8,128], index: 1, kind: input, shape index: {}]
  %s2 = inlined_call_operand.vmem [shape: f32[8,128], index: 2, kind: input, shape index: {}]
  %s3 = inlined_call_operand.vmem [shape: bf16[128,512], index: 3, kind: input, shape index: {}]
  %s4 = inlined_call_operand.hbm [shape: bf16[128,512], index: 4, kind: input, shape index: {}]
  %s5 = inlined_call_operand.vmem [shape: f32[1,512], index: 5, kind: input, shape index: {}]
  %s6 = inlined_call_operand.vmem [shape: bf16[8,8,128], index: 6, kind: output, shape index: {0}]
  %s7 = inlined_call_operand.vmem [shape: f32[8,128], index: 7, kind: output, shape index: {1}]
  %s8 = inlined_call_operand.vmem [shape: f32[8,128], index: 8, kind: output, shape index: {2}]
  %9 = xla_tuple %s6, %s7, %s8
  %s10 = sld [smem:[#allocation0]]
  $region62: #{cell_lstm_forward.3} parent=0
    _
  %s12 = ssub.s32 1, %s10
  %s13 = scalar_select 0, %s12, %s10
  $region1: #{cell_lstm_forward.3} parent=0
    #allocation5 [shape = 'u8[131072]{0}', space=vmem, size = 0x20000, scoped, tag = 'input window, operand 4, single buffered']
    #allocation6 [shape = 's32[1]{0}', space=sflag, size = 0x4, scoped, tag = 'scoped memory for cell_lstm_forward.3']
    %14 = vsyncpa [#allocation6], 0
    // Predicated region
    $region2: #{cell_lstm_forward.3} parent=1 // pred_check
      _
    $region3: #{cell_lstm_forward.3} parent=1 // pred_check_branch
      %16 = sbr.rel (0) target = $region5
    $region4: #{cell_lstm_forward.3} parent=1 // pred_region
      _
    $region5: #{cell_lstm_forward.3} parent=1 // pred_fallthru
      _
    // Predicated region
    $region6: #{cell_lstm_forward.3} parent=1 // pred_check
      _
    $region7: #{cell_lstm_forward.3} parent=1 // pred_check_branch
      %18 = sbr.rel (0) target = $region9
    $region8: #{cell_lstm_forward.3} parent=1 // pred_region
      _
    $region9: #{cell_lstm_forward.3} parent=1 // pred_fallthru
      _
    // Predicated region
    $region10: #{cell_lstm_forward.3} parent=1 // pred_check
      _
    $region11: #{cell_lstm_forward.3} parent=1 // pred_check_branch
      %20 = sbr.rel (0) target = $region13
    $region12: #{cell_lstm_forward.3} parent=1 // pred_region
      _
    $region13: #{cell_lstm_forward.3} parent=1 // pred_fallthru
      _
    // Predicated region
    $region14: #{cell_lstm_forward.3} parent=1 // pred_check
      _
    $region15: #{cell_lstm_forward.3} parent=1 // pred_check_branch
      %22 = sbr.rel (0) target = $region17
    $region16: #{cell_lstm_forward.3} parent=1 // pred_region
      _
    $region17: #{cell_lstm_forward.3} parent=1 // pred_fallthru
      _
    // Predicated region
    $region18: #{cell_lstm_forward.3} parent=1 // pred_check
      _
    $region19: #{cell_lstm_forward.3} parent=1 // pred_check_branch
      %24 = sbr.rel (0) target = $region21
    $region20: #{cell_lstm_forward.3} parent=1 // pred_region
      %s26 = ssub.s32 4096, 4096
      %27 = vsyncadd [#allocation6], %s26
      %s28 = sshll.u32 [#allocation5], 4
      %s29 = int_to_ptr.vmem [resolvable:$true] %s28
      %34 = dma.hbm_to_vmem [thread:$0]  %s4, 4096, %s29, [#allocation6], 256, 256, 16
    $region21: #{cell_lstm_forward.3} parent=1 // pred_fallthru
      _
    // Predicated region
    $region22: #{cell_lstm_forward.3} parent=1 // pred_check
      _
    $region23: #{cell_lstm_forward.3} parent=1 // pred_check_branch
      %36 = sbr.rel (0) target = $region25
    $region24: #{cell_lstm_forward.3} parent=1 // pred_region
      _
    $region25: #{cell_lstm_forward.3} parent=1 // pred_fallthru
      _
    // Predicated region
    $region26: #{cell_lstm_forward.3} parent=1 // pred_check
      _
    $region27: #{cell_lstm_forward.3} parent=1 // pred_check_branch
      %38 = sbr.rel (0) target = $region29
    $region28: #{cell_lstm_forward.3} parent=1 // pred_region
      %39 = dma.done [#allocation6], 4096
    $region29: #{cell_lstm_forward.3} parent=1 // pred_fallthru
      _
    %p41 = scmp.eq.s32.totalorder 0, 0
    // Predicated region
    $region30: #{cell_lstm_forward.3} parent=1 // pred_check
      %p42 = pneg %p41
    $region31: #{cell_lstm_forward.3} parent=1 // pred_check_branch
      %44 = sbr.rel (%p42) target = $region33
    $region32: #{cell_lstm_forward.3} parent=1 // pred_region
      %v45 = vld [vmem:[%s1] sm:$0xff]
      %46 = vst [vmem:[#allocation2] sm:$0xff] %v45
      %v47 = vld [vmem:[%s2] sm:$0xff]
      %48 = vst [vmem:[#allocation3] sm:$0xff] %v47
    $region33: #{cell_lstm_forward.3} parent=1 // pred_fallthru
      _
    %v49 = vld [vmem:[%s0] sm:$0xf]
    %v50 = vld [vmem:[%s0 + $0x4] sm:$0xf]
    %v51 = vld [vmem:[%s0 + $0x8] sm:$0xf]
    %v52 = vld [vmem:[%s0 + $0xc] sm:$0xf]
    %v53 = vld [vmem:[%s0 + $0x10] sm:$0xf]
    %v54 = vld [vmem:[%s0 + $0x14] sm:$0xf]
    %v55 = vld [vmem:[%s0 + $0x18] sm:$0xf]
    %v56 = vld [vmem:[%s0 + $0x1c] sm:$0xf]
    %v57 = vld [vmem:[%s3] sm:$0xff]
    %v58 = vld [vmem:[%s3 + $0x8] sm:$0xff]
    %v59 = vld [vmem:[%s3 + $0x10] sm:$0xff]
    %v60 = vld [vmem:[%s3 + $0x18] sm:$0xff]
    %v61 = vld [vmem:[%s3 + $0x20] sm:$0xff]
    %v62 = vld [vmem:[%s3 + $0x28] sm:$0xff]
    %v63 = vld [vmem:[%s3 + $0x30] sm:$0xff]
    %v64 = vld [vmem:[%s3 + $0x38] sm:$0xff]
    %v65 = vld [vmem:[%s3 + $0x40] sm:$0xff]
    %v66 = vld [vmem:[%s3 + $0x48] sm:$0xff]
    %v67 = vld [vmem:[%s3 + $0x50] sm:$0xff]
    %v68 = vld [vmem:[%s3 + $0x58] sm:$0xff]
    %v69 = vld [vmem:[%s3 + $0x60] sm:$0xff]
    %v70 = vld [vmem:[%s3 + $0x68] sm:$0xff]
    %v71 = vld [vmem:[%s3 + $0x70] sm:$0xff]
    %v72 = vld [vmem:[%s3 + $0x78] sm:$0xff]
    %v73 = vld [vmem:[%s3 + $0x80] sm:$0xff]
    %v74 = vld [vmem:[%s3 + $0x88] sm:$0xff]
    %v75 = vld [vmem:[%s3 + $0x90] sm:$0xff]
    %v76 = vld [vmem:[%s3 + $0x98] sm:$0xff]
    %v77 = vld [vmem:[%s3 + $0xa0] sm:$0xff]
    %v78 = vld [vmem:[%s3 + $0xa8] sm:$0xff]
    %v79 = vld [vmem:[%s3 + $0xb0] sm:$0xff]
    %v80 = vld [vmem:[%s3 + $0xb8] sm:$0xff]
    %v81 = vld [vmem:[%s3 + $0xc0] sm:$0xff]
    %v82 = vld [vmem:[%s3 + $0xc8] sm:$0xff]
    %v83 = vld [vmem:[%s3 + $0xd0] sm:$0xff]
    %v84 = vld [vmem:[%s3 + $0xd8] sm:$0xff]
    %v85 = vld [vmem:[%s3 + $0xe0] sm:$0xff]
    %v86 = vld [vmem:[%s3 + $0xe8] sm:$0xff]
    %v87 = vld [vmem:[%s3 + $0xf0] sm:$0xff]
    %v88 = vld [vmem:[%s3 + $0xf8] sm:$0xff]
    %v97 = vunpack.c.l.b16 %v49
    %v98 = vunpack.c.l.b16 %v50
    %v99 = vunpack.c.l.b16 %v51
    %v100 = vunpack.c.l.b16 %v52
    %v101 = vunpack.c.l.b16 %v53
    %v102 = vunpack.c.l.b16 %v54
    %v103 = vunpack.c.l.b16 %v55
    %v104 = vunpack.c.l.b16 %v56
    %v105 = vpack.c.b16 %v98, %v97
    %v106 = vpack.c.b16 %v100, %v99
    %v107 = vpack.c.b16 %v102, %v101
    %v108 = vpack.c.b16 %v104, %v103
    %v145 = vunpack.c.l.b16 %v57
    %v146 = vunpack.c.h.b16 %v57
    %v147 = vunpack.c.l.b16 %v58
    %v148 = vunpack.c.h.b16 %v58
    %v149 = vunpack.c.l.b16 %v59
    %v150 = vunpack.c.h.b16 %v59
    %v151 = vunpack.c.l.b16 %v60
    %v152 = vunpack.c.h.b16 %v60
    %v153 = vunpack.c.l.b16 %v61
    %v154 = vunpack.c.h.b16 %v61
    %v155 = vunpack.c.l.b16 %v62
    %v156 = vunpack.c.h.b16 %v62
    %v157 = vunpack.c.l.b16 %v63
    %v158 = vunpack.c.h.b16 %v63
    %v159 = vunpack.c.l.b16 %v64
    %v160 = vunpack.c.h.b16 %v64
    %v161 = vunpack.c.l.b16 %v65
    %v162 = vunpack.c.h.b16 %v65
    %v163 = vunpack.c.l.b16 %v66
    %v164 = vunpack.c.h.b16 %v66
    %v165 = vunpack.c.l.b16 %v67
    %v166 = vunpack.c.h.b16 %v67
    %v167 = vunpack.c.l.b16 %v68
    %v168 = vunpack.c.h.b16 %v68
    %v169 = vunpack.c.l.b16 %v69
    %v170 = vunpack.c.h.b16 %v69
    %v171 = vunpack.c.l.b16 %v70
    %v172 = vunpack.c.h.b16 %v70
    %v173 = vunpack.c.l.b16 %v71
    %v174 = vunpack.c.h.b16 %v71
    %v175 = vunpack.c.l.b16 %v72
    %v176 = vunpack.c.h.b16 %v72
    %v177 = vunpack.c.l.b16 %v73
    %v178 = vunpack.c.h.b16 %v73
    %v179 = vunpack.c.l.b16 %v74
    %v180 = vunpack.c.h.b16 %v74
    %v181 = vunpack.c.l.b16 %v75
    %v182 = vunpack.c.h.b16 %v75
    %v183 = vunpack.c.l.b16 %v76
    %v184 = vunpack.c.h.b16 %v76
    %v185 = vunpack.c.l.b16 %v77
    %v186 = vunpack.c.h.b16 %v77
    %v187 = vunpack.c.l.b16 %v78
    %v188 = vunpack.c.h.b16 %v78
    %v189 = vunpack.c.l.b16 %v79
    %v190 = vunpack.c.h.b16 %v79
    %v191 = vunpack.c.l.b16 %v80
    %v192 = vunpack.c.h.b16 %v80
    %v193 = vunpack.c.l.b16 %v81
    %v194 = vunpack.c.h.b16 %v81
    %v195 = vunpack.c.l.b16 %v82
    %v196 = vunpack.c.h.b16 %v82
    %v197 = vunpack.c.l.b16 %v83
    %v198 = vunpack.c.h.b16 %v83
    %v199 = vunpack.c.l.b16 %v84
    %v200 = vunpack.c.h.b16 %v84
    %v201 = vunpack.c.l.b16 %v85
    %v202 = vunpack.c.h.b16 %v85
    %v203 = vunpack.c.l.b16 %v86
    %v204 = vunpack.c.h.b16 %v86
    %v205 = vunpack.c.l.b16 %v87
    %v206 = vunpack.c.h.b16 %v87
    %v207 = vunpack.c.l.b16 %v88
    %v208 = vunpack.c.h.b16 %v88
    %v209 = vpack.c.b16 %v149, %v145
    %v210 = vpack.c.b16 %v150, %v146
    %v211 = vpack.c.b16 %v151, %v147
    %v212 = vpack.c.b16 %v152, %v148
    %v213 = vpack.c.b16 %v157, %v153
    %v214 = vpack.c.b16 %v158, %v154
    %v215 = vpack.c.b16 %v159, %v155
    %v216 = vpack.c.b16 %v160, %v156
    %v217 = vpack.c.b16 %v165, %v161
    %v218 = vpack.c.b16 %v166, %v162
    %v219 = vpack.c.b16 %v167, %v163
    %v220 = vpack.c.b16 %v168, %v164
    %v221 = vpack.c.b16 %v173, %v169
    %v222 = vpack.c.b16 %v174, %v170
    %v223 = vpack.c.b16 %v175, %v171
    %v224 = vpack.c.b16 %v176, %v172
    %v225 = vpack.c.b16 %v181, %v177
    %v226 = vpack.c.b16 %v182, %v178
    %v227 = vpack.c.b16 %v183, %v179
    %v228 = vpack.c.b16 %v184, %v180
    %v229 = vpack.c.b16 %v189, %v185
    %v230 = vpack.c.b16 %v190, %v186
    %v231 = vpack.c.b16 %v191, %v187
    %v232 = vpack.c.b16 %v192, %v188
    %v233 = vpack.c.b16 %v197, %v193
    %v234 = vpack.c.b16 %v198, %v194
    %v235 = vpack.c.b16 %v199, %v195
    %v236 = vpack.c.b16 %v200, %v196
    %v237 = vpack.c.b16 %v205, %v201
    %v238 = vpack.c.b16 %v206, %v202
    %v239 = vpack.c.b16 %v207, %v203
    %v240 = vpack.c.b16 %v208, %v204
    %273 = vmatprep.subr.bf16.mxu0 %v238
    %274 = vmatpush1.bf16.msra.mxu0 %v237
    %275 = vmatprep.subr.bf16.mxu0 %v234
    %276 = vmatpush1.bf16.msra.mxu0 %v233
    %277 = vmatprep.subr.bf16.mxu0 %v230
    %278 = vmatpush1.bf16.msra.mxu0 %v229
    %279 = vmatprep.subr.bf16.mxu0 %v226
    %280 = vmatpush1.bf16.msra.mxu0 %v225
    %281 = vmatprep.subr.bf16.mxu0 %v222
    %282 = vmatpush1.bf16.msra.mxu0 %v221
    %283 = vmatprep.subr.bf16.mxu0 %v218
    %284 = vmatpush1.bf16.msra.mxu0 %v217
    %285 = vmatprep.subr.bf16.mxu0 %v214
    %286 = vmatpush1.bf16.msra.mxu0 %v213
    %287 = vmatprep.subr.bf16.mxu0 %v210
    %288 = vmatpush1.bf16.msra.mxu0 %v209
    %289 = vmatprep.subr.bf16.mxu0 0
    %290 = vmatpush2.bf16.msra.mxu0 0
    %291 = vmatprep.subr.bf16.mxu0 0
    %292 = vmatpush2.bf16.msra.mxu0 0
    %293 = vmatprep.subr.bf16.mxu0 0
    %294 = vmatpush2.bf16.msra.mxu0 0
    %295 = vmatprep.subr.bf16.mxu0 0
    %296 = vmatpush2.bf16.msra.mxu0 0
    %297 = vmatprep.subr.bf16.mxu0 0
    %298 = vmatpush2.bf16.msra.mxu0 0
    %299 = vmatprep.subr.bf16.mxu0 0
    %300 = vmatpush2.bf16.msra.mxu0 0
    %301 = vmatprep.subr.bf16.mxu0 0
    %302 = vmatpush2.bf16.msra.mxu0 0
    %303 = vmatprep.subr.bf16.mxu0 0
    %304 = vmatpush2.bf16.msra.mxu0 0
    %305 = vmatprep.mubr.bf16.mxu0 0
    %306 = vmatmul.mubr.bf16.gmra.mxu0 %v105
    %v307 = vpop.f32.mrf.mxu0
    %v308 = vadd.f32 0.0, %v307
    %v309 = vpop.f32.mrf.mxu0
    %v310 = vadd.f32 0.0, %v309
    %v311 = vpop.f32.mrf.mxu0
    %v312 = vadd.f32 0.0, %v311
    %v313 = vpop.f32.mrf.mxu0
    %v314 = vadd.f32 0.0, %v313
    %315 = vmatprep.mubr.bf16.mxu0 0
    %316 = vmatmul.mubr.bf16.gmra.mxu0 %v106
    %v317 = vpop.f32.mrf.mxu0
    %v318 = vadd.f32 0.0, %v317
    %v319 = vpop.f32.mrf.mxu0
    %v320 = vadd.f32 0.0, %v319
    %v321 = vpop.f32.mrf.mxu0
    %v322 = vadd.f32 0.0, %v321
    %v323 = vpop.f32.mrf.mxu0
    %v324 = vadd.f32 0.0, %v323
    %325 = vmatprep.mubr.bf16.mxu0 0
    %326 = vmatmul.mubr.bf16.gmra.mxu0 %v107
    %v327 = vpop.f32.mrf.mxu0
    %v328 = vadd.f32 0.0, %v327
    %v329 = vpop.f32.mrf.mxu0
    %v330 = vadd.f32 0.0, %v329
    %v331 = vpop.f32.mrf.mxu0
    %v332 = vadd.f32 0.0, %v331
    %v333 = vpop.f32.mrf.mxu0
    %v334 = vadd.f32 0.0, %v333
    %335 = vmatprep.mubr.bf16.mxu0 0
    %336 = vmatmul.mubr.bf16.gmra.mxu0 %v108
    %v337 = vpop.f32.mrf.mxu0
    %v338 = vadd.f32 0.0, %v337
    %v339 = vpop.f32.mrf.mxu0
    %v340 = vadd.f32 0.0, %v339
    %v341 = vpop.f32.mrf.mxu0
    %v342 = vadd.f32 0.0, %v341
    %v343 = vpop.f32.mrf.mxu0
    %v344 = vadd.f32 0.0, %v343
    %345 = vdwg.mxu0
    %346 = vmatprep.subr.bf16.mxu0 %v240
    %347 = vmatpush1.bf16.msra.mxu0 %v239
    %348 = vmatprep.subr.bf16.mxu0 %v236
    %349 = vmatpush1.bf16.msra.mxu0 %v235
    %350 = vmatprep.subr.bf16.mxu0 %v232
    %351 = vmatpush1.bf16.msra.mxu0 %v231
    %352 = vmatprep.subr.bf16.mxu0 %v228
    %353 = vmatpush1.bf16.msra.mxu0 %v227
    %354 = vmatprep.subr.bf16.mxu0 %v224
    %355 = vmatpush1.bf16.msra.mxu0 %v223
    %356 = vmatprep.subr.bf16.mxu0 %v220
    %357 = vmatpush1.bf16.msra.mxu0 %v219
    %358 = vmatprep.subr.bf16.mxu0 %v216
    %359 = vmatpush1.bf16.msra.mxu0 %v215
    %360 = vmatprep.subr.bf16.mxu0 %v212
    %361 = vmatpush1.bf16.msra.mxu0 %v211
    %362 = vmatprep.subr.bf16.mxu0 0
    %363 = vmatpush2.bf16.msra.mxu0 0
    %364 = vmatprep.subr.bf16.mxu0 0
    %365 = vmatpush2.bf16.msra.mxu0 0
    %366 = vmatprep.subr.bf16.mxu0 0
    %367 = vmatpush2.bf16.msra.mxu0 0
    %368 = vmatprep.subr.bf16.mxu0 0
    %369 = vmatpush2.bf16.msra.mxu0 0
    %370 = vmatprep.subr.bf16.mxu0 0
    %371 = vmatpush2.bf16.msra.mxu0 0
    %372 = vmatprep.subr.bf16.mxu0 0
    %373 = vmatpush2.bf16.msra.mxu0 0
    %374 = vmatprep.subr.bf16.mxu0 0
    %375 = vmatpush2.bf16.msra.mxu0 0
    %376 = vmatprep.subr.bf16.mxu0 0
    %377 = vmatpush2.bf16.msra.mxu0 0
    %378 = vmatprep.mubr.bf16.mxu0 0
    %379 = vmatmul.mubr.bf16.gmra.mxu0 %v105
    %v380 = vpop.f32.mrf.mxu0
    %v381 = vadd.f32 0.0, %v380
    %v382 = vpop.f32.mrf.mxu0
    %v383 = vadd.f32 0.0, %v382
    %v384 = vpop.f32.mrf.mxu0
    %v385 = vadd.f32 0.0, %v384
    %v386 = vpop.f32.mrf.mxu0
    %v387 = vadd.f32 0.0, %v386
    %388 = vmatprep.mubr.bf16.mxu0 0
    %389 = vmatmul.mubr.bf16.gmra.mxu0 %v106
    %v390 = vpop.f32.mrf.mxu0
    %v391 = vadd.f32 0.0, %v390
    %v392 = vpop.f32.mrf.mxu0
    %v393 = vadd.f32 0.0, %v392
    %v394 = vpop.f32.mrf.mxu0
    %v395 = vadd.f32 0.0, %v394
    %v396 = vpop.f32.mrf.mxu0
    %v397 = vadd.f32 0.0, %v396
    %398 = vmatprep.mubr.bf16.mxu0 0
    %399 = vmatmul.mubr.bf16.gmra.mxu0 %v107
    %v400 = vpop.f32.mrf.mxu0
    %v401 = vadd.f32 0.0, %v400
    %v402 = vpop.f32.mrf.mxu0
    %v403 = vadd.f32 0.0, %v402
    %v404 = vpop.f32.mrf.mxu0
    %v405 = vadd.f32 0.0, %v404
    %v406 = vpop.f32.mrf.mxu0
    %v407 = vadd.f32 0.0, %v406
    %408 = vmatprep.mubr.bf16.mxu0 0
    %409 = vmatmul.mubr.bf16.gmra.mxu0 %v108
    %v410 = vpop.f32.mrf.mxu0
    %v411 = vadd.f32 0.0, %v410
    %v412 = vpop.f32.mrf.mxu0
    %v413 = vadd.f32 0.0, %v412
    %v414 = vpop.f32.mrf.mxu0
    %v415 = vadd.f32 0.0, %v414
    %v416 = vpop.f32.mrf.mxu0
    %v417 = vadd.f32 0.0, %v416
    %418 = vdwg.mxu0
    %v419 = vld [vmem:[%s5] sm:$0xf]
    %v421 = vlaneseq
    %v422 = vshrl.u32 %v421, 7
    %v423 = vsub.s32 0, %v422
    %v424 = vrot.slane %v419, %v423
    %v425 = vlaneseq
    %v426 = vshrl.u32 %v425, 7
    %v427 = vsub.s32 1, %v426
    %v428 = vrot.slane %v419, %v427
    %v429 = vlaneseq
    %v430 = vshrl.u32 %v429, 7
    %v431 = vsub.s32 2, %v430
    %v432 = vrot.slane %v419, %v431
    %v433 = vlaneseq
    %v434 = vshrl.u32 %v433, 7
    %v435 = vsub.s32 3, %v434
    %v436 = vrot.slane %v419, %v435
    %v441 = vadd.f32 %v308, %v424
    %v442 = vadd.f32 %v310, %v428
    %v443 = vadd.f32 %v381, %v432
    %v444 = vadd.f32 %v383, %v436
    %v445 = vadd.f32 %v312, %v424
    %v446 = vadd.f32 %v314, %v428
    %v447 = vadd.f32 %v385, %v432
    %v448 = vadd.f32 %v387, %v436
    %v449 = vadd.f32 %v318, %v424
    %v450 = vadd.f32 %v320, %v428
    %v451 = vadd.f32 %v391, %v432
    %v452 = vadd.f32 %v393, %v436
    %v453 = vadd.f32 %v322, %v424
    %v454 = vadd.f32 %v324, %v428
    %v455 = vadd.f32 %v395, %v432
    %v456 = vadd.f32 %v397, %v436
    %v457 = vadd.f32 %v328, %v424
    %v458 = vadd.f32 %v330, %v428
    %v459 = vadd.f32 %v401, %v432
    %v460 = vadd.f32 %v403, %v436
    %v461 = vadd.f32 %v332, %v424
    %v462 = vadd.f32 %v334, %v428
    %v463 = vadd.f32 %v405, %v432
    %v464 = vadd.f32 %v407, %v436
    %v465 = vadd.f32 %v338, %v424
    %v466 = vadd.f32 %v340, %v428
    %v467 = vadd.f32 %v411, %v432
    %v468 = vadd.f32 %v413, %v436
    %v469 = vadd.f32 %v342, %v424
    %v470 = vadd.f32 %v344, %v428
    %v471 = vadd.f32 %v415, %v432
    %v472 = vadd.f32 %v417, %v436
    %473 = vst [vmem:[#allocation4] sm:$0xff] %v441
    %474 = vst [vmem:[#allocation4 + $0x8] sm:$0xff] %v442
    %475 = vst [vmem:[#allocation4 + $0x10] sm:$0xff] %v443
    %476 = vst [vmem:[#allocation4 + $0x18] sm:$0xff] %v444
    %477 = vst [vmem:[#allocation4 + $0x20] sm:$0xff] %v445
    %478 = vst [vmem:[#allocation4 + $0x28] sm:$0xff] %v446
    %479 = vst [vmem:[#allocation4 + $0x30] sm:$0xff] %v447
    %480 = vst [vmem:[#allocation4 + $0x38] sm:$0xff] %v448
    %481 = vst [vmem:[#allocation4 + $0x40] sm:$0xff] %v449
    %482 = vst [vmem:[#allocation4 + $0x48] sm:$0xff] %v450
    %483 = vst [vmem:[#allocation4 + $0x50] sm:$0xff] %v451
    %484 = vst [vmem:[#allocation4 + $0x58] sm:$0xff] %v452
    %485 = vst [vmem:[#allocation4 + $0x60] sm:$0xff] %v453
    %486 = vst [vmem:[#allocation4 + $0x68] sm:$0xff] %v454
    %487 = vst [vmem:[#allocation4 + $0x70] sm:$0xff] %v455
    %488 = vst [vmem:[#allocation4 + $0x78] sm:$0xff] %v456
    %489 = vst [vmem:[#allocation4 + $0x80] sm:$0xff] %v457
    %490 = vst [vmem:[#allocation4 + $0x88] sm:$0xff] %v458
    %491 = vst [vmem:[#allocation4 + $0x90] sm:$0xff] %v459
    %492 = vst [vmem:[#allocation4 + $0x98] sm:$0xff] %v460
    %493 = vst [vmem:[#allocation4 + $0xa0] sm:$0xff] %v461
    %494 = vst [vmem:[#allocation4 + $0xa8] sm:$0xff] %v462
    %495 = vst [vmem:[#allocation4 + $0xb0] sm:$0xff] %v463
    %496 = vst [vmem:[#allocation4 + $0xb8] sm:$0xff] %v464
    %497 = vst [vmem:[#allocation4 + $0xc0] sm:$0xff] %v465
    %498 = vst [vmem:[#allocation4 + $0xc8] sm:$0xff] %v466
    %499 = vst [vmem:[#allocation4 + $0xd0] sm:$0xff] %v467
    %500 = vst [vmem:[#allocation4 + $0xd8] sm:$0xff] %v468
    %501 = vst [vmem:[#allocation4 + $0xe0] sm:$0xff] %v469
    %502 = vst [vmem:[#allocation4 + $0xe8] sm:$0xff] %v470
    %503 = vst [vmem:[#allocation4 + $0xf0] sm:$0xff] %v471
    %504 = vst [vmem:[#allocation4 + $0xf8] sm:$0xff] %v472
    %v505 = vld [vmem:[#allocation2] sm:$0xff]
    %v506 = vld [vmem:[#allocation3] sm:$0xff]
    %v507 = vpack.c.bf16 %v505, %v505
    %v508 = vld [vmem:[#allocation5] sm:$0xff]
    %v509 = vld [vmem:[#allocation5 + $0x8] sm:$0xff]
    %v510 = vld [vmem:[#allocation5 + $0x10] sm:$0xff]
    %v511 = vld [vmem:[#allocation5 + $0x18] sm:$0xff]
    %v512 = vld [vmem:[#allocation5 + $0x20] sm:$0xff]
    %v513 = vld [vmem:[#allocation5 + $0x28] sm:$0xff]
    %v514 = vld [vmem:[#allocation5 + $0x30] sm:$0xff]
    %v515 = vld [vmem:[#allocation5 + $0x38] sm:$0xff]
    %v516 = vld [vmem:[#allocation5 + $0x40] sm:$0xff]
    %v517 = vld [vmem:[#allocation5 + $0x48] sm:$0xff]
    %v518 = vld [vmem:[#allocation5 + $0x50] sm:$0xff]
    %v519 = vld [vmem:[#allocation5 + $0x58] sm:$0xff]
    %v520 = vld [vmem:[#allocation5 + $0x60] sm:$0xff]
    %v521 = vld [vmem:[#allocation5 + $0x68] sm:$0xff]
    %v522 = vld [vmem:[#allocation5 + $0x70] sm:$0xff]
    %v523 = vld [vmem:[#allocation5 + $0x78] sm:$0xff]
    %v524 = vld [vmem:[#allocation5 + $0x80] sm:$0xff]
    %v525 = vld [vmem:[#allocation5 + $0x88] sm:$0xff]
    %v526 = vld [vmem:[#allocation5 + $0x90] sm:$0xff]
    %v527 = vld [vmem:[#allocation5 + $0x98] sm:$0xff]
    %v528 = vld [vmem:[#allocation5 + $0xa0] sm:$0xff]
    %v529 = vld [vmem:[#allocation5 + $0xa8] sm:$0xff]
    %v530 = vld [vmem:[#allocation5 + $0xb0] sm:$0xff]
    %v531 = vld [vmem:[#allocation5 + $0xb8] sm:$0xff]
    %v532 = vld [vmem:[#allocation5 + $0xc0] sm:$0xff]
    %v533 = vld [vmem:[#allocation5 + $0xc8] sm:$0xff]
    %v534 = vld [vmem:[#allocation5 + $0xd0] sm:$0xff]
    %v535 = vld [vmem:[#allocation5 + $0xd8] sm:$0xff]
    %v536 = vld [vmem:[#allocation5 + $0xe0] sm:$0xff]
    %v537 = vld [vmem:[#allocation5 + $0xe8] sm:$0xff]
    %v538 = vld [vmem:[#allocation5 + $0xf0] sm:$0xff]
    %v539 = vld [vmem:[#allocation5 + $0xf8] sm:$0xff]
    %v572 = vunpack.c.l.b16 %v508
    %v573 = vunpack.c.h.b16 %v508
    %v574 = vunpack.c.l.b16 %v509
    %v575 = vunpack.c.h.b16 %v509
    %v576 = vunpack.c.l.b16 %v510
    %v577 = vunpack.c.h.b16 %v510
    %v578 = vunpack.c.l.b16 %v511
    %v579 = vunpack.c.h.b16 %v511
    %v580 = vunpack.c.l.b16 %v512
    %v581 = vunpack.c.h.b16 %v512
    %v582 = vunpack.c.l.b16 %v513
    %v583 = vunpack.c.h.b16 %v513
    %v584 = vunpack.c.l.b16 %v514
    %v585 = vunpack.c.h.b16 %v514
    %v586 = vunpack.c.l.b16 %v515
    %v587 = vunpack.c.h.b16 %v515
    %v588 = vunpack.c.l.b16 %v516
    %v589 = vunpack.c.h.b16 %v516
    %v590 = vunpack.c.l.b16 %v517
    %v591 = vunpack.c.h.b16 %v517
    %v592 = vunpack.c.l.b16 %v518
    %v593 = vunpack.c.h.b16 %v518
    %v594 = vunpack.c.l.b16 %v519
    %v595 = vunpack.c.h.b16 %v519
    %v596 = vunpack.c.l.b16 %v520
    %v597 = vunpack.c.h.b16 %v520
    %v598 = vunpack.c.l.b16 %v521
    %v599 = vunpack.c.h.b16 %v521
    %v600 = vunpack.c.l.b16 %v522
    %v601 = vunpack.c.h.b16 %v522
    %v602 = vunpack.c.l.b16 %v523
    %v603 = vunpack.c.h.b16 %v523
    %v604 = vunpack.c.l.b16 %v524
    %v605 = vunpack.c.h.b16 %v524
    %v606 = vunpack.c.l.b16 %v525
    %v607 = vunpack.c.h.b16 %v525
    %v608 = vunpack.c.l.b16 %v526
    %v609 = vunpack.c.h.b16 %v526
    %v610 = vunpack.c.l.b16 %v527
    %v611 = vunpack.c.h.b16 %v527
    %v612 = vunpack.c.l.b16 %v528
    %v613 = vunpack.c.h.b16 %v528
    %v614 = vunpack.c.l.b16 %v529
    %v615 = vunpack.c.h.b16 %v529
    %v616 = vunpack.c.l.b16 %v530
    %v617 = vunpack.c.h.b16 %v530
    %v618 = vunpack.c.l.b16 %v531
    %v619 = vunpack.c.h.b16 %v531
    %v620 = vunpack.c.l.b16 %v532
    %v621 = vunpack.c.h.b16 %v532
    %v622 = vunpack.c.l.b16 %v533
    %v623 = vunpack.c.h.b16 %v533
    %v624 = vunpack.c.l.b16 %v534
    %v625 = vunpack.c.h.b16 %v534
    %v626 = vunpack.c.l.b16 %v535
    %v627 = vunpack.c.h.b16 %v535
    %v628 = vunpack.c.l.b16 %v536
    %v629 = vunpack.c.h.b16 %v536
    %v630 = vunpack.c.l.b16 %v537
    %v631 = vunpack.c.h.b16 %v537
    %v632 = vunpack.c.l.b16 %v538
    %v633 = vunpack.c.h.b16 %v538
    %v634 = vunpack.c.l.b16 %v539
    %v635 = vunpack.c.h.b16 %v539
    %v636 = vpack.c.b16 %v576, %v572
    %v637 = vpack.c.b16 %v577, %v573
    %v638 = vpack.c.b16 %v578, %v574
    %v639 = vpack.c.b16 %v579, %v575
    %v640 = vpack.c.b16 %v584, %v580
    %v641 = vpack.c.b16 %v585, %v581
    %v642 = vpack.c.b16 %v586, %v582
    %v643 = vpack.c.b16 %v587, %v583
    %v644 = vpack.c.b16 %v592, %v588
    %v645 = vpack.c.b16 %v593, %v589
    %v646 = vpack.c.b16 %v594, %v590
    %v647 = vpack.c.b16 %v595, %v591
    %v648 = vpack.c.b16 %v600, %v596
    %v649 = vpack.c.b16 %v601, %v597
    %v650 = vpack.c.b16 %v602, %v598
    %v651 = vpack.c.b16 %v603, %v599
    %v652 = vpack.c.b16 %v608, %v604
    %v653 = vpack.c.b16 %v609, %v605
    %v654 = vpack.c.b16 %v610, %v606
    %v655 = vpack.c.b16 %v611, %v607
    %v656 = vpack.c.b16 %v616, %v612
    %v657 = vpack.c.b16 %v617, %v613
    %v658 = vpack.c.b16 %v618, %v614
    %v659 = vpack.c.b16 %v619, %v615
    %v660 = vpack.c.b16 %v624, %v620
    %v661 = vpack.c.b16 %v625, %v621
    %v662 = vpack.c.b16 %v626, %v622
    %v663 = vpack.c.b16 %v627, %v623
    %v664 = vpack.c.b16 %v632, %v628
    %v665 = vpack.c.b16 %v633, %v629
    %v666 = vpack.c.b16 %v634, %v630
    %v667 = vpack.c.b16 %v635, %v631
    %700 = vmatprep.subr.bf16.mxu0 %v665
    %701 = vmatpush1.bf16.msra.mxu0 %v664
    %702 = vmatprep.subr.bf16.mxu0 %v661
    %703 = vmatpush1.bf16.msra.mxu0 %v660
    %704 = vmatprep.subr.bf16.mxu0 %v657
    %705 = vmatpush1.bf16.msra.mxu0 %v656
    %706 = vmatprep.subr.bf16.mxu0 %v653
    %707 = vmatpush1.bf16.msra.mxu0 %v652
    %708 = vmatprep.subr.bf16.mxu0 %v649
    %709 = vmatpush1.bf16.msra.mxu0 %v648
    %710 = vmatprep.subr.bf16.mxu0 %v645
    %711 = vmatpush1.bf16.msra.mxu0 %v644
    %712 = vmatprep.subr.bf16.mxu0 %v641
    %713 = vmatpush1.bf16.msra.mxu0 %v640
    %714 = vmatprep.subr.bf16.mxu0 %v637
    %715 = vmatpush1.bf16.msra.mxu0 %v636
    %716 = vmatprep.subr.bf16.mxu0 0
    %717 = vmatpush2.bf16.msra.mxu0 0
    %718 = vmatprep.subr.bf16.mxu0 0
    %719 = vmatpush2.bf16.msra.mxu0 0
    %720 = vmatprep.subr.bf16.mxu0 0
    %721 = vmatpush2.bf16.msra.mxu0 0
    %722 = vmatprep.subr.bf16.mxu0 0
    %723 = vmatpush2.bf16.msra.mxu0 0
    %724 = vmatprep.subr.bf16.mxu0 0
    %725 = vmatpush2.bf16.msra.mxu0 0
    %726 = vmatprep.subr.bf16.mxu0 0
    %727 = vmatpush2.bf16.msra.mxu0 0
    %728 = vmatprep.subr.bf16.mxu0 0
    %729 = vmatpush2.bf16.msra.mxu0 0
    %730 = vmatprep.subr.bf16.mxu0 0
    %731 = vmatpush2.bf16.msra.mxu0 0
    %732 = vmatprep.mubr.bf16.mxu0 0
    %733 = vmatmul.mubr.bf16.gmra.mxu0 %v507
    %v734 = vpop.f32.mrf.mxu0
    %v735 = vadd.f32 0.0, %v734
    %v736 = vpop.f32.mrf.mxu0
    %v737 = vadd.f32 0.0, %v736
    %v738 = vpop.f32.mrf.mxu0
    %v739 = vpop.f32.mrf.mxu0
    %740 = vdwg.mxu0
    %741 = vmatprep.subr.bf16.mxu0 %v667
    %742 = vmatpush1.bf16.msra.mxu0 %v666
    %743 = vmatprep.subr.bf16.mxu0 %v663
    %744 = vmatpush1.bf16.msra.mxu0 %v662
    %745 = vmatprep.subr.bf16.mxu0 %v659
    %746 = vmatpush1.bf16.msra.mxu0 %v658
    %747 = vmatprep.subr.bf16.mxu0 %v655
    %748 = vmatpush1.bf16.msra.mxu0 %v654
    %749 = vmatprep.subr.bf16.mxu0 %v651
    %750 = vmatpush1.bf16.msra.mxu0 %v650
    %751 = vmatprep.subr.bf16.mxu0 %v647
    %752 = vmatpush1.bf16.msra.mxu0 %v646
    %753 = vmatprep.subr.bf16.mxu0 %v643
    %754 = vmatpush1.bf16.msra.mxu0 %v642
    %755 = vmatprep.subr.bf16.mxu0 %v639
    %756 = vmatpush1.bf16.msra.mxu0 %v638
    %757 = vmatprep.subr.bf16.mxu0 0
    %758 = vmatpush2.bf16.msra.mxu0 0
    %759 = vmatprep.subr.bf16.mxu0 0
    %760 = vmatpush2.bf16.msra.mxu0 0
    %761 = vmatprep.subr.bf16.mxu0 0
    %762 = vmatpush2.bf16.msra.mxu0 0
    %763 = vmatprep.subr.bf16.mxu0 0
    %764 = vmatpush2.bf16.msra.mxu0 0
    %765 = vmatprep.subr.bf16.mxu0 0
    %766 = vmatpush2.bf16.msra.mxu0 0
    %767 = vmatprep.subr.bf16.mxu0 0
    %768 = vmatpush2.bf16.msra.mxu0 0
    %769 = vmatprep.subr.bf16.mxu0 0
    %770 = vmatpush2.bf16.msra.mxu0 0
    %771 = vmatprep.subr.bf16.mxu0 0
    %772 = vmatpush2.bf16.msra.mxu0 0
    %773 = vmatprep.mubr.bf16.mxu0 0
    %774 = vmatmul.mubr.bf16.gmra.mxu0 %v507
    %v775 = vpop.f32.mrf.mxu0
    %v776 = vadd.f32 0.0, %v775
    %v777 = vpop.f32.mrf.mxu0
    %v778 = vadd.f32 0.0, %v777
    %v779 = vpop.f32.mrf.mxu0
    %v780 = vpop.f32.mrf.mxu0
    %781 = vdwg.mxu0
    %v782 = vld [vmem:[#allocation4] sm:$0xff]
    %v783 = vadd.f32 %v735, %v782
    %v784 = vxor.u32 %v783, 2147483648
    %v785 = vmul.f32 %v784, 1.442695
    %v786 = vpow.pop %v785
    %v787 = vadd.f32 %v786, 1.0
    %v788 = vrcp.pop %v787
    %v789 = vmul.f32 1.0, %v788
    %v790 = vld [vmem:[#allocation4 + $0x8] sm:$0xff]
    %v791 = vadd.f32 %v737, %v790
    %v792 = vxor.u32 %v791, 2147483648
    %v793 = vmul.f32 %v792, 1.442695
    %v794 = vpow.pop %v793
    %v795 = vadd.f32 %v794, 1.0
    %v796 = vrcp.pop %v795
    %v797 = vmul.f32 1.0, %v796
    %v798 = vld [vmem:[#allocation4 + $0x10] sm:$0xff]
    %v799 = vadd.f32 %v776, %v798
    %v800 = vtanh.pop %v799
    %v801 = vld [vmem:[#allocation4 + $0x18] sm:$0xff]
    %v802 = vadd.f32 %v778, %v801
    %v803 = vxor.u32 %v802, 2147483648
    %v804 = vmul.f32 %v803, 1.442695
    %v805 = vpow.pop %v804
    %v806 = vadd.f32 %v805, 1.0
    %v807 = vrcp.pop %v806
    %v808 = vmul.f32 1.0, %v807
    %v809 = vmul.f32 %v797, %v506
    %v810 = vmul.f32 %v789, %v800
    %v811 = vadd.f32 %v809, %v810
    %v812 = vtanh.pop %v811
    %v813 = vmul.f32 %v808, %v812
    %v814 = vpack.c.bf16 %v813, %v813
    %815 = vst [vmem:[%s6] sm:$0xf] %v814
    %v816 = vld [vmem:[#allocation5] sm:$0xff]
    %v817 = vld [vmem:[#allocation5 + $0x8] sm:$0xff]
    %v818 = vld [vmem:[#allocation5 + $0x10] sm:$0xff]
    %v819 = vld [vmem:[#allocation5 + $0x18] sm:$0xff]
    %v820 = vld [vmem:[#allocation5 + $0x20] sm:$0xff]
    %v821 = vld [vmem:[#allocation5 + $0x28] sm:$0xff]
    %v822 = vld [vmem:[#allocation5 + $0x30] sm:$0xff]
    %v823 = vld [vmem:[#allocation5 + $0x38] sm:$0xff]
    %v824 = vld [vmem:[#allocation5 + $0x40] sm:$0xff]
    %v825 = vld [vmem:[#allocation5 + $0x48] sm:$0xff]
    %v826 = vld [vmem:[#allocation5 + $0x50] sm:$0xff]
    %v827 = vld [vmem:[#allocation5 + $0x58] sm:$0xff]
    %v828 = vld [vmem:[#allocation5 + $0x60] sm:$0xff]
    %v829 = vld [vmem:[#allocation5 + $0x68] sm:$0xff]
    %v830 = vld [vmem:[#allocation5 + $0x70] sm:$0xff]
    %v831 = vld [vmem:[#allocation5 + $0x78] sm:$0xff]
    %v832 = vld [vmem:[#allocation5 + $0x80] sm:$0xff]
    %v833 = vld [vmem:[#allocation5 + $0x88] sm:$0xff]
    %v834 = vld [vmem:[#allocation5 + $0x90] sm:$0xff]
    %v835 = vld [vmem:[#allocation5 + $0x98] sm:$0xff]
    %v836 = vld [vmem:[#allocation5 + $0xa0] sm:$0xff]
    %v837 = vld [vmem:[#allocation5 + $0xa8] sm:$0xff]
    %v838 = vld [vmem:[#allocation5 + $0xb0] sm:$0xff]
    %v839 = vld [vmem:[#allocation5 + $0xb8] sm:$0xff]
    %v840 = vld [vmem:[#allocation5 + $0xc0] sm:$0xff]
    %v841 = vld [vmem:[#allocation5 + $0xc8] sm:$0xff]
    %v842 = vld [vmem:[#allocation5 + $0xd0] sm:$0xff]
    %v843 = vld [vmem:[#allocation5 + $0xd8] sm:$0xff]
    %v844 = vld [vmem:[#allocation5 + $0xe0] sm:$0xff]
    %v845 = vld [vmem:[#allocation5 + $0xe8] sm:$0xff]
    %v846 = vld [vmem:[#allocation5 + $0xf0] sm:$0xff]
    %v847 = vld [vmem:[#allocation5 + $0xf8] sm:$0xff]
    %v880 = vunpack.c.l.b16 %v816
    %v881 = vunpack.c.h.b16 %v816
    %v882 = vunpack.c.l.b16 %v817
    %v883 = vunpack.c.h.b16 %v817
    %v884 = vunpack.c.l.b16 %v818
    %v885 = vunpack.c.h.b16 %v818
    %v886 = vunpack.c.l.b16 %v819
    %v887 = vunpack.c.h.b16 %v819
    %v888 = vunpack.c.l.b16 %v820
    %v889 = vunpack.c.h.b16 %v820
    %v890 = vunpack.c.l.b16 %v821
    %v891 = vunpack.c.h.b16 %v821
    %v892 = vunpack.c.l.b16 %v822
    %v893 = vunpack.c.h.b16 %v822
    %v894 = vunpack.c.l.b16 %v823
    %v895 = vunpack.c.h.b16 %v823
    %v896 = vunpack.c.l.b16 %v824
    %v897 = vunpack.c.h.b16 %v824
    %v898 = vunpack.c.l.b16 %v825
    %v899 = vunpack.c.h.b16 %v825
    %v900 = vunpack.c.l.b16 %v826
    %v901 = vunpack.c.h.b16 %v826
    %v902 = vunpack.c.l.b16 %v827
    %v903 = vunpack.c.h.b16 %v827
    %v904 = vunpack.c.l.b16 %v828
    %v905 = vunpack.c.h.b16 %v828
    %v906 = vunpack.c.l.b16 %v829
    %v907 = vunpack.c.h.b16 %v829
    %v908 = vunpack.c.l.b16 %v830
    %v909 = vunpack.c.h.b16 %v830
    %v910 = vunpack.c.l.b16 %v831
    %v911 = vunpack.c.h.b16 %v831
    %v912 = vunpack.c.l.b16 %v832
    %v913 = vunpack.c.h.b16 %v832
    %v914 = vunpack.c.l.b16 %v833
    %v915 = vunpack.c.h.b16 %v833
    %v916 = vunpack.c.l.b16 %v834
    %v917 = vunpack.c.h.b16 %v834
    %v918 = vunpack.c.l.b16 %v835
    %v919 = vunpack.c.h.b16 %v835
    %v920 = vunpack.c.l.b16 %v836
    %v921 = vunpack.c.h.b16 %v836
    %v922 = vunpack.c.l.b16 %v837
    %v923 = vunpack.c.h.b16 %v837
    %v924 = vunpack.c.l.b16 %v838
    %v925 = vunpack.c.h.b16 %v838
    %v926 = vunpack.c.l.b16 %v839
    %v927 = vunpack.c.h.b16 %v839
    %v928 = vunpack.c.l.b16 %v840
    %v929 = vunpack.c.h.b16 %v840
    %v930 = vunpack.c.l.b16 %v841
    %v931 = vunpack.c.h.b16 %v841
    %v932 = vunpack.c.l.b16 %v842
    %v933 = vunpack.c.h.b16 %v842
    %v934 = vunpack.c.l.b16 %v843
    %v935 = vunpack.c.h.b16 %v843
    %v936 = vunpack.c.l.b16 %v844
    %v937 = vunpack.c.h.b16 %v844
    %v938 = vunpack.c.l.b16 %v845
    %v939 = vunpack.c.h.b16 %v845
    %v940 = vunpack.c.l.b16 %v846
    %v941 = vunpack.c.h.b16 %v846
    %v942 = vunpack.c.l.b16 %v847
    %v943 = vunpack.c.h.b16 %v847
    %v944 = vpack.c.b16 %v884, %v880
    %v945 = vpack.c.b16 %v885, %v881
    %v946 = vpack.c.b16 %v886, %v882
    %v947 = vpack.c.b16 %v887, %v883
    %v948 = vpack.c.b16 %v892, %v888
    %v949 = vpack.c.b16 %v893, %v889
    %v950 = vpack.c.b16 %v894, %v890
    %v951 = vpack.c.b16 %v895, %v891
    %v952 = vpack.c.b16 %v900, %v896
    %v953 = vpack.c.b16 %v901, %v897
    %v954 = vpack.c.b16 %v902, %v898
    %v955 = vpack.c.b16 %v903, %v899
    %v956 = vpack.c.b16 %v908, %v904
    %v957 = vpack.c.b16 %v909, %v905
    %v958 = vpack.c.b16 %v910, %v906
    %v959 = vpack.c.b16 %v911, %v907
    %v960 = vpack.c.b16 %v916, %v912
    %v961 = vpack.c.b16 %v917, %v913
    %v962 = vpack.c.b16 %v918, %v914
    %v963 = vpack.c.b16 %v919, %v915
    %v964 = vpack.c.b16 %v924, %v920
    %v965 = vpack.c.b16 %v925, %v921
    %v966 = vpack.c.b16 %v926, %v922
    %v967 = vpack.c.b16 %v927, %v923
    %v968 = vpack.c.b16 %v932, %v928
    %v969 = vpack.c.b16 %v933, %v929
    %v970 = vpack.c.b16 %v934, %v930
    %v971 = vpack.c.b16 %v935, %v931
    %v972 = vpack.c.b16 %v940, %v936
    %v973 = vpack.c.b16 %v941, %v937
    %v974 = vpack.c.b16 %v942, %v938
    %v975 = vpack.c.b16 %v943, %v939
    %1008 = vmatprep.subr.bf16.mxu0 %v973
    %1009 = vmatpush1.bf16.msra.mxu0 %v972
    %1010 = vmatprep.subr.bf16.mxu0 %v969
    %1011 = vmatpush1.bf16.msra.mxu0 %v968
    %1012 = vmatprep.subr.bf16.mxu0 %v965
    %1013 = vmatpush1.bf16.msra.mxu0 %v964
    %1014 = vmatprep.subr.bf16.mxu0 %v961
    %1015 = vmatpush1.bf16.msra.mxu0 %v960
    %1016 = vmatprep.subr.bf16.mxu0 %v957
    %1017 = vmatpush1.bf16.msra.mxu0 %v956
    %1018 = vmatprep.subr.bf16.mxu0 %v953
    %1019 = vmatpush1.bf16.msra.mxu0 %v952
    %1020 = vmatprep.subr.bf16.mxu0 %v949
    %1021 = vmatpush1.bf16.msra.mxu0 %v948
    %1022 = vmatprep.subr.bf16.mxu0 %v945
    %1023 = vmatpush1.bf16.msra.mxu0 %v944
    %1024 = vmatprep.subr.bf16.mxu0 0
    %1025 = vmatpush2.bf16.msra.mxu0 0
    %1026 = vmatprep.subr.bf16.mxu0 0
    %1027 = vmatpush2.bf16.msra.mxu0 0
    %1028 = vmatprep.subr.bf16.mxu0 0
    %1029 = vmatpush2.bf16.msra.mxu0 0
    %1030 = vmatprep.subr.bf16.mxu0 0
    %1031 = vmatpush2.bf16.msra.mxu0 0
    %1032 = vmatprep.subr.bf16.mxu0 0
    %1033 = vmatpush2.bf16.msra.mxu0 0
    %1034 = vmatprep.subr.bf16.mxu0 0
    %1035 = vmatpush2.bf16.msra.mxu0 0
    %1036 = vmatprep.subr.bf16.mxu0 0
    %1037 = vmatpush2.bf16.msra.mxu0 0
    %1038 = vmatprep.subr.bf16.mxu0 0
    %1039 = vmatpush2.bf16.msra.mxu0 0
    %1040 = vmatprep.mubr.bf16.mxu0 0
    %1041 = vmatmul.mubr.bf16.gmra.mxu0 %v814
    %v1042 = vpop.f32.mrf.mxu0
    %v1043 = vadd.f32 0.0, %v1042
    %v1044 = vpop.f32.mrf.mxu0
    %v1045 = vadd.f32 0.0, %v1044
    %v1046 = vpop.f32.mrf.mxu0
    %v1047 = vpop.f32.mrf.mxu0
    %1048 = vdwg.mxu0
    %1049 = vmatprep.subr.bf16.mxu0 %v975
    %1050 = vmatpush1.bf16.msra.mxu0 %v974
    %1051 = vmatprep.subr.bf16.mxu0 %v971
    %1052 = vmatpush1.bf16.msra.mxu0 %v970
    %1053 = vmatprep.subr.bf16.mxu0 %v967
    %1054 = vmatpush1.bf16.msra.mxu0 %v966
    %1055 = vmatprep.subr.bf16.mxu0 %v963
    %1056 = vmatpush1.bf16.msra.mxu0 %v962
    %1057 = vmatprep.subr.bf16.mxu0 %v959
    %1058 = vmatpush1.bf16.msra.mxu0 %v958
    %1059 = vmatprep.subr.bf16.mxu0 %v955
    %1060 = vmatpush1.bf16.msra.mxu0 %v954
    %1061 = vmatprep.subr.bf16.mxu0 %v951
    %1062 = vmatpush1.bf16.msra.mxu0 %v950
    %1063 = vmatprep.subr.bf16.mxu0 %v947
    %1064 = vmatpush1.bf16.msra.mxu0 %v946
    %1065 = vmatprep.subr.bf16.mxu0 0
    %1066 = vmatpush2.bf16.msra.mxu0 0
    %1067 = vmatprep.subr.bf16.mxu0 0
    %1068 = vmatpush2.bf16.msra.mxu0 0
    %1069 = vmatprep.subr.bf16.mxu0 0
    %1070 = vmatpush2.bf16.msra.mxu0 0
    %1071 = vmatprep.subr.bf16.mxu0 0
    %1072 = vmatpush2.bf16.msra.mxu0 0
    %1073 = vmatprep.subr.bf16.mxu0 0
    %1074 = vmatpush2.bf16.msra.mxu0 0
    %1075 = vmatprep.subr.bf16.mxu0 0
    %1076 = vmatpush2.bf16.msra.mxu0 0
    %1077 = vmatprep.subr.bf16.mxu0 0
    %1078 = vmatpush2.bf16.msra.mxu0 0
    %1079 = vmatprep.subr.bf16.mxu0 0
    %1080 = vmatpush2.bf16.msra.mxu0 0
    %1081 = vmatprep.mubr.bf16.mxu0 0
    %1082 = vmatmul.mubr.bf16.gmra.mxu0 %v814
    %v1083 = vpop.f32.mrf.mxu0
    %v1084 = vadd.f32 0.0, %v1083
    %v1085 = vpop.f32.mrf.mxu0
    %v1086 = vadd.f32 0.0, %v1085
    %v1087 = vpop.f32.mrf.mxu0
    %v1088 = vpop.f32.mrf.mxu0
    %1089 = vdwg.mxu0
    %s1090 = scalar_lea.vmem [#allocation4], 32
    %v1091 = vld [vmem:[%s1090] sm:$0xff]
    %v1092 = vadd.f32 %v1043, %v1091
    %v1093 = vxor.u32 %v1092, 2147483648
    %v1094 = vmul.f32 %v1093, 1.442695
    %v1095 = vpow.pop %v1094
    %v1096 = vadd.f32 %v1095, 1.0
    %v1097 = vrcp.pop %v1096
    %v1098 = vmul.f32 1.0, %v1097
    %v1099 = vld [vmem:[%s1090 + $0x8] sm:$0xff]
    %v1100 = vadd.f32 %v1045, %v1099
    %v1101 = vxor.u32 %v1100, 2147483648
    %v1102 = vmul.f32 %v1101, 1.442695
    %v1103 = vpow.pop %v1102
    %v1104 = vadd.f32 %v1103, 1.0
    %v1105 = vrcp.pop %v1104
    %v1106 = vmul.f32 1.0, %v1105
    %v1107 = vld [vmem:[%s1090 + $0x10] sm:$0xff]
    %v1108 = vadd.f32 %v1084, %v1107
    %v1109 = vtanh.pop %v1108
    %v1110 = vld [vmem:[%s1090 + $0x18] sm:$0xff]
    %v1111 = vadd.f32 %v1086, %v1110
    %v1112 = vxor.u32 %v1111, 2147483648
    %v1113 = vmul.f32 %v1112, 1.442695
    %v1114 = vpow.pop %v1113
    %v1115 = vadd.f32 %v1114, 1.0
    %v1116 = vrcp.pop %v1115
    %v1117 = vmul.f32 1.0, %v1116
    %v1118 = vmul.f32 %v1106, %v811
    %v1119 = vmul.f32 %v1098, %v1109
    %v1120 = vadd.f32 %v1118, %v1119
    %v1121 = vtanh.pop %v1120
    %v1122 = vmul.f32 %v1117, %v1121
    %v1123 = vpack.c.bf16 %v1122, %v1122
    %s1124 = scalar_lea.vmem %s6, 4
    %1125 = vst [vmem:[%s1124] sm:$0xf] %v1123
    %v1126 = vld [vmem:[#allocation5] sm:$0xff]
    %v1127 = vld [vmem:[#allocation5 + $0x8] sm:$0xff]
    %v1128 = vld [vmem:[#allocation5 + $0x10] sm:$0xff]
    %v1129 = vld [vmem:[#allocation5 + $0x18] sm:$0xff]
    %v1130 = vld [vmem:[#allocation5 + $0x20] sm:$0xff]
    %v1131 = vld [vmem:[#allocation5 + $0x28] sm:$0xff]
    %v1132 = vld [vmem:[#allocation5 + $0x30] sm:$0xff]
    %v1133 = vld [vmem:[#allocation5 + $0x38] sm:$0xff]
    %v1134 = vld [vmem:[#allocation5 + $0x40] sm:$0xff]
    %v1135 = vld [vmem:[#allocation5 + $0x48] sm:$0xff]
    %v1136 = vld [vmem:[#allocation5 + $0x50] sm:$0xff]
    %v1137 = vld [vmem:[#allocation5 + $0x58] sm:$0xff]
    %v1138 = vld [vmem:[#allocation5 + $0x60] sm:$0xff]
    %v1139 = vld [vmem:[#allocation5 + $0x68] sm:$0xff]
    %v1140 = vld [vmem:[#allocation5 + $0x70] sm:$0xff]
    %v1141 = vld [vmem:[#allocation5 + $0x78] sm:$0xff]
    %v1142 = vld [vmem:[#allocation5 + $0x80] sm:$0xff]
    %v1143 = vld [vmem:[#allocation5 + $0x88] sm:$0xff]
    %v1144 = vld [vmem:[#allocation5 + $0x90] sm:$0xff]
    %v1145 = vld [vmem:[#allocation5 + $0x98] sm:$0xff]
    %v1146 = vld [vmem:[#allocation5 + $0xa0] sm:$0xff]
    %v1147 = vld [vmem:[#allocation5 + $0xa8] sm:$0xff]
    %v1148 = vld [vmem:[#allocation5 + $0xb0] sm:$0xff]
    %v1149 = vld [vmem:[#allocation5 + $0xb8] sm:$0xff]
    %v1150 = vld [vmem:[#allocation5 + $0xc0] sm:$0xff]
    %v1151 = vld [vmem:[#allocation5 + $0xc8] sm:$0xff]
    %v1152 = vld [vmem:[#allocation5 + $0xd0] sm:$0xff]
    %v1153 = vld [vmem:[#allocation5 + $0xd8] sm:$0xff]
    %v1154 = vld [vmem:[#allocation5 + $0xe0] sm:$0xff]
    %v1155 = vld [vmem:[#allocation5 + $0xe8] sm:$0xff]
    %v1156 = vld [vmem:[#allocation5 + $0xf0] sm:$0xff]
    %v1157 = vld [vmem:[#allocation5 + $0xf8] sm:$0xff]
    %v1190 = vunpack.c.l.b16 %v1126
    %v1191 = vunpack.c.h.b16 %v1126
    %v1192 = vunpack.c.l.b16 %v1127
    %v1193 = vunpack.c.h.b16 %v1127
    %v1194 = vunpack.c.l.b16 %v1128
    %v1195 = vunpack.c.h.b16 %v1128
    %v1196 = vunpack.c.l.b16 %v1129
    %v1197 = vunpack.c.h.b16 %v1129
    %v1198 = vunpack.c.l.b16 %v1130
    %v1199 = vunpack.c.h.b16 %v1130
    %v1200 = vunpack.c.l.b16 %v1131
    %v1201 = vunpack.c.h.b16 %v1131
    %v1202 = vunpack.c.l.b16 %v1132
    %v1203 = vunpack.c.h.b16 %v1132
    %v1204 = vunpack.c.l.b16 %v1133
    %v1205 = vunpack.c.h.b16 %v1133
    %v1206 = vunpack.c.l.b16 %v1134
    %v1207 = vunpack.c.h.b16 %v1134
    %v1208 = vunpack.c.l.b16 %v1135
    %v1209 = vunpack.c.h.b16 %v1135
    %v1210 = vunpack.c.l.b16 %v1136
    %v1211 = vunpack.c.h.b16 %v1136
    %v1212 = vunpack.c.l.b16 %v1137
    %v1213 = vunpack.c.h.b16 %v1137
    %v1214 = vunpack.c.l.b16 %v1138
    %v1215 = vunpack.c.h.b16 %v1138
    %v1216 = vunpack.c.l.b16 %v1139
    %v1217 = vunpack.c.h.b16 %v1139
    %v1218 = vunpack.c.l.b16 %v1140
    %v1219 = vunpack.c.h.b16 %v1140
    %v1220 = vunpack.c.l.b16 %v1141
    %v1221 = vunpack.c.h.b16 %v1141
    %v1222 = vunpack.c.l.b16 %v1142
    %v1223 = vunpack.c.h.b16 %v1142
    %v1224 = vunpack.c.l.b16 %v1143
    %v1225 = vunpack.c.h.b16 %v1143
    %v1226 = vunpack.c.l.b16 %v1144
    %v1227 = vunpack.c.h.b16 %v1144
    %v1228 = vunpack.c.l.b16 %v1145
    %v1229 = vunpack.c.h.b16 %v1145
    %v1230 = vunpack.c.l.b16 %v1146
    %v1231 = vunpack.c.h.b16 %v1146
    %v1232 = vunpack.c.l.b16 %v1147
    %v1233 = vunpack.c.h.b16 %v1147
    %v1234 = vunpack.c.l.b16 %v1148
    %v1235 = vunpack.c.h.b16 %v1148
    %v1236 = vunpack.c.l.b16 %v1149
    %v1237 = vunpack.c.h.b16 %v1149
    %v1238 = vunpack.c.l.b16 %v1150
    %v1239 = vunpack.c.h.b16 %v1150
    %v1240 = vunpack.c.l.b16 %v1151
    %v1241 = vunpack.c.h.b16 %v1151
    %v1242 = vunpack.c.l.b16 %v1152
    %v1243 = vunpack.c.h.b16 %v1152
    %v1244 = vunpack.c.l.b16 %v1153
    %v1245 = vunpack.c.h.b16 %v1153
    %v1246 = vunpack.c.l.b16 %v1154
    %v1247 = vunpack.c.h.b16 %v1154
    %v1248 = vunpack.c.l.b16 %v1155
    %v1249 = vunpack.c.h.b16 %v1155
    %v1250 = vunpack.c.l.b16 %v1156
    %v1251 = vunpack.c.h.b16 %v1156
    %v1252 = vunpack.c.l.b16 %v1157
    %v1253 = vunpack.c.h.b16 %v1157
    %v1254 = vpack.c.b16 %v1194, %v1190
    %v1255 = vpack.c.b16 %v1195, %v1191
    %v1256 = vpack.c.b16 %v1196, %v1192
    %v1257 = vpack.c.b16 %v1197, %v1193
    %v1258 = vpack.c.b16 %v1202, %v1198
    %v1259 = vpack.c.b16 %v1203, %v1199
    %v1260 = vpack.c.b16 %v1204, %v1200
    %v1261 = vpack.c.b16 %v1205, %v1201
    %v1262 = vpack.c.b16 %v1210, %v1206
    %v1263 = vpack.c.b16 %v1211, %v1207
    %v1264 = vpack.c.b16 %v1212, %v1208
    %v1265 = vpack.c.b16 %v1213, %v1209
    %v1266 = vpack.c.b16 %v1218, %v1214
    %v1267 = vpack.c.b16 %v1219, %v1215
    %v1268 = vpack.c.b16 %v1220, %v1216
    %v1269 = vpack.c.b16 %v1221, %v1217
    %v1270 = vpack.c.b16 %v1226, %v1222
    %v1271 = vpack.c.b16 %v1227, %v1223
    %v1272 = vpack.c.b16 %v1228, %v1224
    %v1273 = vpack.c.b16 %v1229, %v1225
    %v1274 = vpack.c.b16 %v1234, %v1230
    %v1275 = vpack.c.b16 %v1235, %v1231
    %v1276 = vpack.c.b16 %v1236, %v1232
    %v1277 = vpack.c.b16 %v1237, %v1233
    %v1278 = vpack.c.b16 %v1242, %v1238
    %v1279 = vpack.c.b16 %v1243, %v1239
    %v1280 = vpack.c.b16 %v1244, %v1240
    %v1281 = vpack.c.b16 %v1245, %v1241
    %v1282 = vpack.c.b16 %v1250, %v1246
    %v1283 = vpack.c.b16 %v1251, %v1247
    %v1284 = vpack.c.b16 %v1252, %v1248
    %v1285 = vpack.c.b16 %v1253, %v1249
    %1318 = vmatprep.subr.bf16.mxu0 %v1283
    %1319 = vmatpush1.bf16.msra.mxu0 %v1282
    %1320 = vmatprep.subr.bf16.mxu0 %v1279
    %1321 = vmatpush1.bf16.msra.mxu0 %v1278
    %1322 = vmatprep.subr.bf16.mxu0 %v1275
    %1323 = vmatpush1.bf16.msra.mxu0 %v1274
    %1324 = vmatprep.subr.bf16.mxu0 %v1271
    %1325 = vmatpush1.bf16.msra.mxu0 %v1270
    %1326 = vmatprep.subr.bf16.mxu0 %v1267
    %1327 = vmatpush1.bf16.msra.mxu0 %v1266
    %1328 = vmatprep.subr.bf16.mxu0 %v1263
    %1329 = vmatpush1.bf16.msra.mxu0 %v1262
    %1330 = vmatprep.subr.bf16.mxu0 %v1259
    %1331 = vmatpush1.bf16.msra.mxu0 %v1258
    %1332 = vmatprep.subr.bf16.mxu0 %v1255
    %1333 = vmatpush1.bf16.msra.mxu0 %v1254
    %1334 = vmatprep.subr.bf16.mxu0 0
    %1335 = vmatpush2.bf16.msra.mxu0 0
    %1336 = vmatprep.subr.bf16.mxu0 0
    %1337 = vmatpush2.bf16.msra.mxu0 0
    %1338 = vmatprep.subr.bf16.mxu0 0
    %1339 = vmatpush2.bf16.msra.mxu0 0
    %1340 = vmatprep.subr.bf16.mxu0 0
    %1341 = vmatpush2.bf16.msra.mxu0 0
    %1342 = vmatprep.subr.bf16.mxu0 0
    %1343 = vmatpush2.bf16.msra.mxu0 0
    %1344 = vmatprep.subr.bf16.mxu0 0
    %1345 = vmatpush2.bf16.msra.mxu0 0
    %1346 = vmatprep.subr.bf16.mxu0 0
    %1347 = vmatpush2.bf16.msra.mxu0 0
    %1348 = vmatprep.subr.bf16.mxu0 0
    %1349 = vmatpush2.bf16.msra.mxu0 0
    %1350 = vmatprep.mubr.bf16.mxu0 0
    %1351 = vmatmul.mubr.bf16.gmra.mxu0 %v1123
    %v1352 = vpop.f32.mrf.mxu0
    %v1353 = vadd.f32 0.0, %v1352
    %v1354 = vpop.f32.mrf.mxu0
    %v1355 = vadd.f32 0.0, %v1354
    %v1356 = vpop.f32.mrf.mxu0
    %v1357 = vpop.f32.mrf.mxu0
    %1358 = vdwg.mxu0
    %1359 = vmatprep.subr.bf16.mxu0 %v1285
    %1360 = vmatpush1.bf16.msra.mxu0 %v1284
    %1361 = vmatprep.subr.bf16.mxu0 %v1281
    %1362 = vmatpush1.bf16.msra.mxu0 %v1280
    %1363 = vmatprep.subr.bf16.mxu0 %v1277
    %1364 = vmatpush1.bf16.msra.mxu0 %v1276
    %1365 = vmatprep.subr.bf16.mxu0 %v1273
    %1366 = vmatpush1.bf16.msra.mxu0 %v1272
    %1367 = vmatprep.subr.bf16.mxu0 %v1269
    %1368 = vmatpush1.bf16.msra.mxu0 %v1268
    %1369 = vmatprep.subr.bf16.mxu0 %v1265
    %1370 = vmatpush1.bf16.msra.mxu0 %v1264
    %1371 = vmatprep.subr.bf16.mxu0 %v1261
    %1372 = vmatpush1.bf16.msra.mxu0 %v1260
    %1373 = vmatprep.subr.bf16.mxu0 %v1257
    %1374 = vmatpush1.bf16.msra.mxu0 %v1256
    %1375 = vmatprep.subr.bf16.mxu0 0
    %1376 = vmatpush2.bf16.msra.mxu0 0
    %1377 = vmatprep.subr.bf16.mxu0 0
    %1378 = vmatpush2.bf16.msra.mxu0 0
    %1379 = vmatprep.subr.bf16.mxu0 0
    %1380 = vmatpush2.bf16.msra.mxu0 0
    %1381 = vmatprep.subr.bf16.mxu0 0
    %1382 = vmatpush2.bf16.msra.mxu0 0
    %1383 = vmatprep.subr.bf16.mxu0 0
    %1384 = vmatpush2.bf16.msra.mxu0 0
    %1385 = vmatprep.subr.bf16.mxu0 0
    %1386 = vmatpush2.bf16.msra.mxu0 0
    %1387 = vmatprep.subr.bf16.mxu0 0
    %1388 = vmatpush2.bf16.msra.mxu0 0
    %1389 = vmatprep.subr.bf16.mxu0 0
    %1390 = vmatpush2.bf16.msra.mxu0 0
    %1391 = vmatprep.mubr.bf16.mxu0 0
    %1392 = vmatmul.mubr.bf16.gmra.mxu0 %v1123
    %v1393 = vpop.f32.mrf.mxu0
    %v1394 = vadd.f32 0.0, %v1393
    %v1395 = vpop.f32.mrf.mxu0
    %v1396 = vadd.f32 0.0, %v1395
    %v1397 = vpop.f32.mrf.mxu0
    %v1398 = vpop.f32.mrf.mxu0
    %1399 = vdwg.mxu0
    %s1400 = scalar_lea.vmem [#allocation4], 64
    %v1401 = vld [vmem:[%s1400] sm:$0xff]
    %v1402 = vadd.f32 %v1353, %v1401
    %v1403 = vxor.u32 %v1402, 2147483648
    %v1404 = vmul.f32 %v1403, 1.442695
    %v1405 = vpow.pop %v1404
    %v1406 = vadd.f32 %v1405, 1.0
    %v1407 = vrcp.pop %v1406
    %v1408 = vmul.f32 1.0, %v1407
    %v1409 = vld [vmem:[%s1400 + $0x8] sm:$0xff]
    %v1410 = vadd.f32 %v1355, %v1409
    %v1411 = vxor.u32 %v1410, 2147483648
    %v1412 = vmul.f32 %v1411, 1.442695
    %v1413 = vpow.pop %v1412
    %v1414 = vadd.f32 %v1413, 1.0
    %v1415 = vrcp.pop %v1414
    %v1416 = vmul.f32 1.0, %v1415
    %v1417 = vld [vmem:[%s1400 + $0x10] sm:$0xff]
    %v1418 = vadd.f32 %v1394, %v1417
    %v1419 = vtanh.pop %v1418
    %v1420 = vld [vmem:[%s1400 + $0x18] sm:$0xff]
    %v1421 = vadd.f32 %v1396, %v1420
    %v1422 = vxor.u32 %v1421, 2147483648
    %v1423 = vmul.f32 %v1422, 1.442695
    %v1424 = vpow.pop %v1423
    %v1425 = vadd.f32 %v1424, 1.0
    %v1426 = vrcp.pop %v1425
    %v1427 = vmul.f32 1.0, %v1426
    %v1428 = vmul.f32 %v1416, %v1120
    %v1429 = vmul.f32 %v1408, %v1419
    %v1430 = vadd.f32 %v1428, %v1429
    %v1431 = vtanh.pop %v1430
    %v1432 = vmul.f32 %v1427, %v1431
    %v1433 = vpack.c.bf16 %v1432, %v1432
    %s1434 = scalar_lea.vmem %s6, 8
    %1435 = vst [vmem:[%s1434] sm:$0xf] %v1433
    %v1436 = vld [vmem:[#allocation5] sm:$0xff]
    %v1437 = vld [vmem:[#allocation5 + $0x8] sm:$0xff]
    %v1438 = vld [vmem:[#allocation5 + $0x10] sm:$0xff]
    %v1439 = vld [vmem:[#allocation5 + $0x18] sm:$0xff]
    %v1440 = vld [vmem:[#allocation5 + $0x20] sm:$0xff]
    %v1441 = vld [vmem:[#allocation5 + $0x28] sm:$0xff]
    %v1442 = vld [vmem:[#allocation5 + $0x30] sm:$0xff]
    %v1443 = vld [vmem:[#allocation5 + $0x38] sm:$0xff]
    %v1444 = vld [vmem:[#allocation5 + $0x40] sm:$0xff]
    %v1445 = vld [vmem:[#allocation5 + $0x48] sm:$0xff]
    %v1446 = vld [vmem:[#allocation5 + $0x50] sm:$0xff]
    %v1447 = vld [vmem:[#allocation5 + $0x58] sm:$0xff]
    %v1448 = vld [vmem:[#allocation5 + $0x60] sm:$0xff]
    %v1449 = vld [vmem:[#allocation5 + $0x68] sm:$0xff]
    %v1450 = vld [vmem:[#allocation5 + $0x70] sm:$0xff]
    %v1451 = vld [vmem:[#allocation5 + $0x78] sm:$0xff]
    %v1452 = vld [vmem:[#allocation5 + $0x80] sm:$0xff]
    %v1453 = vld [vmem:[#allocation5 + $0x88] sm:$0xff]
    %v1454 = vld [vmem:[#allocation5 + $0x90] sm:$0xff]
    %v1455 = vld [vmem:[#allocation5 + $0x98] sm:$0xff]
    %v1456 = vld [vmem:[#allocation5 + $0xa0] sm:$0xff]
    %v1457 = vld [vmem:[#allocation5 + $0xa8] sm:$0xff]
    %v1458 = vld [vmem:[#allocation5 + $0xb0] sm:$0xff]
    %v1459 = vld [vmem:[#allocation5 + $0xb8] sm:$0xff]
    %v1460 = vld [vmem:[#allocation5 + $0xc0] sm:$0xff]
    %v1461 = vld [vmem:[#allocation5 + $0xc8] sm:$0xff]
    %v1462 = vld [vmem:[#allocation5 + $0xd0] sm:$0xff]
    %v1463 = vld [vmem:[#allocation5 + $0xd8] sm:$0xff]
    %v1464 = vld [vmem:[#allocation5 + $0xe0] sm:$0xff]
    %v1465 = vld [vmem:[#allocation5 + $0xe8] sm:$0xff]
    %v1466 = vld [vmem:[#allocation5 + $0xf0] sm:$0xff]
    %v1467 = vld [vmem:[#allocation5 + $0xf8] sm:$0xff]
    %v1500 = vunpack.c.l.b16 %v1436
    %v1501 = vunpack.c.h.b16 %v1436
    %v1502 = vunpack.c.l.b16 %v1437
    %v1503 = vunpack.c.h.b16 %v1437
    %v1504 = vunpack.c.l.b16 %v1438
    %v1505 = vunpack.c.h.b16 %v1438
    %v1506 = vunpack.c.l.b16 %v1439
    %v1507 = vunpack.c.h.b16 %v1439
    %v1508 = vunpack.c.l.b16 %v1440
    %v1509 = vunpack.c.h.b16 %v1440
    %v1510 = vunpack.c.l.b16 %v1441
    %v1511 = vunpack.c.h.b16 %v1441
    %v1512 = vunpack.c.l.b16 %v1442
    %v1513 = vunpack.c.h.b16 %v1442
    %v1514 = vunpack.c.l.b16 %v1443
    %v1515 = vunpack.c.h.b16 %v1443
    %v1516 = vunpack.c.l.b16 %v1444
    %v1517 = vunpack.c.h.b16 %v1444
    %v1518 = vunpack.c.l.b16 %v1445
    %v1519 = vunpack.c.h.b16 %v1445
    %v1520 = vunpack.c.l.b16 %v1446
    %v1521 = vunpack.c.h.b16 %v1446
    %v1522 = vunpack.c.l.b16 %v1447
    %v1523 = vunpack.c.h.b16 %v1447
    %v1524 = vunpack.c.l.b16 %v1448
    %v1525 = vunpack.c.h.b16 %v1448
    %v1526 = vunpack.c.l.b16 %v1449
    %v1527 = vunpack.c.h.b16 %v1449
    %v1528 = vunpack.c.l.b16 %v1450
    %v1529 = vunpack.c.h.b16 %v1450
    %v1530 = vunpack.c.l.b16 %v1451
    %v1531 = vunpack.c.h.b16 %v1451
    %v1532 = vunpack.c.l.b16 %v1452
    %v1533 = vunpack.c.h.b16 %v1452
    %v1534 = vunpack.c.l.b16 %v1453
    %v1535 = vunpack.c.h.b16 %v1453
    %v1536 = vunpack.c.l.b16 %v1454
    %v1537 = vunpack.c.h.b16 %v1454
    %v1538 = vunpack.c.l.b16 %v1455
    %v1539 = vunpack.c.h.b16 %v1455
    %v1540 = vunpack.c.l.b16 %v1456
    %v1541 = vunpack.c.h.b16 %v1456
    %v1542 = vunpack.c.l.b16 %v1457
    %v1543 = vunpack.c.h.b16 %v1457
    %v1544 = vunpack.c.l.b16 %v1458
    %v1545 = vunpack.c.h.b16 %v1458
    %v1546 = vunpack.c.l.b16 %v1459
    %v1547 = vunpack.c.h.b16 %v1459
    %v1548 = vunpack.c.l.b16 %v1460
    %v1549 = vunpack.c.h.b16 %v1460
    %v1550 = vunpack.c.l.b16 %v1461
    %v1551 = vunpack.c.h.b16 %v1461
    %v1552 = vunpack.c.l.b16 %v1462
    %v1553 = vunpack.c.h.b16 %v1462
    %v1554 = vunpack.c.l.b16 %v1463
    %v1555 = vunpack.c.h.b16 %v1463
    %v1556 = vunpack.c.l.b16 %v1464
    %v1557 = vunpack.c.h.b16 %v1464
    %v1558 = vunpack.c.l.b16 %v1465
    %v1559 = vunpack.c.h.b16 %v1465
    %v1560 = vunpack.c.l.b16 %v1466
    %v1561 = vunpack.c.h.b16 %v1466
    %v1562 = vunpack.c.l.b16 %v1467
    %v1563 = vunpack.c.h.b16 %v1467
    %v1564 = vpack.c.b16 %v1504, %v1500
    %v1565 = vpack.c.b16 %v1505, %v1501
    %v1566 = vpack.c.b16 %v1506, %v1502
    %v1567 = vpack.c.b16 %v1507, %v1503
    %v1568 = vpack.c.b16 %v1512, %v1508
    %v1569 = vpack.c.b16 %v1513, %v1509
    %v1570 = vpack.c.b16 %v1514, %v1510
    %v1571 = vpack.c.b16 %v1515, %v1511
    %v1572 = vpack.c.b16 %v1520, %v1516
    %v1573 = vpack.c.b16 %v1521, %v1517
    %v1574 = vpack.c.b16 %v1522, %v1518
    %v1575 = vpack.c.b16 %v1523, %v1519
    %v1576 = vpack.c.b16 %v1528, %v1524
    %v1577 = vpack.c.b16 %v1529, %v1525
    %v1578 = vpack.c.b16 %v1530, %v1526
    %v1579 = vpack.c.b16 %v1531, %v1527
    %v1580 = vpack.c.b16 %v1536, %v1532
    %v1581 = vpack.c.b16 %v1537, %v1533
    %v1582 = vpack.c.b16 %v1538, %v1534
    %v1583 = vpack.c.b16 %v1539, %v1535
    %v1584 = vpack.c.b16 %v1544, %v1540
    %v1585 = vpack.c.b16 %v1545, %v1541
    %v1586 = vpack.c.b16 %v1546, %v1542
    %v1587 = vpack.c.b16 %v1547, %v1543
    %v1588 = vpack.c.b16 %v1552, %v1548
    %v1589 = vpack.c.b16 %v1553, %v1549
    %v1590 = vpack.c.b16 %v1554, %v1550
    %v1591 = vpack.c.b16 %v1555, %v1551
    %v1592 = vpack.c.b16 %v1560, %v1556
    %v1593 = vpack.c.b16 %v1561, %v1557
    %v1594 = vpack.c.b16 %v1562, %v1558
    %v1595 = vpack.c.b16 %v1563, %v1559
    %1628 = vmatprep.subr.bf16.mxu0 %v1593
    %1629 = vmatpush1.bf16.msra.mxu0 %v1592
    %1630 = vmatprep.subr.bf16.mxu0 %v1589
    %1631 = vmatpush1.bf16.msra.mxu0 %v1588
    %1632 = vmatprep.subr.bf16.mxu0 %v1585
    %1633 = vmatpush1.bf16.msra.mxu0 %v1584
    %1634 = vmatprep.subr.bf16.mxu0 %v1581
    %1635 = vmatpush1.bf16.msra.mxu0 %v1580
    %1636 = vmatprep.subr.bf16.mxu0 %v1577
    %1637 = vmatpush1.bf16.msra.mxu0 %v1576
    %1638 = vmatprep.subr.bf16.mxu0 %v1573
    %1639 = vmatpush1.bf16.msra.mxu0 %v1572
    %1640 = vmatprep.subr.bf16.mxu0 %v1569
    %1641 = vmatpush1.bf16.msra.mxu0 %v1568
    %1642 = vmatprep.subr.bf16.mxu0 %v1565
    %1643 = vmatpush1.bf16.msra.mxu0 %v1564
    %1644 = vmatprep.subr.bf16.mxu0 0
    %1645 = vmatpush2.bf16.msra.mxu0 0
    %1646 = vmatprep.subr.bf16.mxu0 0
    %1647 = vmatpush2.bf16.msra.mxu0 0
    %1648 = vmatprep.subr.bf16.mxu0 0
    %1649 = vmatpush2.bf16.msra.mxu0 0
    %1650 = vmatprep.subr.bf16.mxu0 0
    %1651 = vmatpush2.bf16.msra.mxu0 0
    %1652 = vmatprep.subr.bf16.mxu0 0
    %1653 = vmatpush2.bf16.msra.mxu0 0
    %1654 = vmatprep.subr.bf16.mxu0 0
    %1655 = vmatpush2.bf16.msra.mxu0 0
    %1656 = vmatprep.subr.bf16.mxu0 0
    %1657 = vmatpush2.bf16.msra.mxu0 0
    %1658 = vmatprep.subr.bf16.mxu0 0
    %1659 = vmatpush2.bf16.msra.mxu0 0
    %1660 = vmatprep.mubr.bf16.mxu0 0
    %1661 = vmatmul.mubr.bf16.gmra.mxu0 %v1433
    %v1662 = vpop.f32.mrf.mxu0
    %v1663 = vadd.f32 0.0, %v1662
    %v1664 = vpop.f32.mrf.mxu0
    %v1665 = vadd.f32 0.0, %v1664
    %v1666 = vpop.f32.mrf.mxu0
    %v1667 = vpop.f32.mrf.mxu0
    %1668 = vdwg.mxu0
    %1669 = vmatprep.subr.bf16.mxu0 %v1595
    %1670 = vmatpush1.bf16.msra.mxu0 %v1594
    %1671 = vmatprep.subr.bf16.mxu0 %v1591
    %1672 = vmatpush1.bf16.msra.mxu0 %v1590
    %1673 = vmatprep.subr.bf16.mxu0 %v1587
    %1674 = vmatpush1.bf16.msra.mxu0 %v1586
    %1675 = vmatprep.subr.bf16.mxu0 %v1583
    %1676 = vmatpush1.bf16.msra.mxu0 %v1582
    %1677 = vmatprep.subr.bf16.mxu0 %v1579
    %1678 = vmatpush1.bf16.msra.mxu0 %v1578
    %1679 = vmatprep.subr.bf16.mxu0 %v1575
    %1680 = vmatpush1.bf16.msra.mxu0 %v1574
    %1681 = vmatprep.subr.bf16.mxu0 %v1571
    %1682 = vmatpush1.bf16.msra.mxu0 %v1570
    %1683 = vmatprep.subr.bf16.mxu0 %v1567
    %1684 = vmatpush1.bf16.msra.mxu0 %v1566
    %1685 = vmatprep.subr.bf16.mxu0 0
    %1686 = vmatpush2.bf16.msra.mxu0 0
    %1687 = vmatprep.subr.bf16.mxu0 0
    %1688 = vmatpush2.bf16.msra.mxu0 0
    %1689 = vmatprep.subr.bf16.mxu0 0
    %1690 = vmatpush2.bf16.msra.mxu0 0
    %1691 = vmatprep.subr.bf16.mxu0 0
    %1692 = vmatpush2.bf16.msra.mxu0 0
    %1693 = vmatprep.subr.bf16.mxu0 0
    %1694 = vmatpush2.bf16.msra.mxu0 0
    %1695 = vmatprep.subr.bf16.mxu0 0
    %1696 = vmatpush2.bf16.msra.mxu0 0
    %1697 = vmatprep.subr.bf16.mxu0 0
    %1698 = vmatpush2.bf16.msra.mxu0 0
    %1699 = vmatprep.subr.bf16.mxu0 0
    %1700 = vmatpush2.bf16.msra.mxu0 0
    %1701 = vmatprep.mubr.bf16.mxu0 0
    %1702 = vmatmul.mubr.bf16.gmra.mxu0 %v1433
    %v1703 = vpop.f32.mrf.mxu0
    %v1704 = vadd.f32 0.0, %v1703
    %v1705 = vpop.f32.mrf.mxu0
    %v1706 = vadd.f32 0.0, %v1705
    %v1707 = vpop.f32.mrf.mxu0
    %v1708 = vpop.f32.mrf.mxu0
    %1709 = vdwg.mxu0
    %s1710 = scalar_lea.vmem [#allocation4], 96
    %v1711 = vld [vmem:[%s1710] sm:$0xff]
    %v1712 = vadd.f32 %v1663, %v1711
    %v1713 = vxor.u32 %v1712, 2147483648
    %v1714 = vmul.f32 %v1713, 1.442695
    %v1715 = vpow.pop %v1714
    %v1716 = vadd.f32 %v1715, 1.0
    %v1717 = vrcp.pop %v1716
    %v1718 = vmul.f32 1.0, %v1717
    %v1719 = vld [vmem:[%s1710 + $0x8] sm:$0xff]
    %v1720 = vadd.f32 %v1665, %v1719
    %v1721 = vxor.u32 %v1720, 2147483648
    %v1722 = vmul.f32 %v1721, 1.442695
    %v1723 = vpow.pop %v1722
    %v1724 = vadd.f32 %v1723, 1.0
    %v1725 = vrcp.pop %v1724
    %v1726 = vmul.f32 1.0, %v1725
    %v1727 = vld [vmem:[%s1710 + $0x10] sm:$0xff]
    %v1728 = vadd.f32 %v1704, %v1727
    %v1729 = vtanh.pop %v1728
    %v1730 = vld [vmem:[%s1710 + $0x18] sm:$0xff]
    %v1731 = vadd.f32 %v1706, %v1730
    %v1732 = vxor.u32 %v1731, 2147483648
    %v1733 = vmul.f32 %v1732, 1.442695
    %v1734 = vpow.pop %v1733
    %v1735 = vadd.f32 %v1734, 1.0
    %v1736 = vrcp.pop %v1735
    %v1737 = vmul.f32 1.0, %v1736
    %v1738 = vmul.f32 %v1726, %v1430
    %v1739 = vmul.f32 %v1718, %v1729
    %v1740 = vadd.f32 %v1738, %v1739
    %v1741 = vtanh.pop %v1740
    %v1742 = vmul.f32 %v1737, %v1741
    %v1743 = vpack.c.bf16 %v1742, %v1742
    %s1744 = scalar_lea.vmem %s6, 12
    %1745 = vst [vmem:[%s1744] sm:$0xf] %v1743
    %v1746 = vld [vmem:[#allocation5] sm:$0xff]
    %v1747 = vld [vmem:[#allocation5 + $0x8] sm:$0xff]
    %v1748 = vld [vmem:[#allocation5 + $0x10] sm:$0xff]
    %v1749 = vld [vmem:[#allocation5 + $0x18] sm:$0xff]
    %v1750 = vld [vmem:[#allocation5 + $0x20] sm:$0xff]
    %v1751 = vld [vmem:[#allocation5 + $0x28] sm:$0xff]
    %v1752 = vld [vmem:[#allocation5 + $0x30] sm:$0xff]
    %v1753 = vld [vmem:[#allocation5 + $0x38] sm:$0xff]
    %v1754 = vld [vmem:[#allocation5 + $0x40] sm:$0xff]
    %v1755 = vld [vmem:[#allocation5 + $0x48] sm:$0xff]
    %v1756 = vld [vmem:[#allocation5 + $0x50] sm:$0xff]
    %v1757 = vld [vmem:[#allocation5 + $0x58] sm:$0xff]
    %v1758 = vld [vmem:[#allocation5 + $0x60] sm:$0xff]
    %v1759 = vld [vmem:[#allocation5 + $0x68] sm:$0xff]
    %v1760 = vld [vmem:[#allocation5 + $0x70] sm:$0xff]
    %v1761 = vld [vmem:[#allocation5 + $0x78] sm:$0xff]
    %v1762 = vld [vmem:[#allocation5 + $0x80] sm:$0xff]
    %v1763 = vld [vmem:[#allocation5 + $0x88] sm:$0xff]
    %v1764 = vld [vmem:[#allocation5 + $0x90] sm:$0xff]
    %v1765 = vld [vmem:[#allocation5 + $0x98] sm:$0xff]
    %v1766 = vld [vmem:[#allocation5 + $0xa0] sm:$0xff]
    %v1767 = vld [vmem:[#allocation5 + $0xa8] sm:$0xff]
    %v1768 = vld [vmem:[#allocation5 + $0xb0] sm:$0xff]
    %v1769 = vld [vmem:[#allocation5 + $0xb8] sm:$0xff]
    %v1770 = vld [vmem:[#allocation5 + $0xc0] sm:$0xff]
    %v1771 = vld [vmem:[#allocation5 + $0xc8] sm:$0xff]
    %v1772 = vld [vmem:[#allocation5 + $0xd0] sm:$0xff]
    %v1773 = vld [vmem:[#allocation5 + $0xd8] sm:$0xff]
    %v1774 = vld [vmem:[#allocation5 + $0xe0] sm:$0xff]
    %v1775 = vld [vmem:[#allocation5 + $0xe8] sm:$0xff]
    %v1776 = vld [vmem:[#allocation5 + $0xf0] sm:$0xff]
    %v1777 = vld [vmem:[#allocation5 + $0xf8] sm:$0xff]
    %v1810 = vunpack.c.l.b16 %v1746
    %v1811 = vunpack.c.h.b16 %v1746
    %v1812 = vunpack.c.l.b16 %v1747
    %v1813 = vunpack.c.h.b16 %v1747
    %v1814 = vunpack.c.l.b16 %v1748
    %v1815 = vunpack.c.h.b16 %v1748
    %v1816 = vunpack.c.l.b16 %v1749
    %v1817 = vunpack.c.h.b16 %v1749
    %v1818 = vunpack.c.l.b16 %v1750
    %v1819 = vunpack.c.h.b16 %v1750
    %v1820 = vunpack.c.l.b16 %v1751
    %v1821 = vunpack.c.h.b16 %v1751
    %v1822 = vunpack.c.l.b16 %v1752
    %v1823 = vunpack.c.h.b16 %v1752
    %v1824 = vunpack.c.l.b16 %v1753
    %v1825 = vunpack.c.h.b16 %v1753
    %v1826 = vunpack.c.l.b16 %v1754
    %v1827 = vunpack.c.h.b16 %v1754
    %v1828 = vunpack.c.l.b16 %v1755
    %v1829 = vunpack.c.h.b16 %v1755
    %v1830 = vunpack.c.l.b16 %v1756
    %v1831 = vunpack.c.h.b16 %v1756
    %v1832 = vunpack.c.l.b16 %v1757
    %v1833 = vunpack.c.h.b16 %v1757
    %v1834 = vunpack.c.l.b16 %v1758
    %v1835 = vunpack.c.h.b16 %v1758
    %v1836 = vunpack.c.l.b16 %v1759
    %v1837 = vunpack.c.h.b16 %v1759
    %v1838 = vunpack.c.l.b16 %v1760
    %v1839 = vunpack.c.h.b16 %v1760
    %v1840 = vunpack.c.l.b16 %v1761
    %v1841 = vunpack.c.h.b16 %v1761
    %v1842 = vunpack.c.l.b16 %v1762
    %v1843 = vunpack.c.h.b16 %v1762
    %v1844 = vunpack.c.l.b16 %v1763
    %v1845 = vunpack.c.h.b16 %v1763
    %v1846 = vunpack.c.l.b16 %v1764
    %v1847 = vunpack.c.h.b16 %v1764
    %v1848 = vunpack.c.l.b16 %v1765
    %v1849 = vunpack.c.h.b16 %v1765
    %v1850 = vunpack.c.l.b16 %v1766
    %v1851 = vunpack.c.h.b16 %v1766
    %v1852 = vunpack.c.l.b16 %v1767
    %v1853 = vunpack.c.h.b16 %v1767
    %v1854 = vunpack.c.l.b16 %v1768
    %v1855 = vunpack.c.h.b16 %v1768
    %v1856 = vunpack.c.l.b16 %v1769
    %v1857 = vunpack.c.h.b16 %v1769
    %v1858 = vunpack.c.l.b16 %v1770
    %v1859 = vunpack.c.h.b16 %v1770
    %v1860 = vunpack.c.l.b16 %v1771
    %v1861 = vunpack.c.h.b16 %v1771
    %v1862 = vunpack.c.l.b16 %v1772
    %v1863 = vunpack.c.h.b16 %v1772
    %v1864 = vunpack.c.l.b16 %v1773
    %v1865 = vunpack.c.h.b16 %v1773
    %v1866 = vunpack.c.l.b16 %v1774
    %v1867 = vunpack.c.h.b16 %v1774
    %v1868 = vunpack.c.l.b16 %v1775
    %v1869 = vunpack.c.h.b16 %v1775
    %v1870 = vunpack.c.l.b16 %v1776
    %v1871 = vunpack.c.h.b16 %v1776
    %v1872 = vunpack.c.l.b16 %v1777
    %v1873 = vunpack.c.h.b16 %v1777
    %v1874 = vpack.c.b16 %v1814, %v1810
    %v1875 = vpack.c.b16 %v1815, %v1811
    %v1876 = vpack.c.b16 %v1816, %v1812
    %v1877 = vpack.c.b16 %v1817, %v1813
    %v1878 = vpack.c.b16 %v1822, %v1818
    %v1879 = vpack.c.b16 %v1823, %v1819
    %v1880 = vpack.c.b16 %v1824, %v1820
    %v1881 = vpack.c.b16 %v1825, %v1821
    %v1882 = vpack.c.b16 %v1830, %v1826
    %v1883 = vpack.c.b16 %v1831, %v1827
    %v1884 = vpack.c.b16 %v1832, %v1828
    %v1885 = vpack.c.b16 %v1833, %v1829
    %v1886 = vpack.c.b16 %v1838, %v1834
    %v1887 = vpack.c.b16 %v1839, %v1835
    %v1888 = vpack.c.b16 %v1840, %v1836
    %v1889 = vpack.c.b16 %v1841, %v1837
    %v1890 = vpack.c.b16 %v1846, %v1842
    %v1891 = vpack.c.b16 %v1847, %v1843
    %v1892 = vpack.c.b16 %v1848, %v1844
    %v1893 = vpack.c.b16 %v1849, %v1845
    %v1894 = vpack.c.b16 %v1854, %v1850
    %v1895 = vpack.c.b16 %v1855, %v1851
    %v1896 = vpack.c.b16 %v1856, %v1852
    %v1897 = vpack.c.b16 %v1857, %v1853
    %v1898 = vpack.c.b16 %v1862, %v1858
    %v1899 = vpack.c.b16 %v1863, %v1859
    %v1900 = vpack.c.b16 %v1864, %v1860
    %v1901 = vpack.c.b16 %v1865, %v1861
    %v1902 = vpack.c.b16 %v1870, %v1866
    %v1903 = vpack.c.b16 %v1871, %v1867
    %v1904 = vpack.c.b16 %v1872, %v1868
    %v1905 = vpack.c.b16 %v1873, %v1869
    %1938 = vmatprep.subr.bf16.mxu0 %v1903
    %1939 = vmatpush1.bf16.msra.mxu0 %v1902
    %1940 = vmatprep.subr.bf16.mxu0 %v1899
    %1941 = vmatpush1.bf16.msra.mxu0 %v1898
    %1942 = vmatprep.subr.bf16.mxu0 %v1895
    %1943 = vmatpush1.bf16.msra.mxu0 %v1894
    %1944 = vmatprep.subr.bf16.mxu0 %v1891
    %1945 = vmatpush1.bf16.msra.mxu0 %v1890
    %1946 = vmatprep.subr.bf16.mxu0 %v1887
    %1947 = vmatpush1.bf16.msra.mxu0 %v1886
    %1948 = vmatprep.subr.bf16.mxu0 %v1883
    %1949 = vmatpush1.bf16.msra.mxu0 %v1882
    %1950 = vmatprep.subr.bf16.mxu0 %v1879
    %1951 = vmatpush1.bf16.msra.mxu0 %v1878
    %1952 = vmatprep.subr.bf16.mxu0 %v1875
    %1953 = vmatpush1.bf16.msra.mxu0 %v1874
    %1954 = vmatprep.subr.bf16.mxu0 0
    %1955 = vmatpush2.bf16.msra.mxu0 0
    %1956 = vmatprep.subr.bf16.mxu0 0
    %1957 = vmatpush2.bf16.msra.mxu0 0
    %1958 = vmatprep.subr.bf16.mxu0 0
    %1959 = vmatpush2.bf16.msra.mxu0 0
    %1960 = vmatprep.subr.bf16.mxu0 0
    %1961 = vmatpush2.bf16.msra.mxu0 0
    %1962 = vmatprep.subr.bf16.mxu0 0
    %1963 = vmatpush2.bf16.msra.mxu0 0
    %1964 = vmatprep.subr.bf16.mxu0 0
    %1965 = vmatpush2.bf16.msra.mxu0 0
    %1966 = vmatprep.subr.bf16.mxu0 0
    %1967 = vmatpush2.bf16.msra.mxu0 0
    %1968 = vmatprep.subr.bf16.mxu0 0
    %1969 = vmatpush2.bf16.msra.mxu0 0
    %1970 = vmatprep.mubr.bf16.mxu0 0
    %1971 = vmatmul.mubr.bf16.gmra.mxu0 %v1743
    %v1972 = vpop.f32.mrf.mxu0
    %v1973 = vadd.f32 0.0, %v1972
    %v1974 = vpop.f32.mrf.mxu0
    %v1975 = vadd.f32 0.0, %v1974
    %v1976 = vpop.f32.mrf.mxu0
    %v1977 = vpop.f32.mrf.mxu0
    %1978 = vdwg.mxu0
    %1979 = vmatprep.subr.bf16.mxu0 %v1905
    %1980 = vmatpush1.bf16.msra.mxu0 %v1904
    %1981 = vmatprep.subr.bf16.mxu0 %v1901
    %1982 = vmatpush1.bf16.msra.mxu0 %v1900
    %1983 = vmatprep.subr.bf16.mxu0 %v1897
    %1984 = vmatpush1.bf16.msra.mxu0 %v1896
    %1985 = vmatprep.subr.bf16.mxu0 %v1893
    %1986 = vmatpush1.bf16.msra.mxu0 %v1892
    %1987 = vmatprep.subr.bf16.mxu0 %v1889
    %1988 = vmatpush1.bf16.msra.mxu0 %v1888
    %1989 = vmatprep.subr.bf16.mxu0 %v1885
    %1990 = vmatpush1.bf16.msra.mxu0 %v1884
    %1991 = vmatprep.subr.bf16.mxu0 %v1881
    %1992 = vmatpush1.bf16.msra.mxu0 %v1880
    %1993 = vmatprep.subr.bf16.mxu0 %v1877
    %1994 = vmatpush1.bf16.msra.mxu0 %v1876
    %1995 = vmatprep.subr.bf16.mxu0 0
    %1996 = vmatpush2.bf16.msra.mxu0 0
    %1997 = vmatprep.subr.bf16.mxu0 0
    %1998 = vmatpush2.bf16.msra.mxu0 0
    %1999 = vmatprep.subr.bf16.mxu0 0
    %2000 = vmatpush2.bf16.msra.mxu0 0
    %2001 = vmatprep.subr.bf16.mxu0 0
    %2002 = vmatpush2.bf16.msra.mxu0 0
    %2003 = vmatprep.subr.bf16.mxu0 0
    %2004 = vmatpush2.bf16.msra.mxu0 0
    %2005 = vmatprep.subr.bf16.mxu0 0
    %2006 = vmatpush2.bf16.msra.mxu0 0
    %2007 = vmatprep.subr.bf16.mxu0 0
    %2008 = vmatpush2.bf16.msra.mxu0 0
    %2009 = vmatprep.subr.bf16.mxu0 0
    %2010 = vmatpush2.bf16.msra.mxu0 0
    %2011 = vmatprep.mubr.bf16.mxu0 0
    %2012 = vmatmul.mubr.bf16.gmra.mxu0 %v1743
    %v2013 = vpop.f32.mrf.mxu0
    %v2014 = vadd.f32 0.0, %v2013
    %v2015 = vpop.f32.mrf.mxu0
    %v2016 = vadd.f32 0.0, %v2015
    %v2017 = vpop.f32.mrf.mxu0
    %v2018 = vpop.f32.mrf.mxu0
    %2019 = vdwg.mxu0
    %s2020 = scalar_lea.vmem [#allocation4], 128
    %v2021 = vld [vmem:[%s2020] sm:$0xff]
    %v2022 = vadd.f32 %v1973, %v2021
    %v2023 = vxor.u32 %v2022, 2147483648
    %v2024 = vmul.f32 %v2023, 1.442695
    %v2025 = vpow.pop %v2024
    %v2026 = vadd.f32 %v2025, 1.0
    %v2027 = vrcp.pop %v2026
    %v2028 = vmul.f32 1.0, %v2027
    %v2029 = vld [vmem:[%s2020 + $0x8] sm:$0xff]
    %v2030 = vadd.f32 %v1975, %v2029
    %v2031 = vxor.u32 %v2030, 2147483648
    %v2032 = vmul.f32 %v2031, 1.442695
    %v2033 = vpow.pop %v2032
    %v2034 = vadd.f32 %v2033, 1.0
    %v2035 = vrcp.pop %v2034
    %v2036 = vmul.f32 1.0, %v2035
    %v2037 = vld [vmem:[%s2020 + $0x10] sm:$0xff]
    %v2038 = vadd.f32 %v2014, %v2037
    %v2039 = vtanh.pop %v2038
    %v2040 = vld [vmem:[%s2020 + $0x18] sm:$0xff]
    %v2041 = vadd.f32 %v2016, %v2040
    %v2042 = vxor.u32 %v2041, 2147483648
    %v2043 = vmul.f32 %v2042, 1.442695
    %v2044 = vpow.pop %v2043
    %v2045 = vadd.f32 %v2044, 1.0
    %v2046 = vrcp.pop %v2045
    %v2047 = vmul.f32 1.0, %v2046
    %v2048 = vmul.f32 %v2036, %v1740
    %v2049 = vmul.f32 %v2028, %v2039
    %v2050 = vadd.f32 %v2048, %v2049
    %v2051 = vtanh.pop %v2050
    %v2052 = vmul.f32 %v2047, %v2051
    %v2053 = vpack.c.bf16 %v2052, %v2052
    %s2054 = scalar_lea.vmem %s6, 16
    %2055 = vst [vmem:[%s2054] sm:$0xf] %v2053
    %v2056 = vld [vmem:[#allocation5] sm:$0xff]
    %v2057 = vld [vmem:[#allocation5 + $0x8] sm:$0xff]
    %v2058 = vld [vmem:[#allocation5 + $0x10] sm:$0xff]
    %v2059 = vld [vmem:[#allocation5 + $0x18] sm:$0xff]
    %v2060 = vld [vmem:[#allocation5 + $0x20] sm:$0xff]
    %v2061 = vld [vmem:[#allocation5 + $0x28] sm:$0xff]
    %v2062 = vld [vmem:[#allocation5 + $0x30] sm:$0xff]
    %v2063 = vld [vmem:[#allocation5 + $0x38] sm:$0xff]
    %v2064 = vld [vmem:[#allocation5 + $0x40] sm:$0xff]
    %v2065 = vld [vmem:[#allocation5 + $0x48] sm:$0xff]
    %v2066 = vld [vmem:[#allocation5 + $0x50] sm:$0xff]
    %v2067 = vld [vmem:[#allocation5 + $0x58] sm:$0xff]
    %v2068 = vld [vmem:[#allocation5 + $0x60] sm:$0xff]
    %v2069 = vld [vmem:[#allocation5 + $0x68] sm:$0xff]
    %v2070 = vld [vmem:[#allocation5 + $0x70] sm:$0xff]
    %v2071 = vld [vmem:[#allocation5 + $0x78] sm:$0xff]
    %v2072 = vld [vmem:[#allocation5 + $0x80] sm:$0xff]
    %v2073 = vld [vmem:[#allocation5 + $0x88] sm:$0xff]
    %v2074 = vld [vmem:[#allocation5 + $0x90] sm:$0xff]
    %v2075 = vld [vmem:[#allocation5 + $0x98] sm:$0xff]
    %v2076 = vld [vmem:[#allocation5 + $0xa0] sm:$0xff]
    %v2077 = vld [vmem:[#allocation5 + $0xa8] sm:$0xff]
    %v2078 = vld [vmem:[#allocation5 + $0xb0] sm:$0xff]
    %v2079 = vld [vmem:[#allocation5 + $0xb8] sm:$0xff]
    %v2080 = vld [vmem:[#allocation5 + $0xc0] sm:$0xff]
    %v2081 = vld [vmem:[#allocation5 + $0xc8] sm:$0xff]
    %v2082 = vld [vmem:[#allocation5 + $0xd0] sm:$0xff]
    %v2083 = vld [vmem:[#allocation5 + $0xd8] sm:$0xff]
    %v2084 = vld [vmem:[#allocation5 + $0xe0] sm:$0xff]
    %v2085 = vld [vmem:[#allocation5 + $0xe8] sm:$0xff]
    %v2086 = vld [vmem:[#allocation5 + $0xf0] sm:$0xff]
    %v2087 = vld [vmem:[#allocation5 + $0xf8] sm:$0xff]
    %v2120 = vunpack.c.l.b16 %v2056
    %v2121 = vunpack.c.h.b16 %v2056
    %v2122 = vunpack.c.l.b16 %v2057
    %v2123 = vunpack.c.h.b16 %v2057
    %v2124 = vunpack.c.l.b16 %v2058
    %v2125 = vunpack.c.h.b16 %v2058
    %v2126 = vunpack.c.l.b16 %v2059
    %v2127 = vunpack.c.h.b16 %v2059
    %v2128 = vunpack.c.l.b16 %v2060
    %v2129 = vunpack.c.h.b16 %v2060
    %v2130 = vunpack.c.l.b16 %v2061
    %v2131 = vunpack.c.h.b16 %v2061
    %v2132 = vunpack.c.l.b16 %v2062
    %v2133 = vunpack.c.h.b16 %v2062
    %v2134 = vunpack.c.l.b16 %v2063
    %v2135 = vunpack.c.h.b16 %v2063
    %v2136 = vunpack.c.l.b16 %v2064
    %v2137 = vunpack.c.h.b16 %v2064
    %v2138 = vunpack.c.l.b16 %v2065
    %v2139 = vunpack.c.h.b16 %v2065
    %v2140 = vunpack.c.l.b16 %v2066
    %v2141 = vunpack.c.h.b16 %v2066
    %v2142 = vunpack.c.l.b16 %v2067
    %v2143 = vunpack.c.h.b16 %v2067
    %v2144 = vunpack.c.l.b16 %v2068
    %v2145 = vunpack.c.h.b16 %v2068
    %v2146 = vunpack.c.l.b16 %v2069
    %v2147 = vunpack.c.h.b16 %v2069
    %v2148 = vunpack.c.l.b16 %v2070
    %v2149 = vunpack.c.h.b16 %v2070
    %v2150 = vunpack.c.l.b16 %v2071
    %v2151 = vunpack.c.h.b16 %v2071
    %v2152 = vunpack.c.l.b16 %v2072
    %v2153 = vunpack.c.h.b16 %v2072
    %v2154 = vunpack.c.l.b16 %v2073
    %v2155 = vunpack.c.h.b16 %v2073
    %v2156 = vunpack.c.l.b16 %v2074
    %v2157 = vunpack.c.h.b16 %v2074
    %v2158 = vunpack.c.l.b16 %v2075
    %v2159 = vunpack.c.h.b16 %v2075
    %v2160 = vunpack.c.l.b16 %v2076
    %v2161 = vunpack.c.h.b16 %v2076
    %v2162 = vunpack.c.l.b16 %v2077
    %v2163 = vunpack.c.h.b16 %v2077
    %v2164 = vunpack.c.l.b16 %v2078
    %v2165 = vunpack.c.h.b16 %v2078
    %v2166 = vunpack.c.l.b16 %v2079
    %v2167 = vunpack.c.h.b16 %v2079
    %v2168 = vunpack.c.l.b16 %v2080
    %v2169 = vunpack.c.h.b16 %v2080
    %v2170 = vunpack.c.l.b16 %v2081
    %v2171 = vunpack.c.h.b16 %v2081
    %v2172 = vunpack.c.l.b16 %v2082
    %v2173 = vunpack.c.h.b16 %v2082
    %v2174 = vunpack.c.l.b16 %v2083
    %v2175 = vunpack.c.h.b16 %v2083
    %v2176 = vunpack.c.l.b16 %v2084
    %v2177 = vunpack.c.h.b16 %v2084
    %v2178 = vunpack.c.l.b16 %v2085
    %v2179 = vunpack.c.h.b16 %v2085
    %v2180 = vunpack.c.l.b16 %v2086
    %v2181 = vunpack.c.h.b16 %v2086
    %v2182 = vunpack.c.l.b16 %v2087
    %v2183 = vunpack.c.h.b16 %v2087
    %v2184 = vpack.c.b16 %v2124, %v2120
    %v2185 = vpack.c.b16 %v2125, %v2121
    %v2186 = vpack.c.b16 %v2126, %v2122
    %v2187 = vpack.c.b16 %v2127, %v2123
    %v2188 = vpack.c.b16 %v2132, %v2128
    %v2189 = vpack.c.b16 %v2133, %v2129
    %v2190 = vpack.c.b16 %v2134, %v2130
    %v2191 = vpack.c.b16 %v2135, %v2131
    %v2192 = vpack.c.b16 %v2140, %v2136
    %v2193 = vpack.c.b16 %v2141, %v2137
    %v2194 = vpack.c.b16 %v2142, %v2138
    %v2195 = vpack.c.b16 %v2143, %v2139
    %v2196 = vpack.c.b16 %v2148, %v2144
    %v2197 = vpack.c.b16 %v2149, %v2145
    %v2198 = vpack.c.b16 %v2150, %v2146
    %v2199 = vpack.c.b16 %v2151, %v2147
    %v2200 = vpack.c.b16 %v2156, %v2152
    %v2201 = vpack.c.b16 %v2157, %v2153
    %v2202 = vpack.c.b16 %v2158, %v2154
    %v2203 = vpack.c.b16 %v2159, %v2155
    %v2204 = vpack.c.b16 %v2164, %v2160
    %v2205 = vpack.c.b16 %v2165, %v2161
    %v2206 = vpack.c.b16 %v2166, %v2162
    %v2207 = vpack.c.b16 %v2167, %v2163
    %v2208 = vpack.c.b16 %v2172, %v2168
    %v2209 = vpack.c.b16 %v2173, %v2169
    %v2210 = vpack.c.b16 %v2174, %v2170
    %v2211 = vpack.c.b16 %v2175, %v2171
    %v2212 = vpack.c.b16 %v2180, %v2176
    %v2213 = vpack.c.b16 %v2181, %v2177
    %v2214 = vpack.c.b16 %v2182, %v2178
    %v2215 = vpack.c.b16 %v2183, %v2179
    %2248 = vmatprep.subr.bf16.mxu0 %v2213
    %2249 = vmatpush1.bf16.msra.mxu0 %v2212
    %2250 = vmatprep.subr.bf16.mxu0 %v2209
    %2251 = vmatpush1.bf16.msra.mxu0 %v2208
    %2252 = vmatprep.subr.bf16.mxu0 %v2205
    %2253 = vmatpush1.bf16.msra.mxu0 %v2204
    %2254 = vmatprep.subr.bf16.mxu0 %v2201
    %2255 = vmatpush1.bf16.msra.mxu0 %v2200
    %2256 = vmatprep.subr.bf16.mxu0 %v2197
    %2257 = vmatpush1.bf16.msra.mxu0 %v2196
    %2258 = vmatprep.subr.bf16.mxu0 %v2193
    %2259 = vmatpush1.bf16.msra.mxu0 %v2192
    %2260 = vmatprep.subr.bf16.mxu0 %v2189
    %2261 = vmatpush1.bf16.msra.mxu0 %v2188
    %2262 = vmatprep.subr.bf16.mxu0 %v2185
    %2263 = vmatpush1.bf16.msra.mxu0 %v2184
    %2264 = vmatprep.subr.bf16.mxu0 0
    %2265 = vmatpush2.bf16.msra.mxu0 0
    %2266 = vmatprep.subr.bf16.mxu0 0
    %2267 = vmatpush2.bf16.msra.mxu0 0
    %2268 = vmatprep.subr.bf16.mxu0 0
    %2269 = vmatpush2.bf16.msra.mxu0 0
    %2270 = vmatprep.subr.bf16.mxu0 0
    %2271 = vmatpush2.bf16.msra.mxu0 0
    %2272 = vmatprep.subr.bf16.mxu0 0
    %2273 = vmatpush2.bf16.msra.mxu0 0
    %2274 = vmatprep.subr.bf16.mxu0 0
    %2275 = vmatpush2.bf16.msra.mxu0 0
    %2276 = vmatprep.subr.bf16.mxu0 0
    %2277 = vmatpush2.bf16.msra.mxu0 0
    %2278 = vmatprep.subr.bf16.mxu0 0
    %2279 = vmatpush2.bf16.msra.mxu0 0
    %2280 = vmatprep.mubr.bf16.mxu0 0
    %2281 = vmatmul.mubr.bf16.gmra.mxu0 %v2053
    %v2282 = vpop.f32.mrf.mxu0
    %v2283 = vadd.f32 0.0, %v2282
    %v2284 = vpop.f32.mrf.mxu0
    %v2285 = vadd.f32 0.0, %v2284
    %v2286 = vpop.f32.mrf.mxu0
    %v2287 = vpop.f32.mrf.mxu0
    %2288 = vdwg.mxu0
    %2289 = vmatprep.subr.bf16.mxu0 %v2215
    %2290 = vmatpush1.bf16.msra.mxu0 %v2214
    %2291 = vmatprep.subr.bf16.mxu0 %v2211
    %2292 = vmatpush1.bf16.msra.mxu0 %v2210
    %2293 = vmatprep.subr.bf16.mxu0 %v2207
    %2294 = vmatpush1.bf16.msra.mxu0 %v2206
    %2295 = vmatprep.subr.bf16.mxu0 %v2203
    %2296 = vmatpush1.bf16.msra.mxu0 %v2202
    %2297 = vmatprep.subr.bf16.mxu0 %v2199
    %2298 = vmatpush1.bf16.msra.mxu0 %v2198
    %2299 = vmatprep.subr.bf16.mxu0 %v2195
    %2300 = vmatpush1.bf16.msra.mxu0 %v2194
    %2301 = vmatprep.subr.bf16.mxu0 %v2191
    %2302 = vmatpush1.bf16.msra.mxu0 %v2190
    %2303 = vmatprep.subr.bf16.mxu0 %v2187
    %2304 = vmatpush1.bf16.msra.mxu0 %v2186
    %2305 = vmatprep.subr.bf16.mxu0 0
    %2306 = vmatpush2.bf16.msra.mxu0 0
    %2307 = vmatprep.subr.bf16.mxu0 0
    %2308 = vmatpush2.bf16.msra.mxu0 0
    %2309 = vmatprep.subr.bf16.mxu0 0
    %2310 = vmatpush2.bf16.msra.mxu0 0
    %2311 = vmatprep.subr.bf16.mxu0 0
    %2312 = vmatpush2.bf16.msra.mxu0 0
    %2313 = vmatprep.subr.bf16.mxu0 0
    %2314 = vmatpush2.bf16.msra.mxu0 0
    %2315 = vmatprep.subr.bf16.mxu0 0
    %2316 = vmatpush2.bf16.msra.mxu0 0
    %2317 = vmatprep.subr.bf16.mxu0 0
    %2318 = vmatpush2.bf16.msra.mxu0 0
    %2319 = vmatprep.subr.bf16.mxu0 0
    %2320 = vmatpush2.bf16.msra.mxu0 0
    %2321 = vmatprep.mubr.bf16.mxu0 0
    %2322 = vmatmul.mubr.bf16.gmra.mxu0 %v2053
    %v2323 = vpop.f32.mrf.mxu0
    %v2324 = vadd.f32 0.0, %v2323
    %v2325 = vpop.f32.mrf.mxu0
    %v2326 = vadd.f32 0.0, %v2325
    %v2327 = vpop.f32.mrf.mxu0
    %v2328 = vpop.f32.mrf.mxu0
    %2329 = vdwg.mxu0
    %s2330 = scalar_lea.vmem [#allocation4], 160
    %v2331 = vld [vmem:[%s2330] sm:$0xff]
    %v2332 = vadd.f32 %v2283, %v2331
    %v2333 = vxor.u32 %v2332, 2147483648
    %v2334 = vmul.f32 %v2333, 1.442695
    %v2335 = vpow.pop %v2334
    %v2336 = vadd.f32 %v2335, 1.0
    %v2337 = vrcp.pop %v2336
    %v2338 = vmul.f32 1.0, %v2337
    %v2339 = vld [vmem:[%s2330 + $0x8] sm:$0xff]
    %v2340 = vadd.f32 %v2285, %v2339
    %v2341 = vxor.u32 %v2340, 2147483648
    %v2342 = vmul.f32 %v2341, 1.442695
    %v2343 = vpow.pop %v2342
    %v2344 = vadd.f32 %v2343, 1.0
    %v2345 = vrcp.pop %v2344
    %v2346 = vmul.f32 1.0, %v2345
    %v2347 = vld [vmem:[%s2330 + $0x10] sm:$0xff]
    %v2348 = vadd.f32 %v2324, %v2347
    %v2349 = vtanh.pop %v2348
    %v2350 = vld [vmem:[%s2330 + $0x18] sm:$0xff]
    %v2351 = vadd.f32 %v2326, %v2350
    %v2352 = vxor.u32 %v2351, 2147483648
    %v2353 = vmul.f32 %v2352, 1.442695
    %v2354 = vpow.pop %v2353
    %v2355 = vadd.f32 %v2354, 1.0
    %v2356 = vrcp.pop %v2355
    %v2357 = vmul.f32 1.0, %v2356
    %v2358 = vmul.f32 %v2346, %v2050
    %v2359 = vmul.f32 %v2338, %v2349
    %v2360 = vadd.f32 %v2358, %v2359
    %v2361 = vtanh.pop %v2360
    %v2362 = vmul.f32 %v2357, %v2361
    %v2363 = vpack.c.bf16 %v2362, %v2362
    %s2364 = scalar_lea.vmem %s6, 20
    %2365 = vst [vmem:[%s2364] sm:$0xf] %v2363
    %v2366 = vld [vmem:[#allocation5] sm:$0xff]
    %v2367 = vld [vmem:[#allocation5 + $0x8] sm:$0xff]
    %v2368 = vld [vmem:[#allocation5 + $0x10] sm:$0xff]
    %v2369 = vld [vmem:[#allocation5 + $0x18] sm:$0xff]
    %v2370 = vld [vmem:[#allocation5 + $0x20] sm:$0xff]
    %v2371 = vld [vmem:[#allocation5 + $0x28] sm:$0xff]
    %v2372 = vld [vmem:[#allocation5 + $0x30] sm:$0xff]
    %v2373 = vld [vmem:[#allocation5 + $0x38] sm:$0xff]
    %v2374 = vld [vmem:[#allocation5 + $0x40] sm:$0xff]
    %v2375 = vld [vmem:[#allocation5 + $0x48] sm:$0xff]
    %v2376 = vld [vmem:[#allocation5 + $0x50] sm:$0xff]
    %v2377 = vld [vmem:[#allocation5 + $0x58] sm:$0xff]
    %v2378 = vld [vmem:[#allocation5 + $0x60] sm:$0xff]
    %v2379 = vld [vmem:[#allocation5 + $0x68] sm:$0xff]
    %v2380 = vld [vmem:[#allocation5 + $0x70] sm:$0xff]
    %v2381 = vld [vmem:[#allocation5 + $0x78] sm:$0xff]
    %v2382 = vld [vmem:[#allocation5 + $0x80] sm:$0xff]
    %v2383 = vld [vmem:[#allocation5 + $0x88] sm:$0xff]
    %v2384 = vld [vmem:[#allocation5 + $0x90] sm:$0xff]
    %v2385 = vld [vmem:[#allocation5 + $0x98] sm:$0xff]
    %v2386 = vld [vmem:[#allocation5 + $0xa0] sm:$0xff]
    %v2387 = vld [vmem:[#allocation5 + $0xa8] sm:$0xff]
    %v2388 = vld [vmem:[#allocation5 + $0xb0] sm:$0xff]
    %v2389 = vld [vmem:[#allocation5 + $0xb8] sm:$0xff]
    %v2390 = vld [vmem:[#allocation5 + $0xc0] sm:$0xff]
    %v2391 = vld [vmem:[#allocation5 + $0xc8] sm:$0xff]
    %v2392 = vld [vmem:[#allocation5 + $0xd0] sm:$0xff]
    %v2393 = vld [vmem:[#allocation5 + $0xd8] sm:$0xff]
    %v2394 = vld [vmem:[#allocation5 + $0xe0] sm:$0xff]
    %v2395 = vld [vmem:[#allocation5 + $0xe8] sm:$0xff]
    %v2396 = vld [vmem:[#allocation5 + $0xf0] sm:$0xff]
    %v2397 = vld [vmem:[#allocation5 + $0xf8] sm:$0xff]
    %v2430 = vunpack.c.l.b16 %v2366
    %v2431 = vunpack.c.h.b16 %v2366
    %v2432 = vunpack.c.l.b16 %v2367
    %v2433 = vunpack.c.h.b16 %v2367
    %v2434 = vunpack.c.l.b16 %v2368
    %v2435 = vunpack.c.h.b16 %v2368
    %v2436 = vunpack.c.l.b16 %v2369
    %v2437 = vunpack.c.h.b16 %v2369
    %v2438 = vunpack.c.l.b16 %v2370
    %v2439 = vunpack.c.h.b16 %v2370
    %v2440 = vunpack.c.l.b16 %v2371
    %v2441 = vunpack.c.h.b16 %v2371
    %v2442 = vunpack.c.l.b16 %v2372
    %v2443 = vunpack.c.h.b16 %v2372
    %v2444 = vunpack.c.l.b16 %v2373
    %v2445 = vunpack.c.h.b16 %v2373
    %v2446 = vunpack.c.l.b16 %v2374
    %v2447 = vunpack.c.h.b16 %v2374
    %v2448 = vunpack.c.l.b16 %v2375
    %v2449 = vunpack.c.h.b16 %v2375
    %v2450 = vunpack.c.l.b16 %v2376
    %v2451 = vunpack.c.h.b16 %v2376
    %v2452 = vunpack.c.l.b16 %v2377
    %v2453 = vunpack.c.h.b16 %v2377
    %v2454 = vunpack.c.l.b16 %v2378
    %v2455 = vunpack.c.h.b16 %v2378
    %v2456 = vunpack.c.l.b16 %v2379
    %v2457 = vunpack.c.h.b16 %v2379
    %v2458 = vunpack.c.l.b16 %v2380
    %v2459 = vunpack.c.h.b16 %v2380
    %v2460 = vunpack.c.l.b16 %v2381
    %v2461 = vunpack.c.h.b16 %v2381
    %v2462 = vunpack.c.l.b16 %v2382
    %v2463 = vunpack.c.h.b16 %v2382
    %v2464 = vunpack.c.l.b16 %v2383
    %v2465 = vunpack.c.h.b16 %v2383
    %v2466 = vunpack.c.l.b16 %v2384
    %v2467 = vunpack.c.h.b16 %v2384
    %v2468 = vunpack.c.l.b16 %v2385
    %v2469 = vunpack.c.h.b16 %v2385
    %v2470 = vunpack.c.l.b16 %v2386
    %v2471 = vunpack.c.h.b16 %v2386
    %v2472 = vunpack.c.l.b16 %v2387
    %v2473 = vunpack.c.h.b16 %v2387
    %v2474 = vunpack.c.l.b16 %v2388
    %v2475 = vunpack.c.h.b16 %v2388
    %v2476 = vunpack.c.l.b16 %v2389
    %v2477 = vunpack.c.h.b16 %v2389
    %v2478 = vunpack.c.l.b16 %v2390
    %v2479 = vunpack.c.h.b16 %v2390
    %v2480 = vunpack.c.l.b16 %v2391
    %v2481 = vunpack.c.h.b16 %v2391
    %v2482 = vunpack.c.l.b16 %v2392
    %v2483 = vunpack.c.h.b16 %v2392
    %v2484 = vunpack.c.l.b16 %v2393
    %v2485 = vunpack.c.h.b16 %v2393
    %v2486 = vunpack.c.l.b16 %v2394
    %v2487 = vunpack.c.h.b16 %v2394
    %v2488 = vunpack.c.l.b16 %v2395
    %v2489 = vunpack.c.h.b16 %v2395
    %v2490 = vunpack.c.l.b16 %v2396
    %v2491 = vunpack.c.h.b16 %v2396
    %v2492 = vunpack.c.l.b16 %v2397
    %v2493 = vunpack.c.h.b16 %v2397
    %v2494 = vpack.c.b16 %v2434, %v2430
    %v2495 = vpack.c.b16 %v2435, %v2431
    %v2496 = vpack.c.b16 %v2436, %v2432
    %v2497 = vpack.c.b16 %v2437, %v2433
    %v2498 = vpack.c.b16 %v2442, %v2438
    %v2499 = vpack.c.b16 %v2443, %v2439
    %v2500 = vpack.c.b16 %v2444, %v2440
    %v2501 = vpack.c.b16 %v2445, %v2441
    %v2502 = vpack.c.b16 %v2450, %v2446
    %v2503 = vpack.c.b16 %v2451, %v2447
    %v2504 = vpack.c.b16 %v2452, %v2448
    %v2505 = vpack.c.b16 %v2453, %v2449
    %v2506 = vpack.c.b16 %v2458, %v2454
    %v2507 = vpack.c.b16 %v2459, %v2455
    %v2508 = vpack.c.b16 %v2460, %v2456
    %v2509 = vpack.c.b16 %v2461, %v2457
    %v2510 = vpack.c.b16 %v2466, %v2462
    %v2511 = vpack.c.b16 %v2467, %v2463
    %v2512 = vpack.c.b16 %v2468, %v2464
    %v2513 = vpack.c.b16 %v2469, %v2465
    %v2514 = vpack.c.b16 %v2474, %v2470
    %v2515 = vpack.c.b16 %v2475, %v2471
    %v2516 = vpack.c.b16 %v2476, %v2472
    %v2517 = vpack.c.b16 %v2477, %v2473
    %v2518 = vpack.c.b16 %v2482, %v2478
    %v2519 = vpack.c.b16 %v2483, %v2479
    %v2520 = vpack.c.b16 %v2484, %v2480
    %v2521 = vpack.c.b16 %v2485, %v2481
    %v2522 = vpack.c.b16 %v2490, %v2486
    %v2523 = vpack.c.b16 %v2491, %v2487
    %v2524 = vpack.c.b16 %v2492, %v2488
    %v2525 = vpack.c.b16 %v2493, %v2489
    %2558 = vmatprep.subr.bf16.mxu0 %v2523
    %2559 = vmatpush1.bf16.msra.mxu0 %v2522
    %2560 = vmatprep.subr.bf16.mxu0 %v2519
    %2561 = vmatpush1.bf16.msra.mxu0 %v2518
    %2562 = vmatprep.subr.bf16.mxu0 %v2515
    %2563 = vmatpush1.bf16.msra.mxu0 %v2514
    %2564 = vmatprep.subr.bf16.mxu0 %v2511
    %2565 = vmatpush1.bf16.msra.mxu0 %v2510
    %2566 = vmatprep.subr.bf16.mxu0 %v2507
    %2567 = vmatpush1.bf16.msra.mxu0 %v2506
    %2568 = vmatprep.subr.bf16.mxu0 %v2503
    %2569 = vmatpush1.bf16.msra.mxu0 %v2502
    %2570 = vmatprep.subr.bf16.mxu0 %v2499
    %2571 = vmatpush1.bf16.msra.mxu0 %v2498
    %2572 = vmatprep.subr.bf16.mxu0 %v2495
    %2573 = vmatpush1.bf16.msra.mxu0 %v2494
    %2574 = vmatprep.subr.bf16.mxu0 0
    %2575 = vmatpush2.bf16.msra.mxu0 0
    %2576 = vmatprep.subr.bf16.mxu0 0
    %2577 = vmatpush2.bf16.msra.mxu0 0
    %2578 = vmatprep.subr.bf16.mxu0 0
    %2579 = vmatpush2.bf16.msra.mxu0 0
    %2580 = vmatprep.subr.bf16.mxu0 0
    %2581 = vmatpush2.bf16.msra.mxu0 0
    %2582 = vmatprep.subr.bf16.mxu0 0
    %2583 = vmatpush2.bf16.msra.mxu0 0
    %2584 = vmatprep.subr.bf16.mxu0 0
    %2585 = vmatpush2.bf16.msra.mxu0 0
    %2586 = vmatprep.subr.bf16.mxu0 0
    %2587 = vmatpush2.bf16.msra.mxu0 0
    %2588 = vmatprep.subr.bf16.mxu0 0
    %2589 = vmatpush2.bf16.msra.mxu0 0
    %2590 = vmatprep.mubr.bf16.mxu0 0
    %2591 = vmatmul.mubr.bf16.gmra.mxu0 %v2363
    %v2592 = vpop.f32.mrf.mxu0
    %v2593 = vadd.f32 0.0, %v2592
    %v2594 = vpop.f32.mrf.mxu0
    %v2595 = vadd.f32 0.0, %v2594
    %v2596 = vpop.f32.mrf.mxu0
    %v2597 = vpop.f32.mrf.mxu0
    %2598 = vdwg.mxu0
    %2599 = vmatprep.subr.bf16.mxu0 %v2525
    %2600 = vmatpush1.bf16.msra.mxu0 %v2524
    %2601 = vmatprep.subr.bf16.mxu0 %v2521
    %2602 = vmatpush1.bf16.msra.mxu0 %v2520
    %2603 = vmatprep.subr.bf16.mxu0 %v2517
    %2604 = vmatpush1.bf16.msra.mxu0 %v2516
    %2605 = vmatprep.subr.bf16.mxu0 %v2513
    %2606 = vmatpush1.bf16.msra.mxu0 %v2512
    %2607 = vmatprep.subr.bf16.mxu0 %v2509
    %2608 = vmatpush1.bf16.msra.mxu0 %v2508
    %2609 = vmatprep.subr.bf16.mxu0 %v2505
    %2610 = vmatpush1.bf16.msra.mxu0 %v2504
    %2611 = vmatprep.subr.bf16.mxu0 %v2501
    %2612 = vmatpush1.bf16.msra.mxu0 %v2500
    %2613 = vmatprep.subr.bf16.mxu0 %v2497
    %2614 = vmatpush1.bf16.msra.mxu0 %v2496
    %2615 = vmatprep.subr.bf16.mxu0 0
    %2616 = vmatpush2.bf16.msra.mxu0 0
    %2617 = vmatprep.subr.bf16.mxu0 0
    %2618 = vmatpush2.bf16.msra.mxu0 0
    %2619 = vmatprep.subr.bf16.mxu0 0
    %2620 = vmatpush2.bf16.msra.mxu0 0
    %2621 = vmatprep.subr.bf16.mxu0 0
    %2622 = vmatpush2.bf16.msra.mxu0 0
    %2623 = vmatprep.subr.bf16.mxu0 0
    %2624 = vmatpush2.bf16.msra.mxu0 0
    %2625 = vmatprep.subr.bf16.mxu0 0
    %2626 = vmatpush2.bf16.msra.mxu0 0
    %2627 = vmatprep.subr.bf16.mxu0 0
    %2628 = vmatpush2.bf16.msra.mxu0 0
    %2629 = vmatprep.subr.bf16.mxu0 0
    %2630 = vmatpush2.bf16.msra.mxu0 0
    %2631 = vmatprep.mubr.bf16.mxu0 0
    %2632 = vmatmul.mubr.bf16.gmra.mxu0 %v2363
    %v2633 = vpop.f32.mrf.mxu0
    %v2634 = vadd.f32 0.0, %v2633
    %v2635 = vpop.f32.mrf.mxu0
    %v2636 = vadd.f32 0.0, %v2635
    %v2637 = vpop.f32.mrf.mxu0
    %v2638 = vpop.f32.mrf.mxu0
    %2639 = vdwg.mxu0
    %s2640 = scalar_lea.vmem [#allocation4], 192
    %v2641 = vld [vmem:[%s2640] sm:$0xff]
    %v2642 = vadd.f32 %v2593, %v2641
    %v2643 = vxor.u32 %v2642, 2147483648
    %v2644 = vmul.f32 %v2643, 1.442695
    %v2645 = vpow.pop %v2644
    %v2646 = vadd.f32 %v2645, 1.0
    %v2647 = vrcp.pop %v2646
    %v2648 = vmul.f32 1.0, %v2647
    %v2649 = vld [vmem:[%s2640 + $0x8] sm:$0xff]
    %v2650 = vadd.f32 %v2595, %v2649
    %v2651 = vxor.u32 %v2650, 2147483648
    %v2652 = vmul.f32 %v2651, 1.442695
    %v2653 = vpow.pop %v2652
    %v2654 = vadd.f32 %v2653, 1.0
    %v2655 = vrcp.pop %v2654
    %v2656 = vmul.f32 1.0, %v2655
    %v2657 = vld [vmem:[%s2640 + $0x10] sm:$0xff]
    %v2658 = vadd.f32 %v2634, %v2657
    %v2659 = vtanh.pop %v2658
    %v2660 = vld [vmem:[%s2640 + $0x18] sm:$0xff]
    %v2661 = vadd.f32 %v2636, %v2660
    %v2662 = vxor.u32 %v2661, 2147483648
    %v2663 = vmul.f32 %v2662, 1.442695
    %v2664 = vpow.pop %v2663
    %v2665 = vadd.f32 %v2664, 1.0
    %v2666 = vrcp.pop %v2665
    %v2667 = vmul.f32 1.0, %v2666
    %v2668 = vmul.f32 %v2656, %v2360
    %v2669 = vmul.f32 %v2648, %v2659
    %v2670 = vadd.f32 %v2668, %v2669
    %v2671 = vtanh.pop %v2670
    %v2672 = vmul.f32 %v2667, %v2671
    %v2673 = vpack.c.bf16 %v2672, %v2672
    %s2674 = scalar_lea.vmem %s6, 24
    %2675 = vst [vmem:[%s2674] sm:$0xf] %v2673
    %v2676 = vld [vmem:[#allocation5] sm:$0xff]
    %v2677 = vld [vmem:[#allocation5 + $0x8] sm:$0xff]
    %v2678 = vld [vmem:[#allocation5 + $0x10] sm:$0xff]
    %v2679 = vld [vmem:[#allocation5 + $0x18] sm:$0xff]
    %v2680 = vld [vmem:[#allocation5 + $0x20] sm:$0xff]
    %v2681 = vld [vmem:[#allocation5 + $0x28] sm:$0xff]
    %v2682 = vld [vmem:[#allocation5 + $0x30] sm:$0xff]
    %v2683 = vld [vmem:[#allocation5 + $0x38] sm:$0xff]
    %v2684 = vld [vmem:[#allocation5 + $0x40] sm:$0xff]
    %v2685 = vld [vmem:[#allocation5 + $0x48] sm:$0xff]
    %v2686 = vld [vmem:[#allocation5 + $0x50] sm:$0xff]
    %v2687 = vld [vmem:[#allocation5 + $0x58] sm:$0xff]
    %v2688 = vld [vmem:[#allocation5 + $0x60] sm:$0xff]
    %v2689 = vld [vmem:[#allocation5 + $0x68] sm:$0xff]
    %v2690 = vld [vmem:[#allocation5 + $0x70] sm:$0xff]
    %v2691 = vld [vmem:[#allocation5 + $0x78] sm:$0xff]
    %v2692 = vld [vmem:[#allocation5 + $0x80] sm:$0xff]
    %v2693 = vld [vmem:[#allocation5 + $0x88] sm:$0xff]
    %v2694 = vld [vmem:[#allocation5 + $0x90] sm:$0xff]
    %v2695 = vld [vmem:[#allocation5 + $0x98] sm:$0xff]
    %v2696 = vld [vmem:[#allocation5 + $0xa0] sm:$0xff]
    %v2697 = vld [vmem:[#allocation5 + $0xa8] sm:$0xff]
    %v2698 = vld [vmem:[#allocation5 + $0xb0] sm:$0xff]
    %v2699 = vld [vmem:[#allocation5 + $0xb8] sm:$0xff]
    %v2700 = vld [vmem:[#allocation5 + $0xc0] sm:$0xff]
    %v2701 = vld [vmem:[#allocation5 + $0xc8] sm:$0xff]
    %v2702 = vld [vmem:[#allocation5 + $0xd0] sm:$0xff]
    %v2703 = vld [vmem:[#allocation5 + $0xd8] sm:$0xff]
    %v2704 = vld [vmem:[#allocation5 + $0xe0] sm:$0xff]
    %v2705 = vld [vmem:[#allocation5 + $0xe8] sm:$0xff]
    %v2706 = vld [vmem:[#allocation5 + $0xf0] sm:$0xff]
    %v2707 = vld [vmem:[#allocation5 + $0xf8] sm:$0xff]
    %v2740 = vunpack.c.l.b16 %v2676
    %v2741 = vunpack.c.h.b16 %v2676
    %v2742 = vunpack.c.l.b16 %v2677
    %v2743 = vunpack.c.h.b16 %v2677
    %v2744 = vunpack.c.l.b16 %v2678
    %v2745 = vunpack.c.h.b16 %v2678
    %v2746 = vunpack.c.l.b16 %v2679
    %v2747 = vunpack.c.h.b16 %v2679
    %v2748 = vunpack.c.l.b16 %v2680
    %v2749 = vunpack.c.h.b16 %v2680
    %v2750 = vunpack.c.l.b16 %v2681
    %v2751 = vunpack.c.h.b16 %v2681
    %v2752 = vunpack.c.l.b16 %v2682
    %v2753 = vunpack.c.h.b16 %v2682
    %v2754 = vunpack.c.l.b16 %v2683
    %v2755 = vunpack.c.h.b16 %v2683
    %v2756 = vunpack.c.l.b16 %v2684
    %v2757 = vunpack.c.h.b16 %v2684
    %v2758 = vunpack.c.l.b16 %v2685
    %v2759 = vunpack.c.h.b16 %v2685
    %v2760 = vunpack.c.l.b16 %v2686
    %v2761 = vunpack.c.h.b16 %v2686
    %v2762 = vunpack.c.l.b16 %v2687
    %v2763 = vunpack.c.h.b16 %v2687
    %v2764 = vunpack.c.l.b16 %v2688
    %v2765 = vunpack.c.h.b16 %v2688
    %v2766 = vunpack.c.l.b16 %v2689
    %v2767 = vunpack.c.h.b16 %v2689
    %v2768 = vunpack.c.l.b16 %v2690
    %v2769 = vunpack.c.h.b16 %v2690
    %v2770 = vunpack.c.l.b16 %v2691
    %v2771 = vunpack.c.h.b16 %v2691
    %v2772 = vunpack.c.l.b16 %v2692
    %v2773 = vunpack.c.h.b16 %v2692
    %v2774 = vunpack.c.l.b16 %v2693
    %v2775 = vunpack.c.h.b16 %v2693
    %v2776 = vunpack.c.l.b16 %v2694
    %v2777 = vunpack.c.h.b16 %v2694
    %v2778 = vunpack.c.l.b16 %v2695
    %v2779 = vunpack.c.h.b16 %v2695
    %v2780 = vunpack.c.l.b16 %v2696
    %v2781 = vunpack.c.h.b16 %v2696
    %v2782 = vunpack.c.l.b16 %v2697
    %v2783 = vunpack.c.h.b16 %v2697
    %v2784 = vunpack.c.l.b16 %v2698
    %v2785 = vunpack.c.h.b16 %v2698
    %v2786 = vunpack.c.l.b16 %v2699
    %v2787 = vunpack.c.h.b16 %v2699
    %v2788 = vunpack.c.l.b16 %v2700
    %v2789 = vunpack.c.h.b16 %v2700
    %v2790 = vunpack.c.l.b16 %v2701
    %v2791 = vunpack.c.h.b16 %v2701
    %v2792 = vunpack.c.l.b16 %v2702
    %v2793 = vunpack.c.h.b16 %v2702
    %v2794 = vunpack.c.l.b16 %v2703
    %v2795 = vunpack.c.h.b16 %v2703
    %v2796 = vunpack.c.l.b16 %v2704
    %v2797 = vunpack.c.h.b16 %v2704
    %v2798 = vunpack.c.l.b16 %v2705
    %v2799 = vunpack.c.h.b16 %v2705
    %v2800 = vunpack.c.l.b16 %v2706
    %v2801 = vunpack.c.h.b16 %v2706
    %v2802 = vunpack.c.l.b16 %v2707
    %v2803 = vunpack.c.h.b16 %v2707
    %v2804 = vpack.c.b16 %v2744, %v2740
    %v2805 = vpack.c.b16 %v2745, %v2741
    %v2806 = vpack.c.b16 %v2746, %v2742
    %v2807 = vpack.c.b16 %v2747, %v2743
    %v2808 = vpack.c.b16 %v2752, %v2748
    %v2809 = vpack.c.b16 %v2753, %v2749
    %v2810 = vpack.c.b16 %v2754, %v2750
    %v2811 = vpack.c.b16 %v2755, %v2751
    %v2812 = vpack.c.b16 %v2760, %v2756
    %v2813 = vpack.c.b16 %v2761, %v2757
    %v2814 = vpack.c.b16 %v2762, %v2758
    %v2815 = vpack.c.b16 %v2763, %v2759
    %v2816 = vpack.c.b16 %v2768, %v2764
    %v2817 = vpack.c.b16 %v2769, %v2765
    %v2818 = vpack.c.b16 %v2770, %v2766
    %v2819 = vpack.c.b16 %v2771, %v2767
    %v2820 = vpack.c.b16 %v2776, %v2772
    %v2821 = vpack.c.b16 %v2777, %v2773
    %v2822 = vpack.c.b16 %v2778, %v2774
    %v2823 = vpack.c.b16 %v2779, %v2775
    %v2824 = vpack.c.b16 %v2784, %v2780
    %v2825 = vpack.c.b16 %v2785, %v2781
    %v2826 = vpack.c.b16 %v2786, %v2782
    %v2827 = vpack.c.b16 %v2787, %v2783
    %v2828 = vpack.c.b16 %v2792, %v2788
    %v2829 = vpack.c.b16 %v2793, %v2789
    %v2830 = vpack.c.b16 %v2794, %v2790
    %v2831 = vpack.c.b16 %v2795, %v2791
    %v2832 = vpack.c.b16 %v2800, %v2796
    %v2833 = vpack.c.b16 %v2801, %v2797
    %v2834 = vpack.c.b16 %v2802, %v2798
    %v2835 = vpack.c.b16 %v2803, %v2799
    %2868 = vmatprep.subr.bf16.mxu0 %v2833
    %2869 = vmatpush1.bf16.msra.mxu0 %v2832
    %2870 = vmatprep.subr.bf16.mxu0 %v2829
    %2871 = vmatpush1.bf16.msra.mxu0 %v2828
    %2872 = vmatprep.subr.bf16.mxu0 %v2825
    %2873 = vmatpush1.bf16.msra.mxu0 %v2824
    %2874 = vmatprep.subr.bf16.mxu0 %v2821
    %2875 = vmatpush1.bf16.msra.mxu0 %v2820
    %2876 = vmatprep.subr.bf16.mxu0 %v2817
    %2877 = vmatpush1.bf16.msra.mxu0 %v2816
    %2878 = vmatprep.subr.bf16.mxu0 %v2813
    %2879 = vmatpush1.bf16.msra.mxu0 %v2812
    %2880 = vmatprep.subr.bf16.mxu0 %v2809
    %2881 = vmatpush1.bf16.msra.mxu0 %v2808
    %2882 = vmatprep.subr.bf16.mxu0 %v2805
    %2883 = vmatpush1.bf16.msra.mxu0 %v2804
    %2884 = vmatprep.subr.bf16.mxu0 0
    %2885 = vmatpush2.bf16.msra.mxu0 0
    %2886 = vmatprep.subr.bf16.mxu0 0
    %2887 = vmatpush2.bf16.msra.mxu0 0
    %2888 = vmatprep.subr.bf16.mxu0 0
    %2889 = vmatpush2.bf16.msra.mxu0 0
    %2890 = vmatprep.subr.bf16.mxu0 0
    %2891 = vmatpush2.bf16.msra.mxu0 0
    %2892 = vmatprep.subr.bf16.mxu0 0
    %2893 = vmatpush2.bf16.msra.mxu0 0
    %2894 = vmatprep.subr.bf16.mxu0 0
    %2895 = vmatpush2.bf16.msra.mxu0 0
    %2896 = vmatprep.subr.bf16.mxu0 0
    %2897 = vmatpush2.bf16.msra.mxu0 0
    %2898 = vmatprep.subr.bf16.mxu0 0
    %2899 = vmatpush2.bf16.msra.mxu0 0
    %2900 = vmatprep.mubr.bf16.mxu0 0
    %2901 = vmatmul.mubr.bf16.gmra.mxu0 %v2673
    %v2902 = vpop.f32.mrf.mxu0
    %v2903 = vadd.f32 0.0, %v2902
    %v2904 = vpop.f32.mrf.mxu0
    %v2905 = vadd.f32 0.0, %v2904
    %v2906 = vpop.f32.mrf.mxu0
    %v2907 = vpop.f32.mrf.mxu0
    %2908 = vdwg.mxu0
    %2909 = vmatprep.subr.bf16.mxu0 %v2835
    %2910 = vmatpush1.bf16.msra.mxu0 %v2834
    %2911 = vmatprep.subr.bf16.mxu0 %v2831
    %2912 = vmatpush1.bf16.msra.mxu0 %v2830
    %2913 = vmatprep.subr.bf16.mxu0 %v2827
    %2914 = vmatpush1.bf16.msra.mxu0 %v2826
    %2915 = vmatprep.subr.bf16.mxu0 %v2823
    %2916 = vmatpush1.bf16.msra.mxu0 %v2822
    %2917 = vmatprep.subr.bf16.mxu0 %v2819
    %2918 = vmatpush1.bf16.msra.mxu0 %v2818
    %2919 = vmatprep.subr.bf16.mxu0 %v2815
    %2920 = vmatpush1.bf16.msra.mxu0 %v2814
    %2921 = vmatprep.subr.bf16.mxu0 %v2811
    %2922 = vmatpush1.bf16.msra.mxu0 %v2810
    %2923 = vmatprep.subr.bf16.mxu0 %v2807
    %2924 = vmatpush1.bf16.msra.mxu0 %v2806
    %2925 = vmatprep.subr.bf16.mxu0 0
    %2926 = vmatpush2.bf16.msra.mxu0 0
    %2927 = vmatprep.subr.bf16.mxu0 0
    %2928 = vmatpush2.bf16.msra.mxu0 0
    %2929 = vmatprep.subr.bf16.mxu0 0
    %2930 = vmatpush2.bf16.msra.mxu0 0
    %2931 = vmatprep.subr.bf16.mxu0 0
    %2932 = vmatpush2.bf16.msra.mxu0 0
    %2933 = vmatprep.subr.bf16.mxu0 0
    %2934 = vmatpush2.bf16.msra.mxu0 0
    %2935 = vmatprep.subr.bf16.mxu0 0
    %2936 = vmatpush2.bf16.msra.mxu0 0
    %2937 = vmatprep.subr.bf16.mxu0 0
    %2938 = vmatpush2.bf16.msra.mxu0 0
    %2939 = vmatprep.subr.bf16.mxu0 0
    %2940 = vmatpush2.bf16.msra.mxu0 0
    %2941 = vmatprep.mubr.bf16.mxu0 0
    %2942 = vmatmul.mubr.bf16.gmra.mxu0 %v2673
    %v2943 = vpop.f32.mrf.mxu0
    %v2944 = vadd.f32 0.0, %v2943
    %v2945 = vpop.f32.mrf.mxu0
    %v2946 = vadd.f32 0.0, %v2945
    %v2947 = vpop.f32.mrf.mxu0
    %v2948 = vpop.f32.mrf.mxu0
    %2949 = vdwg.mxu0
    %s2950 = scalar_lea.vmem [#allocation4], 224
    %v2951 = vld [vmem:[%s2950] sm:$0xff]
    %v2952 = vadd.f32 %v2903, %v2951
    %v2953 = vxor.u32 %v2952, 2147483648
    %v2954 = vmul.f32 %v2953, 1.442695
    %v2955 = vpow.pop %v2954
    %v2956 = vadd.f32 %v2955, 1.0
    %v2957 = vrcp.pop %v2956
    %v2958 = vmul.f32 1.0, %v2957
    %v2959 = vld [vmem:[%s2950 + $0x8] sm:$0xff]
    %v2960 = vadd.f32 %v2905, %v2959
    %v2961 = vxor.u32 %v2960, 2147483648
    %v2962 = vmul.f32 %v2961, 1.442695
    %v2963 = vpow.pop %v2962
    %v2964 = vadd.f32 %v2963, 1.0
    %v2965 = vrcp.pop %v2964
    %v2966 = vmul.f32 1.0, %v2965
    %v2967 = vld [vmem:[%s2950 + $0x10] sm:$0xff]
    %v2968 = vadd.f32 %v2944, %v2967
    %v2969 = vtanh.pop %v2968
    %v2970 = vld [vmem:[%s2950 + $0x18] sm:$0xff]
    %v2971 = vadd.f32 %v2946, %v2970
    %v2972 = vxor.u32 %v2971, 2147483648
    %v2973 = vmul.f32 %v2972, 1.442695
    %v2974 = vpow.pop %v2973
    %v2975 = vadd.f32 %v2974, 1.0
    %v2976 = vrcp.pop %v2975
    %v2977 = vmul.f32 1.0, %v2976
    %v2978 = vmul.f32 %v2966, %v2670
    %v2979 = vmul.f32 %v2958, %v2969
    %v2980 = vadd.f32 %v2978, %v2979
    %v2981 = vtanh.pop %v2980
    %v2982 = vmul.f32 %v2977, %v2981
    %v2983 = vpack.c.bf16 %v2982, %v2982
    %s2984 = scalar_lea.vmem %s6, 28
    %2985 = vst [vmem:[%s2984] sm:$0xf] %v2983
    %2986 = vst [vmem:[#allocation2] sm:$0xff] %v2982
    %2987 = vst [vmem:[#allocation3] sm:$0xff] %v2980
    // Predicated region
    $region34: #{cell_lstm_forward.3} parent=1 // pred_check
      %p2988 = pneg %p41
    $region35: #{cell_lstm_forward.3} parent=1 // pred_check_branch
      %2990 = sbr.rel (%p2988) target = $region37
    $region36: #{cell_lstm_forward.3} parent=1 // pred_region
      %2991 = vst [vmem:[%s7] sm:$0xff] %v2982
      %2992 = vst [vmem:[%s8] sm:$0xff] %v2980
    $region37: #{cell_lstm_forward.3} parent=1 // pred_fallthru
      _
    // Predicated region
    $region38: #{cell_lstm_forward.3} parent=1 // pred_check
      _
    $region39: #{cell_lstm_forward.3} parent=1 // pred_check_branch
      %2994 = sbr.rel (0) target = $region41
    $region40: #{cell_lstm_forward.3} parent=1 // pred_region
      _
    $region41: #{cell_lstm_forward.3} parent=1 // pred_fallthru
      _
    // Predicated region
    $region42: #{cell_lstm_forward.3} parent=1 // pred_check
      _
    $region43: #{cell_lstm_forward.3} parent=1 // pred_check_branch
      %2996 = sbr.rel (0) target = $region45
    $region44: #{cell_lstm_forward.3} parent=1 // pred_region
      _
    $region45: #{cell_lstm_forward.3} parent=1 // pred_fallthru
      _
    // Predicated region
    $region46: #{cell_lstm_forward.3} parent=1 // pred_check
      _
    $region47: #{cell_lstm_forward.3} parent=1 // pred_check_branch
      %2998 = sbr.rel (0) target = $region49
    $region48: #{cell_lstm_forward.3} parent=1 // pred_region
      _
    $region49: #{cell_lstm_forward.3} parent=1 // pred_fallthru
      _
    // Predicated region
    $region50: #{cell_lstm_forward.3} parent=1 // pred_check
      _
    $region51: #{cell_lstm_forward.3} parent=1 // pred_check_branch
      %3000 = sbr.rel (0) target = $region53
    $region52: #{cell_lstm_forward.3} parent=1 // pred_region
      _
    $region53: #{cell_lstm_forward.3} parent=1 // pred_fallthru
      _
    // Predicated region
    $region54: #{cell_lstm_forward.3} parent=1 // pred_check
      _
    $region55: #{cell_lstm_forward.3} parent=1 // pred_check_branch
      %3002 = sbr.rel (0) target = $region57
    $region56: #{cell_lstm_forward.3} parent=1 // pred_region
      _
    $region57: #{cell_lstm_forward.3} parent=1 // pred_fallthru
      _
    // Predicated region
    $region58: #{cell_lstm_forward.3} parent=1 // pred_check
      _
    $region59: #{cell_lstm_forward.3} parent=1 // pred_check_branch
      %3004 = sbr.rel (0) target = $region61
    $region60: #{cell_lstm_forward.3} parent=1 // pred_region
      _
    $region61: #{cell_lstm_forward.3} parent=1 // pred_fallthru
      _
    %3005 = vsyncpa [#allocation6], 1

</llo_original>
